<compile_context>
chip_gen: v5e
topology: v5e:2x2
jax: 0.10.0
libtpu: 0.0.40
codegen_flags: <defaults>
</compile_context>

<pallas_src>
import functools
import jax
import jax.numpy as jnp
from jax.experimental import pallas as pl
from jax.experimental.pallas import tpu as pltpu

IMAGE_SIZE  = 32        # stands in for 224
PATCH_SIZE  = 8         # stands in for 16
DIM         = 128       # stands in for 256 (lane-dense)
DEPTH       = 2         # stands in for 4
HEADS       = 2         # stands in for 4
DIM_HEAD    = 64        # vit-pytorch default
MLP_DIM     = 256       # stands in for 512 (lane-dense)
CHANNELS    = 1
NUM_PATCHES = (IMAGE_SIZE // PATCH_SIZE) ** 2
PATCH_DIM   = CHANNELS * PATCH_SIZE * PATCH_SIZE
SEQ_LEN     = NUM_PATCHES + 1
SEQ_PAD     = ((SEQ_LEN + 7) // 8) * 8          # pad sequence to a sublane multiple (17 -> 24)
INNER_DIM   = HEADS * DIM_HEAD                  # == DIM here (as in the real config)
LN_EPS      = 1e-5


# ----------------------------- in-kernel math helpers -----------------------------

def _layernorm(x, g, b):
    mu = jnp.mean(x, axis=-1, keepdims=True)
    var = jnp.mean(jnp.square(x - mu), axis=-1, keepdims=True)
    return (x - mu) * jax.lax.rsqrt(var + LN_EPS) * g + b


def _gelu(x):
    # tanh-form GELU (goes to the EUP slot).
    # TODO(synk): nn.GELU() defaults to exact erf; tanh form differs by <~1e-3 absolute.
    return 0.5 * x * (1.0 + jnp.tanh(0.7978845608028654 * (x + 0.044715 * x * x * x)))


def _mm(a, b):
    # bf16 MXU inputs, f32 accumulation.
    return jnp.dot(a.astype(jnp.bfloat16), b.astype(jnp.bfloat16),
                   preferred_element_type=jnp.float32)


# ----------------------------- fused kernel -----------------------------

def fused_vit_kernel(xp_ref, pe_g1_ref, pe_b1_ref, pe_w_ref, pe_bw_ref, pe_g2_ref, pe_b2_ref,
                     cls_ref, pos_ref,
                     a_g_ref, a_b_ref, wqkv_ref, wo_ref, bo_ref,
                     f_g_ref, f_b_ref, w1_ref, b1_ref, w2_ref, b2_ref,
                     fin_g_ref, fin_b_ref, dec_w_ref, dec_b_ref,
                     out_ref, tok_scratch, *, time):
    T = time
    N = NUM_PATCHES
    S = SEQ_LEN
    SP = SEQ_PAD
    inner = INNER_DIM
    dh = DIM_HEAD
    scale = DIM_HEAD ** -0.5

    # ---- to_patch_embedding: LN(patch_dim) -> Linear -> LN(dim), flattened over all T*N rows ----
    xp = xp_ref[0]                                               # (T*N, PATCH_DIM)
    xp = _layernorm(xp, pe_g1_ref[...], pe_b1_ref[...])
    tok = _mm(xp, pe_w_ref[...]) + pe_bw_ref[...]                # (T*N, DIM)
    tok = _layernorm(tok, pe_g2_ref[...], pe_b2_ref[...])
    tok3 = tok.reshape(T, N, DIM)                                # aligned split (N % 8 == 0)

    # ---- assemble padded token block (cls + patches + pos) in a VMEM scratch ----
    cls_row = cls_ref[...] + pos_ref[0:1, :]                     # (1, DIM)
    tok_scratch[:, 0:1, :] = jnp.broadcast_to(cls_row, (T, 1, DIM))
    tok_scratch[:, 1:1 + N, :] = tok3 + pos_ref[1:S, :][None]
    tok_scratch[:, S:, :] = jnp.zeros((T, SP - S, DIM), jnp.float32)   # inert pad rows
    x2 = tok_scratch[...].reshape(T * SP, DIM)                   # (T*SP, DIM), aligned merge

    # padded rows must never contribute as attention keys
    kmask = jax.lax.broadcasted_iota(jnp.int32, (1, 1, SP), 2) < S

    # ---- transformer layers (statically unrolled, all weights resident in VMEM) ----
    for l in range(DEPTH):
        # Attention (pre-norm)
        xn = _layernorm(x2, a_g_ref[l], a_b_ref[l])
        qkv = _mm(xn, wqkv_ref[l])                               # (T*SP, 3*inner), one big matmul
        qkv3 = qkv.reshape(T, SP, 3 * inner)                     # aligned split
        head_outs = []
        for h in range(HEADS):                                   # static unroll (HEADS small)
            q = qkv3[:, :, h * dh:(h + 1) * dh]
            k = qkv3[:, :, inner + h * dh:inner + (h + 1) * dh]
            v = qkv3[:, :, 2 * inner + h * dh:2 * inner + (h + 1) * dh]
            dots = jnp.einsum('bqd,bkd->bqk',
                              q.astype(jnp.bfloat16), k.astype(jnp.bfloat16),
                              preferred_element_type=jnp.float32) * scale
            dots = jnp.where(kmask, dots, -1e30)                 # mask padded keys
            attn = jax.nn.softmax(dots, axis=-1)
            head_outs.append(jnp.einsum('bqk,bkd->bqd',
                                        attn.astype(jnp.bfloat16), v.astype(jnp.bfloat16),
                                        preferred_element_type=jnp.float32))
        o = jnp.concatenate(head_outs, axis=-1).reshape(T * SP, inner)
        x2 = x2 + _mm(o, wo_ref[l]) + bo_ref[l]

        # FeedForward (pre-norm)
        xn = _layernorm(x2, f_g_ref[l], f_b_ref[l])
        hdn = _gelu(_mm(xn, w1_ref[l]) + b1_ref[l])
        x2 = x2 + _mm(hdn, w2_ref[l]) + b2_ref[l]

    # ---- head: Transformer.norm on cls token, mean over T frames, decoder Linear ----
    tokens3 = x2.reshape(T, SP, DIM)
    cls_tok = tokens3[:, 0:1, :]                                 # (T, 1, DIM)
    feats = _layernorm(cls_tok, fin_g_ref[...], fin_b_ref[...])
    pooled = jnp.mean(feats, axis=0)                             # (1, DIM)
    out_ref[0] = _mm(pooled, dec_w_ref[...]) + dec_b_ref[...]    # (1, H*W), lane-dense store


# ----------------------------- pallas_call wrapper -----------------------------

def _bcast(shape):
    zeros = (0,) * len(shape)
    return pl.BlockSpec(shape, lambda b, _z=zeros: _z)


def temporal_scan_predictor(x, params):
    """x: (B, T, C, H, W) float32 -> (B, 1, H, W)."""
    B, T, C, H, W = x.shape
    ps = PATCH_SIZE
    hh, ww = H // ps, W // ps
    hw = H * W

    # einops 'b c (h p1) (w p2) -> b (h w) (p1 p2 c)', kept frame-major per batch element.
    # TODO(synk): fold this patchify transpose into the input BlockSpec index_map to skip
    #             the extra XLA layout pass (matters at the real 224x224 input size).
    xp = x.reshape(B, T, C, hh, ps, ww, ps)
    xp = jnp.transpose(xp, (0, 1, 3, 5, 4, 6, 2)).reshape(B, T * hh * ww, ps * ps * C)

    kern = functools.partial(fused_vit_kernel, time=T)
    out = pl.pallas_call(
        kern,
        out_shape=jax.ShapeDtypeStruct((B, 1, hw), jnp.float32),
        grid=(B,),
        in_specs=[
            pl.BlockSpec((1, T * NUM_PATCHES, PATCH_DIM), lambda b: (b, 0, 0)),
            _bcast((1, PATCH_DIM)), _bcast((1, PATCH_DIM)),
            _bcast((PATCH_DIM, DIM)), _bcast((1, DIM)),
            _bcast((1, DIM)), _bcast((1, DIM)),
            _bcast((1, DIM)), _bcast((SEQ_LEN, DIM)),
            _bcast((DEPTH, 1, DIM)), _bcast((DEPTH, 1, DIM)),
            _bcast((DEPTH, DIM, 3 * INNER_DIM)),
            _bcast((DEPTH, INNER_DIM, DIM)), _bcast((DEPTH, 1, DIM)),
            _bcast((DEPTH, 1, DIM)), _bcast((DEPTH, 1, DIM)),
            _bcast((DEPTH, DIM, MLP_DIM)), _bcast((DEPTH, 1, MLP_DIM)),
            _bcast((DEPTH, MLP_DIM, DIM)), _bcast((DEPTH, 1, DIM)),
            _bcast((1, DIM)), _bcast((1, DIM)),
            _bcast((DIM, hw)), _bcast((1, hw)),
        ],
        out_specs=pl.BlockSpec((1, 1, hw), lambda b: (b, 0, 0)),
        scratch_shapes=[pltpu.VMEM((T, SEQ_PAD, DIM), jnp.float32)],
        compiler_params=pltpu.CompilerParams(
            dimension_semantics=("parallel",)),
    )(xp,
      params["pe_ln1_g"], params["pe_ln1_b"], params["pe_w"], params["pe_b"],
      params["pe_ln2_g"], params["pe_ln2_b"], params["cls"], params["pos"],
      params["attn_ln_g"], params["attn_ln_b"], params["wqkv"], params["wo"], params["bo"],
      params["ff_ln_g"], params["ff_ln_b"], params["w1"], params["b1"], params["w2"], params["b2"],
      params["final_ln_g"], params["final_ln_b"], params["dec_w"], params["dec_b"])

    return out.reshape(B, 1, H, W)


# ----------------------------- deterministic parameter init -----------------------------

def init_params(key):
    keys = iter(jax.random.split(key, 64))

    def rnd(shape, scale=0.02):
        return (scale * jax.random.normal(next(keys), shape)).astype(jnp.float32)

    hw = IMAGE_SIZE * IMAGE_SIZE
    return dict(
        pe_ln1_g=jnp.ones((1, PATCH_DIM), jnp.float32),
        pe_ln1_b=jnp.zeros((1, PATCH_DIM), jnp.float32),
        pe_w=rnd((PATCH_DIM, DIM)),
        pe_b=jnp.zeros((1, DIM), jnp.float32),
        pe_ln2_g=jnp.ones((1, DIM), jnp.float32),
        pe_ln2_b=jnp.zeros((1, DIM), jnp.float32),
        cls=rnd((1, DIM), scale=1.0),                      # cls_token ~ randn
        pos=rnd((SEQ_LEN, DIM), scale=1.0),                # pos_embedding ~ randn
        # per-layer weights stacked along a leading DEPTH axis
        attn_ln_g=jnp.ones((DEPTH, 1, DIM), jnp.float32),
        attn_ln_b=jnp.zeros((DEPTH, 1, DIM), jnp.float32),
        wqkv=rnd((DEPTH, DIM, 3 * INNER_DIM)),             # to_qkv (no bias)
        wo=rnd((DEPTH, INNER_DIM, DIM)),                   # to_out Linear
        bo=jnp.zeros((DEPTH, 1, DIM), jnp.float32),
        ff_ln_g=jnp.ones((DEPTH, 1, DIM), jnp.float32),
        ff_ln_b=jnp.zeros((DEPTH, 1, DIM), jnp.float32),
        w1=rnd((DEPTH, DIM, MLP_DIM)),
        b1=jnp.zeros((DEPTH, 1, MLP_DIM), jnp.float32),
        w2=rnd((DEPTH, MLP_DIM, DIM)),
        b2=jnp.zeros((DEPTH, 1, DIM), jnp.float32),
        final_ln_g=jnp.ones((1, DIM), jnp.float32),
        final_ln_b=jnp.zeros((1, DIM), jnp.float32),
        dec_w=rnd((DIM, hw)),                              # nn.Linear(dim, image_size**2)
        dec_b=jnp.zeros((1, hw), jnp.float32),
    )


if __name__ == "__main__":
    key = jax.random.PRNGKey(0)
    pkey, xkey = jax.random.split(key)
    params = init_params(pkey)

    B, T = 2, 3
    x = jax.random.normal(xkey, (B, T, CHANNELS, IMAGE_SIZE, IMAGE_SIZE), dtype=jnp.float32)

    fwd = jax.jit(temporal_scan_predictor)
    out = jax.block_until_ready(fwd(x, params))
    assert out.shape == (B, 1, IMAGE_SIZE, IMAGE_SIZE)
    assert bool(jnp.all(jnp.isfinite(out)))
    print("KERNEL_OK")
</pallas_src>

<mosaic_0001>
module attributes {stable_mosaic.version = 11 : i64} {
  func.func @fused_vit_kernel(%arg0: i32, %arg1: memref<1x48x64xf32, #tpu.memory_space<vmem>>, %arg2: memref<1x64xf32, #tpu.memory_space<vmem>>, %arg3: memref<1x64xf32, #tpu.memory_space<vmem>>, %arg4: memref<64x128xf32, #tpu.memory_space<vmem>>, %arg5: memref<1x128xf32, #tpu.memory_space<vmem>>, %arg6: memref<1x128xf32, #tpu.memory_space<vmem>>, %arg7: memref<1x128xf32, #tpu.memory_space<vmem>>, %arg8: memref<1x128xf32, #tpu.memory_space<vmem>>, %arg9: memref<17x128xf32, #tpu.memory_space<vmem>>, %arg10: memref<2x1x128xf32, #tpu.memory_space<vmem>>, %arg11: memref<2x1x128xf32, #tpu.memory_space<vmem>>, %arg12: memref<2x128x384xf32, #tpu.memory_space<vmem>>, %arg13: memref<2x128x128xf32, #tpu.memory_space<vmem>>, %arg14: memref<2x1x128xf32, #tpu.memory_space<vmem>>, %arg15: memref<2x1x128xf32, #tpu.memory_space<vmem>>, %arg16: memref<2x1x128xf32, #tpu.memory_space<vmem>>, %arg17: memref<2x128x256xf32, #tpu.memory_space<vmem>>, %arg18: memref<2x1x256xf32, #tpu.memory_space<vmem>>, %arg19: memref<2x256x128xf32, #tpu.memory_space<vmem>>, %arg20: memref<2x1x128xf32, #tpu.memory_space<vmem>>, %arg21: memref<1x128xf32, #tpu.memory_space<vmem>>, %arg22: memref<1x128xf32, #tpu.memory_space<vmem>>, %arg23: memref<128x1024xf32, #tpu.memory_space<vmem>>, %arg24: memref<1x1024xf32, #tpu.memory_space<vmem>>, %arg25: memref<1x1x1024xf32, #tpu.memory_space<vmem>>, %arg26: memref<3x24x128xf32, #tpu.memory_space<vmem>>) attributes {dimension_semantics = [#tpu.dimension_semantics<parallel>], iteration_bounds = array<i64: 2>, scalar_prefetch = 0 : i64, scratch_operands = 1 : i64, tpu.core_type = #tpu.core_type<tc>, window_params = [{transform_indices = @transform_0, window_bounds = array<i64: 1, 48, 64>}, {pipeline_mode = #tpu.pipeline_mode<synchronous>, transform_indices = @transform_1, window_bounds = array<i64: 1, 64>}, {pipeline_mode = #tpu.pipeline_mode<synchronous>, transform_indices = @transform_2, window_bounds = array<i64: 1, 64>}, {pipeline_mode = #tpu.pipeline_mode<synchronous>, transform_indices = @transform_3, window_bounds = array<i64: 64, 128>}, {pipeline_mode = #tpu.pipeline_mode<synchronous>, transform_indices = @transform_4, window_bounds = array<i64: 1, 128>}, {pipeline_mode = #tpu.pipeline_mode<synchronous>, transform_indices = @transform_5, window_bounds = array<i64: 1, 128>}, {pipeline_mode = #tpu.pipeline_mode<synchronous>, transform_indices = @transform_6, window_bounds = array<i64: 1, 128>}, {pipeline_mode = #tpu.pipeline_mode<synchronous>, transform_indices = @transform_7, window_bounds = array<i64: 1, 128>}, {pipeline_mode = #tpu.pipeline_mode<synchronous>, transform_indices = @transform_8, window_bounds = array<i64: 17, 128>}, {pipeline_mode = #tpu.pipeline_mode<synchronous>, transform_indices = @transform_9, window_bounds = array<i64: 2, 1, 128>}, {pipeline_mode = #tpu.pipeline_mode<synchronous>, transform_indices = @transform_10, window_bounds = array<i64: 2, 1, 128>}, {pipeline_mode = #tpu.pipeline_mode<synchronous>, transform_indices = @transform_11, window_bounds = array<i64: 2, 128, 384>}, {pipeline_mode = #tpu.pipeline_mode<synchronous>, transform_indices = @transform_12, window_bounds = array<i64: 2, 128, 128>}, {pipeline_mode = #tpu.pipeline_mode<synchronous>, transform_indices = @transform_13, window_bounds = array<i64: 2, 1, 128>}, {pipeline_mode = #tpu.pipeline_mode<synchronous>, transform_indices = @transform_14, window_bounds = array<i64: 2, 1, 128>}, {pipeline_mode = #tpu.pipeline_mode<synchronous>, transform_indices = @transform_15, window_bounds = array<i64: 2, 1, 128>}, {pipeline_mode = #tpu.pipeline_mode<synchronous>, transform_indices = @transform_16, window_bounds = array<i64: 2, 128, 256>}, {pipeline_mode = #tpu.pipeline_mode<synchronous>, transform_indices = @transform_17, window_bounds = array<i64: 2, 1, 256>}, {pipeline_mode = #tpu.pipeline_mode<synchronous>, transform_indices = @transform_18, window_bounds = array<i64: 2, 256, 128>}, {pipeline_mode = #tpu.pipeline_mode<synchronous>, transform_indices = @transform_19, window_bounds = array<i64: 2, 1, 128>}, {pipeline_mode = #tpu.pipeline_mode<synchronous>, transform_indices = @transform_20, window_bounds = array<i64: 1, 128>}, {pipeline_mode = #tpu.pipeline_mode<synchronous>, transform_indices = @transform_21, window_bounds = array<i64: 1, 128>}, {pipeline_mode = #tpu.pipeline_mode<synchronous>, transform_indices = @transform_22, window_bounds = array<i64: 128, 1024>}, {pipeline_mode = #tpu.pipeline_mode<synchronous>, transform_indices = @transform_23, window_bounds = array<i64: 1, 1024>}, {transform_indices = @transform_24, window_bounds = array<i64: 1, 1, 1024>}]} {
    %c0 = arith.constant 0 : index
    %c0_0 = arith.constant 0 : index
    %c0_1 = arith.constant 0 : index
    %0 = vector.load %arg1[%c0, %c0_0, %c0_1] : memref<1x48x64xf32, #tpu.memory_space<vmem>>, vector<1x48x64xf32>
    %1 = vector.shape_cast %0 : vector<1x48x64xf32> to vector<48x64xf32>
    %c0_2 = arith.constant 0 : index
    %c0_3 = arith.constant 0 : index
    %2 = vector.load %arg2[%c0_2, %c0_3] : memref<1x64xf32, #tpu.memory_space<vmem>>, vector<1x64xf32>
    %c0_4 = arith.constant 0 : index
    %c0_5 = arith.constant 0 : index
    %3 = vector.load %arg3[%c0_4, %c0_5] : memref<1x64xf32, #tpu.memory_space<vmem>>, vector<1x64xf32>
    %cst = arith.constant dense<0.000000e+00> : vector<48xf32>
    %4 = vector.multi_reduction <add>, %1, %cst [1] : vector<48x64xf32> to vector<48xf32>
    %5 = vector.shape_cast %4 : vector<48xf32> to vector<48x1xf32>
    %cst_6 = arith.constant 6.400000e+01 : f32
    %6 = vector.broadcast %cst_6 : f32 to vector<48x1xf32>
    %7 = arith.divf %5, %6 : vector<48x1xf32>
    %8 = vector.broadcast %7 : vector<48x1xf32> to vector<48x64xf32>
    %9 = arith.subf %1, %8 : vector<48x64xf32>
    %10 = arith.mulf %9, %9 : vector<48x64xf32>
    %cst_7 = arith.constant dense<0.000000e+00> : vector<48xf32>
    %11 = vector.multi_reduction <add>, %10, %cst_7 [1] : vector<48x64xf32> to vector<48xf32>
    %12 = vector.shape_cast %11 : vector<48xf32> to vector<48x1xf32>
    %cst_8 = arith.constant 6.400000e+01 : f32
    %13 = vector.broadcast %cst_8 : f32 to vector<48x1xf32>
    %14 = arith.divf %12, %13 : vector<48x1xf32>
    %15 = vector.broadcast %7 : vector<48x1xf32> to vector<48x64xf32>
    %16 = arith.subf %1, %15 : vector<48x64xf32>
    %cst_9 = arith.constant 9.99999974E-6 : f32
    %17 = vector.broadcast %cst_9 : f32 to vector<48x1xf32>
    %18 = arith.addf %14, %17 : vector<48x1xf32>
    %19 = math.rsqrt %18 : vector<48x1xf32>
    %20 = vector.broadcast %19 : vector<48x1xf32> to vector<48x64xf32>
    %21 = arith.mulf %16, %20 : vector<48x64xf32>
    %22 = vector.broadcast %2 : vector<1x64xf32> to vector<48x64xf32>
    %23 = arith.mulf %21, %22 : vector<48x64xf32>
    %24 = vector.broadcast %3 : vector<1x64xf32> to vector<48x64xf32>
    %25 = arith.addf %23, %24 : vector<48x64xf32>
    %c0_10 = arith.constant 0 : index
    %c0_11 = arith.constant 0 : index
    %26 = vector.load %arg4[%c0_10, %c0_11] : memref<64x128xf32, #tpu.memory_space<vmem>>, vector<64x128xf32>
    %27 = arith.truncf %25 : vector<48x64xf32> to vector<48x64xbf16>
    %28 = arith.truncf %26 : vector<64x128xf32> to vector<64x128xbf16>
    %cst_12 = arith.constant dense<0.000000e+00> : vector<48x128xf32>
    %29 = tpu.matmul %27, %28, %cst_12 {dimension_numbers = #tpu.dot_dimension_numbers<[1], [0], [0], [1], [0, 0, 1, 1], [], []>} : vector<48x64xbf16>, vector<64x128xbf16>, vector<48x128xf32> -> vector<48x128xf32>
    %c0_13 = arith.constant 0 : index
    %c0_14 = arith.constant 0 : index
    %30 = vector.load %arg5[%c0_13, %c0_14] : memref<1x128xf32, #tpu.memory_space<vmem>>, vector<1x128xf32>
    %31 = vector.broadcast %30 : vector<1x128xf32> to vector<48x128xf32>
    %32 = arith.addf %29, %31 : vector<48x128xf32>
    %c0_15 = arith.constant 0 : index
    %c0_16 = arith.constant 0 : index
    %33 = vector.load %arg6[%c0_15, %c0_16] : memref<1x128xf32, #tpu.memory_space<vmem>>, vector<1x128xf32>
    %c0_17 = arith.constant 0 : index
    %c0_18 = arith.constant 0 : index
    %34 = vector.load %arg7[%c0_17, %c0_18] : memref<1x128xf32, #tpu.memory_space<vmem>>, vector<1x128xf32>
    %cst_19 = arith.constant dense<0.000000e+00> : vector<48xf32>
    %35 = vector.multi_reduction <add>, %32, %cst_19 [1] : vector<48x128xf32> to vector<48xf32>
    %36 = vector.shape_cast %35 : vector<48xf32> to vector<48x1xf32>
    %cst_20 = arith.constant 1.280000e+02 : f32
    %37 = vector.broadcast %cst_20 : f32 to vector<48x1xf32>
    %38 = arith.divf %36, %37 : vector<48x1xf32>
    %39 = vector.broadcast %38 : vector<48x1xf32> to vector<48x128xf32>
    %40 = arith.subf %32, %39 : vector<48x128xf32>
    %41 = arith.mulf %40, %40 : vector<48x128xf32>
    %cst_21 = arith.constant dense<0.000000e+00> : vector<48xf32>
    %42 = vector.multi_reduction <add>, %41, %cst_21 [1] : vector<48x128xf32> to vector<48xf32>
    %43 = vector.shape_cast %42 : vector<48xf32> to vector<48x1xf32>
    %cst_22 = arith.constant 1.280000e+02 : f32
    %44 = vector.broadcast %cst_22 : f32 to vector<48x1xf32>
    %45 = arith.divf %43, %44 : vector<48x1xf32>
    %46 = vector.broadcast %38 : vector<48x1xf32> to vector<48x128xf32>
    %47 = arith.subf %32, %46 : vector<48x128xf32>
    %cst_23 = arith.constant 9.99999974E-6 : f32
    %48 = vector.broadcast %cst_23 : f32 to vector<48x1xf32>
    %49 = arith.addf %45, %48 : vector<48x1xf32>
    %50 = math.rsqrt %49 : vector<48x1xf32>
    %51 = vector.broadcast %50 : vector<48x1xf32> to vector<48x128xf32>
    %52 = arith.mulf %47, %51 : vector<48x128xf32>
    %53 = vector.broadcast %33 : vector<1x128xf32> to vector<48x128xf32>
    %54 = arith.mulf %52, %53 : vector<48x128xf32>
    %55 = vector.broadcast %34 : vector<1x128xf32> to vector<48x128xf32>
    %56 = arith.addf %54, %55 : vector<48x128xf32>
    %57 = vector.shape_cast %56 : vector<48x128xf32> to vector<3x16x128xf32>
    %c0_24 = arith.constant 0 : index
    %c0_25 = arith.constant 0 : index
    %58 = vector.load %arg8[%c0_24, %c0_25] : memref<1x128xf32, #tpu.memory_space<vmem>>, vector<1x128xf32>
    %c0_26 = arith.constant 0 : index
    %c0_27 = arith.constant 0 : index
    %59 = vector.load %arg9[%c0_26, %c0_27] : memref<17x128xf32, #tpu.memory_space<vmem>>, vector<1x128xf32>
    %60 = arith.addf %58, %59 : vector<1x128xf32>
    %61 = vector.shape_cast %60 : vector<1x128xf32> to vector<1x1x128xf32>
    %62 = vector.broadcast %61 : vector<1x1x128xf32> to vector<3x1x128xf32>
    %c0_28 = arith.constant 0 : index
    %c0_29 = arith.constant 0 : index
    %c0_30 = arith.constant 0 : index
    %63 = vector.load %arg26[%c0_28, %c0_29, %c0_30] : memref<3x24x128xf32, #tpu.memory_space<vmem>>, vector<3x1x128xf32>
    tpu.vector_store %arg26[%c0_28, %c0_29, %c0_30], %62 {strides = array<i32>} : memref<3x24x128xf32, #tpu.memory_space<vmem>>, vector<3x1x128xf32>,
    %c1 = arith.constant 1 : index
    %c0_31 = arith.constant 0 : index
    %64 = vector.load %arg9[%c1, %c0_31] : memref<17x128xf32, #tpu.memory_space<vmem>>, vector<16x128xf32>
    %65 = vector.shape_cast %64 : vector<16x128xf32> to vector<1x16x128xf32>
    %66 = vector.broadcast %65 : vector<1x16x128xf32> to vector<3x16x128xf32>
    %67 = arith.addf %57, %66 : vector<3x16x128xf32>
    %c0_32 = arith.constant 0 : index
    %c1_33 = arith.constant 1 : index
    %c0_34 = arith.constant 0 : index
    %68 = vector.load %arg26[%c0_32, %c1_33, %c0_34] : memref<3x24x128xf32, #tpu.memory_space<vmem>>, vector<3x16x128xf32>
    tpu.vector_store %arg26[%c0_32, %c1_33, %c0_34], %67 {strides = array<i32>} : memref<3x24x128xf32, #tpu.memory_space<vmem>>, vector<3x16x128xf32>,
    %cst_35 = arith.constant 0.000000e+00 : f32
    %69 = vector.broadcast %cst_35 : f32 to vector<3x7x128xf32>
    %c0_36 = arith.constant 0 : index
    %c17 = arith.constant 17 : index
    %c0_37 = arith.constant 0 : index
    %70 = vector.load %arg26[%c0_36, %c17, %c0_37] : memref<3x24x128xf32, #tpu.memory_space<vmem>>, vector<3x7x128xf32>
    tpu.vector_store %arg26[%c0_36, %c17, %c0_37], %69 {strides = array<i32>} : memref<3x24x128xf32, #tpu.memory_space<vmem>>, vector<3x7x128xf32>,
    %c0_38 = arith.constant 0 : index
    %c0_39 = arith.constant 0 : index
    %c0_40 = arith.constant 0 : index
    %71 = vector.load %arg26[%c0_38, %c0_39, %c0_40] : memref<3x24x128xf32, #tpu.memory_space<vmem>>, vector<3x24x128xf32>
    %72 = vector.shape_cast %71 : vector<3x24x128xf32> to vector<72x128xf32>
    %73 = tpu.iota {dimensions = array<i32: 2>} : vector<1x1x24xi32>
    %c17_i32 = arith.constant 17 : i32
    %74 = vector.broadcast %c17_i32 : i32 to vector<1x1x24xi32>
    %75 = arith.cmpi slt, %73, %74 : vector<1x1x24xi32>
    %c0_41 = arith.constant 0 : index
    %c0_42 = arith.constant 0 : index
    %c0_43 = arith.constant 0 : index
    %76 = vector.load %arg10[%c0_41, %c0_42, %c0_43] : memref<2x1x128xf32, #tpu.memory_space<vmem>>, vector<1x1x128xf32>
    %77 = vector.shape_cast %76 : vector<1x1x128xf32> to vector<1x128xf32>
    %c0_44 = arith.constant 0 : index
    %c0_45 = arith.constant 0 : index
    %c0_46 = arith.constant 0 : index
    %78 = vector.load %arg11[%c0_44, %c0_45, %c0_46] : memref<2x1x128xf32, #tpu.memory_space<vmem>>, vector<1x1x128xf32>
    %79 = vector.shape_cast %78 : vector<1x1x128xf32> to vector<1x128xf32>
    %cst_47 = arith.constant dense<0.000000e+00> : vector<72xf32>
    %80 = vector.multi_reduction <add>, %72, %cst_47 [1] : vector<72x128xf32> to vector<72xf32>
    %81 = vector.shape_cast %80 : vector<72xf32> to vector<72x1xf32>
    %cst_48 = arith.constant 1.280000e+02 : f32
    %82 = vector.broadcast %cst_48 : f32 to vector<72x1xf32>
    %83 = arith.divf %81, %82 : vector<72x1xf32>
    %84 = vector.broadcast %83 : vector<72x1xf32> to vector<72x128xf32>
    %85 = arith.subf %72, %84 : vector<72x128xf32>
    %86 = arith.mulf %85, %85 : vector<72x128xf32>
    %cst_49 = arith.constant dense<0.000000e+00> : vector<72xf32>
    %87 = vector.multi_reduction <add>, %86, %cst_49 [1] : vector<72x128xf32> to vector<72xf32>
    %88 = vector.shape_cast %87 : vector<72xf32> to vector<72x1xf32>
    %cst_50 = arith.constant 1.280000e+02 : f32
    %89 = vector.broadcast %cst_50 : f32 to vector<72x1xf32>
    %90 = arith.divf %88, %89 : vector<72x1xf32>
    %91 = vector.broadcast %83 : vector<72x1xf32> to vector<72x128xf32>
    %92 = arith.subf %72, %91 : vector<72x128xf32>
    %cst_51 = arith.constant 9.99999974E-6 : f32
    %93 = vector.broadcast %cst_51 : f32 to vector<72x1xf32>
    %94 = arith.addf %90, %93 : vector<72x1xf32>
    %95 = math.rsqrt %94 : vector<72x1xf32>
    %96 = vector.broadcast %95 : vector<72x1xf32> to vector<72x128xf32>
    %97 = arith.mulf %92, %96 : vector<72x128xf32>
    %98 = vector.broadcast %77 : vector<1x128xf32> to vector<72x128xf32>
    %99 = arith.mulf %97, %98 : vector<72x128xf32>
    %100 = vector.broadcast %79 : vector<1x128xf32> to vector<72x128xf32>
    %101 = arith.addf %99, %100 : vector<72x128xf32>
    %c0_52 = arith.constant 0 : index
    %c0_53 = arith.constant 0 : index
    %c0_54 = arith.constant 0 : index
    %102 = vector.load %arg12[%c0_52, %c0_53, %c0_54] : memref<2x128x384xf32, #tpu.memory_space<vmem>>, vector<1x128x384xf32>
    %103 = vector.shape_cast %102 : vector<1x128x384xf32> to vector<128x384xf32>
    %104 = arith.truncf %101 : vector<72x128xf32> to vector<72x128xbf16>
    %105 = arith.truncf %103 : vector<128x384xf32> to vector<128x384xbf16>
    %cst_55 = arith.constant dense<0.000000e+00> : vector<72x384xf32>
    %106 = tpu.matmul %104, %105, %cst_55 {dimension_numbers = #tpu.dot_dimension_numbers<[1], [0], [0], [1], [0, 0, 1, 1], [], []>} : vector<72x128xbf16>, vector<128x384xbf16>, vector<72x384xf32> -> vector<72x384xf32>
    %107 = vector.shape_cast %106 : vector<72x384xf32> to vector<3x24x384xf32>
    %108 = vector.extract_strided_slice %107 {offsets = [0, 0, 0], sizes = [3, 24, 64], strides = [1, 1, 1]} : vector<3x24x384xf32> to vector<3x24x64xf32>
    %109 = vector.extract_strided_slice %107 {offsets = [0, 0, 128], sizes = [3, 24, 64], strides = [1, 1, 1]} : vector<3x24x384xf32> to vector<3x24x64xf32>
    %110 = vector.extract_strided_slice %107 {offsets = [0, 0, 256], sizes = [3, 24, 64], strides = [1, 1, 1]} : vector<3x24x384xf32> to vector<3x24x64xf32>
    %111 = arith.truncf %108 : vector<3x24x64xf32> to vector<3x24x64xbf16>
    %112 = arith.truncf %109 : vector<3x24x64xf32> to vector<3x24x64xbf16>
    "tpu.trace_start"() <{level = 10 : i32, message = "bqd,bkd->bqk"}> : () -> ()
    %cst_56 = arith.constant dense<0.000000e+00> : vector<3x24x24xf32>
    %113 = tpu.matmul %111, %112, %cst_56 {dimension_numbers = #tpu.dot_dimension_numbers<[2], [2], [1], [1], [0, 0, 0, 1, 1, 1], [0], [0]>} : vector<3x24x64xbf16>, vector<3x24x64xbf16>, vector<3x24x24xf32> -> vector<3x24x24xf32>
    "tpu.trace_stop"() : () -> ()
    %cst_57 = arith.constant 1.250000e-01 : f32
    %114 = vector.broadcast %cst_57 : f32 to vector<3x24x24xf32>
    %115 = arith.mulf %113, %114 : vector<3x24x24xf32>
    %cst_58 = arith.constant -1.000000e+30 : f32
    %116 = vector.shape_cast %75 : vector<1x1x24xi1> to vector<1x1x24xi1>
    %117 = vector.broadcast %116 : vector<1x1x24xi1> to vector<3x24x24xi1>
    %118 = vector.broadcast %cst_58 : f32 to vector<3x24x24xf32>
    %119 = arith.select %117, %115, %118 : vector<3x24x24xi1>, vector<3x24x24xf32>
    %cst_59 = arith.constant dense<0xFF800000> : vector<3x24xf32>
    %120 = vector.multi_reduction <maximumf>, %119, %cst_59 [2] : vector<3x24x24xf32> to vector<3x24xf32>
    %cst_60 = arith.constant 0xFF800000 : f32
    %121 = vector.broadcast %cst_60 : f32 to vector<3x24xf32>
    %122 = arith.maximumf %121, %120 : vector<3x24xf32>
    %123 = vector.shape_cast %122 : vector<3x24xf32> to vector<3x24x1xf32>
    %124 = vector.broadcast %123 : vector<3x24x1xf32> to vector<3x24x24xf32>
    %125 = arith.subf %119, %124 : vector<3x24x24xf32>
    %126 = math.exp %125 : vector<3x24x24xf32>
    %cst_61 = arith.constant dense<0.000000e+00> : vector<3x24xf32>
    %127 = vector.multi_reduction <add>, %126, %cst_61 [2] : vector<3x24x24xf32> to vector<3x24xf32>
    %128 = vector.shape_cast %127 : vector<3x24xf32> to vector<3x24x1xf32>
    %129 = vector.broadcast %128 : vector<3x24x1xf32> to vector<3x24x24xf32>
    %130 = arith.divf %126, %129 : vector<3x24x24xf32>
    %131 = arith.truncf %130 : vector<3x24x24xf32> to vector<3x24x24xbf16>
    %132 = arith.truncf %110 : vector<3x24x64xf32> to vector<3x24x64xbf16>
    "tpu.trace_start"() <{level = 10 : i32, message = "bqk,bkd->bqd"}> : () -> ()
    %cst_62 = arith.constant dense<0.000000e+00> : vector<3x24x64xf32>
    %133 = tpu.matmul %131, %132, %cst_62 {dimension_numbers = #tpu.dot_dimension_numbers<[2], [1], [1], [2], [0, 0, 0, 1, 1, 2], [0], [0]>} : vector<3x24x24xbf16>, vector<3x24x64xbf16>, vector<3x24x64xf32> -> vector<3x24x64xf32>
    "tpu.trace_stop"() : () -> ()
    %134 = vector.extract_strided_slice %107 {offsets = [0, 0, 64], sizes = [3, 24, 64], strides = [1, 1, 1]} : vector<3x24x384xf32> to vector<3x24x64xf32>
    %135 = vector.extract_strided_slice %107 {offsets = [0, 0, 192], sizes = [3, 24, 64], strides = [1, 1, 1]} : vector<3x24x384xf32> to vector<3x24x64xf32>
    %136 = vector.extract_strided_slice %107 {offsets = [0, 0, 320], sizes = [3, 24, 64], strides = [1, 1, 1]} : vector<3x24x384xf32> to vector<3x24x64xf32>
    %137 = arith.truncf %134 : vector<3x24x64xf32> to vector<3x24x64xbf16>
    %138 = arith.truncf %135 : vector<3x24x64xf32> to vector<3x24x64xbf16>
    "tpu.trace_start"() <{level = 10 : i32, message = "bqd,bkd->bqk"}> : () -> ()
    %cst_63 = arith.constant dense<0.000000e+00> : vector<3x24x24xf32>
    %139 = tpu.matmul %137, %138, %cst_63 {dimension_numbers = #tpu.dot_dimension_numbers<[2], [2], [1], [1], [0, 0, 0, 1, 1, 1], [0], [0]>} : vector<3x24x64xbf16>, vector<3x24x64xbf16>, vector<3x24x24xf32> -> vector<3x24x24xf32>
    "tpu.trace_stop"() : () -> ()
    %cst_64 = arith.constant 1.250000e-01 : f32
    %140 = vector.broadcast %cst_64 : f32 to vector<3x24x24xf32>
    %141 = arith.mulf %139, %140 : vector<3x24x24xf32>
    %cst_65 = arith.constant -1.000000e+30 : f32
    %142 = vector.shape_cast %75 : vector<1x1x24xi1> to vector<1x1x24xi1>
    %143 = vector.broadcast %142 : vector<1x1x24xi1> to vector<3x24x24xi1>
    %144 = vector.broadcast %cst_65 : f32 to vector<3x24x24xf32>
    %145 = arith.select %143, %141, %144 : vector<3x24x24xi1>, vector<3x24x24xf32>
    %cst_66 = arith.constant dense<0xFF800000> : vector<3x24xf32>
    %146 = vector.multi_reduction <maximumf>, %145, %cst_66 [2] : vector<3x24x24xf32> to vector<3x24xf32>
    %cst_67 = arith.constant 0xFF800000 : f32
    %147 = vector.broadcast %cst_67 : f32 to vector<3x24xf32>
    %148 = arith.maximumf %147, %146 : vector<3x24xf32>
    %149 = vector.shape_cast %148 : vector<3x24xf32> to vector<3x24x1xf32>
    %150 = vector.broadcast %149 : vector<3x24x1xf32> to vector<3x24x24xf32>
    %151 = arith.subf %145, %150 : vector<3x24x24xf32>
    %152 = math.exp %151 : vector<3x24x24xf32>
    %cst_68 = arith.constant dense<0.000000e+00> : vector<3x24xf32>
    %153 = vector.multi_reduction <add>, %152, %cst_68 [2] : vector<3x24x24xf32> to vector<3x24xf32>
    %154 = vector.shape_cast %153 : vector<3x24xf32> to vector<3x24x1xf32>
    %155 = vector.broadcast %154 : vector<3x24x1xf32> to vector<3x24x24xf32>
    %156 = arith.divf %152, %155 : vector<3x24x24xf32>
    %157 = arith.truncf %156 : vector<3x24x24xf32> to vector<3x24x24xbf16>
    %158 = arith.truncf %136 : vector<3x24x64xf32> to vector<3x24x64xbf16>
    "tpu.trace_start"() <{level = 10 : i32, message = "bqk,bkd->bqd"}> : () -> ()
    %cst_69 = arith.constant dense<0.000000e+00> : vector<3x24x64xf32>
    %159 = tpu.matmul %157, %158, %cst_69 {dimension_numbers = #tpu.dot_dimension_numbers<[2], [1], [1], [2], [0, 0, 0, 1, 1, 2], [0], [0]>} : vector<3x24x24xbf16>, vector<3x24x64xbf16>, vector<3x24x64xf32> -> vector<3x24x64xf32>
    "tpu.trace_stop"() : () -> ()
    %160 = tpu.concatenate %133, %159 in 2 : vector<3x24x64xf32>, vector<3x24x64xf32> -> vector<3x24x128xf32>
    %161 = vector.shape_cast %160 : vector<3x24x128xf32> to vector<72x128xf32>
    %c0_70 = arith.constant 0 : index
    %c0_71 = arith.constant 0 : index
    %c0_72 = arith.constant 0 : index
    %162 = vector.load %arg13[%c0_70, %c0_71, %c0_72] : memref<2x128x128xf32, #tpu.memory_space<vmem>>, vector<1x128x128xf32>
    %163 = vector.shape_cast %162 : vector<1x128x128xf32> to vector<128x128xf32>
    %164 = arith.truncf %161 : vector<72x128xf32> to vector<72x128xbf16>
    %165 = arith.truncf %163 : vector<128x128xf32> to vector<128x128xbf16>
    %cst_73 = arith.constant dense<0.000000e+00> : vector<72x128xf32>
    %166 = tpu.matmul %164, %165, %cst_73 {dimension_numbers = #tpu.dot_dimension_numbers<[1], [0], [0], [1], [0, 0, 1, 1], [], []>} : vector<72x128xbf16>, vector<128x128xbf16>, vector<72x128xf32> -> vector<72x128xf32>
    %167 = arith.addf %72, %166 : vector<72x128xf32>
    %c0_74 = arith.constant 0 : index
    %c0_75 = arith.constant 0 : index
    %c0_76 = arith.constant 0 : index
    %168 = vector.load %arg14[%c0_74, %c0_75, %c0_76] : memref<2x1x128xf32, #tpu.memory_space<vmem>>, vector<1x1x128xf32>
    %169 = vector.shape_cast %168 : vector<1x1x128xf32> to vector<1x128xf32>
    %170 = vector.broadcast %169 : vector<1x128xf32> to vector<72x128xf32>
    %171 = arith.addf %167, %170 : vector<72x128xf32>
    %c0_77 = arith.constant 0 : index
    %c0_78 = arith.constant 0 : index
    %c0_79 = arith.constant 0 : index
    %172 = vector.load %arg15[%c0_77, %c0_78, %c0_79] : memref<2x1x128xf32, #tpu.memory_space<vmem>>, vector<1x1x128xf32>
    %173 = vector.shape_cast %172 : vector<1x1x128xf32> to vector<1x128xf32>
    %c0_80 = arith.constant 0 : index
    %c0_81 = arith.constant 0 : index
    %c0_82 = arith.constant 0 : index
    %174 = vector.load %arg16[%c0_80, %c0_81, %c0_82] : memref<2x1x128xf32, #tpu.memory_space<vmem>>, vector<1x1x128xf32>
    %175 = vector.shape_cast %174 : vector<1x1x128xf32> to vector<1x128xf32>
    %cst_83 = arith.constant dense<0.000000e+00> : vector<72xf32>
    %176 = vector.multi_reduction <add>, %171, %cst_83 [1] : vector<72x128xf32> to vector<72xf32>
    %177 = vector.shape_cast %176 : vector<72xf32> to vector<72x1xf32>
    %cst_84 = arith.constant 1.280000e+02 : f32
    %178 = vector.broadcast %cst_84 : f32 to vector<72x1xf32>
    %179 = arith.divf %177, %178 : vector<72x1xf32>
    %180 = vector.broadcast %179 : vector<72x1xf32> to vector<72x128xf32>
    %181 = arith.subf %171, %180 : vector<72x128xf32>
    %182 = arith.mulf %181, %181 : vector<72x128xf32>
    %cst_85 = arith.constant dense<0.000000e+00> : vector<72xf32>
    %183 = vector.multi_reduction <add>, %182, %cst_85 [1] : vector<72x128xf32> to vector<72xf32>
    %184 = vector.shape_cast %183 : vector<72xf32> to vector<72x1xf32>
    %cst_86 = arith.constant 1.280000e+02 : f32
    %185 = vector.broadcast %cst_86 : f32 to vector<72x1xf32>
    %186 = arith.divf %184, %185 : vector<72x1xf32>
    %187 = vector.broadcast %179 : vector<72x1xf32> to vector<72x128xf32>
    %188 = arith.subf %171, %187 : vector<72x128xf32>
    %cst_87 = arith.constant 9.99999974E-6 : f32
    %189 = vector.broadcast %cst_87 : f32 to vector<72x1xf32>
    %190 = arith.addf %186, %189 : vector<72x1xf32>
    %191 = math.rsqrt %190 : vector<72x1xf32>
    %192 = vector.broadcast %191 : vector<72x1xf32> to vector<72x128xf32>
    %193 = arith.mulf %188, %192 : vector<72x128xf32>
    %194 = vector.broadcast %173 : vector<1x128xf32> to vector<72x128xf32>
    %195 = arith.mulf %193, %194 : vector<72x128xf32>
    %196 = vector.broadcast %175 : vector<1x128xf32> to vector<72x128xf32>
    %197 = arith.addf %195, %196 : vector<72x128xf32>
    %c0_88 = arith.constant 0 : index
    %c0_89 = arith.constant 0 : index
    %c0_90 = arith.constant 0 : index
    %198 = vector.load %arg17[%c0_88, %c0_89, %c0_90] : memref<2x128x256xf32, #tpu.memory_space<vmem>>, vector<1x128x256xf32>
    %199 = vector.shape_cast %198 : vector<1x128x256xf32> to vector<128x256xf32>
    %200 = arith.truncf %197 : vector<72x128xf32> to vector<72x128xbf16>
    %201 = arith.truncf %199 : vector<128x256xf32> to vector<128x256xbf16>
    %cst_91 = arith.constant dense<0.000000e+00> : vector<72x256xf32>
    %202 = tpu.matmul %200, %201, %cst_91 {dimension_numbers = #tpu.dot_dimension_numbers<[1], [0], [0], [1], [0, 0, 1, 1], [], []>} : vector<72x128xbf16>, vector<128x256xbf16>, vector<72x256xf32> -> vector<72x256xf32>
    %c0_92 = arith.constant 0 : index
    %c0_93 = arith.constant 0 : index
    %c0_94 = arith.constant 0 : index
    %203 = vector.load %arg18[%c0_92, %c0_93, %c0_94] : memref<2x1x256xf32, #tpu.memory_space<vmem>>, vector<1x1x256xf32>
    %204 = vector.shape_cast %203 : vector<1x1x256xf32> to vector<1x256xf32>
    %205 = vector.broadcast %204 : vector<1x256xf32> to vector<72x256xf32>
    %206 = arith.addf %202, %205 : vector<72x256xf32>
    %cst_95 = arith.constant 5.000000e-01 : f32
    %207 = vector.broadcast %cst_95 : f32 to vector<72x256xf32>
    %208 = arith.mulf %207, %206 : vector<72x256xf32>
    %cst_96 = arith.constant 4.471500e-02 : f32
    %209 = vector.broadcast %cst_96 : f32 to vector<72x256xf32>
    %210 = arith.mulf %209, %206 : vector<72x256xf32>
    %211 = arith.mulf %210, %206 : vector<72x256xf32>
    %212 = arith.mulf %211, %206 : vector<72x256xf32>
    %213 = arith.addf %206, %212 : vector<72x256xf32>
    %cst_97 = arith.constant 0.797884583 : f32
    %214 = vector.broadcast %cst_97 : f32 to vector<72x256xf32>
    %215 = arith.mulf %214, %213 : vector<72x256xf32>
    %216 = math.tanh %215 : vector<72x256xf32>
    %cst_98 = arith.constant 1.000000e+00 : f32
    %217 = vector.broadcast %cst_98 : f32 to vector<72x256xf32>
    %218 = arith.addf %217, %216 : vector<72x256xf32>
    %219 = arith.mulf %208, %218 : vector<72x256xf32>
    %c0_99 = arith.constant 0 : index
    %c0_100 = arith.constant 0 : index
    %c0_101 = arith.constant 0 : index
    %220 = vector.load %arg19[%c0_99, %c0_100, %c0_101] : memref<2x256x128xf32, #tpu.memory_space<vmem>>, vector<1x256x128xf32>
    %221 = vector.shape_cast %220 : vector<1x256x128xf32> to vector<256x128xf32>
    %222 = arith.truncf %219 : vector<72x256xf32> to vector<72x256xbf16>
    %223 = arith.truncf %221 : vector<256x128xf32> to vector<256x128xbf16>
    %cst_102 = arith.constant dense<0.000000e+00> : vector<72x128xf32>
    %224 = tpu.matmul %222, %223, %cst_102 {dimension_numbers = #tpu.dot_dimension_numbers<[1], [0], [0], [1], [0, 0, 1, 1], [], []>} : vector<72x256xbf16>, vector<256x128xbf16>, vector<72x128xf32> -> vector<72x128xf32>
    %225 = arith.addf %171, %224 : vector<72x128xf32>
    %c0_103 = arith.constant 0 : index
    %c0_104 = arith.constant 0 : index
    %c0_105 = arith.constant 0 : index
    %226 = vector.load %arg20[%c0_103, %c0_104, %c0_105] : memref<2x1x128xf32, #tpu.memory_space<vmem>>, vector<1x1x128xf32>
    %227 = vector.shape_cast %226 : vector<1x1x128xf32> to vector<1x128xf32>
    %228 = vector.broadcast %227 : vector<1x128xf32> to vector<72x128xf32>
    %229 = arith.addf %225, %228 : vector<72x128xf32>
    %c1_106 = arith.constant 1 : index
    %c0_107 = arith.constant 0 : index
    %c0_108 = arith.constant 0 : index
    %230 = vector.load %arg10[%c1_106, %c0_107, %c0_108] : memref<2x1x128xf32, #tpu.memory_space<vmem>>, vector<1x1x128xf32>
    %231 = vector.shape_cast %230 : vector<1x1x128xf32> to vector<1x128xf32>
    %c1_109 = arith.constant 1 : index
    %c0_110 = arith.constant 0 : index
    %c0_111 = arith.constant 0 : index
    %232 = vector.load %arg11[%c1_109, %c0_110, %c0_111] : memref<2x1x128xf32, #tpu.memory_space<vmem>>, vector<1x1x128xf32>
    %233 = vector.shape_cast %232 : vector<1x1x128xf32> to vector<1x128xf32>
    %cst_112 = arith.constant dense<0.000000e+00> : vector<72xf32>
    %234 = vector.multi_reduction <add>, %229, %cst_112 [1] : vector<72x128xf32> to vector<72xf32>
    %235 = vector.shape_cast %234 : vector<72xf32> to vector<72x1xf32>
    %cst_113 = arith.constant 1.280000e+02 : f32
    %236 = vector.broadcast %cst_113 : f32 to vector<72x1xf32>
    %237 = arith.divf %235, %236 : vector<72x1xf32>
    %238 = vector.broadcast %237 : vector<72x1xf32> to vector<72x128xf32>
    %239 = arith.subf %229, %238 : vector<72x128xf32>
    %240 = arith.mulf %239, %239 : vector<72x128xf32>
    %cst_114 = arith.constant dense<0.000000e+00> : vector<72xf32>
    %241 = vector.multi_reduction <add>, %240, %cst_114 [1] : vector<72x128xf32> to vector<72xf32>
    %242 = vector.shape_cast %241 : vector<72xf32> to vector<72x1xf32>
    %cst_115 = arith.constant 1.280000e+02 : f32
    %243 = vector.broadcast %cst_115 : f32 to vector<72x1xf32>
    %244 = arith.divf %242, %243 : vector<72x1xf32>
    %245 = vector.broadcast %237 : vector<72x1xf32> to vector<72x128xf32>
    %246 = arith.subf %229, %245 : vector<72x128xf32>
    %cst_116 = arith.constant 9.99999974E-6 : f32
    %247 = vector.broadcast %cst_116 : f32 to vector<72x1xf32>
    %248 = arith.addf %244, %247 : vector<72x1xf32>
    %249 = math.rsqrt %248 : vector<72x1xf32>
    %250 = vector.broadcast %249 : vector<72x1xf32> to vector<72x128xf32>
    %251 = arith.mulf %246, %250 : vector<72x128xf32>
    %252 = vector.broadcast %231 : vector<1x128xf32> to vector<72x128xf32>
    %253 = arith.mulf %251, %252 : vector<72x128xf32>
    %254 = vector.broadcast %233 : vector<1x128xf32> to vector<72x128xf32>
    %255 = arith.addf %253, %254 : vector<72x128xf32>
    %c1_117 = arith.constant 1 : index
    %c0_118 = arith.constant 0 : index
    %c0_119 = arith.constant 0 : index
    %256 = vector.load %arg12[%c1_117, %c0_118, %c0_119] : memref<2x128x384xf32, #tpu.memory_space<vmem>>, vector<1x128x384xf32>
    %257 = vector.shape_cast %256 : vector<1x128x384xf32> to vector<128x384xf32>
    %258 = arith.truncf %255 : vector<72x128xf32> to vector<72x128xbf16>
    %259 = arith.truncf %257 : vector<128x384xf32> to vector<128x384xbf16>
    %cst_120 = arith.constant dense<0.000000e+00> : vector<72x384xf32>
    %260 = tpu.matmul %258, %259, %cst_120 {dimension_numbers = #tpu.dot_dimension_numbers<[1], [0], [0], [1], [0, 0, 1, 1], [], []>} : vector<72x128xbf16>, vector<128x384xbf16>, vector<72x384xf32> -> vector<72x384xf32>
    %261 = vector.shape_cast %260 : vector<72x384xf32> to vector<3x24x384xf32>
    %262 = vector.extract_strided_slice %261 {offsets = [0, 0, 0], sizes = [3, 24, 64], strides = [1, 1, 1]} : vector<3x24x384xf32> to vector<3x24x64xf32>
    %263 = vector.extract_strided_slice %261 {offsets = [0, 0, 128], sizes = [3, 24, 64], strides = [1, 1, 1]} : vector<3x24x384xf32> to vector<3x24x64xf32>
    %264 = vector.extract_strided_slice %261 {offsets = [0, 0, 256], sizes = [3, 24, 64], strides = [1, 1, 1]} : vector<3x24x384xf32> to vector<3x24x64xf32>
    %265 = arith.truncf %262 : vector<3x24x64xf32> to vector<3x24x64xbf16>
    %266 = arith.truncf %263 : vector<3x24x64xf32> to vector<3x24x64xbf16>
    "tpu.trace_start"() <{level = 10 : i32, message = "bqd,bkd->bqk"}> : () -> ()
    %cst_121 = arith.constant dense<0.000000e+00> : vector<3x24x24xf32>
    %267 = tpu.matmul %265, %266, %cst_121 {dimension_numbers = #tpu.dot_dimension_numbers<[2], [2], [1], [1], [0, 0, 0, 1, 1, 1], [0], [0]>} : vector<3x24x64xbf16>, vector<3x24x64xbf16>, vector<3x24x24xf32> -> vector<3x24x24xf32>
    "tpu.trace_stop"() : () -> ()
    %cst_122 = arith.constant 1.250000e-01 : f32
    %268 = vector.broadcast %cst_122 : f32 to vector<3x24x24xf32>
    %269 = arith.mulf %267, %268 : vector<3x24x24xf32>
    %cst_123 = arith.constant -1.000000e+30 : f32
    %270 = vector.shape_cast %75 : vector<1x1x24xi1> to vector<1x1x24xi1>
    %271 = vector.broadcast %270 : vector<1x1x24xi1> to vector<3x24x24xi1>
    %272 = vector.broadcast %cst_123 : f32 to vector<3x24x24xf32>
    %273 = arith.select %271, %269, %272 : vector<3x24x24xi1>, vector<3x24x24xf32>
    %cst_124 = arith.constant dense<0xFF800000> : vector<3x24xf32>
    %274 = vector.multi_reduction <maximumf>, %273, %cst_124 [2] : vector<3x24x24xf32> to vector<3x24xf32>
    %cst_125 = arith.constant 0xFF800000 : f32
    %275 = vector.broadcast %cst_125 : f32 to vector<3x24xf32>
    %276 = arith.maximumf %275, %274 : vector<3x24xf32>
    %277 = vector.shape_cast %276 : vector<3x24xf32> to vector<3x24x1xf32>
    %278 = vector.broadcast %277 : vector<3x24x1xf32> to vector<3x24x24xf32>
    %279 = arith.subf %273, %278 : vector<3x24x24xf32>
    %280 = math.exp %279 : vector<3x24x24xf32>
    %cst_126 = arith.constant dense<0.000000e+00> : vector<3x24xf32>
    %281 = vector.multi_reduction <add>, %280, %cst_126 [2] : vector<3x24x24xf32> to vector<3x24xf32>
    %282 = vector.shape_cast %281 : vector<3x24xf32> to vector<3x24x1xf32>
    %283 = vector.broadcast %282 : vector<3x24x1xf32> to vector<3x24x24xf32>
    %284 = arith.divf %280, %283 : vector<3x24x24xf32>
    %285 = arith.truncf %284 : vector<3x24x24xf32> to vector<3x24x24xbf16>
    %286 = arith.truncf %264 : vector<3x24x64xf32> to vector<3x24x64xbf16>
    "tpu.trace_start"() <{level = 10 : i32, message = "bqk,bkd->bqd"}> : () -> ()
    %cst_127 = arith.constant dense<0.000000e+00> : vector<3x24x64xf32>
    %287 = tpu.matmul %285, %286, %cst_127 {dimension_numbers = #tpu.dot_dimension_numbers<[2], [1], [1], [2], [0, 0, 0, 1, 1, 2], [0], [0]>} : vector<3x24x24xbf16>, vector<3x24x64xbf16>, vector<3x24x64xf32> -> vector<3x24x64xf32>
    "tpu.trace_stop"() : () -> ()
    %288 = vector.extract_strided_slice %261 {offsets = [0, 0, 64], sizes = [3, 24, 64], strides = [1, 1, 1]} : vector<3x24x384xf32> to vector<3x24x64xf32>
    %289 = vector.extract_strided_slice %261 {offsets = [0, 0, 192], sizes = [3, 24, 64], strides = [1, 1, 1]} : vector<3x24x384xf32> to vector<3x24x64xf32>
    %290 = vector.extract_strided_slice %261 {offsets = [0, 0, 320], sizes = [3, 24, 64], strides = [1, 1, 1]} : vector<3x24x384xf32> to vector<3x24x64xf32>
    %291 = arith.truncf %288 : vector<3x24x64xf32> to vector<3x24x64xbf16>
    %292 = arith.truncf %289 : vector<3x24x64xf32> to vector<3x24x64xbf16>
    "tpu.trace_start"() <{level = 10 : i32, message = "bqd,bkd->bqk"}> : () -> ()
    %cst_128 = arith.constant dense<0.000000e+00> : vector<3x24x24xf32>
    %293 = tpu.matmul %291, %292, %cst_128 {dimension_numbers = #tpu.dot_dimension_numbers<[2], [2], [1], [1], [0, 0, 0, 1, 1, 1], [0], [0]>} : vector<3x24x64xbf16>, vector<3x24x64xbf16>, vector<3x24x24xf32> -> vector<3x24x24xf32>
    "tpu.trace_stop"() : () -> ()
    %cst_129 = arith.constant 1.250000e-01 : f32
    %294 = vector.broadcast %cst_129 : f32 to vector<3x24x24xf32>
    %295 = arith.mulf %293, %294 : vector<3x24x24xf32>
    %cst_130 = arith.constant -1.000000e+30 : f32
    %296 = vector.shape_cast %75 : vector<1x1x24xi1> to vector<1x1x24xi1>
    %297 = vector.broadcast %296 : vector<1x1x24xi1> to vector<3x24x24xi1>
    %298 = vector.broadcast %cst_130 : f32 to vector<3x24x24xf32>
    %299 = arith.select %297, %295, %298 : vector<3x24x24xi1>, vector<3x24x24xf32>
    %cst_131 = arith.constant dense<0xFF800000> : vector<3x24xf32>
    %300 = vector.multi_reduction <maximumf>, %299, %cst_131 [2] : vector<3x24x24xf32> to vector<3x24xf32>
    %cst_132 = arith.constant 0xFF800000 : f32
    %301 = vector.broadcast %cst_132 : f32 to vector<3x24xf32>
    %302 = arith.maximumf %301, %300 : vector<3x24xf32>
    %303 = vector.shape_cast %302 : vector<3x24xf32> to vector<3x24x1xf32>
    %304 = vector.broadcast %303 : vector<3x24x1xf32> to vector<3x24x24xf32>
    %305 = arith.subf %299, %304 : vector<3x24x24xf32>
    %306 = math.exp %305 : vector<3x24x24xf32>
    %cst_133 = arith.constant dense<0.000000e+00> : vector<3x24xf32>
    %307 = vector.multi_reduction <add>, %306, %cst_133 [2] : vector<3x24x24xf32> to vector<3x24xf32>
    %308 = vector.shape_cast %307 : vector<3x24xf32> to vector<3x24x1xf32>
    %309 = vector.broadcast %308 : vector<3x24x1xf32> to vector<3x24x24xf32>
    %310 = arith.divf %306, %309 : vector<3x24x24xf32>
    %311 = arith.truncf %310 : vector<3x24x24xf32> to vector<3x24x24xbf16>
    %312 = arith.truncf %290 : vector<3x24x64xf32> to vector<3x24x64xbf16>
    "tpu.trace_start"() <{level = 10 : i32, message = "bqk,bkd->bqd"}> : () -> ()
    %cst_134 = arith.constant dense<0.000000e+00> : vector<3x24x64xf32>
    %313 = tpu.matmul %311, %312, %cst_134 {dimension_numbers = #tpu.dot_dimension_numbers<[2], [1], [1], [2], [0, 0, 0, 1, 1, 2], [0], [0]>} : vector<3x24x24xbf16>, vector<3x24x64xbf16>, vector<3x24x64xf32> -> vector<3x24x64xf32>
    "tpu.trace_stop"() : () -> ()
    %314 = tpu.concatenate %287, %313 in 2 : vector<3x24x64xf32>, vector<3x24x64xf32> -> vector<3x24x128xf32>
    %315 = vector.shape_cast %314 : vector<3x24x128xf32> to vector<72x128xf32>
    %c1_135 = arith.constant 1 : index
    %c0_136 = arith.constant 0 : index
    %c0_137 = arith.constant 0 : index
    %316 = vector.load %arg13[%c1_135, %c0_136, %c0_137] : memref<2x128x128xf32, #tpu.memory_space<vmem>>, vector<1x128x128xf32>
    %317 = vector.shape_cast %316 : vector<1x128x128xf32> to vector<128x128xf32>
    %318 = arith.truncf %315 : vector<72x128xf32> to vector<72x128xbf16>
    %319 = arith.truncf %317 : vector<128x128xf32> to vector<128x128xbf16>
    %cst_138 = arith.constant dense<0.000000e+00> : vector<72x128xf32>
    %320 = tpu.matmul %318, %319, %cst_138 {dimension_numbers = #tpu.dot_dimension_numbers<[1], [0], [0], [1], [0, 0, 1, 1], [], []>} : vector<72x128xbf16>, vector<128x128xbf16>, vector<72x128xf32> -> vector<72x128xf32>
    %321 = arith.addf %229, %320 : vector<72x128xf32>
    %c1_139 = arith.constant 1 : index
    %c0_140 = arith.constant 0 : index
    %c0_141 = arith.constant 0 : index
    %322 = vector.load %arg14[%c1_139, %c0_140, %c0_141] : memref<2x1x128xf32, #tpu.memory_space<vmem>>, vector<1x1x128xf32>
    %323 = vector.shape_cast %322 : vector<1x1x128xf32> to vector<1x128xf32>
    %324 = vector.broadcast %323 : vector<1x128xf32> to vector<72x128xf32>
    %325 = arith.addf %321, %324 : vector<72x128xf32>
    %c1_142 = arith.constant 1 : index
    %c0_143 = arith.constant 0 : index
    %c0_144 = arith.constant 0 : index
    %326 = vector.load %arg15[%c1_142, %c0_143, %c0_144] : memref<2x1x128xf32, #tpu.memory_space<vmem>>, vector<1x1x128xf32>
    %327 = vector.shape_cast %326 : vector<1x1x128xf32> to vector<1x128xf32>
    %c1_145 = arith.constant 1 : index
    %c0_146 = arith.constant 0 : index
    %c0_147 = arith.constant 0 : index
    %328 = vector.load %arg16[%c1_145, %c0_146, %c0_147] : memref<2x1x128xf32, #tpu.memory_space<vmem>>, vector<1x1x128xf32>
    %329 = vector.shape_cast %328 : vector<1x1x128xf32> to vector<1x128xf32>
    %cst_148 = arith.constant dense<0.000000e+00> : vector<72xf32>
    %330 = vector.multi_reduction <add>, %325, %cst_148 [1] : vector<72x128xf32> to vector<72xf32>
    %331 = vector.shape_cast %330 : vector<72xf32> to vector<72x1xf32>
    %cst_149 = arith.constant 1.280000e+02 : f32
    %332 = vector.broadcast %cst_149 : f32 to vector<72x1xf32>
    %333 = arith.divf %331, %332 : vector<72x1xf32>
    %334 = vector.broadcast %333 : vector<72x1xf32> to vector<72x128xf32>
    %335 = arith.subf %325, %334 : vector<72x128xf32>
    %336 = arith.mulf %335, %335 : vector<72x128xf32>
    %cst_150 = arith.constant dense<0.000000e+00> : vector<72xf32>
    %337 = vector.multi_reduction <add>, %336, %cst_150 [1] : vector<72x128xf32> to vector<72xf32>
    %338 = vector.shape_cast %337 : vector<72xf32> to vector<72x1xf32>
    %cst_151 = arith.constant 1.280000e+02 : f32
    %339 = vector.broadcast %cst_151 : f32 to vector<72x1xf32>
    %340 = arith.divf %338, %339 : vector<72x1xf32>
    %341 = vector.broadcast %333 : vector<72x1xf32> to vector<72x128xf32>
    %342 = arith.subf %325, %341 : vector<72x128xf32>
    %cst_152 = arith.constant 9.99999974E-6 : f32
    %343 = vector.broadcast %cst_152 : f32 to vector<72x1xf32>
    %344 = arith.addf %340, %343 : vector<72x1xf32>
    %345 = math.rsqrt %344 : vector<72x1xf32>
    %346 = vector.broadcast %345 : vector<72x1xf32> to vector<72x128xf32>
    %347 = arith.mulf %342, %346 : vector<72x128xf32>
    %348 = vector.broadcast %327 : vector<1x128xf32> to vector<72x128xf32>
    %349 = arith.mulf %347, %348 : vector<72x128xf32>
    %350 = vector.broadcast %329 : vector<1x128xf32> to vector<72x128xf32>
    %351 = arith.addf %349, %350 : vector<72x128xf32>
    %c1_153 = arith.constant 1 : index
    %c0_154 = arith.constant 0 : index
    %c0_155 = arith.constant 0 : index
    %352 = vector.load %arg17[%c1_153, %c0_154, %c0_155] : memref<2x128x256xf32, #tpu.memory_space<vmem>>, vector<1x128x256xf32>
    %353 = vector.shape_cast %352 : vector<1x128x256xf32> to vector<128x256xf32>
    %354 = arith.truncf %351 : vector<72x128xf32> to vector<72x128xbf16>
    %355 = arith.truncf %353 : vector<128x256xf32> to vector<128x256xbf16>
    %cst_156 = arith.constant dense<0.000000e+00> : vector<72x256xf32>
    %356 = tpu.matmul %354, %355, %cst_156 {dimension_numbers = #tpu.dot_dimension_numbers<[1], [0], [0], [1], [0, 0, 1, 1], [], []>} : vector<72x128xbf16>, vector<128x256xbf16>, vector<72x256xf32> -> vector<72x256xf32>
    %c1_157 = arith.constant 1 : index
    %c0_158 = arith.constant 0 : index
    %c0_159 = arith.constant 0 : index
    %357 = vector.load %arg18[%c1_157, %c0_158, %c0_159] : memref<2x1x256xf32, #tpu.memory_space<vmem>>, vector<1x1x256xf32>
    %358 = vector.shape_cast %357 : vector<1x1x256xf32> to vector<1x256xf32>
    %359 = vector.broadcast %358 : vector<1x256xf32> to vector<72x256xf32>
    %360 = arith.addf %356, %359 : vector<72x256xf32>
    %cst_160 = arith.constant 5.000000e-01 : f32
    %361 = vector.broadcast %cst_160 : f32 to vector<72x256xf32>
    %362 = arith.mulf %361, %360 : vector<72x256xf32>
    %cst_161 = arith.constant 4.471500e-02 : f32
    %363 = vector.broadcast %cst_161 : f32 to vector<72x256xf32>
    %364 = arith.mulf %363, %360 : vector<72x256xf32>
    %365 = arith.mulf %364, %360 : vector<72x256xf32>
    %366 = arith.mulf %365, %360 : vector<72x256xf32>
    %367 = arith.addf %360, %366 : vector<72x256xf32>
    %cst_162 = arith.constant 0.797884583 : f32
    %368 = vector.broadcast %cst_162 : f32 to vector<72x256xf32>
    %369 = arith.mulf %368, %367 : vector<72x256xf32>
    %370 = math.tanh %369 : vector<72x256xf32>
    %cst_163 = arith.constant 1.000000e+00 : f32
    %371 = vector.broadcast %cst_163 : f32 to vector<72x256xf32>
    %372 = arith.addf %371, %370 : vector<72x256xf32>
    %373 = arith.mulf %362, %372 : vector<72x256xf32>
    %c1_164 = arith.constant 1 : index
    %c0_165 = arith.constant 0 : index
    %c0_166 = arith.constant 0 : index
    %374 = vector.load %arg19[%c1_164, %c0_165, %c0_166] : memref<2x256x128xf32, #tpu.memory_space<vmem>>, vector<1x256x128xf32>
    %375 = vector.shape_cast %374 : vector<1x256x128xf32> to vector<256x128xf32>
    %376 = arith.truncf %373 : vector<72x256xf32> to vector<72x256xbf16>
    %377 = arith.truncf %375 : vector<256x128xf32> to vector<256x128xbf16>
    %cst_167 = arith.constant dense<0.000000e+00> : vector<72x128xf32>
    %378 = tpu.matmul %376, %377, %cst_167 {dimension_numbers = #tpu.dot_dimension_numbers<[1], [0], [0], [1], [0, 0, 1, 1], [], []>} : vector<72x256xbf16>, vector<256x128xbf16>, vector<72x128xf32> -> vector<72x128xf32>
    %379 = arith.addf %325, %378 : vector<72x128xf32>
    %c1_168 = arith.constant 1 : index
    %c0_169 = arith.constant 0 : index
    %c0_170 = arith.constant 0 : index
    %380 = vector.load %arg20[%c1_168, %c0_169, %c0_170] : memref<2x1x128xf32, #tpu.memory_space<vmem>>, vector<1x1x128xf32>
    %381 = vector.shape_cast %380 : vector<1x1x128xf32> to vector<1x128xf32>
    %382 = vector.broadcast %381 : vector<1x128xf32> to vector<72x128xf32>
    %383 = arith.addf %379, %382 : vector<72x128xf32>
    %384 = vector.shape_cast %383 : vector<72x128xf32> to vector<3x24x128xf32>
    %385 = vector.extract_strided_slice %384 {offsets = [0, 0, 0], sizes = [3, 1, 128], strides = [1, 1, 1]} : vector<3x24x128xf32> to vector<3x1x128xf32>
    %c0_171 = arith.constant 0 : index
    %c0_172 = arith.constant 0 : index
    %386 = vector.load %arg21[%c0_171, %c0_172] : memref<1x128xf32, #tpu.memory_space<vmem>>, vector<1x128xf32>
    %c0_173 = arith.constant 0 : index
    %c0_174 = arith.constant 0 : index
    %387 = vector.load %arg22[%c0_173, %c0_174] : memref<1x128xf32, #tpu.memory_space<vmem>>, vector<1x128xf32>
    %cst_175 = arith.constant dense<0.000000e+00> : vector<3x1xf32>
    %388 = vector.multi_reduction <add>, %385, %cst_175 [2] : vector<3x1x128xf32> to vector<3x1xf32>
    %389 = vector.shape_cast %388 : vector<3x1xf32> to vector<3x1x1xf32>
    %cst_176 = arith.constant 1.280000e+02 : f32
    %390 = vector.broadcast %cst_176 : f32 to vector<3x1x1xf32>
    %391 = arith.divf %389, %390 : vector<3x1x1xf32>
    %392 = vector.broadcast %391 : vector<3x1x1xf32> to vector<3x1x128xf32>
    %393 = arith.subf %385, %392 : vector<3x1x128xf32>
    %394 = arith.mulf %393, %393 : vector<3x1x128xf32>
    %cst_177 = arith.constant dense<0.000000e+00> : vector<3x1xf32>
    %395 = vector.multi_reduction <add>, %394, %cst_177 [2] : vector<3x1x128xf32> to vector<3x1xf32>
    %396 = vector.shape_cast %395 : vector<3x1xf32> to vector<3x1x1xf32>
    %cst_178 = arith.constant 1.280000e+02 : f32
    %397 = vector.broadcast %cst_178 : f32 to vector<3x1x1xf32>
    %398 = arith.divf %396, %397 : vector<3x1x1xf32>
    %399 = vector.broadcast %391 : vector<3x1x1xf32> to vector<3x1x128xf32>
    %400 = arith.subf %385, %399 : vector<3x1x128xf32>
    %cst_179 = arith.constant 9.99999974E-6 : f32
    %401 = vector.broadcast %cst_179 : f32 to vector<3x1x1xf32>
    %402 = arith.addf %398, %401 : vector<3x1x1xf32>
    %403 = math.rsqrt %402 : vector<3x1x1xf32>
    %404 = vector.broadcast %403 : vector<3x1x1xf32> to vector<3x1x128xf32>
    %405 = arith.mulf %400, %404 : vector<3x1x128xf32>
    %406 = vector.shape_cast %386 : vector<1x128xf32> to vector<1x1x128xf32>
    %407 = vector.broadcast %406 : vector<1x1x128xf32> to vector<3x1x128xf32>
    %408 = arith.mulf %405, %407 : vector<3x1x128xf32>
    %409 = vector.shape_cast %387 : vector<1x128xf32> to vector<1x1x128xf32>
    %410 = vector.broadcast %409 : vector<1x1x128xf32> to vector<3x1x128xf32>
    %411 = arith.addf %408, %410 : vector<3x1x128xf32>
    %cst_180 = arith.constant dense<0.000000e+00> : vector<1x128xf32>
    %412 = vector.multi_reduction <add>, %411, %cst_180 [0] : vector<3x1x128xf32> to vector<1x128xf32>
    %cst_181 = arith.constant 3.000000e+00 : f32
    %413 = vector.broadcast %cst_181 : f32 to vector<1x128xf32>
    %414 = arith.divf %412, %413 : vector<1x128xf32>
    %c0_182 = arith.constant 0 : index
    %c0_183 = arith.constant 0 : index
    %415 = vector.load %arg23[%c0_182, %c0_183] : memref<128x1024xf32, #tpu.memory_space<vmem>>, vector<128x1024xf32>
    %416 = arith.truncf %414 : vector<1x128xf32> to vector<1x128xbf16>
    %417 = arith.truncf %415 : vector<128x1024xf32> to vector<128x1024xbf16>
    %cst_184 = arith.constant dense<0.000000e+00> : vector<1x1024xf32>
    %418 = tpu.matmul %416, %417, %cst_184 {dimension_numbers = #tpu.dot_dimension_numbers<[1], [0], [0], [1], [0, 0, 1, 1], [], []>} : vector<1x128xbf16>, vector<128x1024xbf16>, vector<1x1024xf32> -> vector<1x1024xf32>
    %c0_185 = arith.constant 0 : index
    %c0_186 = arith.constant 0 : index
    %419 = vector.load %arg24[%c0_185, %c0_186] : memref<1x1024xf32, #tpu.memory_space<vmem>>, vector<1x1024xf32>
    %420 = arith.addf %418, %419 : vector<1x1024xf32>
    %c0_187 = arith.constant 0 : index
    %c0_188 = arith.constant 0 : index
    %c0_189 = arith.constant 0 : index
    %421 = vector.load %arg25[%c0_187, %c0_188, %c0_189] : memref<1x1x1024xf32, #tpu.memory_space<vmem>>, vector<1x1x1024xf32>
    %422 = vector.shape_cast %421 : vector<1x1x1024xf32> to vector<1x1024xf32>
    %423 = vector.shape_cast %420 : vector<1x1024xf32> to vector<1x1x1024xf32>
    tpu.vector_store %arg25[%c0_187, %c0_188, %c0_189], %423 {strides = array<i32>} : memref<1x1x1024xf32, #tpu.memory_space<vmem>>, vector<1x1x1024xf32>,
    return
  }
  func.func @transform_0(%arg0: i32) -> (i32, i32, i32) {
    %c0_i32 = arith.constant 0 : i32
    %c0_i32_0 = arith.constant 0 : i32
    %c0_i32_1 = arith.constant 0 : i32
    return %arg0, %c0_i32, %c0_i32_0 : i32, i32, i32
  }
  func.func @transform_1(%arg0: i32) -> (i32, i32) {
    %c0_i32 = arith.constant 0 : i32
    %c0_i32_0 = arith.constant 0 : i32
    %c0_i32_1 = arith.constant 0 : i32
    return %c0_i32, %c0_i32_0 : i32, i32
  }
  func.func @transform_2(%arg0: i32) -> (i32, i32) {
    %c0_i32 = arith.constant 0 : i32
    %c0_i32_0 = arith.constant 0 : i32
    %c0_i32_1 = arith.constant 0 : i32
    return %c0_i32, %c0_i32_0 : i32, i32
  }
  func.func @transform_3(%arg0: i32) -> (i32, i32) {
    %c0_i32 = arith.constant 0 : i32
    %c0_i32_0 = arith.constant 0 : i32
    %c0_i32_1 = arith.constant 0 : i32
    return %c0_i32, %c0_i32_0 : i32, i32
  }
  func.func @transform_4(%arg0: i32) -> (i32, i32) {
    %c0_i32 = arith.constant 0 : i32
    %c0_i32_0 = arith.constant 0 : i32
    %c0_i32_1 = arith.constant 0 : i32
    return %c0_i32, %c0_i32_0 : i32, i32
  }
  func.func @transform_5(%arg0: i32) -> (i32, i32) {
    %c0_i32 = arith.constant 0 : i32
    %c0_i32_0 = arith.constant 0 : i32
    %c0_i32_1 = arith.constant 0 : i32
    return %c0_i32, %c0_i32_0 : i32, i32
  }
  func.func @transform_6(%arg0: i32) -> (i32, i32) {
    %c0_i32 = arith.constant 0 : i32
    %c0_i32_0 = arith.constant 0 : i32
    %c0_i32_1 = arith.constant 0 : i32
    return %c0_i32, %c0_i32_0 : i32, i32
  }
  func.func @transform_7(%arg0: i32) -> (i32, i32) {
    %c0_i32 = arith.constant 0 : i32
    %c0_i32_0 = arith.constant 0 : i32
    %c0_i32_1 = arith.constant 0 : i32
    return %c0_i32, %c0_i32_0 : i32, i32
  }
  func.func @transform_8(%arg0: i32) -> (i32, i32) {
    %c0_i32 = arith.constant 0 : i32
    %c0_i32_0 = arith.constant 0 : i32
    %c0_i32_1 = arith.constant 0 : i32
    return %c0_i32, %c0_i32_0 : i32, i32
  }
  func.func @transform_9(%arg0: i32) -> (i32, i32, i32) {
    %c0_i32 = arith.constant 0 : i32
    %c0_i32_0 = arith.constant 0 : i32
    %c0_i32_1 = arith.constant 0 : i32
    %c0_i32_2 = arith.constant 0 : i32
    return %c0_i32, %c0_i32_0, %c0_i32_1 : i32, i32, i32
  }
  func.func @transform_10(%arg0: i32) -> (i32, i32, i32) {
    %c0_i32 = arith.constant 0 : i32
    %c0_i32_0 = arith.constant 0 : i32
    %c0_i32_1 = arith.constant 0 : i32
    %c0_i32_2 = arith.constant 0 : i32
    return %c0_i32, %c0_i32_0, %c0_i32_1 : i32, i32, i32
  }
  func.func @transform_11(%arg0: i32) -> (i32, i32, i32) {
    %c0_i32 = arith.constant 0 : i32
    %c0_i32_0 = arith.constant 0 : i32
    %c0_i32_1 = arith.constant 0 : i32
    %c0_i32_2 = arith.constant 0 : i32
    return %c0_i32, %c0_i32_0, %c0_i32_1 : i32, i32, i32
  }
  func.func @transform_12(%arg0: i32) -> (i32, i32, i32) {
    %c0_i32 = arith.constant 0 : i32
    %c0_i32_0 = arith.constant 0 : i32
    %c0_i32_1 = arith.constant 0 : i32
    %c0_i32_2 = arith.constant 0 : i32
    return %c0_i32, %c0_i32_0, %c0_i32_1 : i32, i32, i32
  }
  func.func @transform_13(%arg0: i32) -> (i32, i32, i32) {
    %c0_i32 = arith.constant 0 : i32
    %c0_i32_0 = arith.constant 0 : i32
    %c0_i32_1 = arith.constant 0 : i32
    %c0_i32_2 = arith.constant 0 : i32
    return %c0_i32, %c0_i32_0, %c0_i32_1 : i32, i32, i32
  }
  func.func @transform_14(%arg0: i32) -> (i32, i32, i32) {
    %c0_i32 = arith.constant 0 : i32
    %c0_i32_0 = arith.constant 0 : i32
    %c0_i32_1 = arith.constant 0 : i32
    %c0_i32_2 = arith.constant 0 : i32
    return %c0_i32, %c0_i32_0, %c0_i32_1 : i32, i32, i32
  }
  func.func @transform_15(%arg0: i32) -> (i32, i32, i32) {
    %c0_i32 = arith.constant 0 : i32
    %c0_i32_0 = arith.constant 0 : i32
    %c0_i32_1 = arith.constant 0 : i32
    %c0_i32_2 = arith.constant 0 : i32
    return %c0_i32, %c0_i32_0, %c0_i32_1 : i32, i32, i32
  }
  func.func @transform_16(%arg0: i32) -> (i32, i32, i32) {
    %c0_i32 = arith.constant 0 : i32
    %c0_i32_0 = arith.constant 0 : i32
    %c0_i32_1 = arith.constant 0 : i32
    %c0_i32_2 = arith.constant 0 : i32
    return %c0_i32, %c0_i32_0, %c0_i32_1 : i32, i32, i32
  }
  func.func @transform_17(%arg0: i32) -> (i32, i32, i32) {
    %c0_i32 = arith.constant 0 : i32
    %c0_i32_0 = arith.constant 0 : i32
    %c0_i32_1 = arith.constant 0 : i32
    %c0_i32_2 = arith.constant 0 : i32
    return %c0_i32, %c0_i32_0, %c0_i32_1 : i32, i32, i32
  }
  func.func @transform_18(%arg0: i32) -> (i32, i32, i32) {
    %c0_i32 = arith.constant 0 : i32
    %c0_i32_0 = arith.constant 0 : i32
    %c0_i32_1 = arith.constant 0 : i32
    %c0_i32_2 = arith.constant 0 : i32
    return %c0_i32, %c0_i32_0, %c0_i32_1 : i32, i32, i32
  }
  func.func @transform_19(%arg0: i32) -> (i32, i32, i32) {
    %c0_i32 = arith.constant 0 : i32
    %c0_i32_0 = arith.constant 0 : i32
    %c0_i32_1 = arith.constant 0 : i32
    %c0_i32_2 = arith.constant 0 : i32
    return %c0_i32, %c0_i32_0, %c0_i32_1 : i32, i32, i32
  }
  func.func @transform_20(%arg0: i32) -> (i32, i32) {
    %c0_i32 = arith.constant 0 : i32
    %c0_i32_0 = arith.constant 0 : i32
    %c0_i32_1 = arith.constant 0 : i32
    return %c0_i32, %c0_i32_0 : i32, i32
  }
  func.func @transform_21(%arg0: i32) -> (i32, i32) {
    %c0_i32 = arith.constant 0 : i32
    %c0_i32_0 = arith.constant 0 : i32
    %c0_i32_1 = arith.constant 0 : i32
    return %c0_i32, %c0_i32_0 : i32, i32
  }
  func.func @transform_22(%arg0: i32) -> (i32, i32) {
    %c0_i32 = arith.constant 0 : i32
    %c0_i32_0 = arith.constant 0 : i32
    %c0_i32_1 = arith.constant 0 : i32
    return %c0_i32, %c0_i32_0 : i32, i32
  }
  func.func @transform_23(%arg0: i32) -> (i32, i32) {
    %c0_i32 = arith.constant 0 : i32
    %c0_i32_0 = arith.constant 0 : i32
    %c0_i32_1 = arith.constant 0 : i32
    return %c0_i32, %c0_i32_0 : i32, i32
  }
  func.func @transform_24(%arg0: i32) -> (i32, i32, i32) {
    %c0_i32 = arith.constant 0 : i32
    %c0_i32_0 = arith.constant 0 : i32
    %c0_i32_1 = arith.constant 0 : i32
    return %arg0, %c0_i32, %c0_i32_0 : i32, i32, i32
  }
}

</mosaic_0001>

<llo_original>
// kernel: temporal_scan_predictor.1
$region0: #{temporal_scan_predictor.1}
  #allocation0 [shape = 'u32[]', space=smem, size = 0x4, offset = 0x4, fixed_abs, tag = 'smem constant byte address 0x4 - core index']
  #allocation1 [shape = 'u32[72,128]{1,0:T(1,128)}', space=vmem, size = 0x9000, scoped, tag = 'internal scratch']
  #allocation2 [shape = 'f32[3,24,128]{2,1,0:T(8,128)}', space=vmem, size = 0x9000, scoped, tag = 'scratch operand']
  %s0 = inlined_call_operand.vmem [shape: f32[2,48,64], index: 0, kind: input, shape index: {}]
  %s1 = inlined_call_operand.vmem [shape: f32[1,64], index: 1, kind: input, shape index: {}]
  %s2 = inlined_call_operand.vmem [shape: f32[1,64], index: 2, kind: input, shape index: {}]
  %s3 = inlined_call_operand.vmem [shape: f32[64,128], index: 3, kind: input, shape index: {}]
  %s4 = inlined_call_operand.vmem [shape: f32[1,128], index: 4, kind: input, shape index: {}]
  %s5 = inlined_call_operand.vmem [shape: f32[1,128], index: 5, kind: input, shape index: {}]
  %s6 = inlined_call_operand.vmem [shape: f32[1,128], index: 6, kind: input, shape index: {}]
  %s7 = inlined_call_operand.vmem [shape: f32[1,128], index: 7, kind: input, shape index: {}]
  %s8 = inlined_call_operand.vmem [shape: f32[17,128], index: 8, kind: input, shape index: {}]
  %s9 = inlined_call_operand.vmem [shape: f32[2,1,128], index: 9, kind: input, shape index: {}]
  %s10 = inlined_call_operand.vmem [shape: f32[2,1,128], index: 10, kind: input, shape index: {}]
  %s11 = inlined_call_operand.vmem [shape: f32[2,128,384], index: 11, kind: input, shape index: {}]
  %s12 = inlined_call_operand.vmem [shape: f32[2,128,128], index: 12, kind: input, shape index: {}]
  %s13 = inlined_call_operand.vmem [shape: f32[2,1,128], index: 13, kind: input, shape index: {}]
  %s14 = inlined_call_operand.vmem [shape: f32[2,1,128], index: 14, kind: input, shape index: {}]
  %s15 = inlined_call_operand.vmem [shape: f32[2,1,128], index: 15, kind: input, shape index: {}]
  %s16 = inlined_call_operand.vmem [shape: f32[2,128,256], index: 16, kind: input, shape index: {}]
  %s17 = inlined_call_operand.vmem [shape: f32[2,1,256], index: 17, kind: input, shape index: {}]
  %s18 = inlined_call_operand.vmem [shape: f32[2,256,128], index: 18, kind: input, shape index: {}]
  %s19 = inlined_call_operand.vmem [shape: f32[2,1,128], index: 19, kind: input, shape index: {}]
  %s20 = inlined_call_operand.vmem [shape: f32[1,128], index: 20, kind: input, shape index: {}]
  %s21 = inlined_call_operand.vmem [shape: f32[1,128], index: 21, kind: input, shape index: {}]
  %s22 = inlined_call_operand.vmem [shape: f32[128,1024], index: 22, kind: input, shape index: {}]
  %s23 = inlined_call_operand.vmem [shape: f32[1,1024], index: 23, kind: input, shape index: {}]
  %s24 = inlined_call_operand.vmem [shape: f32[2,1,1024], index: 24, kind: output, shape index: {}]
  %s25 = sld [smem:[#allocation0]]
  $region129: #{temporal_scan_predictor.1} parent=0
    _
  %s27 = ssub.s32 1, %s25
  %s28 = scalar_select 0, %s27, %s25
  loop: start=0, step=1, limit=4
  $region2: #{temporal_scan_predictor.1} parent=0 // loop_pre_header
    _
  $region3: #{temporal_scan_predictor.1} parent=0 // loop_header
    %s30 = sphi 0, %s34
    %p31 = scmp.ge.s32.totalorder %s30, 4
    %s40 = sphi 0, %s42
    %s43 = sphi 0, %s40
    %s44 = sphi 0, %s43
    %s60 = sphi 0, %s44
    %s64 = sphi 0, %s64
    %s66 = sphi 0, %s64
    %s67 = sphi 0, %s66
    %s81 = sphi 0, %s67
    %s85 = sphi 0, %s85
    %s87 = sphi 0, %s85
    %s88 = sphi 0, %s87
    %s102 = sphi 0, %s88
    %s106 = sphi 0, %s106
    %s108 = sphi 0, %s106
    %s109 = sphi 0, %s108
    %s123 = sphi 0, %s109
    %s127 = sphi 0, %s127
    %s129 = sphi 0, %s127
    %s130 = sphi 0, %s129
    %s144 = sphi 0, %s130
    %s148 = sphi 0, %s148
    %s150 = sphi 0, %s148
    %s151 = sphi 0, %s150
    %s165 = sphi 0, %s151
    %s169 = sphi 0, %s169
    %s171 = sphi 0, %s169
    %s172 = sphi 0, %s171
    %s186 = sphi 0, %s172
    %s190 = sphi 0, %s190
    %s192 = sphi 0, %s190
    %s193 = sphi 0, %s192
    %s207 = sphi 0, %s193
    %s211 = sphi 0, %s211
    %s213 = sphi 0, %s211
    %s214 = sphi 0, %s213
    %s228 = sphi 0, %s214
    %s232 = sphi 0, %s232
    %s234 = sphi 0, %s232
    %s235 = sphi 0, %s234
    %s249 = sphi 0, %s235
    %s253 = sphi 0, %s253
    %s255 = sphi 0, %s253
    %s256 = sphi 0, %s255
    %s270 = sphi 0, %s256
    %s274 = sphi 0, %s274
    %s276 = sphi 0, %s274
    %s277 = sphi 0, %s276
    %s291 = sphi 0, %s277
    %s295 = sphi 0, %s295
    %s297 = sphi 0, %s295
    %s298 = sphi 0, %s297
    %s312 = sphi 0, %s298
    %s316 = sphi 0, %s316
    %s318 = sphi 0, %s316
    %s319 = sphi 0, %s318
    %s333 = sphi 0, %s319
    %s337 = sphi 0, %s337
    %s339 = sphi 0, %s337
    %s340 = sphi 0, %s339
    %s354 = sphi 0, %s340
    %s358 = sphi 0, %s358
    %s360 = sphi 0, %s358
    %s361 = sphi 0, %s360
    %s375 = sphi 0, %s361
    %s379 = sphi 0, %s379
    %s381 = sphi 0, %s379
    %s382 = sphi 0, %s381
    %s396 = sphi 0, %s382
    %s400 = sphi 0, %s400
    %s402 = sphi 0, %s400
    %s403 = sphi 0, %s402
    %s417 = sphi 0, %s403
    %s421 = sphi 0, %s421
    %s423 = sphi 0, %s421
    %s424 = sphi 0, %s423
    %s438 = sphi 0, %s424
    %s442 = sphi 0, %s442
    %s444 = sphi 0, %s442
    %s445 = sphi 0, %s444
    %s459 = sphi 0, %s445
    %s463 = sphi 0, %s463
    %s465 = sphi 0, %s463
    %s466 = sphi 0, %s465
    %s480 = sphi 0, %s466
    %s484 = sphi 0, %s484
    %s486 = sphi 0, %s484
    %s487 = sphi 0, %s486
    %s501 = sphi 0, %s487
    %s505 = sphi 0, %s505
    %s507 = sphi 0, %s505
    %s508 = sphi 0, %s507
    %s522 = sphi 0, %s508
    %s526 = sphi 0, %s526
    %s528 = sphi 0, %s526
    %s529 = sphi 0, %s528
    %s543 = sphi 0, %s529
    %s549 = sphi 0, %s551
    %s552 = sphi 0, %s549
    %s553 = sphi 0, %s552
    %s569 = sphi 0, %s553
  $region4: #{temporal_scan_predictor.1} parent=0 // loop_header_branch
    %33 = sbr.rel (%p31) target = $region8
  $region5: #{temporal_scan_predictor.1} parent=0 // loop_body
    %s35 = ssub.s32 %s30, 1
    %s36 = ssub.s32 %s30, 2
    %s37 = sadd.s32 %s30, 1
    %s38 = ssub.s32 %s30, %s37
    %p39 = scmp.eq.s32.totalorder %s38, 0
    %s41 = sadd.s32 %s40, 1
    %s42 = scalar_select %p39, %s40, %s41
    %p45 = pneg %p39
    %p46 = scmp.eq.s32.totalorder %s30, 1
    %p47 = por %p45, %p46
    %p48 = scmp.ne.s32.totalorder %s40, %s43
    %p49 = scmp.eq.s32.totalorder %s30, 0
    %p50 = por %p48, %p49
    %p51 = scmp.ne.s32.totalorder %s40, %s43
    %p52 = scmp.eq.s32.totalorder %s35, 1
    %p53 = por %p51, %p52
    %p54 = scmp.ne.s32.totalorder %s43, %s44
    %p55 = scmp.eq.s32.totalorder %s35, 0
    %p56 = por %p54, %p55
    %p57 = scmp.ne.s32.totalorder %s43, %s44
    %p58 = scmp.eq.s32.totalorder %s36, 1
    %p59 = por %p57, %p58
    %p61 = scmp.ne.s32.totalorder %s44, %s60
    %p62 = scmp.eq.s32.totalorder %s36, 0
    %p63 = por %p61, %p62
    %s65 = sadd.s32 %s64, 1
    %p68 = scmp.eq.s32.totalorder %s30, 1
    %p69 = scmp.ne.s32.totalorder %s64, %s66
    %p70 = scmp.eq.s32.totalorder %s30, 0
    %p71 = por %p69, %p70
    %p72 = scmp.ne.s32.totalorder %s64, %s66
    %p73 = scmp.eq.s32.totalorder %s35, 1
    %p74 = por %p72, %p73
    %p75 = scmp.ne.s32.totalorder %s66, %s67
    %p76 = scmp.eq.s32.totalorder %s35, 0
    %p77 = por %p75, %p76
    %p78 = scmp.ne.s32.totalorder %s66, %s67
    %p79 = scmp.eq.s32.totalorder %s36, 1
    %p80 = por %p78, %p79
    %p82 = scmp.ne.s32.totalorder %s67, %s81
    %p83 = scmp.eq.s32.totalorder %s36, 0
    %p84 = por %p82, %p83
    %s86 = sadd.s32 %s85, 1
    %p89 = scmp.eq.s32.totalorder %s30, 1
    %p90 = scmp.ne.s32.totalorder %s85, %s87
    %p91 = scmp.eq.s32.totalorder %s30, 0
    %p92 = por %p90, %p91
    %p93 = scmp.ne.s32.totalorder %s85, %s87
    %p94 = scmp.eq.s32.totalorder %s35, 1
    %p95 = por %p93, %p94
    %p96 = scmp.ne.s32.totalorder %s87, %s88
    %p97 = scmp.eq.s32.totalorder %s35, 0
    %p98 = por %p96, %p97
    %p99 = scmp.ne.s32.totalorder %s87, %s88
    %p100 = scmp.eq.s32.totalorder %s36, 1
    %p101 = por %p99, %p100
    %p103 = scmp.ne.s32.totalorder %s88, %s102
    %p104 = scmp.eq.s32.totalorder %s36, 0
    %p105 = por %p103, %p104
    %s107 = sadd.s32 %s106, 1
    %p110 = scmp.eq.s32.totalorder %s30, 1
    %p111 = scmp.ne.s32.totalorder %s106, %s108
    %p112 = scmp.eq.s32.totalorder %s30, 0
    %p113 = por %p111, %p112
    %p114 = scmp.ne.s32.totalorder %s106, %s108
    %p115 = scmp.eq.s32.totalorder %s35, 1
    %p116 = por %p114, %p115
    %p117 = scmp.ne.s32.totalorder %s108, %s109
    %p118 = scmp.eq.s32.totalorder %s35, 0
    %p119 = por %p117, %p118
    %p120 = scmp.ne.s32.totalorder %s108, %s109
    %p121 = scmp.eq.s32.totalorder %s36, 1
    %p122 = por %p120, %p121
    %p124 = scmp.ne.s32.totalorder %s109, %s123
    %p125 = scmp.eq.s32.totalorder %s36, 0
    %p126 = por %p124, %p125
    %s128 = sadd.s32 %s127, 1
    %p131 = scmp.eq.s32.totalorder %s30, 1
    %p132 = scmp.ne.s32.totalorder %s127, %s129
    %p133 = scmp.eq.s32.totalorder %s30, 0
    %p134 = por %p132, %p133
    %p135 = scmp.ne.s32.totalorder %s127, %s129
    %p136 = scmp.eq.s32.totalorder %s35, 1
    %p137 = por %p135, %p136
    %p138 = scmp.ne.s32.totalorder %s129, %s130
    %p139 = scmp.eq.s32.totalorder %s35, 0
    %p140 = por %p138, %p139
    %p141 = scmp.ne.s32.totalorder %s129, %s130
    %p142 = scmp.eq.s32.totalorder %s36, 1
    %p143 = por %p141, %p142
    %p145 = scmp.ne.s32.totalorder %s130, %s144
    %p146 = scmp.eq.s32.totalorder %s36, 0
    %p147 = por %p145, %p146
    %s149 = sadd.s32 %s148, 1
    %p152 = scmp.eq.s32.totalorder %s30, 1
    %p153 = scmp.ne.s32.totalorder %s148, %s150
    %p154 = scmp.eq.s32.totalorder %s30, 0
    %p155 = por %p153, %p154
    %p156 = scmp.ne.s32.totalorder %s148, %s150
    %p157 = scmp.eq.s32.totalorder %s35, 1
    %p158 = por %p156, %p157
    %p159 = scmp.ne.s32.totalorder %s150, %s151
    %p160 = scmp.eq.s32.totalorder %s35, 0
    %p161 = por %p159, %p160
    %p162 = scmp.ne.s32.totalorder %s150, %s151
    %p163 = scmp.eq.s32.totalorder %s36, 1
    %p164 = por %p162, %p163
    %p166 = scmp.ne.s32.totalorder %s151, %s165
    %p167 = scmp.eq.s32.totalorder %s36, 0
    %p168 = por %p166, %p167
    %s170 = sadd.s32 %s169, 1
    %p173 = scmp.eq.s32.totalorder %s30, 1
    %p174 = scmp.ne.s32.totalorder %s169, %s171
    %p175 = scmp.eq.s32.totalorder %s30, 0
    %p176 = por %p174, %p175
    %p177 = scmp.ne.s32.totalorder %s169, %s171
    %p178 = scmp.eq.s32.totalorder %s35, 1
    %p179 = por %p177, %p178
    %p180 = scmp.ne.s32.totalorder %s171, %s172
    %p181 = scmp.eq.s32.totalorder %s35, 0
    %p182 = por %p180, %p181
    %p183 = scmp.ne.s32.totalorder %s171, %s172
    %p184 = scmp.eq.s32.totalorder %s36, 1
    %p185 = por %p183, %p184
    %p187 = scmp.ne.s32.totalorder %s172, %s186
    %p188 = scmp.eq.s32.totalorder %s36, 0
    %p189 = por %p187, %p188
    %s191 = sadd.s32 %s190, 1
    %p194 = scmp.eq.s32.totalorder %s30, 1
    %p195 = scmp.ne.s32.totalorder %s190, %s192
    %p196 = scmp.eq.s32.totalorder %s30, 0
    %p197 = por %p195, %p196
    %p198 = scmp.ne.s32.totalorder %s190, %s192
    %p199 = scmp.eq.s32.totalorder %s35, 1
    %p200 = por %p198, %p199
    %p201 = scmp.ne.s32.totalorder %s192, %s193
    %p202 = scmp.eq.s32.totalorder %s35, 0
    %p203 = por %p201, %p202
    %p204 = scmp.ne.s32.totalorder %s192, %s193
    %p205 = scmp.eq.s32.totalorder %s36, 1
    %p206 = por %p204, %p205
    %p208 = scmp.ne.s32.totalorder %s193, %s207
    %p209 = scmp.eq.s32.totalorder %s36, 0
    %p210 = por %p208, %p209
    %s212 = sadd.s32 %s211, 1
    %p215 = scmp.eq.s32.totalorder %s30, 1
    %p216 = scmp.ne.s32.totalorder %s211, %s213
    %p217 = scmp.eq.s32.totalorder %s30, 0
    %p218 = por %p216, %p217
    %p219 = scmp.ne.s32.totalorder %s211, %s213
    %p220 = scmp.eq.s32.totalorder %s35, 1
    %p221 = por %p219, %p220
    %p222 = scmp.ne.s32.totalorder %s213, %s214
    %p223 = scmp.eq.s32.totalorder %s35, 0
    %p224 = por %p222, %p223
    %p225 = scmp.ne.s32.totalorder %s213, %s214
    %p226 = scmp.eq.s32.totalorder %s36, 1
    %p227 = por %p225, %p226
    %p229 = scmp.ne.s32.totalorder %s214, %s228
    %p230 = scmp.eq.s32.totalorder %s36, 0
    %p231 = por %p229, %p230
    %s233 = sadd.s32 %s232, 1
    %p236 = scmp.eq.s32.totalorder %s30, 1
    %p237 = scmp.ne.s32.totalorder %s232, %s234
    %p238 = scmp.eq.s32.totalorder %s30, 0
    %p239 = por %p237, %p238
    %p240 = scmp.ne.s32.totalorder %s232, %s234
    %p241 = scmp.eq.s32.totalorder %s35, 1
    %p242 = por %p240, %p241
    %p243 = scmp.ne.s32.totalorder %s234, %s235
    %p244 = scmp.eq.s32.totalorder %s35, 0
    %p245 = por %p243, %p244
    %p246 = scmp.ne.s32.totalorder %s234, %s235
    %p247 = scmp.eq.s32.totalorder %s36, 1
    %p248 = por %p246, %p247
    %p250 = scmp.ne.s32.totalorder %s235, %s249
    %p251 = scmp.eq.s32.totalorder %s36, 0
    %p252 = por %p250, %p251
    %s254 = sadd.s32 %s253, 1
    %p257 = scmp.eq.s32.totalorder %s30, 1
    %p258 = scmp.ne.s32.totalorder %s253, %s255
    %p259 = scmp.eq.s32.totalorder %s30, 0
    %p260 = por %p258, %p259
    %p261 = scmp.ne.s32.totalorder %s253, %s255
    %p262 = scmp.eq.s32.totalorder %s35, 1
    %p263 = por %p261, %p262
    %p264 = scmp.ne.s32.totalorder %s255, %s256
    %p265 = scmp.eq.s32.totalorder %s35, 0
    %p266 = por %p264, %p265
    %p267 = scmp.ne.s32.totalorder %s255, %s256
    %p268 = scmp.eq.s32.totalorder %s36, 1
    %p269 = por %p267, %p268
    %p271 = scmp.ne.s32.totalorder %s256, %s270
    %p272 = scmp.eq.s32.totalorder %s36, 0
    %p273 = por %p271, %p272
    %s275 = sadd.s32 %s274, 1
    %p278 = scmp.eq.s32.totalorder %s30, 1
    %p279 = scmp.ne.s32.totalorder %s274, %s276
    %p280 = scmp.eq.s32.totalorder %s30, 0
    %p281 = por %p279, %p280
    %p282 = scmp.ne.s32.totalorder %s274, %s276
    %p283 = scmp.eq.s32.totalorder %s35, 1
    %p284 = por %p282, %p283
    %p285 = scmp.ne.s32.totalorder %s276, %s277
    %p286 = scmp.eq.s32.totalorder %s35, 0
    %p287 = por %p285, %p286
    %p288 = scmp.ne.s32.totalorder %s276, %s277
    %p289 = scmp.eq.s32.totalorder %s36, 1
    %p290 = por %p288, %p289
    %p292 = scmp.ne.s32.totalorder %s277, %s291
    %p293 = scmp.eq.s32.totalorder %s36, 0
    %p294 = por %p292, %p293
    %s296 = sadd.s32 %s295, 1
    %p299 = scmp.eq.s32.totalorder %s30, 1
    %p300 = scmp.ne.s32.totalorder %s295, %s297
    %p301 = scmp.eq.s32.totalorder %s30, 0
    %p302 = por %p300, %p301
    %p303 = scmp.ne.s32.totalorder %s295, %s297
    %p304 = scmp.eq.s32.totalorder %s35, 1
    %p305 = por %p303, %p304
    %p306 = scmp.ne.s32.totalorder %s297, %s298
    %p307 = scmp.eq.s32.totalorder %s35, 0
    %p308 = por %p306, %p307
    %p309 = scmp.ne.s32.totalorder %s297, %s298
    %p310 = scmp.eq.s32.totalorder %s36, 1
    %p311 = por %p309, %p310
    %p313 = scmp.ne.s32.totalorder %s298, %s312
    %p314 = scmp.eq.s32.totalorder %s36, 0
    %p315 = por %p313, %p314
    %s317 = sadd.s32 %s316, 1
    %p320 = scmp.eq.s32.totalorder %s30, 1
    %p321 = scmp.ne.s32.totalorder %s316, %s318
    %p322 = scmp.eq.s32.totalorder %s30, 0
    %p323 = por %p321, %p322
    %p324 = scmp.ne.s32.totalorder %s316, %s318
    %p325 = scmp.eq.s32.totalorder %s35, 1
    %p326 = por %p324, %p325
    %p327 = scmp.ne.s32.totalorder %s318, %s319
    %p328 = scmp.eq.s32.totalorder %s35, 0
    %p329 = por %p327, %p328
    %p330 = scmp.ne.s32.totalorder %s318, %s319
    %p331 = scmp.eq.s32.totalorder %s36, 1
    %p332 = por %p330, %p331
    %p334 = scmp.ne.s32.totalorder %s319, %s333
    %p335 = scmp.eq.s32.totalorder %s36, 0
    %p336 = por %p334, %p335
    %s338 = sadd.s32 %s337, 1
    %p341 = scmp.eq.s32.totalorder %s30, 1
    %p342 = scmp.ne.s32.totalorder %s337, %s339
    %p343 = scmp.eq.s32.totalorder %s30, 0
    %p344 = por %p342, %p343
    %p345 = scmp.ne.s32.totalorder %s337, %s339
    %p346 = scmp.eq.s32.totalorder %s35, 1
    %p347 = por %p345, %p346
    %p348 = scmp.ne.s32.totalorder %s339, %s340
    %p349 = scmp.eq.s32.totalorder %s35, 0
    %p350 = por %p348, %p349
    %p351 = scmp.ne.s32.totalorder %s339, %s340
    %p352 = scmp.eq.s32.totalorder %s36, 1
    %p353 = por %p351, %p352
    %p355 = scmp.ne.s32.totalorder %s340, %s354
    %p356 = scmp.eq.s32.totalorder %s36, 0
    %p357 = por %p355, %p356
    %s359 = sadd.s32 %s358, 1
    %p362 = scmp.eq.s32.totalorder %s30, 1
    %p363 = scmp.ne.s32.totalorder %s358, %s360
    %p364 = scmp.eq.s32.totalorder %s30, 0
    %p365 = por %p363, %p364
    %p366 = scmp.ne.s32.totalorder %s358, %s360
    %p367 = scmp.eq.s32.totalorder %s35, 1
    %p368 = por %p366, %p367
    %p369 = scmp.ne.s32.totalorder %s360, %s361
    %p370 = scmp.eq.s32.totalorder %s35, 0
    %p371 = por %p369, %p370
    %p372 = scmp.ne.s32.totalorder %s360, %s361
    %p373 = scmp.eq.s32.totalorder %s36, 1
    %p374 = por %p372, %p373
    %p376 = scmp.ne.s32.totalorder %s361, %s375
    %p377 = scmp.eq.s32.totalorder %s36, 0
    %p378 = por %p376, %p377
    %s380 = sadd.s32 %s379, 1
    %p383 = scmp.eq.s32.totalorder %s30, 1
    %p384 = scmp.ne.s32.totalorder %s379, %s381
    %p385 = scmp.eq.s32.totalorder %s30, 0
    %p386 = por %p384, %p385
    %p387 = scmp.ne.s32.totalorder %s379, %s381
    %p388 = scmp.eq.s32.totalorder %s35, 1
    %p389 = por %p387, %p388
    %p390 = scmp.ne.s32.totalorder %s381, %s382
    %p391 = scmp.eq.s32.totalorder %s35, 0
    %p392 = por %p390, %p391
    %p393 = scmp.ne.s32.totalorder %s381, %s382
    %p394 = scmp.eq.s32.totalorder %s36, 1
    %p395 = por %p393, %p394
    %p397 = scmp.ne.s32.totalorder %s382, %s396
    %p398 = scmp.eq.s32.totalorder %s36, 0
    %p399 = por %p397, %p398
    %s401 = sadd.s32 %s400, 1
    %p404 = scmp.eq.s32.totalorder %s30, 1
    %p405 = scmp.ne.s32.totalorder %s400, %s402
    %p406 = scmp.eq.s32.totalorder %s30, 0
    %p407 = por %p405, %p406
    %p408 = scmp.ne.s32.totalorder %s400, %s402
    %p409 = scmp.eq.s32.totalorder %s35, 1
    %p410 = por %p408, %p409
    %p411 = scmp.ne.s32.totalorder %s402, %s403
    %p412 = scmp.eq.s32.totalorder %s35, 0
    %p413 = por %p411, %p412
    %p414 = scmp.ne.s32.totalorder %s402, %s403
    %p415 = scmp.eq.s32.totalorder %s36, 1
    %p416 = por %p414, %p415
    %p418 = scmp.ne.s32.totalorder %s403, %s417
    %p419 = scmp.eq.s32.totalorder %s36, 0
    %p420 = por %p418, %p419
    %s422 = sadd.s32 %s421, 1
    %p425 = scmp.eq.s32.totalorder %s30, 1
    %p426 = scmp.ne.s32.totalorder %s421, %s423
    %p427 = scmp.eq.s32.totalorder %s30, 0
    %p428 = por %p426, %p427
    %p429 = scmp.ne.s32.totalorder %s421, %s423
    %p430 = scmp.eq.s32.totalorder %s35, 1
    %p431 = por %p429, %p430
    %p432 = scmp.ne.s32.totalorder %s423, %s424
    %p433 = scmp.eq.s32.totalorder %s35, 0
    %p434 = por %p432, %p433
    %p435 = scmp.ne.s32.totalorder %s423, %s424
    %p436 = scmp.eq.s32.totalorder %s36, 1
    %p437 = por %p435, %p436
    %p439 = scmp.ne.s32.totalorder %s424, %s438
    %p440 = scmp.eq.s32.totalorder %s36, 0
    %p441 = por %p439, %p440
    %s443 = sadd.s32 %s442, 1
    %p446 = scmp.eq.s32.totalorder %s30, 1
    %p447 = scmp.ne.s32.totalorder %s442, %s444
    %p448 = scmp.eq.s32.totalorder %s30, 0
    %p449 = por %p447, %p448
    %p450 = scmp.ne.s32.totalorder %s442, %s444
    %p451 = scmp.eq.s32.totalorder %s35, 1
    %p452 = por %p450, %p451
    %p453 = scmp.ne.s32.totalorder %s444, %s445
    %p454 = scmp.eq.s32.totalorder %s35, 0
    %p455 = por %p453, %p454
    %p456 = scmp.ne.s32.totalorder %s444, %s445
    %p457 = scmp.eq.s32.totalorder %s36, 1
    %p458 = por %p456, %p457
    %p460 = scmp.ne.s32.totalorder %s445, %s459
    %p461 = scmp.eq.s32.totalorder %s36, 0
    %p462 = por %p460, %p461
    %s464 = sadd.s32 %s463, 1
    %p467 = scmp.eq.s32.totalorder %s30, 1
    %p468 = scmp.ne.s32.totalorder %s463, %s465
    %p469 = scmp.eq.s32.totalorder %s30, 0
    %p470 = por %p468, %p469
    %p471 = scmp.ne.s32.totalorder %s463, %s465
    %p472 = scmp.eq.s32.totalorder %s35, 1
    %p473 = por %p471, %p472
    %p474 = scmp.ne.s32.totalorder %s465, %s466
    %p475 = scmp.eq.s32.totalorder %s35, 0
    %p476 = por %p474, %p475
    %p477 = scmp.ne.s32.totalorder %s465, %s466
    %p478 = scmp.eq.s32.totalorder %s36, 1
    %p479 = por %p477, %p478
    %p481 = scmp.ne.s32.totalorder %s466, %s480
    %p482 = scmp.eq.s32.totalorder %s36, 0
    %p483 = por %p481, %p482
    %s485 = sadd.s32 %s484, 1
    %p488 = scmp.eq.s32.totalorder %s30, 1
    %p489 = scmp.ne.s32.totalorder %s484, %s486
    %p490 = scmp.eq.s32.totalorder %s30, 0
    %p491 = por %p489, %p490
    %p492 = scmp.ne.s32.totalorder %s484, %s486
    %p493 = scmp.eq.s32.totalorder %s35, 1
    %p494 = por %p492, %p493
    %p495 = scmp.ne.s32.totalorder %s486, %s487
    %p496 = scmp.eq.s32.totalorder %s35, 0
    %p497 = por %p495, %p496
    %p498 = scmp.ne.s32.totalorder %s486, %s487
    %p499 = scmp.eq.s32.totalorder %s36, 1
    %p500 = por %p498, %p499
    %p502 = scmp.ne.s32.totalorder %s487, %s501
    %p503 = scmp.eq.s32.totalorder %s36, 0
    %p504 = por %p502, %p503
    %s506 = sadd.s32 %s505, 1
    %p509 = scmp.eq.s32.totalorder %s30, 1
    %p510 = scmp.ne.s32.totalorder %s505, %s507
    %p511 = scmp.eq.s32.totalorder %s30, 0
    %p512 = por %p510, %p511
    %p513 = scmp.ne.s32.totalorder %s505, %s507
    %p514 = scmp.eq.s32.totalorder %s35, 1
    %p515 = por %p513, %p514
    %p516 = scmp.ne.s32.totalorder %s507, %s508
    %p517 = scmp.eq.s32.totalorder %s35, 0
    %p518 = por %p516, %p517
    %p519 = scmp.ne.s32.totalorder %s507, %s508
    %p520 = scmp.eq.s32.totalorder %s36, 1
    %p521 = por %p519, %p520
    %p523 = scmp.ne.s32.totalorder %s508, %s522
    %p524 = scmp.eq.s32.totalorder %s36, 0
    %p525 = por %p523, %p524
    %s527 = sadd.s32 %s526, 1
    %p530 = scmp.eq.s32.totalorder %s30, 1
    %p531 = scmp.ne.s32.totalorder %s526, %s528
    %p532 = scmp.eq.s32.totalorder %s30, 0
    %p533 = por %p531, %p532
    %p534 = scmp.ne.s32.totalorder %s526, %s528
    %p535 = scmp.eq.s32.totalorder %s35, 1
    %p536 = por %p534, %p535
    %p537 = scmp.ne.s32.totalorder %s528, %s529
    %p538 = scmp.eq.s32.totalorder %s35, 0
    %p539 = por %p537, %p538
    %p540 = scmp.ne.s32.totalorder %s528, %s529
    %p541 = scmp.eq.s32.totalorder %s36, 1
    %p542 = por %p540, %p541
    %p544 = scmp.ne.s32.totalorder %s529, %s543
    %p545 = scmp.eq.s32.totalorder %s36, 0
    %p546 = por %p544, %p545
    %s547 = ssub.s32 %s30, %s37
    %p548 = scmp.eq.s32.totalorder %s547, 0
    %s550 = sadd.s32 %s549, 1
    %s551 = scalar_select %p548, %s549, %s550
    %p554 = pneg %p548
    %p555 = scmp.eq.s32.totalorder %s30, 1
    %p556 = por %p554, %p555
    %p557 = scmp.ne.s32.totalorder %s549, %s552
    %p558 = scmp.eq.s32.totalorder %s30, 0
    %p559 = por %p557, %p558
    %p560 = scmp.ne.s32.totalorder %s549, %s552
    %p561 = scmp.eq.s32.totalorder %s35, 1
    %p562 = por %p560, %p561
    %p563 = scmp.ne.s32.totalorder %s552, %s553
    %p564 = scmp.eq.s32.totalorder %s35, 0
    %p565 = por %p563, %p564
    %p566 = scmp.ne.s32.totalorder %s552, %s553
    %p567 = scmp.eq.s32.totalorder %s36, 1
    %p568 = por %p566, %p567
    %p570 = scmp.ne.s32.totalorder %s553, %s569
    %p571 = scmp.eq.s32.totalorder %s36, 0
    %p572 = por %p570, %p571
    %p573 = scmp.le.s32.totalorder 1, %s30
    %p574 = scmp.lt.s32.totalorder %s30, 3
    %p575 = pnand %p573, %p574
    %p576 = pneg %p575
    // Predicated region
    $region9: #{temporal_scan_predictor.1} parent=5 // pred_check
      _
    $region10: #{temporal_scan_predictor.1} parent=5 // pred_check_branch
      %578 = sbr.rel (%p575) target = $region12
    $region11: #{temporal_scan_predictor.1} parent=5 // pred_region
      %s579 = ssub.s32 %s30, 1
      // Predicated region
      $region13: #{temporal_scan_predictor.1} parent=11 // pred_check
        %p580 = pneg %p77
      $region14: #{temporal_scan_predictor.1} parent=11 // pred_check_branch
        %582 = sbr.rel (%p580) target = $region16
      $region15: #{temporal_scan_predictor.1} parent=11 // pred_region
        _
      $region16: #{temporal_scan_predictor.1} parent=11 // pred_fallthru
        _
      // Predicated region
      $region17: #{temporal_scan_predictor.1} parent=11 // pred_check
        %p583 = pneg %p98
      $region18: #{temporal_scan_predictor.1} parent=11 // pred_check_branch
        %585 = sbr.rel (%p583) target = $region20
      $region19: #{temporal_scan_predictor.1} parent=11 // pred_region
        _
      $region20: #{temporal_scan_predictor.1} parent=11 // pred_fallthru
        _
      // Predicated region
      $region21: #{temporal_scan_predictor.1} parent=11 // pred_check
        %p586 = pneg %p119
      $region22: #{temporal_scan_predictor.1} parent=11 // pred_check_branch
        %588 = sbr.rel (%p586) target = $region24
      $region23: #{temporal_scan_predictor.1} parent=11 // pred_region
        _
      $region24: #{temporal_scan_predictor.1} parent=11 // pred_fallthru
        _
      // Predicated region
      $region25: #{temporal_scan_predictor.1} parent=11 // pred_check
        %p589 = pneg %p140
      $region26: #{temporal_scan_predictor.1} parent=11 // pred_check_branch
        %591 = sbr.rel (%p589) target = $region28
      $region27: #{temporal_scan_predictor.1} parent=11 // pred_region
        _
      $region28: #{temporal_scan_predictor.1} parent=11 // pred_fallthru
        _
      // Predicated region
      $region29: #{temporal_scan_predictor.1} parent=11 // pred_check
        %p592 = pneg %p161
      $region30: #{temporal_scan_predictor.1} parent=11 // pred_check_branch
        %594 = sbr.rel (%p592) target = $region32
      $region31: #{temporal_scan_predictor.1} parent=11 // pred_region
        _
      $region32: #{temporal_scan_predictor.1} parent=11 // pred_fallthru
        _
      // Predicated region
      $region33: #{temporal_scan_predictor.1} parent=11 // pred_check
        %p595 = pneg %p182
      $region34: #{temporal_scan_predictor.1} parent=11 // pred_check_branch
        %597 = sbr.rel (%p595) target = $region36
      $region35: #{temporal_scan_predictor.1} parent=11 // pred_region
        _
      $region36: #{temporal_scan_predictor.1} parent=11 // pred_fallthru
        _
      // Predicated region
      $region37: #{temporal_scan_predictor.1} parent=11 // pred_check
        %p598 = pneg %p203
      $region38: #{temporal_scan_predictor.1} parent=11 // pred_check_branch
        %600 = sbr.rel (%p598) target = $region40
      $region39: #{temporal_scan_predictor.1} parent=11 // pred_region
        _
      $region40: #{temporal_scan_predictor.1} parent=11 // pred_fallthru
        _
      // Predicated region
      $region41: #{temporal_scan_predictor.1} parent=11 // pred_check
        %p601 = pneg %p224
      $region42: #{temporal_scan_predictor.1} parent=11 // pred_check_branch
        %603 = sbr.rel (%p601) target = $region44
      $region43: #{temporal_scan_predictor.1} parent=11 // pred_region
        _
      $region44: #{temporal_scan_predictor.1} parent=11 // pred_fallthru
        _
      // Predicated region
      $region45: #{temporal_scan_predictor.1} parent=11 // pred_check
        %p604 = pneg %p245
      $region46: #{temporal_scan_predictor.1} parent=11 // pred_check_branch
        %606 = sbr.rel (%p604) target = $region48
      $region47: #{temporal_scan_predictor.1} parent=11 // pred_region
        _
      $region48: #{temporal_scan_predictor.1} parent=11 // pred_fallthru
        _
      // Predicated region
      $region49: #{temporal_scan_predictor.1} parent=11 // pred_check
        %p607 = pneg %p266
      $region50: #{temporal_scan_predictor.1} parent=11 // pred_check_branch
        %609 = sbr.rel (%p607) target = $region52
      $region51: #{temporal_scan_predictor.1} parent=11 // pred_region
        _
      $region52: #{temporal_scan_predictor.1} parent=11 // pred_fallthru
        _
      // Predicated region
      $region53: #{temporal_scan_predictor.1} parent=11 // pred_check
        %p610 = pneg %p287
      $region54: #{temporal_scan_predictor.1} parent=11 // pred_check_branch
        %612 = sbr.rel (%p610) target = $region56
      $region55: #{temporal_scan_predictor.1} parent=11 // pred_region
        _
      $region56: #{temporal_scan_predictor.1} parent=11 // pred_fallthru
        _
      // Predicated region
      $region57: #{temporal_scan_predictor.1} parent=11 // pred_check
        %p613 = pneg %p308
      $region58: #{temporal_scan_predictor.1} parent=11 // pred_check_branch
        %615 = sbr.rel (%p613) target = $region60
      $region59: #{temporal_scan_predictor.1} parent=11 // pred_region
        _
      $region60: #{temporal_scan_predictor.1} parent=11 // pred_fallthru
        _
      // Predicated region
      $region61: #{temporal_scan_predictor.1} parent=11 // pred_check
        %p616 = pneg %p329
      $region62: #{temporal_scan_predictor.1} parent=11 // pred_check_branch
        %618 = sbr.rel (%p616) target = $region64
      $region63: #{temporal_scan_predictor.1} parent=11 // pred_region
        _
      $region64: #{temporal_scan_predictor.1} parent=11 // pred_fallthru
        _
      // Predicated region
      $region65: #{temporal_scan_predictor.1} parent=11 // pred_check
        %p619 = pneg %p350
      $region66: #{temporal_scan_predictor.1} parent=11 // pred_check_branch
        %621 = sbr.rel (%p619) target = $region68
      $region67: #{temporal_scan_predictor.1} parent=11 // pred_region
        _
      $region68: #{temporal_scan_predictor.1} parent=11 // pred_fallthru
        _
      // Predicated region
      $region69: #{temporal_scan_predictor.1} parent=11 // pred_check
        %p622 = pneg %p371
      $region70: #{temporal_scan_predictor.1} parent=11 // pred_check_branch
        %624 = sbr.rel (%p622) target = $region72
      $region71: #{temporal_scan_predictor.1} parent=11 // pred_region
        _
      $region72: #{temporal_scan_predictor.1} parent=11 // pred_fallthru
        _
      // Predicated region
      $region73: #{temporal_scan_predictor.1} parent=11 // pred_check
        %p625 = pneg %p392
      $region74: #{temporal_scan_predictor.1} parent=11 // pred_check_branch
        %627 = sbr.rel (%p625) target = $region76
      $region75: #{temporal_scan_predictor.1} parent=11 // pred_region
        _
      $region76: #{temporal_scan_predictor.1} parent=11 // pred_fallthru
        _
      // Predicated region
      $region77: #{temporal_scan_predictor.1} parent=11 // pred_check
        %p628 = pneg %p413
      $region78: #{temporal_scan_predictor.1} parent=11 // pred_check_branch
        %630 = sbr.rel (%p628) target = $region80
      $region79: #{temporal_scan_predictor.1} parent=11 // pred_region
        _
      $region80: #{temporal_scan_predictor.1} parent=11 // pred_fallthru
        _
      // Predicated region
      $region81: #{temporal_scan_predictor.1} parent=11 // pred_check
        %p631 = pneg %p434
      $region82: #{temporal_scan_predictor.1} parent=11 // pred_check_branch
        %633 = sbr.rel (%p631) target = $region84
      $region83: #{temporal_scan_predictor.1} parent=11 // pred_region
        _
      $region84: #{temporal_scan_predictor.1} parent=11 // pred_fallthru
        _
      // Predicated region
      $region85: #{temporal_scan_predictor.1} parent=11 // pred_check
        %p634 = pneg %p455
      $region86: #{temporal_scan_predictor.1} parent=11 // pred_check_branch
        %636 = sbr.rel (%p634) target = $region88
      $region87: #{temporal_scan_predictor.1} parent=11 // pred_region
        _
      $region88: #{temporal_scan_predictor.1} parent=11 // pred_fallthru
        _
      // Predicated region
      $region89: #{temporal_scan_predictor.1} parent=11 // pred_check
        %p637 = pneg %p476
      $region90: #{temporal_scan_predictor.1} parent=11 // pred_check_branch
        %639 = sbr.rel (%p637) target = $region92
      $region91: #{temporal_scan_predictor.1} parent=11 // pred_region
        _
      $region92: #{temporal_scan_predictor.1} parent=11 // pred_fallthru
        _
      // Predicated region
      $region93: #{temporal_scan_predictor.1} parent=11 // pred_check
        %p640 = pneg %p497
      $region94: #{temporal_scan_predictor.1} parent=11 // pred_check_branch
        %642 = sbr.rel (%p640) target = $region96
      $region95: #{temporal_scan_predictor.1} parent=11 // pred_region
        _
      $region96: #{temporal_scan_predictor.1} parent=11 // pred_fallthru
        _
      // Predicated region
      $region97: #{temporal_scan_predictor.1} parent=11 // pred_check
        %p643 = pneg %p518
      $region98: #{temporal_scan_predictor.1} parent=11 // pred_check_branch
        %645 = sbr.rel (%p643) target = $region100
      $region99: #{temporal_scan_predictor.1} parent=11 // pred_region
        _
      $region100: #{temporal_scan_predictor.1} parent=11 // pred_fallthru
        _
      // Predicated region
      $region101: #{temporal_scan_predictor.1} parent=11 // pred_check
        %p646 = pneg %p539
      $region102: #{temporal_scan_predictor.1} parent=11 // pred_check_branch
        %648 = sbr.rel (%p646) target = $region104
      $region103: #{temporal_scan_predictor.1} parent=11 // pred_region
        _
      $region104: #{temporal_scan_predictor.1} parent=11 // pred_fallthru
        _
    $region12: #{temporal_scan_predictor.1} parent=5 // pred_fallthru
      _
    %p649 = scmp.lt.s32.totalorder %s30, 2
    // Predicated region
    $region105: #{temporal_scan_predictor.1} parent=5 // pred_check
      %p650 = pneg %p649
    $region106: #{temporal_scan_predictor.1} parent=5 // pred_check_branch
      %652 = sbr.rel (%p650) target = $region108
    $region107: #{temporal_scan_predictor.1} parent=5 // pred_region
      // Predicated region
      $region109: #{temporal_scan_predictor.1} parent=107 // pred_check
        %p653 = pneg %p50
      $region110: #{temporal_scan_predictor.1} parent=107 // pred_check_branch
        %655 = sbr.rel (%p653) target = $region112
      $region111: #{temporal_scan_predictor.1} parent=107 // pred_region
        %p656 = scmp.lt.s32.totalorder %s30, 1
        %s657 = scalar_select %p656, %s30, 1
        %s658 = smul.addr %s657, 6
        %s659 = smul.addr %s658, 8
        %s660 = scalar_lea.vmem %s0, %s659
      $region112: #{temporal_scan_predictor.1} parent=107 // pred_fallthru
        _
    $region108: #{temporal_scan_predictor.1} parent=5 // pred_fallthru
      _
    %p661 = scmp.le.s32.totalorder 1, %s30
    %p662 = scmp.lt.s32.totalorder %s30, 3
    %p663 = pnand %p661, %p662
    %p664 = pneg %p663
    // Predicated region
    $region113: #{temporal_scan_predictor.1} parent=5 // pred_check
      _
    $region114: #{temporal_scan_predictor.1} parent=5 // pred_check_branch
      %666 = sbr.rel (%p663) target = $region116
    $region115: #{temporal_scan_predictor.1} parent=5 // pred_region
      %s667 = ssub.s32 %s30, 1
      %p668 = scmp.lt.s32.totalorder %s35, 1
      %s669 = scalar_select %p668, %s35, 1
      %s670 = smul.addr %s669, 6
      %s671 = smul.addr %s670, 8
      %s672 = scalar_lea.vmem %s0, %s671
      %p673 = pneg %p56
      %p674 = pneg %p53
      %p675 = pneg %p77
      %p676 = pneg %p74
      %p677 = pneg %p98
      %p678 = pneg %p95
      %p679 = pneg %p119
      %p680 = pneg %p116
      %p681 = pneg %p140
      %p682 = pneg %p137
      %p683 = pneg %p161
      %p684 = pneg %p158
      %p685 = pneg %p182
      %p686 = pneg %p179
      %p687 = pneg %p203
      %p688 = pneg %p200
      %p689 = pneg %p224
      %p690 = pneg %p221
      %p691 = pneg %p245
      %p692 = pneg %p242
      %p693 = pneg %p266
      %p694 = pneg %p263
      %p695 = pneg %p287
      %p696 = pneg %p284
      %p697 = pneg %p308
      %p698 = pneg %p305
      %p699 = pneg %p329
      %p700 = pneg %p326
      %p701 = pneg %p350
      %p702 = pneg %p347
      %p703 = pneg %p371
      %p704 = pneg %p368
      %p705 = pneg %p392
      %p706 = pneg %p389
      %p707 = pneg %p413
      %p708 = pneg %p410
      %p709 = pneg %p434
      %p710 = pneg %p431
      %p711 = pneg %p455
      %p712 = pneg %p452
      %p713 = pneg %p476
      %p714 = pneg %p473
      %p715 = pneg %p497
      %p716 = pneg %p494
      %p717 = pneg %p518
      %p718 = pneg %p515
      %p719 = pneg %p539
      %p720 = pneg %p536
      %p721 = pneg %p565
      %p722 = pneg %p562
      %p723 = scmp.lt.s32.totalorder %s35, 1
      %s724 = scalar_select %p723, %s35, 1
      %s725 = smul.addr %s724, 8
      %s726 = scalar_lea.vmem %s24, %s725
      %p727 = scmp.lt.s32.totalorder %s35, 1
      %s728 = scalar_select %p727, %s35, 1
      %s729 = smul.addr %s728, 6
      %s730 = smul.addr %s729, 8
      %s731 = scalar_lea.vmem %s0, %s730
      %p732 = scmp.lt.s32.totalorder %s35, 1
      %s733 = scalar_select %p732, %s35, 1
      %s734 = smul.addr %s733, 8
      %s735 = scalar_lea.vmem %s24, %s734
      %v737 = vld [vmem:[%s731] sm:$0xff]
      %v738 = vld [vmem:[%s731 + $0x8] sm:$0xff]
      %v739 = vld [vmem:[%s731 + $0x10] sm:$0xff]
      %v740 = vld [vmem:[%s731 + $0x18] sm:$0xff]
      %v741 = vld [vmem:[%s731 + $0x20] sm:$0xff]
      %v742 = vld [vmem:[%s731 + $0x28] sm:$0xff]
      %v743 = vld [vmem:[%s1] sm:$0x1]
      %v744 = vld [vmem:[%s2] sm:$0x1]
      %vm745 = vcmask 523264
      %v746 = vsel %vm745, %v737, 0.0
      %747 = vadd.xlane.f32.xlu0 %v746
      %v748 = vpop.xlane.xlu0 %747
      %v749 = vsel %vm745, %v738, 0.0
      %750 = vadd.xlane.f32.xlu0 %v749
      %v751 = vpop.xlane.xlu0 %750
      %v752 = vsel %vm745, %v739, 0.0
      %753 = vadd.xlane.f32.xlu0 %v752
      %v754 = vpop.xlane.xlu0 %753
      %v755 = vsel %vm745, %v740, 0.0
      %756 = vadd.xlane.f32.xlu0 %v755
      %v757 = vpop.xlane.xlu0 %756
      %v758 = vsel %vm745, %v741, 0.0
      %759 = vadd.xlane.f32.xlu0 %v758
      %v760 = vpop.xlane.xlu0 %759
      %v761 = vsel %vm745, %v742, 0.0
      %762 = vadd.xlane.f32.xlu0 %v761
      %v763 = vpop.xlane.xlu0 %762
      %v764 = vrcp.pop 64.0
      %v765 = vmul.f32 64.0, %v764
      %v766 = vsub.f32 1.0, %v765
      %v767 = vmul.f32 %v764, %v766
      %v768 = vadd.f32 %v764, %v767
      %vm769 = vweird.f32 %v764
      %v770 = vsel %vm769, %v764, %v768
      %v771 = vmul.f32 %v748, %v770
      %v772 = vmul.f32 %v751, %v770
      %v773 = vmul.f32 %v754, %v770
      %v774 = vmul.f32 %v757, %v770
      %v775 = vmul.f32 %v760, %v770
      %v776 = vmul.f32 %v763, %v770
      %v777 = vsub.f32 %v737, %v771
      %v778 = vsub.f32 %v738, %v772
      %v779 = vsub.f32 %v739, %v773
      %v780 = vsub.f32 %v740, %v774
      %v781 = vsub.f32 %v741, %v775
      %v782 = vsub.f32 %v742, %v776
      %v783 = vmul.f32 %v777, %v777
      %v784 = vmul.f32 %v778, %v778
      %v785 = vmul.f32 %v779, %v779
      %v786 = vmul.f32 %v780, %v780
      %v787 = vmul.f32 %v781, %v781
      %v788 = vmul.f32 %v782, %v782
      %v789 = vsel %vm745, %v783, 0.0
      %790 = vadd.xlane.f32.xlu0 %v789
      %v791 = vpop.xlane.xlu0 %790
      %v792 = vsel %vm745, %v784, 0.0
      %793 = vadd.xlane.f32.xlu0 %v792
      %v794 = vpop.xlane.xlu0 %793
      %v795 = vsel %vm745, %v785, 0.0
      %796 = vadd.xlane.f32.xlu0 %v795
      %v797 = vpop.xlane.xlu0 %796
      %v798 = vsel %vm745, %v786, 0.0
      %799 = vadd.xlane.f32.xlu0 %v798
      %v800 = vpop.xlane.xlu0 %799
      %v801 = vsel %vm745, %v787, 0.0
      %802 = vadd.xlane.f32.xlu0 %v801
      %v803 = vpop.xlane.xlu0 %802
      %v804 = vsel %vm745, %v788, 0.0
      %805 = vadd.xlane.f32.xlu0 %v804
      %v806 = vpop.xlane.xlu0 %805
      %v807 = vmul.f32 %v791, %v770
      %v808 = vmul.f32 %v794, %v770
      %v809 = vmul.f32 %v797, %v770
      %v810 = vmul.f32 %v800, %v770
      %v811 = vmul.f32 %v803, %v770
      %v812 = vmul.f32 %v806, %v770
      %v813 = vadd.f32 %v807, 1e-05
      %v814 = vadd.f32 %v808, 1e-05
      %v815 = vadd.f32 %v809, 1e-05
      %v816 = vadd.f32 %v810, 1e-05
      %v817 = vadd.f32 %v811, 1e-05
      %v818 = vadd.f32 %v812, 1e-05
      %v819 = vrsqrt.pop %v813
      %v820 = vmul.f32 %v819, %v813
      %v821 = vmul.f32 %v820, %v819
      %v822 = vmul.f32 0.5, %v821
      %v823 = vsub.f32 1.5, %v822
      %v824 = vmul.f32 %v819, %v823
      %vm825 = vweird.f32 %v813
      %vm826 = vweird.f32 %v819
      %vm827 = vmor %vm825, %vm826
      %v828 = vsel %vm827, %v819, %v824
      %v829 = vrsqrt.pop %v814
      %v830 = vmul.f32 %v829, %v814
      %v831 = vmul.f32 %v830, %v829
      %v832 = vmul.f32 0.5, %v831
      %v833 = vsub.f32 1.5, %v832
      %v834 = vmul.f32 %v829, %v833
      %vm835 = vweird.f32 %v814
      %vm836 = vweird.f32 %v829
      %vm837 = vmor %vm835, %vm836
      %v838 = vsel %vm837, %v829, %v834
      %v839 = vrsqrt.pop %v815
      %v840 = vmul.f32 %v839, %v815
      %v841 = vmul.f32 %v840, %v839
      %v842 = vmul.f32 0.5, %v841
      %v843 = vsub.f32 1.5, %v842
      %v844 = vmul.f32 %v839, %v843
      %vm845 = vweird.f32 %v815
      %vm846 = vweird.f32 %v839
      %vm847 = vmor %vm845, %vm846
      %v848 = vsel %vm847, %v839, %v844
      %v849 = vrsqrt.pop %v816
      %v850 = vmul.f32 %v849, %v816
      %v851 = vmul.f32 %v850, %v849
      %v852 = vmul.f32 0.5, %v851
      %v853 = vsub.f32 1.5, %v852
      %v854 = vmul.f32 %v849, %v853
      %vm855 = vweird.f32 %v816
      %vm856 = vweird.f32 %v849
      %vm857 = vmor %vm855, %vm856
      %v858 = vsel %vm857, %v849, %v854
      %v859 = vrsqrt.pop %v817
      %v860 = vmul.f32 %v859, %v817
      %v861 = vmul.f32 %v860, %v859
      %v862 = vmul.f32 0.5, %v861
      %v863 = vsub.f32 1.5, %v862
      %v864 = vmul.f32 %v859, %v863
      %vm865 = vweird.f32 %v817
      %vm866 = vweird.f32 %v859
      %vm867 = vmor %vm865, %vm866
      %v868 = vsel %vm867, %v859, %v864
      %v869 = vrsqrt.pop %v818
      %v870 = vmul.f32 %v869, %v818
      %v871 = vmul.f32 %v870, %v869
      %v872 = vmul.f32 0.5, %v871
      %v873 = vsub.f32 1.5, %v872
      %v874 = vmul.f32 %v869, %v873
      %vm875 = vweird.f32 %v818
      %vm876 = vweird.f32 %v869
      %vm877 = vmor %vm875, %vm876
      %v878 = vsel %vm877, %v869, %v874
      %v879 = vmul.f32 %v777, %v828
      %v880 = vmul.f32 %v778, %v838
      %v881 = vmul.f32 %v779, %v848
      %v882 = vmul.f32 %v780, %v858
      %v883 = vmul.f32 %v781, %v868
      %v884 = vmul.f32 %v782, %v878
      %v886 = vperm.slane %v743, 0
      %v888 = vmul.f32 %v879, %v886
      %v889 = vmul.f32 %v880, %v886
      %v890 = vmul.f32 %v881, %v886
      %v891 = vmul.f32 %v882, %v886
      %v892 = vmul.f32 %v883, %v886
      %v893 = vmul.f32 %v884, %v886
      %v895 = vperm.slane %v744, 0
      %v897 = vadd.f32 %v888, %v895
      %v898 = vadd.f32 %v889, %v895
      %v899 = vadd.f32 %v890, %v895
      %v900 = vadd.f32 %v891, %v895
      %v901 = vadd.f32 %v892, %v895
      %v902 = vadd.f32 %v893, %v895
      %v903 = vld [vmem:[%s3] sm:$0xff]
      %v904 = vld [vmem:[%s3 + $0x8] sm:$0xff]
      %v905 = vld [vmem:[%s3 + $0x10] sm:$0xff]
      %v906 = vld [vmem:[%s3 + $0x18] sm:$0xff]
      %v907 = vld [vmem:[%s3 + $0x20] sm:$0xff]
      %v908 = vld [vmem:[%s3 + $0x28] sm:$0xff]
      %v909 = vld [vmem:[%s3 + $0x30] sm:$0xff]
      %v910 = vld [vmem:[%s3 + $0x38] sm:$0xff]
      %v911 = vpack.c.bf16 %v898, %v897
      %v912 = vpack.c.bf16 %v900, %v899
      %v913 = vpack.c.bf16 %v902, %v901
      %v914 = vpack.c.bf16 %v904, %v903
      %v915 = vpack.c.bf16 %v906, %v905
      %v916 = vpack.c.bf16 %v908, %v907
      %v917 = vpack.c.bf16 %v910, %v909
      %v918 = vld [vmem:[%s4] sm:$0x1]
      %v920 = vperm.slane %v918, 0
      %v923 = vsel %vm745, %v911, 0
      %v926 = vsel %vm745, %v912, 0
      %v929 = vsel %vm745, %v913, 0
      %931 = vmatpush.bf16.msra.mxu0 0
      %932 = vmatpush.bf16.msra.mxu0 0
      %933 = vmatpush.bf16.msra.mxu0 0
      %934 = vmatpush.bf16.msra.mxu0 0
      %935 = vmatpush.bf16.msra.mxu0 %v917
      %936 = vmatpush.bf16.msra.mxu0 %v916
      %937 = vmatpush.bf16.msra.mxu0 %v915
      %938 = vmatpush.bf16.msra.mxu0 %v914
      %939 = vmatmul.bf16.gmra.mxu0 %v923
      %v940 = vpop.f32.mrf.mxu0
      %v941 = vadd.f32 %v920, %v940
      %v942 = vpop.f32.mrf.mxu0
      %v943 = vadd.f32 %v920, %v942
      %944 = vmatmul.bf16.gmra.mxu0 %v926
      %v945 = vpop.f32.mrf.mxu0
      %v946 = vadd.f32 %v920, %v945
      %v947 = vpop.f32.mrf.mxu0
      %v948 = vadd.f32 %v920, %v947
      %949 = vmatmul.bf16.gmra.mxu0 %v929
      %v950 = vpop.f32.mrf.mxu0
      %v951 = vadd.f32 %v920, %v950
      %v952 = vpop.f32.mrf.mxu0
      %v953 = vadd.f32 %v920, %v952
      %954 = vdwg.mxu0
      %v955 = vld [vmem:[%s5] sm:$0x1]
      %v956 = vld [vmem:[%s6] sm:$0x1]
      %957 = vadd.xlane.f32.xlu0 %v941
      %v958 = vpop.xlane.xlu0 %957
      %959 = vadd.xlane.f32.xlu0 %v943
      %v960 = vpop.xlane.xlu0 %959
      %961 = vadd.xlane.f32.xlu0 %v946
      %v962 = vpop.xlane.xlu0 %961
      %963 = vadd.xlane.f32.xlu0 %v948
      %v964 = vpop.xlane.xlu0 %963
      %965 = vadd.xlane.f32.xlu0 %v951
      %v966 = vpop.xlane.xlu0 %965
      %967 = vadd.xlane.f32.xlu0 %v953
      %v968 = vpop.xlane.xlu0 %967
      %v969 = vrcp.pop 128.0
      %v970 = vmul.f32 128.0, %v969
      %v971 = vsub.f32 1.0, %v970
      %v972 = vmul.f32 %v969, %v971
      %v973 = vadd.f32 %v969, %v972
      %vm974 = vweird.f32 %v969
      %v975 = vsel %vm974, %v969, %v973
      %v976 = vmul.f32 %v958, %v975
      %v977 = vmul.f32 %v960, %v975
      %v978 = vmul.f32 %v962, %v975
      %v979 = vmul.f32 %v964, %v975
      %v980 = vmul.f32 %v966, %v975
      %v981 = vmul.f32 %v968, %v975
      %v982 = vsub.f32 %v941, %v976
      %v983 = vsub.f32 %v943, %v977
      %v984 = vsub.f32 %v946, %v978
      %v985 = vsub.f32 %v948, %v979
      %v986 = vsub.f32 %v951, %v980
      %v987 = vsub.f32 %v953, %v981
      %v988 = vmul.f32 %v982, %v982
      %v989 = vmul.f32 %v983, %v983
      %v990 = vmul.f32 %v984, %v984
      %v991 = vmul.f32 %v985, %v985
      %v992 = vmul.f32 %v986, %v986
      %v993 = vmul.f32 %v987, %v987
      %994 = vadd.xlane.f32.xlu0 %v988
      %v995 = vpop.xlane.xlu0 %994
      %996 = vadd.xlane.f32.xlu0 %v989
      %v997 = vpop.xlane.xlu0 %996
      %998 = vadd.xlane.f32.xlu0 %v990
      %v999 = vpop.xlane.xlu0 %998
      %1000 = vadd.xlane.f32.xlu0 %v991
      %v1001 = vpop.xlane.xlu0 %1000
      %1002 = vadd.xlane.f32.xlu0 %v992
      %v1003 = vpop.xlane.xlu0 %1002
      %1004 = vadd.xlane.f32.xlu0 %v993
      %v1005 = vpop.xlane.xlu0 %1004
      %v1006 = vmul.f32 %v995, %v975
      %v1007 = vmul.f32 %v997, %v975
      %v1008 = vmul.f32 %v999, %v975
      %v1009 = vmul.f32 %v1001, %v975
      %v1010 = vmul.f32 %v1003, %v975
      %v1011 = vmul.f32 %v1005, %v975
      %v1012 = vadd.f32 %v1006, 1e-05
      %v1013 = vadd.f32 %v1007, 1e-05
      %v1014 = vadd.f32 %v1008, 1e-05
      %v1015 = vadd.f32 %v1009, 1e-05
      %v1016 = vadd.f32 %v1010, 1e-05
      %v1017 = vadd.f32 %v1011, 1e-05
      %v1018 = vrsqrt.pop %v1012
      %v1019 = vmul.f32 %v1018, %v1012
      %v1020 = vmul.f32 %v1019, %v1018
      %v1021 = vmul.f32 0.5, %v1020
      %v1022 = vsub.f32 1.5, %v1021
      %v1023 = vmul.f32 %v1018, %v1022
      %vm1024 = vweird.f32 %v1012
      %vm1025 = vweird.f32 %v1018
      %vm1026 = vmor %vm1024, %vm1025
      %v1027 = vsel %vm1026, %v1018, %v1023
      %v1028 = vrsqrt.pop %v1013
      %v1029 = vmul.f32 %v1028, %v1013
      %v1030 = vmul.f32 %v1029, %v1028
      %v1031 = vmul.f32 0.5, %v1030
      %v1032 = vsub.f32 1.5, %v1031
      %v1033 = vmul.f32 %v1028, %v1032
      %vm1034 = vweird.f32 %v1013
      %vm1035 = vweird.f32 %v1028
      %vm1036 = vmor %vm1034, %vm1035
      %v1037 = vsel %vm1036, %v1028, %v1033
      %v1038 = vrsqrt.pop %v1014
      %v1039 = vmul.f32 %v1038, %v1014
      %v1040 = vmul.f32 %v1039, %v1038
      %v1041 = vmul.f32 0.5, %v1040
      %v1042 = vsub.f32 1.5, %v1041
      %v1043 = vmul.f32 %v1038, %v1042
      %vm1044 = vweird.f32 %v1014
      %vm1045 = vweird.f32 %v1038
      %vm1046 = vmor %vm1044, %vm1045
      %v1047 = vsel %vm1046, %v1038, %v1043
      %v1048 = vrsqrt.pop %v1015
      %v1049 = vmul.f32 %v1048, %v1015
      %v1050 = vmul.f32 %v1049, %v1048
      %v1051 = vmul.f32 0.5, %v1050
      %v1052 = vsub.f32 1.5, %v1051
      %v1053 = vmul.f32 %v1048, %v1052
      %vm1054 = vweird.f32 %v1015
      %vm1055 = vweird.f32 %v1048
      %vm1056 = vmor %vm1054, %vm1055
      %v1057 = vsel %vm1056, %v1048, %v1053
      %v1058 = vrsqrt.pop %v1016
      %v1059 = vmul.f32 %v1058, %v1016
      %v1060 = vmul.f32 %v1059, %v1058
      %v1061 = vmul.f32 0.5, %v1060
      %v1062 = vsub.f32 1.5, %v1061
      %v1063 = vmul.f32 %v1058, %v1062
      %vm1064 = vweird.f32 %v1016
      %vm1065 = vweird.f32 %v1058
      %vm1066 = vmor %vm1064, %vm1065
      %v1067 = vsel %vm1066, %v1058, %v1063
      %v1068 = vrsqrt.pop %v1017
      %v1069 = vmul.f32 %v1068, %v1017
      %v1070 = vmul.f32 %v1069, %v1068
      %v1071 = vmul.f32 0.5, %v1070
      %v1072 = vsub.f32 1.5, %v1071
      %v1073 = vmul.f32 %v1068, %v1072
      %vm1074 = vweird.f32 %v1017
      %vm1075 = vweird.f32 %v1068
      %vm1076 = vmor %vm1074, %vm1075
      %v1077 = vsel %vm1076, %v1068, %v1073
      %v1078 = vmul.f32 %v982, %v1027
      %v1079 = vmul.f32 %v983, %v1037
      %v1080 = vmul.f32 %v984, %v1047
      %v1081 = vmul.f32 %v985, %v1057
      %v1082 = vmul.f32 %v986, %v1067
      %v1083 = vmul.f32 %v987, %v1077
      %v1085 = vperm.slane %v955, 0
      %v1087 = vmul.f32 %v1078, %v1085
      %v1088 = vmul.f32 %v1079, %v1085
      %v1089 = vmul.f32 %v1080, %v1085
      %v1090 = vmul.f32 %v1081, %v1085
      %v1091 = vmul.f32 %v1082, %v1085
      %v1092 = vmul.f32 %v1083, %v1085
      %v1094 = vperm.slane %v956, 0
      %v1096 = vadd.f32 %v1087, %v1094
      %v1097 = vadd.f32 %v1088, %v1094
      %v1098 = vadd.f32 %v1089, %v1094
      %v1099 = vadd.f32 %v1090, %v1094
      %v1100 = vadd.f32 %v1091, %v1094
      %v1101 = vadd.f32 %v1092, %v1094
      %v1102 = vld [vmem:[%s7] sm:$0x1]
      %v1103 = vld [vmem:[%s8] sm:$0x1]
      %v1104 = vadd.f32 %v1102, %v1103
      %1105 = vst [vmem:[#allocation2] sm:$0x1] %v1104
      %1106 = vst [vmem:[#allocation2 + $0x18] sm:$0x1] %v1104
      %1107 = vst [vmem:[#allocation2 + $0x30] sm:$0x1] %v1104
      %v1108 = vld [vmem:[%s8 + $0x1] sm:$0xff]
      %v1109 = vld [vmem:[%s8 + $0x9] sm:$0xff]
      %v1110 = vadd.f32 %v1096, %v1108
      %v1111 = vadd.f32 %v1097, %v1109
      %v1112 = vadd.f32 %v1098, %v1108
      %v1113 = vadd.f32 %v1099, %v1109
      %v1114 = vadd.f32 %v1100, %v1108
      %v1115 = vadd.f32 %v1101, %v1109
      %1116 = vst [vmem:[#allocation2 + $0x1] sm:$0xff] %v1110
      %1117 = vst [vmem:[#allocation2 + $0x9] sm:$0xff] %v1111
      %1118 = vst [vmem:[#allocation2 + $0x19] sm:$0xff] %v1112
      %1119 = vst [vmem:[#allocation2 + $0x21] sm:$0xff] %v1113
      %1120 = vst [vmem:[#allocation2 + $0x31] sm:$0xff] %v1114
      %1121 = vst [vmem:[#allocation2 + $0x39] sm:$0xff] %v1115
      %1122 = vst [vmem:[#allocation2 + $0x11] sm:$0x7f] 0.0
      %1123 = vst [vmem:[#allocation2 + $0x29] sm:$0x7f] 0.0
      %1124 = vst [vmem:[#allocation2 + $0x41] sm:$0x7f] 0.0
      %v1125 = vld [vmem:[#allocation2] sm:$0xff]
      %v1126 = vld [vmem:[#allocation2 + $0x8] sm:$0xff]
      %v1127 = vld [vmem:[#allocation2 + $0x10] sm:$0xff]
      %v1128 = vld [vmem:[#allocation2 + $0x18] sm:$0xff]
      %v1129 = vld [vmem:[#allocation2 + $0x20] sm:$0xff]
      %v1130 = vld [vmem:[#allocation2 + $0x28] sm:$0xff]
      %v1131 = vld [vmem:[#allocation2 + $0x30] sm:$0xff]
      %v1132 = vld [vmem:[#allocation2 + $0x38] sm:$0xff]
      %v1133 = vld [vmem:[#allocation2 + $0x40] sm:$0xff]
      %v1134 = vlaneseq
      %v1135 = vand.u32 %v1134, 127
      %vm1136 = vcmp.lt.s32.totalorder %v1135, 17
      %v1137 = vld [vmem:[%s9] sm:$0x1]
      %v1138 = vld [vmem:[%s10] sm:$0x1]
      %1139 = vadd.xlane.f32.xlu0 %v1125
      %v1140 = vpop.xlane.xlu0 %1139
      %1141 = vadd.xlane.f32.xlu0 %v1126
      %v1142 = vpop.xlane.xlu0 %1141
      %1143 = vadd.xlane.f32.xlu0 %v1127
      %v1144 = vpop.xlane.xlu0 %1143
      %1145 = vadd.xlane.f32.xlu0 %v1128
      %v1146 = vpop.xlane.xlu0 %1145
      %1147 = vadd.xlane.f32.xlu0 %v1129
      %v1148 = vpop.xlane.xlu0 %1147
      %1149 = vadd.xlane.f32.xlu0 %v1130
      %v1150 = vpop.xlane.xlu0 %1149
      %1151 = vadd.xlane.f32.xlu0 %v1131
      %v1152 = vpop.xlane.xlu0 %1151
      %1153 = vadd.xlane.f32.xlu0 %v1132
      %v1154 = vpop.xlane.xlu0 %1153
      %1155 = vadd.xlane.f32.xlu0 %v1133
      %v1156 = vpop.xlane.xlu0 %1155
      %v1157 = vmul.f32 %v1140, %v975
      %v1158 = vmul.f32 %v1142, %v975
      %v1159 = vmul.f32 %v1144, %v975
      %v1160 = vmul.f32 %v1146, %v975
      %v1161 = vmul.f32 %v1148, %v975
      %v1162 = vmul.f32 %v1150, %v975
      %v1163 = vmul.f32 %v1152, %v975
      %v1164 = vmul.f32 %v1154, %v975
      %v1165 = vmul.f32 %v1156, %v975
      %v1166 = vsub.f32 %v1125, %v1157
      %v1167 = vsub.f32 %v1126, %v1158
      %v1168 = vsub.f32 %v1127, %v1159
      %v1169 = vsub.f32 %v1128, %v1160
      %v1170 = vsub.f32 %v1129, %v1161
      %v1171 = vsub.f32 %v1130, %v1162
      %v1172 = vsub.f32 %v1131, %v1163
      %v1173 = vsub.f32 %v1132, %v1164
      %v1174 = vsub.f32 %v1133, %v1165
      %v1175 = vmul.f32 %v1166, %v1166
      %v1176 = vmul.f32 %v1167, %v1167
      %v1177 = vmul.f32 %v1168, %v1168
      %v1178 = vmul.f32 %v1169, %v1169
      %v1179 = vmul.f32 %v1170, %v1170
      %v1180 = vmul.f32 %v1171, %v1171
      %v1181 = vmul.f32 %v1172, %v1172
      %v1182 = vmul.f32 %v1173, %v1173
      %v1183 = vmul.f32 %v1174, %v1174
      %1184 = vadd.xlane.f32.xlu0 %v1175
      %v1185 = vpop.xlane.xlu0 %1184
      %1186 = vadd.xlane.f32.xlu0 %v1176
      %v1187 = vpop.xlane.xlu0 %1186
      %1188 = vadd.xlane.f32.xlu0 %v1177
      %v1189 = vpop.xlane.xlu0 %1188
      %1190 = vadd.xlane.f32.xlu0 %v1178
      %v1191 = vpop.xlane.xlu0 %1190
      %1192 = vadd.xlane.f32.xlu0 %v1179
      %v1193 = vpop.xlane.xlu0 %1192
      %1194 = vadd.xlane.f32.xlu0 %v1180
      %v1195 = vpop.xlane.xlu0 %1194
      %1196 = vadd.xlane.f32.xlu0 %v1181
      %v1197 = vpop.xlane.xlu0 %1196
      %1198 = vadd.xlane.f32.xlu0 %v1182
      %v1199 = vpop.xlane.xlu0 %1198
      %1200 = vadd.xlane.f32.xlu0 %v1183
      %v1201 = vpop.xlane.xlu0 %1200
      %v1202 = vmul.f32 %v1185, %v975
      %v1203 = vmul.f32 %v1187, %v975
      %v1204 = vmul.f32 %v1189, %v975
      %v1205 = vmul.f32 %v1191, %v975
      %v1206 = vmul.f32 %v1193, %v975
      %v1207 = vmul.f32 %v1195, %v975
      %v1208 = vmul.f32 %v1197, %v975
      %v1209 = vmul.f32 %v1199, %v975
      %v1210 = vmul.f32 %v1201, %v975
      %v1211 = vadd.f32 %v1202, 1e-05
      %v1212 = vadd.f32 %v1203, 1e-05
      %v1213 = vadd.f32 %v1204, 1e-05
      %v1214 = vadd.f32 %v1205, 1e-05
      %v1215 = vadd.f32 %v1206, 1e-05
      %v1216 = vadd.f32 %v1207, 1e-05
      %v1217 = vadd.f32 %v1208, 1e-05
      %v1218 = vadd.f32 %v1209, 1e-05
      %v1219 = vadd.f32 %v1210, 1e-05
      %v1220 = vrsqrt.pop %v1211
      %v1221 = vmul.f32 %v1220, %v1211
      %v1222 = vmul.f32 %v1221, %v1220
      %v1223 = vmul.f32 0.5, %v1222
      %v1224 = vsub.f32 1.5, %v1223
      %v1225 = vmul.f32 %v1220, %v1224
      %vm1226 = vweird.f32 %v1211
      %vm1227 = vweird.f32 %v1220
      %vm1228 = vmor %vm1226, %vm1227
      %v1229 = vsel %vm1228, %v1220, %v1225
      %v1230 = vrsqrt.pop %v1212
      %v1231 = vmul.f32 %v1230, %v1212
      %v1232 = vmul.f32 %v1231, %v1230
      %v1233 = vmul.f32 0.5, %v1232
      %v1234 = vsub.f32 1.5, %v1233
      %v1235 = vmul.f32 %v1230, %v1234
      %vm1236 = vweird.f32 %v1212
      %vm1237 = vweird.f32 %v1230
      %vm1238 = vmor %vm1236, %vm1237
      %v1239 = vsel %vm1238, %v1230, %v1235
      %v1240 = vrsqrt.pop %v1213
      %v1241 = vmul.f32 %v1240, %v1213
      %v1242 = vmul.f32 %v1241, %v1240
      %v1243 = vmul.f32 0.5, %v1242
      %v1244 = vsub.f32 1.5, %v1243
      %v1245 = vmul.f32 %v1240, %v1244
      %vm1246 = vweird.f32 %v1213
      %vm1247 = vweird.f32 %v1240
      %vm1248 = vmor %vm1246, %vm1247
      %v1249 = vsel %vm1248, %v1240, %v1245
      %v1250 = vrsqrt.pop %v1214
      %v1251 = vmul.f32 %v1250, %v1214
      %v1252 = vmul.f32 %v1251, %v1250
      %v1253 = vmul.f32 0.5, %v1252
      %v1254 = vsub.f32 1.5, %v1253
      %v1255 = vmul.f32 %v1250, %v1254
      %vm1256 = vweird.f32 %v1214
      %vm1257 = vweird.f32 %v1250
      %vm1258 = vmor %vm1256, %vm1257
      %v1259 = vsel %vm1258, %v1250, %v1255
      %v1260 = vrsqrt.pop %v1215
      %v1261 = vmul.f32 %v1260, %v1215
      %v1262 = vmul.f32 %v1261, %v1260
      %v1263 = vmul.f32 0.5, %v1262
      %v1264 = vsub.f32 1.5, %v1263
      %v1265 = vmul.f32 %v1260, %v1264
      %vm1266 = vweird.f32 %v1215
      %vm1267 = vweird.f32 %v1260
      %vm1268 = vmor %vm1266, %vm1267
      %v1269 = vsel %vm1268, %v1260, %v1265
      %v1270 = vrsqrt.pop %v1216
      %v1271 = vmul.f32 %v1270, %v1216
      %v1272 = vmul.f32 %v1271, %v1270
      %v1273 = vmul.f32 0.5, %v1272
      %v1274 = vsub.f32 1.5, %v1273
      %v1275 = vmul.f32 %v1270, %v1274
      %vm1276 = vweird.f32 %v1216
      %vm1277 = vweird.f32 %v1270
      %vm1278 = vmor %vm1276, %vm1277
      %v1279 = vsel %vm1278, %v1270, %v1275
      %v1280 = vrsqrt.pop %v1217
      %v1281 = vmul.f32 %v1280, %v1217
      %v1282 = vmul.f32 %v1281, %v1280
      %v1283 = vmul.f32 0.5, %v1282
      %v1284 = vsub.f32 1.5, %v1283
      %v1285 = vmul.f32 %v1280, %v1284
      %vm1286 = vweird.f32 %v1217
      %vm1287 = vweird.f32 %v1280
      %vm1288 = vmor %vm1286, %vm1287
      %v1289 = vsel %vm1288, %v1280, %v1285
      %v1290 = vrsqrt.pop %v1218
      %v1291 = vmul.f32 %v1290, %v1218
      %v1292 = vmul.f32 %v1291, %v1290
      %v1293 = vmul.f32 0.5, %v1292
      %v1294 = vsub.f32 1.5, %v1293
      %v1295 = vmul.f32 %v1290, %v1294
      %vm1296 = vweird.f32 %v1218
      %vm1297 = vweird.f32 %v1290
      %vm1298 = vmor %vm1296, %vm1297
      %v1299 = vsel %vm1298, %v1290, %v1295
      %v1300 = vrsqrt.pop %v1219
      %v1301 = vmul.f32 %v1300, %v1219
      %v1302 = vmul.f32 %v1301, %v1300
      %v1303 = vmul.f32 0.5, %v1302
      %v1304 = vsub.f32 1.5, %v1303
      %v1305 = vmul.f32 %v1300, %v1304
      %vm1306 = vweird.f32 %v1219
      %vm1307 = vweird.f32 %v1300
      %vm1308 = vmor %vm1306, %vm1307
      %v1309 = vsel %vm1308, %v1300, %v1305
      %v1310 = vmul.f32 %v1166, %v1229
      %v1311 = vmul.f32 %v1167, %v1239
      %v1312 = vmul.f32 %v1168, %v1249
      %v1313 = vmul.f32 %v1169, %v1259
      %v1314 = vmul.f32 %v1170, %v1269
      %v1315 = vmul.f32 %v1171, %v1279
      %v1316 = vmul.f32 %v1172, %v1289
      %v1317 = vmul.f32 %v1173, %v1299
      %v1318 = vmul.f32 %v1174, %v1309
      %v1320 = vperm.slane %v1137, 0
      %v1322 = vmul.f32 %v1310, %v1320
      %v1323 = vmul.f32 %v1311, %v1320
      %v1324 = vmul.f32 %v1312, %v1320
      %v1325 = vmul.f32 %v1313, %v1320
      %v1326 = vmul.f32 %v1314, %v1320
      %v1327 = vmul.f32 %v1315, %v1320
      %v1328 = vmul.f32 %v1316, %v1320
      %v1329 = vmul.f32 %v1317, %v1320
      %v1330 = vmul.f32 %v1318, %v1320
      %v1332 = vperm.slane %v1138, 0
      %v1334 = vadd.f32 %v1322, %v1332
      %v1335 = vadd.f32 %v1323, %v1332
      %v1336 = vadd.f32 %v1324, %v1332
      %v1337 = vadd.f32 %v1325, %v1332
      %v1338 = vadd.f32 %v1326, %v1332
      %v1339 = vadd.f32 %v1327, %v1332
      %v1340 = vadd.f32 %v1328, %v1332
      %v1341 = vadd.f32 %v1329, %v1332
      %v1342 = vadd.f32 %v1330, %v1332
      %v1343 = vld [vmem:[%s11] sm:$0xff]
      %v1344 = vld [vmem:[%s11 + $0x8] sm:$0xff]
      %v1345 = vld [vmem:[%s11 + $0x10] sm:$0xff]
      %v1346 = vld [vmem:[%s11 + $0x18] sm:$0xff]
      %v1347 = vld [vmem:[%s11 + $0x20] sm:$0xff]
      %v1348 = vld [vmem:[%s11 + $0x28] sm:$0xff]
      %v1349 = vld [vmem:[%s11 + $0x30] sm:$0xff]
      %v1350 = vld [vmem:[%s11 + $0x38] sm:$0xff]
      %v1351 = vld [vmem:[%s11 + $0x40] sm:$0xff]
      %v1352 = vld [vmem:[%s11 + $0x48] sm:$0xff]
      %v1353 = vld [vmem:[%s11 + $0x50] sm:$0xff]
      %v1354 = vld [vmem:[%s11 + $0x58] sm:$0xff]
      %v1355 = vld [vmem:[%s11 + $0x60] sm:$0xff]
      %v1356 = vld [vmem:[%s11 + $0x68] sm:$0xff]
      %v1357 = vld [vmem:[%s11 + $0x70] sm:$0xff]
      %v1358 = vld [vmem:[%s11 + $0x78] sm:$0xff]
      %v1359 = vld [vmem:[%s11 + $0x80] sm:$0xff]
      %v1360 = vld [vmem:[%s11 + $0x88] sm:$0xff]
      %v1361 = vld [vmem:[%s11 + $0x90] sm:$0xff]
      %v1362 = vld [vmem:[%s11 + $0x98] sm:$0xff]
      %v1363 = vld [vmem:[%s11 + $0xa0] sm:$0xff]
      %v1364 = vld [vmem:[%s11 + $0xa8] sm:$0xff]
      %v1365 = vld [vmem:[%s11 + $0xb0] sm:$0xff]
      %v1366 = vld [vmem:[%s11 + $0xb8] sm:$0xff]
      %v1367 = vld [vmem:[%s11 + $0xc0] sm:$0xff]
      %v1368 = vld [vmem:[%s11 + $0xc8] sm:$0xff]
      %v1369 = vld [vmem:[%s11 + $0xd0] sm:$0xff]
      %v1370 = vld [vmem:[%s11 + $0xd8] sm:$0xff]
      %v1371 = vld [vmem:[%s11 + $0xe0] sm:$0xff]
      %v1372 = vld [vmem:[%s11 + $0xe8] sm:$0xff]
      %v1373 = vld [vmem:[%s11 + $0xf0] sm:$0xff]
      %v1374 = vld [vmem:[%s11 + $0xf8] sm:$0xff]
      %v1375 = vld [vmem:[%s11 + $0x100] sm:$0xff]
      %v1376 = vld [vmem:[%s11 + $0x108] sm:$0xff]
      %v1377 = vld [vmem:[%s11 + $0x110] sm:$0xff]
      %v1378 = vld [vmem:[%s11 + $0x118] sm:$0xff]
      %v1379 = vld [vmem:[%s11 + $0x120] sm:$0xff]
      %v1380 = vld [vmem:[%s11 + $0x128] sm:$0xff]
      %v1381 = vld [vmem:[%s11 + $0x130] sm:$0xff]
      %v1382 = vld [vmem:[%s11 + $0x138] sm:$0xff]
      %v1383 = vld [vmem:[%s11 + $0x140] sm:$0xff]
      %v1384 = vld [vmem:[%s11 + $0x148] sm:$0xff]
      %v1385 = vld [vmem:[%s11 + $0x150] sm:$0xff]
      %v1386 = vld [vmem:[%s11 + $0x158] sm:$0xff]
      %v1387 = vld [vmem:[%s11 + $0x160] sm:$0xff]
      %v1388 = vld [vmem:[%s11 + $0x168] sm:$0xff]
      %v1389 = vld [vmem:[%s11 + $0x170] sm:$0xff]
      %v1390 = vld [vmem:[%s11 + $0x178] sm:$0xff]
      %v1391 = vpack.c.bf16 %v1335, %v1334
      %v1392 = vpack.c.bf16 %v1337, %v1336
      %v1393 = vpack.c.bf16 %v1339, %v1338
      %v1394 = vpack.c.bf16 %v1341, %v1340
      %v1395 = vpack.c.bf16 %v1342, %v1342
      %v1396 = vpack.c.bf16 %v1346, %v1343
      %v1397 = vpack.c.bf16 %v1347, %v1344
      %v1398 = vpack.c.bf16 %v1348, %v1345
      %v1399 = vpack.c.bf16 %v1352, %v1349
      %v1400 = vpack.c.bf16 %v1353, %v1350
      %v1401 = vpack.c.bf16 %v1354, %v1351
      %v1402 = vpack.c.bf16 %v1358, %v1355
      %v1403 = vpack.c.bf16 %v1359, %v1356
      %v1404 = vpack.c.bf16 %v1360, %v1357
      %v1405 = vpack.c.bf16 %v1364, %v1361
      %v1406 = vpack.c.bf16 %v1365, %v1362
      %v1407 = vpack.c.bf16 %v1366, %v1363
      %v1408 = vpack.c.bf16 %v1370, %v1367
      %v1409 = vpack.c.bf16 %v1371, %v1368
      %v1410 = vpack.c.bf16 %v1372, %v1369
      %v1411 = vpack.c.bf16 %v1376, %v1373
      %v1412 = vpack.c.bf16 %v1377, %v1374
      %v1413 = vpack.c.bf16 %v1378, %v1375
      %v1414 = vpack.c.bf16 %v1382, %v1379
      %v1415 = vpack.c.bf16 %v1383, %v1380
      %v1416 = vpack.c.bf16 %v1384, %v1381
      %v1417 = vpack.c.bf16 %v1388, %v1385
      %v1418 = vpack.c.bf16 %v1389, %v1386
      %v1419 = vpack.c.bf16 %v1390, %v1387
      %1420 = vmatpush.bf16.msra.mxu0 %v1417
      %1421 = vmatpush.bf16.msra.mxu0 %v1414
      %1422 = vmatpush.bf16.msra.mxu0 %v1411
      %1423 = vmatpush.bf16.msra.mxu0 %v1408
      %1424 = vmatpush.bf16.msra.mxu0 %v1405
      %1425 = vmatpush.bf16.msra.mxu0 %v1402
      %1426 = vmatpush.bf16.msra.mxu0 %v1399
      %1427 = vmatpush.bf16.msra.mxu0 %v1396
      %1428 = vmatmul.bf16.gmra.mxu0 %v1391
      %v1429 = vpop.f32.mrf.mxu0
      %v1430 = vadd.f32 0.0, %v1429
      %v1431 = vpop.f32.mrf.mxu0
      %v1432 = vadd.f32 0.0, %v1431
      %1433 = vmatmul.bf16.gmra.mxu0 %v1392
      %v1434 = vpop.f32.mrf.mxu0
      %v1435 = vadd.f32 0.0, %v1434
      %v1436 = vpop.f32.mrf.mxu0
      %v1437 = vadd.f32 0.0, %v1436
      %1438 = vmatmul.bf16.gmra.mxu0 %v1393
      %v1439 = vpop.f32.mrf.mxu0
      %v1440 = vadd.f32 0.0, %v1439
      %v1441 = vpop.f32.mrf.mxu0
      %v1442 = vadd.f32 0.0, %v1441
      %1443 = vmatmul.bf16.gmra.mxu0 %v1394
      %v1444 = vpop.f32.mrf.mxu0
      %v1445 = vadd.f32 0.0, %v1444
      %v1446 = vpop.f32.mrf.mxu0
      %v1447 = vadd.f32 0.0, %v1446
      %1448 = vmatmul.bf16.gmra.mxu0 %v1395
      %v1449 = vpop.f32.mrf.mxu0
      %v1450 = vadd.f32 0.0, %v1449
      %v1451 = vpop.f32.mrf.mxu0
      %1452 = vdwg.mxu0
      %1453 = vmatpush.bf16.msra.mxu0 %v1418
      %1454 = vmatpush.bf16.msra.mxu0 %v1415
      %1455 = vmatpush.bf16.msra.mxu0 %v1412
      %1456 = vmatpush.bf16.msra.mxu0 %v1409
      %1457 = vmatpush.bf16.msra.mxu0 %v1406
      %1458 = vmatpush.bf16.msra.mxu0 %v1403
      %1459 = vmatpush.bf16.msra.mxu0 %v1400
      %1460 = vmatpush.bf16.msra.mxu0 %v1397
      %1461 = vmatmul.bf16.gmra.mxu0 %v1391
      %v1462 = vpop.f32.mrf.mxu0
      %v1463 = vadd.f32 0.0, %v1462
      %v1464 = vpop.f32.mrf.mxu0
      %v1465 = vadd.f32 0.0, %v1464
      %1466 = vmatmul.bf16.gmra.mxu0 %v1392
      %v1467 = vpop.f32.mrf.mxu0
      %v1468 = vadd.f32 0.0, %v1467
      %v1469 = vpop.f32.mrf.mxu0
      %v1470 = vadd.f32 0.0, %v1469
      %1471 = vmatmul.bf16.gmra.mxu0 %v1393
      %v1472 = vpop.f32.mrf.mxu0
      %v1473 = vadd.f32 0.0, %v1472
      %v1474 = vpop.f32.mrf.mxu0
      %v1475 = vadd.f32 0.0, %v1474
      %1476 = vmatmul.bf16.gmra.mxu0 %v1394
      %v1477 = vpop.f32.mrf.mxu0
      %v1478 = vadd.f32 0.0, %v1477
      %v1479 = vpop.f32.mrf.mxu0
      %v1480 = vadd.f32 0.0, %v1479
      %1481 = vmatmul.bf16.gmra.mxu0 %v1395
      %v1482 = vpop.f32.mrf.mxu0
      %v1483 = vadd.f32 0.0, %v1482
      %v1484 = vpop.f32.mrf.mxu0
      %1485 = vdwg.mxu0
      %1486 = vmatpush.bf16.msra.mxu0 %v1419
      %1487 = vmatpush.bf16.msra.mxu0 %v1416
      %1488 = vmatpush.bf16.msra.mxu0 %v1413
      %1489 = vmatpush.bf16.msra.mxu0 %v1410
      %1490 = vmatpush.bf16.msra.mxu0 %v1407
      %1491 = vmatpush.bf16.msra.mxu0 %v1404
      %1492 = vmatpush.bf16.msra.mxu0 %v1401
      %1493 = vmatpush.bf16.msra.mxu0 %v1398
      %1494 = vmatmul.bf16.gmra.mxu0 %v1391
      %v1495 = vpop.f32.mrf.mxu0
      %v1496 = vadd.f32 0.0, %v1495
      %v1497 = vpop.f32.mrf.mxu0
      %v1498 = vadd.f32 0.0, %v1497
      %1499 = vmatmul.bf16.gmra.mxu0 %v1392
      %v1500 = vpop.f32.mrf.mxu0
      %v1501 = vadd.f32 0.0, %v1500
      %v1502 = vpop.f32.mrf.mxu0
      %v1503 = vadd.f32 0.0, %v1502
      %1504 = vmatmul.bf16.gmra.mxu0 %v1393
      %v1505 = vpop.f32.mrf.mxu0
      %v1506 = vadd.f32 0.0, %v1505
      %v1507 = vpop.f32.mrf.mxu0
      %v1508 = vadd.f32 0.0, %v1507
      %1509 = vmatmul.bf16.gmra.mxu0 %v1394
      %v1510 = vpop.f32.mrf.mxu0
      %v1511 = vadd.f32 0.0, %v1510
      %v1512 = vpop.f32.mrf.mxu0
      %v1513 = vadd.f32 0.0, %v1512
      %1514 = vmatmul.bf16.gmra.mxu0 %v1395
      %v1515 = vpop.f32.mrf.mxu0
      %v1516 = vadd.f32 0.0, %v1515
      %v1517 = vpop.f32.mrf.mxu0
      %1518 = vdwg.mxu0
      %v1519 = vpack.c.bf16 %v1430, %v1430
      %v1520 = vpack.c.bf16 %v1432, %v1432
      %v1521 = vpack.c.bf16 %v1435, %v1435
      %v1522 = vpack.c.bf16 %v1437, %v1437
      %v1523 = vpack.c.bf16 %v1440, %v1440
      %v1524 = vpack.c.bf16 %v1442, %v1442
      %v1525 = vpack.c.bf16 %v1445, %v1445
      %v1526 = vpack.c.bf16 %v1447, %v1447
      %v1527 = vpack.c.bf16 %v1450, %v1450
      %v1528 = vpack.c.bf16 %v1463, %v1463
      %v1529 = vpack.c.bf16 %v1465, %v1465
      %v1530 = vpack.c.bf16 %v1468, %v1468
      %v1531 = vpack.c.bf16 %v1470, %v1470
      %v1532 = vpack.c.bf16 %v1473, %v1473
      %v1533 = vpack.c.bf16 %v1475, %v1475
      %v1534 = vpack.c.bf16 %v1478, %v1478
      %v1535 = vpack.c.bf16 %v1480, %v1480
      %v1536 = vpack.c.bf16 %v1483, %v1483
      %v1540 = vunpack.c.l.b16 %v1519
      %v1541 = vunpack.c.l.b16 %v1520
      %v1542 = vunpack.c.l.b16 %v1521
      %v1543 = vpack.c.b16 %v1541, %v1540
      %v1544 = vpack.c.b16 %v1542, %v1542
      %v1548 = vunpack.c.l.b16 %v1528
      %v1549 = vunpack.c.l.b16 %v1529
      %v1550 = vunpack.c.l.b16 %v1530
      %v1551 = vpack.c.b16 %v1549, %v1548
      %v1552 = vpack.c.b16 %v1550, %v1550
      %v1554 = vsel %vm745, %v1543, 0
      %v1557 = vsel %vm745, %v1544, 0
      %v1560 = vsel %vm745, %v1551, 0
      %v1563 = vsel %vm745, %v1552, 0
      %1565 = vmatpush.bf16.xpose.msra.mxu0 0
      %1566 = vmatpush.bf16.xpose.msra.mxu0 0
      %1567 = vmatpush.bf16.xpose.msra.mxu0 0
      %1568 = vmatpush.bf16.xpose.msra.mxu0 0
      %1569 = vmatpush.bf16.xpose.msra.mxu0 0
      %1570 = vmatpush.bf16.xpose.msra.mxu0 0
      %1571 = vmatpush.bf16.xpose.msra.mxu0 %v1563
      %1572 = vmatpush.bf16.xpose.msra.mxu0 %v1560
      %1573 = vmatmul.bf16.gmra.mxu0 %v1554
      %v1574 = vpop.f32.mrf.mxu0
      %v1575 = vadd.f32 0.0, %v1574
      %v1576 = vpop.f32.mrf.mxu0
      %v1577 = vadd.f32 0.0, %v1576
      %1578 = vmatmul.bf16.gmra.mxu0 %v1557
      %v1579 = vpop.f32.mrf.mxu0
      %v1580 = vadd.f32 0.0, %v1579
      %v1581 = vpop.f32.mrf.mxu0
      %1582 = vdwg.mxu0
      %v1586 = vunpack.c.l.b16 %v1522
      %v1587 = vunpack.c.l.b16 %v1523
      %v1588 = vunpack.c.l.b16 %v1524
      %v1589 = vpack.c.b16 %v1587, %v1586
      %v1590 = vpack.c.b16 %v1588, %v1588
      %v1594 = vunpack.c.l.b16 %v1531
      %v1595 = vunpack.c.l.b16 %v1532
      %v1596 = vunpack.c.l.b16 %v1533
      %v1597 = vpack.c.b16 %v1595, %v1594
      %v1598 = vpack.c.b16 %v1596, %v1596
      %v1600 = vsel %vm745, %v1589, 0
      %v1603 = vsel %vm745, %v1590, 0
      %v1606 = vsel %vm745, %v1597, 0
      %v1609 = vsel %vm745, %v1598, 0
      %1611 = vmatpush.bf16.xpose.msra.mxu0 0
      %1612 = vmatpush.bf16.xpose.msra.mxu0 0
      %1613 = vmatpush.bf16.xpose.msra.mxu0 0
      %1614 = vmatpush.bf16.xpose.msra.mxu0 0
      %1615 = vmatpush.bf16.xpose.msra.mxu0 0
      %1616 = vmatpush.bf16.xpose.msra.mxu0 0
      %1617 = vmatpush.bf16.xpose.msra.mxu0 %v1609
      %1618 = vmatpush.bf16.xpose.msra.mxu0 %v1606
      %1619 = vmatmul.bf16.gmra.mxu0 %v1600
      %v1620 = vpop.f32.mrf.mxu0
      %v1621 = vadd.f32 0.0, %v1620
      %v1622 = vpop.f32.mrf.mxu0
      %v1623 = vadd.f32 0.0, %v1622
      %1624 = vmatmul.bf16.gmra.mxu0 %v1603
      %v1625 = vpop.f32.mrf.mxu0
      %v1626 = vadd.f32 0.0, %v1625
      %v1627 = vpop.f32.mrf.mxu0
      %1628 = vdwg.mxu0
      %v1632 = vunpack.c.l.b16 %v1525
      %v1633 = vunpack.c.l.b16 %v1526
      %v1634 = vunpack.c.l.b16 %v1527
      %v1635 = vpack.c.b16 %v1633, %v1632
      %v1636 = vpack.c.b16 %v1634, %v1634
      %v1640 = vunpack.c.l.b16 %v1534
      %v1641 = vunpack.c.l.b16 %v1535
      %v1642 = vunpack.c.l.b16 %v1536
      %v1643 = vpack.c.b16 %v1641, %v1640
      %v1644 = vpack.c.b16 %v1642, %v1642
      %v1646 = vsel %vm745, %v1635, 0
      %v1649 = vsel %vm745, %v1636, 0
      %v1652 = vsel %vm745, %v1643, 0
      %v1655 = vsel %vm745, %v1644, 0
      %1657 = vmatpush.bf16.xpose.msra.mxu0 0
      %1658 = vmatpush.bf16.xpose.msra.mxu0 0
      %1659 = vmatpush.bf16.xpose.msra.mxu0 0
      %1660 = vmatpush.bf16.xpose.msra.mxu0 0
      %1661 = vmatpush.bf16.xpose.msra.mxu0 0
      %1662 = vmatpush.bf16.xpose.msra.mxu0 0
      %1663 = vmatpush.bf16.xpose.msra.mxu0 %v1655
      %1664 = vmatpush.bf16.xpose.msra.mxu0 %v1652
      %1665 = vmatmul.bf16.gmra.mxu0 %v1646
      %v1666 = vpop.f32.mrf.mxu0
      %v1667 = vadd.f32 0.0, %v1666
      %v1668 = vpop.f32.mrf.mxu0
      %v1669 = vadd.f32 0.0, %v1668
      %1670 = vmatmul.bf16.gmra.mxu0 %v1649
      %v1671 = vpop.f32.mrf.mxu0
      %v1672 = vadd.f32 0.0, %v1671
      %v1673 = vpop.f32.mrf.mxu0
      %1674 = vdwg.mxu0
      %v1675 = vmul.f32 %v1575, 0.125
      %v1676 = vmul.f32 %v1577, 0.125
      %v1677 = vmul.f32 %v1580, 0.125
      %v1678 = vmul.f32 %v1621, 0.125
      %v1679 = vmul.f32 %v1623, 0.125
      %v1680 = vmul.f32 %v1626, 0.125
      %v1681 = vmul.f32 %v1667, 0.125
      %v1682 = vmul.f32 %v1669, 0.125
      %v1683 = vmul.f32 %v1672, 0.125
      %v1684 = vsel %vm1136, 1, 0
      %vm1685 = vcmp.eq.s32.totalorder %v1684, 1
      %v1686 = vsel %vm1685, %v1675, -1e+30
      %v1687 = vsel %vm1685, %v1676, -1e+30
      %v1688 = vsel %vm1685, %v1677, -1e+30
      %v1689 = vsel %vm1685, %v1678, -1e+30
      %v1690 = vsel %vm1685, %v1679, -1e+30
      %v1691 = vsel %vm1685, %v1680, -1e+30
      %v1692 = vsel %vm1685, %v1681, -1e+30
      %v1693 = vsel %vm1685, %v1682, -1e+30
      %v1694 = vsel %vm1685, %v1683, -1e+30
      %vm1695 = vcmask 195584
      %v1696 = vsel %vm1695, %v1686, -inf
      %1697 = vmax.xlane.f32.xlu0 %v1696
      %v1698 = vpop.xlane.xlu0 %1697
      %v1699 = vsel %vm1695, %v1687, -inf
      %1700 = vmax.xlane.f32.xlu0 %v1699
      %v1701 = vpop.xlane.xlu0 %1700
      %v1702 = vsel %vm1695, %v1688, -inf
      %1703 = vmax.xlane.f32.xlu0 %v1702
      %v1704 = vpop.xlane.xlu0 %1703
      %v1705 = vsel %vm1695, %v1689, -inf
      %1706 = vmax.xlane.f32.xlu0 %v1705
      %v1707 = vpop.xlane.xlu0 %1706
      %v1708 = vsel %vm1695, %v1690, -inf
      %1709 = vmax.xlane.f32.xlu0 %v1708
      %v1710 = vpop.xlane.xlu0 %1709
      %v1711 = vsel %vm1695, %v1691, -inf
      %1712 = vmax.xlane.f32.xlu0 %v1711
      %v1713 = vpop.xlane.xlu0 %1712
      %v1714 = vsel %vm1695, %v1692, -inf
      %1715 = vmax.xlane.f32.xlu0 %v1714
      %v1716 = vpop.xlane.xlu0 %1715
      %v1717 = vsel %vm1695, %v1693, -inf
      %1718 = vmax.xlane.f32.xlu0 %v1717
      %v1719 = vpop.xlane.xlu0 %1718
      %v1720 = vsel %vm1695, %v1694, -inf
      %1721 = vmax.xlane.f32.xlu0 %v1720
      %v1722 = vpop.xlane.xlu0 %1721
      %v1723 = vsub.f32 %v1686, %v1698
      %v1724 = vsub.f32 %v1687, %v1701
      %v1725 = vsub.f32 %v1688, %v1704
      %v1726 = vsub.f32 %v1689, %v1707
      %v1727 = vsub.f32 %v1690, %v1710
      %v1728 = vsub.f32 %v1691, %v1713
      %v1729 = vsub.f32 %v1692, %v1716
      %v1730 = vsub.f32 %v1693, %v1719
      %v1731 = vsub.f32 %v1694, %v1722
      %v1732 = vmul.f32 %v1723, 1.442695
      %v1733 = vpow.pop %v1732
      %v1734 = vmul.f32 %v1724, 1.442695
      %v1735 = vpow.pop %v1734
      %v1736 = vmul.f32 %v1725, 1.442695
      %v1737 = vpow.pop %v1736
      %v1738 = vmul.f32 %v1726, 1.442695
      %v1739 = vpow.pop %v1738
      %v1740 = vmul.f32 %v1727, 1.442695
      %v1741 = vpow.pop %v1740
      %v1742 = vmul.f32 %v1728, 1.442695
      %v1743 = vpow.pop %v1742
      %v1744 = vmul.f32 %v1729, 1.442695
      %v1745 = vpow.pop %v1744
      %v1746 = vmul.f32 %v1730, 1.442695
      %v1747 = vpow.pop %v1746
      %v1748 = vmul.f32 %v1731, 1.442695
      %v1749 = vpow.pop %v1748
      %v1750 = vsel %vm1695, %v1733, 0.0
      %1751 = vadd.xlane.f32.xlu0 %v1750
      %v1752 = vpop.xlane.xlu0 %1751
      %v1753 = vsel %vm1695, %v1735, 0.0
      %1754 = vadd.xlane.f32.xlu0 %v1753
      %v1755 = vpop.xlane.xlu0 %1754
      %v1756 = vsel %vm1695, %v1737, 0.0
      %1757 = vadd.xlane.f32.xlu0 %v1756
      %v1758 = vpop.xlane.xlu0 %1757
      %v1759 = vsel %vm1695, %v1739, 0.0
      %1760 = vadd.xlane.f32.xlu0 %v1759
      %v1761 = vpop.xlane.xlu0 %1760
      %v1762 = vsel %vm1695, %v1741, 0.0
      %1763 = vadd.xlane.f32.xlu0 %v1762
      %v1764 = vpop.xlane.xlu0 %1763
      %v1765 = vsel %vm1695, %v1743, 0.0
      %1766 = vadd.xlane.f32.xlu0 %v1765
      %v1767 = vpop.xlane.xlu0 %1766
      %v1768 = vsel %vm1695, %v1745, 0.0
      %1769 = vadd.xlane.f32.xlu0 %v1768
      %v1770 = vpop.xlane.xlu0 %1769
      %v1771 = vsel %vm1695, %v1747, 0.0
      %1772 = vadd.xlane.f32.xlu0 %v1771
      %v1773 = vpop.xlane.xlu0 %1772
      %v1774 = vsel %vm1695, %v1749, 0.0
      %1775 = vadd.xlane.f32.xlu0 %v1774
      %v1776 = vpop.xlane.xlu0 %1775
      %v1777 = vrcp.pop %v1752
      %v1778 = vmul.f32 %v1752, %v1777
      %v1779 = vsub.f32 1.0, %v1778
      %v1780 = vmul.f32 %v1777, %v1779
      %v1781 = vadd.f32 %v1777, %v1780
      %vm1782 = vweird.f32 %v1752
      %vm1783 = vweird.f32 %v1777
      %vm1784 = vmor %vm1782, %vm1783
      %v1785 = vsel %vm1784, %v1777, %v1781
      %v1786 = vand.u32 2147483647, %v1752
      %vm1787 = vcmp.eq.f32.partialorder %v1786, 8.507059e+37
      %v1788 = vand.u32 %v1752, 2147483648
      %v1789 = vor.u32 1.1754944e-38, %v1788
      %v1790 = vsel %vm1787, %v1789, %v1785
      %v1791 = vmul.f32 %v1733, %v1790
      %v1792 = vrcp.pop %v1755
      %v1793 = vmul.f32 %v1755, %v1792
      %v1794 = vsub.f32 1.0, %v1793
      %v1795 = vmul.f32 %v1792, %v1794
      %v1796 = vadd.f32 %v1792, %v1795
      %vm1797 = vweird.f32 %v1755
      %vm1798 = vweird.f32 %v1792
      %vm1799 = vmor %vm1797, %vm1798
      %v1800 = vsel %vm1799, %v1792, %v1796
      %v1801 = vand.u32 2147483647, %v1755
      %vm1802 = vcmp.eq.f32.partialorder %v1801, 8.507059e+37
      %v1803 = vand.u32 %v1755, 2147483648
      %v1804 = vor.u32 1.1754944e-38, %v1803
      %v1805 = vsel %vm1802, %v1804, %v1800
      %v1806 = vmul.f32 %v1735, %v1805
      %v1807 = vrcp.pop %v1758
      %v1808 = vmul.f32 %v1758, %v1807
      %v1809 = vsub.f32 1.0, %v1808
      %v1810 = vmul.f32 %v1807, %v1809
      %v1811 = vadd.f32 %v1807, %v1810
      %vm1812 = vweird.f32 %v1758
      %vm1813 = vweird.f32 %v1807
      %vm1814 = vmor %vm1812, %vm1813
      %v1815 = vsel %vm1814, %v1807, %v1811
      %v1816 = vand.u32 2147483647, %v1758
      %vm1817 = vcmp.eq.f32.partialorder %v1816, 8.507059e+37
      %v1818 = vand.u32 %v1758, 2147483648
      %v1819 = vor.u32 1.1754944e-38, %v1818
      %v1820 = vsel %vm1817, %v1819, %v1815
      %v1821 = vmul.f32 %v1737, %v1820
      %v1822 = vrcp.pop %v1761
      %v1823 = vmul.f32 %v1761, %v1822
      %v1824 = vsub.f32 1.0, %v1823
      %v1825 = vmul.f32 %v1822, %v1824
      %v1826 = vadd.f32 %v1822, %v1825
      %vm1827 = vweird.f32 %v1761
      %vm1828 = vweird.f32 %v1822
      %vm1829 = vmor %vm1827, %vm1828
      %v1830 = vsel %vm1829, %v1822, %v1826
      %v1831 = vand.u32 2147483647, %v1761
      %vm1832 = vcmp.eq.f32.partialorder %v1831, 8.507059e+37
      %v1833 = vand.u32 %v1761, 2147483648
      %v1834 = vor.u32 1.1754944e-38, %v1833
      %v1835 = vsel %vm1832, %v1834, %v1830
      %v1836 = vmul.f32 %v1739, %v1835
      %v1837 = vrcp.pop %v1764
      %v1838 = vmul.f32 %v1764, %v1837
      %v1839 = vsub.f32 1.0, %v1838
      %v1840 = vmul.f32 %v1837, %v1839
      %v1841 = vadd.f32 %v1837, %v1840
      %vm1842 = vweird.f32 %v1764
      %vm1843 = vweird.f32 %v1837
      %vm1844 = vmor %vm1842, %vm1843
      %v1845 = vsel %vm1844, %v1837, %v1841
      %v1846 = vand.u32 2147483647, %v1764
      %vm1847 = vcmp.eq.f32.partialorder %v1846, 8.507059e+37
      %v1848 = vand.u32 %v1764, 2147483648
      %v1849 = vor.u32 1.1754944e-38, %v1848
      %v1850 = vsel %vm1847, %v1849, %v1845
      %v1851 = vmul.f32 %v1741, %v1850
      %v1852 = vrcp.pop %v1767
      %v1853 = vmul.f32 %v1767, %v1852
      %v1854 = vsub.f32 1.0, %v1853
      %v1855 = vmul.f32 %v1852, %v1854
      %v1856 = vadd.f32 %v1852, %v1855
      %vm1857 = vweird.f32 %v1767
      %vm1858 = vweird.f32 %v1852
      %vm1859 = vmor %vm1857, %vm1858
      %v1860 = vsel %vm1859, %v1852, %v1856
      %v1861 = vand.u32 2147483647, %v1767
      %vm1862 = vcmp.eq.f32.partialorder %v1861, 8.507059e+37
      %v1863 = vand.u32 %v1767, 2147483648
      %v1864 = vor.u32 1.1754944e-38, %v1863
      %v1865 = vsel %vm1862, %v1864, %v1860
      %v1866 = vmul.f32 %v1743, %v1865
      %v1867 = vrcp.pop %v1770
      %v1868 = vmul.f32 %v1770, %v1867
      %v1869 = vsub.f32 1.0, %v1868
      %v1870 = vmul.f32 %v1867, %v1869
      %v1871 = vadd.f32 %v1867, %v1870
      %vm1872 = vweird.f32 %v1770
      %vm1873 = vweird.f32 %v1867
      %vm1874 = vmor %vm1872, %vm1873
      %v1875 = vsel %vm1874, %v1867, %v1871
      %v1876 = vand.u32 2147483647, %v1770
      %vm1877 = vcmp.eq.f32.partialorder %v1876, 8.507059e+37
      %v1878 = vand.u32 %v1770, 2147483648
      %v1879 = vor.u32 1.1754944e-38, %v1878
      %v1880 = vsel %vm1877, %v1879, %v1875
      %v1881 = vmul.f32 %v1745, %v1880
      %v1882 = vrcp.pop %v1773
      %v1883 = vmul.f32 %v1773, %v1882
      %v1884 = vsub.f32 1.0, %v1883
      %v1885 = vmul.f32 %v1882, %v1884
      %v1886 = vadd.f32 %v1882, %v1885
      %vm1887 = vweird.f32 %v1773
      %vm1888 = vweird.f32 %v1882
      %vm1889 = vmor %vm1887, %vm1888
      %v1890 = vsel %vm1889, %v1882, %v1886
      %v1891 = vand.u32 2147483647, %v1773
      %vm1892 = vcmp.eq.f32.partialorder %v1891, 8.507059e+37
      %v1893 = vand.u32 %v1773, 2147483648
      %v1894 = vor.u32 1.1754944e-38, %v1893
      %v1895 = vsel %vm1892, %v1894, %v1890
      %v1896 = vmul.f32 %v1747, %v1895
      %v1897 = vrcp.pop %v1776
      %v1898 = vmul.f32 %v1776, %v1897
      %v1899 = vsub.f32 1.0, %v1898
      %v1900 = vmul.f32 %v1897, %v1899
      %v1901 = vadd.f32 %v1897, %v1900
      %vm1902 = vweird.f32 %v1776
      %vm1903 = vweird.f32 %v1897
      %vm1904 = vmor %vm1902, %vm1903
      %v1905 = vsel %vm1904, %v1897, %v1901
      %v1906 = vand.u32 2147483647, %v1776
      %vm1907 = vcmp.eq.f32.partialorder %v1906, 8.507059e+37
      %v1908 = vand.u32 %v1776, 2147483648
      %v1909 = vor.u32 1.1754944e-38, %v1908
      %v1910 = vsel %vm1907, %v1909, %v1905
      %v1911 = vmul.f32 %v1749, %v1910
      %v1912 = vpack.c.bf16 %v1791, %v1791
      %v1913 = vpack.c.bf16 %v1806, %v1806
      %v1914 = vpack.c.bf16 %v1821, %v1821
      %v1915 = vpack.c.bf16 %v1836, %v1836
      %v1916 = vpack.c.bf16 %v1851, %v1851
      %v1917 = vpack.c.bf16 %v1866, %v1866
      %v1918 = vpack.c.bf16 %v1881, %v1881
      %v1919 = vpack.c.bf16 %v1896, %v1896
      %v1920 = vpack.c.bf16 %v1911, %v1911
      %v1921 = vpack.c.bf16 %v1496, %v1496
      %v1922 = vpack.c.bf16 %v1498, %v1498
      %v1923 = vpack.c.bf16 %v1501, %v1501
      %v1924 = vpack.c.bf16 %v1503, %v1503
      %v1925 = vpack.c.bf16 %v1506, %v1506
      %v1926 = vpack.c.bf16 %v1508, %v1508
      %v1927 = vpack.c.bf16 %v1511, %v1511
      %v1928 = vpack.c.bf16 %v1513, %v1513
      %v1929 = vpack.c.bf16 %v1516, %v1516
      %v1933 = vunpack.c.l.b16 %v1912
      %v1934 = vunpack.c.l.b16 %v1913
      %v1935 = vunpack.c.l.b16 %v1914
      %v1936 = vpack.c.b16 %v1934, %v1933
      %v1937 = vpack.c.b16 %v1935, %v1935
      %v1941 = vunpack.c.l.b16 %v1921
      %v1942 = vunpack.c.l.b16 %v1922
      %v1943 = vunpack.c.l.b16 %v1923
      %v1944 = vpack.c.b16 %v1942, %v1941
      %v1945 = vpack.c.b16 %v1943, %v1943
      %v1948 = vsel %vm1695, %v1936, 0
      %v1951 = vsel %vm1695, %v1937, 0
      %vm1953 = vcmask 1043456
      %v1955 = vsel %vm1953, %v1945, 0
      %1957 = vmatpush.bf16.msra.mxu0 0
      %1958 = vmatpush.bf16.msra.mxu0 0
      %1959 = vmatpush.bf16.msra.mxu0 0
      %1960 = vmatpush.bf16.msra.mxu0 0
      %1961 = vmatpush.bf16.msra.mxu0 0
      %1962 = vmatpush.bf16.msra.mxu0 0
      %1963 = vmatpush.bf16.msra.mxu0 %v1955
      %1964 = vmatpush.bf16.msra.mxu0 %v1944
      %1965 = vmatmul.bf16.gmra.mxu0 %v1948
      %v1966 = vpop.f32.mrf.mxu0
      %v1967 = vadd.f32 0.0, %v1966
      %v1968 = vpop.f32.mrf.mxu0
      %v1969 = vadd.f32 0.0, %v1968
      %1970 = vmatmul.bf16.gmra.mxu0 %v1951
      %v1971 = vpop.f32.mrf.mxu0
      %v1972 = vadd.f32 0.0, %v1971
      %v1973 = vpop.f32.mrf.mxu0
      %1974 = vdwg.mxu0
      %v1978 = vunpack.c.l.b16 %v1915
      %v1979 = vunpack.c.l.b16 %v1916
      %v1980 = vunpack.c.l.b16 %v1917
      %v1981 = vpack.c.b16 %v1979, %v1978
      %v1982 = vpack.c.b16 %v1980, %v1980
      %v1986 = vunpack.c.l.b16 %v1924
      %v1987 = vunpack.c.l.b16 %v1925
      %v1988 = vunpack.c.l.b16 %v1926
      %v1989 = vpack.c.b16 %v1987, %v1986
      %v1990 = vpack.c.b16 %v1988, %v1988
      %v1993 = vsel %vm1695, %v1981, 0
      %v1996 = vsel %vm1695, %v1982, 0
      %v1999 = vsel %vm1953, %v1990, 0
      %2001 = vmatpush.bf16.msra.mxu0 0
      %2002 = vmatpush.bf16.msra.mxu0 0
      %2003 = vmatpush.bf16.msra.mxu0 0
      %2004 = vmatpush.bf16.msra.mxu0 0
      %2005 = vmatpush.bf16.msra.mxu0 0
      %2006 = vmatpush.bf16.msra.mxu0 0
      %2007 = vmatpush.bf16.msra.mxu0 %v1999
      %2008 = vmatpush.bf16.msra.mxu0 %v1989
      %2009 = vmatmul.bf16.gmra.mxu0 %v1993
      %v2010 = vpop.f32.mrf.mxu0
      %v2011 = vadd.f32 0.0, %v2010
      %v2012 = vpop.f32.mrf.mxu0
      %v2013 = vadd.f32 0.0, %v2012
      %2014 = vmatmul.bf16.gmra.mxu0 %v1996
      %v2015 = vpop.f32.mrf.mxu0
      %v2016 = vadd.f32 0.0, %v2015
      %v2017 = vpop.f32.mrf.mxu0
      %2018 = vdwg.mxu0
      %v2022 = vunpack.c.l.b16 %v1918
      %v2023 = vunpack.c.l.b16 %v1919
      %v2024 = vunpack.c.l.b16 %v1920
      %v2025 = vpack.c.b16 %v2023, %v2022
      %v2026 = vpack.c.b16 %v2024, %v2024
      %v2030 = vunpack.c.l.b16 %v1927
      %v2031 = vunpack.c.l.b16 %v1928
      %v2032 = vunpack.c.l.b16 %v1929
      %v2033 = vpack.c.b16 %v2031, %v2030
      %v2034 = vpack.c.b16 %v2032, %v2032
      %v2037 = vsel %vm1695, %v2025, 0
      %v2040 = vsel %vm1695, %v2026, 0
      %v2043 = vsel %vm1953, %v2034, 0
      %2045 = vmatpush.bf16.msra.mxu0 0
      %2046 = vmatpush.bf16.msra.mxu0 0
      %2047 = vmatpush.bf16.msra.mxu0 0
      %2048 = vmatpush.bf16.msra.mxu0 0
      %2049 = vmatpush.bf16.msra.mxu0 0
      %2050 = vmatpush.bf16.msra.mxu0 0
      %2051 = vmatpush.bf16.msra.mxu0 %v2043
      %2052 = vmatpush.bf16.msra.mxu0 %v2033
      %2053 = vmatmul.bf16.gmra.mxu0 %v2037
      %v2054 = vpop.f32.mrf.mxu0
      %v2055 = vadd.f32 0.0, %v2054
      %v2056 = vpop.f32.mrf.mxu0
      %v2057 = vadd.f32 0.0, %v2056
      %2058 = vmatmul.bf16.gmra.mxu0 %v2040
      %v2059 = vpop.f32.mrf.mxu0
      %v2060 = vadd.f32 0.0, %v2059
      %v2061 = vpop.f32.mrf.mxu0
      %2062 = vdwg.mxu0
      %2063 = vrot.lane.b32.xlu0 %v1543, 64
      %v2064 = vpop.permute.xlu0 %2063
      %2065 = vrot.lane.b32.xlu0 %v1544, 64
      %v2066 = vpop.permute.xlu0 %2065
      %2067 = vrot.lane.b32.xlu0 %v1551, 64
      %v2068 = vpop.permute.xlu0 %2067
      %2069 = vrot.lane.b32.xlu0 %v1552, 64
      %v2070 = vpop.permute.xlu0 %2069
      %v2072 = vsel %vm745, %v2064, 0
      %v2075 = vsel %vm745, %v2066, 0
      %v2078 = vsel %vm745, %v2068, 0
      %v2081 = vsel %vm745, %v2070, 0
      %2083 = vmatpush.bf16.xpose.msra.mxu0 0
      %2084 = vmatpush.bf16.xpose.msra.mxu0 0
      %2085 = vmatpush.bf16.xpose.msra.mxu0 0
      %2086 = vmatpush.bf16.xpose.msra.mxu0 0
      %2087 = vmatpush.bf16.xpose.msra.mxu0 0
      %2088 = vmatpush.bf16.xpose.msra.mxu0 0
      %2089 = vmatpush.bf16.xpose.msra.mxu0 %v2081
      %2090 = vmatpush.bf16.xpose.msra.mxu0 %v2078
      %2091 = vmatmul.bf16.gmra.mxu0 %v2072
      %v2092 = vpop.f32.mrf.mxu0
      %v2093 = vadd.f32 0.0, %v2092
      %v2094 = vpop.f32.mrf.mxu0
      %v2095 = vadd.f32 0.0, %v2094
      %2096 = vmatmul.bf16.gmra.mxu0 %v2075
      %v2097 = vpop.f32.mrf.mxu0
      %v2098 = vadd.f32 0.0, %v2097
      %v2099 = vpop.f32.mrf.mxu0
      %2100 = vdwg.mxu0
      %2101 = vrot.lane.b32.xlu0 %v1589, 64
      %v2102 = vpop.permute.xlu0 %2101
      %2103 = vrot.lane.b32.xlu0 %v1590, 64
      %v2104 = vpop.permute.xlu0 %2103
      %2105 = vrot.lane.b32.xlu0 %v1597, 64
      %v2106 = vpop.permute.xlu0 %2105
      %2107 = vrot.lane.b32.xlu0 %v1598, 64
      %v2108 = vpop.permute.xlu0 %2107
      %v2110 = vsel %vm745, %v2102, 0
      %v2113 = vsel %vm745, %v2104, 0
      %v2116 = vsel %vm745, %v2106, 0
      %v2119 = vsel %vm745, %v2108, 0
      %2121 = vmatpush.bf16.xpose.msra.mxu0 0
      %2122 = vmatpush.bf16.xpose.msra.mxu0 0
      %2123 = vmatpush.bf16.xpose.msra.mxu0 0
      %2124 = vmatpush.bf16.xpose.msra.mxu0 0
      %2125 = vmatpush.bf16.xpose.msra.mxu0 0
      %2126 = vmatpush.bf16.xpose.msra.mxu0 0
      %2127 = vmatpush.bf16.xpose.msra.mxu0 %v2119
      %2128 = vmatpush.bf16.xpose.msra.mxu0 %v2116
      %2129 = vmatmul.bf16.gmra.mxu0 %v2110
      %v2130 = vpop.f32.mrf.mxu0
      %v2131 = vadd.f32 0.0, %v2130
      %v2132 = vpop.f32.mrf.mxu0
      %v2133 = vadd.f32 0.0, %v2132
      %2134 = vmatmul.bf16.gmra.mxu0 %v2113
      %v2135 = vpop.f32.mrf.mxu0
      %v2136 = vadd.f32 0.0, %v2135
      %v2137 = vpop.f32.mrf.mxu0
      %2138 = vdwg.mxu0
      %2139 = vrot.lane.b32.xlu0 %v1635, 64
      %v2140 = vpop.permute.xlu0 %2139
      %2141 = vrot.lane.b32.xlu0 %v1636, 64
      %v2142 = vpop.permute.xlu0 %2141
      %2143 = vrot.lane.b32.xlu0 %v1643, 64
      %v2144 = vpop.permute.xlu0 %2143
      %2145 = vrot.lane.b32.xlu0 %v1644, 64
      %v2146 = vpop.permute.xlu0 %2145
      %v2148 = vsel %vm745, %v2140, 0
      %v2151 = vsel %vm745, %v2142, 0
      %v2154 = vsel %vm745, %v2144, 0
      %v2157 = vsel %vm745, %v2146, 0
      %2159 = vmatpush.bf16.xpose.msra.mxu0 0
      %2160 = vmatpush.bf16.xpose.msra.mxu0 0
      %2161 = vmatpush.bf16.xpose.msra.mxu0 0
      %2162 = vmatpush.bf16.xpose.msra.mxu0 0
      %2163 = vmatpush.bf16.xpose.msra.mxu0 0
      %2164 = vmatpush.bf16.xpose.msra.mxu0 0
      %2165 = vmatpush.bf16.xpose.msra.mxu0 %v2157
      %2166 = vmatpush.bf16.xpose.msra.mxu0 %v2154
      %2167 = vmatmul.bf16.gmra.mxu0 %v2148
      %v2168 = vpop.f32.mrf.mxu0
      %v2169 = vadd.f32 0.0, %v2168
      %v2170 = vpop.f32.mrf.mxu0
      %v2171 = vadd.f32 0.0, %v2170
      %2172 = vmatmul.bf16.gmra.mxu0 %v2151
      %v2173 = vpop.f32.mrf.mxu0
      %v2174 = vadd.f32 0.0, %v2173
      %v2175 = vpop.f32.mrf.mxu0
      %2176 = vdwg.mxu0
      %v2177 = vmul.f32 %v2093, 0.125
      %v2178 = vmul.f32 %v2095, 0.125
      %v2179 = vmul.f32 %v2098, 0.125
      %v2180 = vmul.f32 %v2131, 0.125
      %v2181 = vmul.f32 %v2133, 0.125
      %v2182 = vmul.f32 %v2136, 0.125
      %v2183 = vmul.f32 %v2169, 0.125
      %v2184 = vmul.f32 %v2171, 0.125
      %v2185 = vmul.f32 %v2174, 0.125
      %v2186 = vsel %vm1685, %v2177, -1e+30
      %v2187 = vsel %vm1685, %v2178, -1e+30
      %v2188 = vsel %vm1685, %v2179, -1e+30
      %v2189 = vsel %vm1685, %v2180, -1e+30
      %v2190 = vsel %vm1685, %v2181, -1e+30
      %v2191 = vsel %vm1685, %v2182, -1e+30
      %v2192 = vsel %vm1685, %v2183, -1e+30
      %v2193 = vsel %vm1685, %v2184, -1e+30
      %v2194 = vsel %vm1685, %v2185, -1e+30
      %v2195 = vsel %vm1695, %v2186, -inf
      %2196 = vmax.xlane.f32.xlu0 %v2195
      %v2197 = vpop.xlane.xlu0 %2196
      %v2198 = vsel %vm1695, %v2187, -inf
      %2199 = vmax.xlane.f32.xlu0 %v2198
      %v2200 = vpop.xlane.xlu0 %2199
      %v2201 = vsel %vm1695, %v2188, -inf
      %2202 = vmax.xlane.f32.xlu0 %v2201
      %v2203 = vpop.xlane.xlu0 %2202
      %v2204 = vsel %vm1695, %v2189, -inf
      %2205 = vmax.xlane.f32.xlu0 %v2204
      %v2206 = vpop.xlane.xlu0 %2205
      %v2207 = vsel %vm1695, %v2190, -inf
      %2208 = vmax.xlane.f32.xlu0 %v2207
      %v2209 = vpop.xlane.xlu0 %2208
      %v2210 = vsel %vm1695, %v2191, -inf
      %2211 = vmax.xlane.f32.xlu0 %v2210
      %v2212 = vpop.xlane.xlu0 %2211
      %v2213 = vsel %vm1695, %v2192, -inf
      %2214 = vmax.xlane.f32.xlu0 %v2213
      %v2215 = vpop.xlane.xlu0 %2214
      %v2216 = vsel %vm1695, %v2193, -inf
      %2217 = vmax.xlane.f32.xlu0 %v2216
      %v2218 = vpop.xlane.xlu0 %2217
      %v2219 = vsel %vm1695, %v2194, -inf
      %2220 = vmax.xlane.f32.xlu0 %v2219
      %v2221 = vpop.xlane.xlu0 %2220
      %v2222 = vsub.f32 %v2186, %v2197
      %v2223 = vsub.f32 %v2187, %v2200
      %v2224 = vsub.f32 %v2188, %v2203
      %v2225 = vsub.f32 %v2189, %v2206
      %v2226 = vsub.f32 %v2190, %v2209
      %v2227 = vsub.f32 %v2191, %v2212
      %v2228 = vsub.f32 %v2192, %v2215
      %v2229 = vsub.f32 %v2193, %v2218
      %v2230 = vsub.f32 %v2194, %v2221
      %v2231 = vmul.f32 %v2222, 1.442695
      %v2232 = vpow.pop %v2231
      %v2233 = vmul.f32 %v2223, 1.442695
      %v2234 = vpow.pop %v2233
      %v2235 = vmul.f32 %v2224, 1.442695
      %v2236 = vpow.pop %v2235
      %v2237 = vmul.f32 %v2225, 1.442695
      %v2238 = vpow.pop %v2237
      %v2239 = vmul.f32 %v2226, 1.442695
      %v2240 = vpow.pop %v2239
      %v2241 = vmul.f32 %v2227, 1.442695
      %v2242 = vpow.pop %v2241
      %v2243 = vmul.f32 %v2228, 1.442695
      %v2244 = vpow.pop %v2243
      %v2245 = vmul.f32 %v2229, 1.442695
      %v2246 = vpow.pop %v2245
      %v2247 = vmul.f32 %v2230, 1.442695
      %v2248 = vpow.pop %v2247
      %v2249 = vsel %vm1695, %v2232, 0.0
      %2250 = vadd.xlane.f32.xlu0 %v2249
      %v2251 = vpop.xlane.xlu0 %2250
      %v2252 = vsel %vm1695, %v2234, 0.0
      %2253 = vadd.xlane.f32.xlu0 %v2252
      %v2254 = vpop.xlane.xlu0 %2253
      %v2255 = vsel %vm1695, %v2236, 0.0
      %2256 = vadd.xlane.f32.xlu0 %v2255
      %v2257 = vpop.xlane.xlu0 %2256
      %v2258 = vsel %vm1695, %v2238, 0.0
      %2259 = vadd.xlane.f32.xlu0 %v2258
      %v2260 = vpop.xlane.xlu0 %2259
      %v2261 = vsel %vm1695, %v2240, 0.0
      %2262 = vadd.xlane.f32.xlu0 %v2261
      %v2263 = vpop.xlane.xlu0 %2262
      %v2264 = vsel %vm1695, %v2242, 0.0
      %2265 = vadd.xlane.f32.xlu0 %v2264
      %v2266 = vpop.xlane.xlu0 %2265
      %v2267 = vsel %vm1695, %v2244, 0.0
      %2268 = vadd.xlane.f32.xlu0 %v2267
      %v2269 = vpop.xlane.xlu0 %2268
      %v2270 = vsel %vm1695, %v2246, 0.0
      %2271 = vadd.xlane.f32.xlu0 %v2270
      %v2272 = vpop.xlane.xlu0 %2271
      %v2273 = vsel %vm1695, %v2248, 0.0
      %2274 = vadd.xlane.f32.xlu0 %v2273
      %v2275 = vpop.xlane.xlu0 %2274
      %v2276 = vrcp.pop %v2251
      %v2277 = vmul.f32 %v2251, %v2276
      %v2278 = vsub.f32 1.0, %v2277
      %v2279 = vmul.f32 %v2276, %v2278
      %v2280 = vadd.f32 %v2276, %v2279
      %vm2281 = vweird.f32 %v2251
      %vm2282 = vweird.f32 %v2276
      %vm2283 = vmor %vm2281, %vm2282
      %v2284 = vsel %vm2283, %v2276, %v2280
      %v2285 = vand.u32 2147483647, %v2251
      %vm2286 = vcmp.eq.f32.partialorder %v2285, 8.507059e+37
      %v2287 = vand.u32 %v2251, 2147483648
      %v2288 = vor.u32 1.1754944e-38, %v2287
      %v2289 = vsel %vm2286, %v2288, %v2284
      %v2290 = vmul.f32 %v2232, %v2289
      %v2291 = vrcp.pop %v2254
      %v2292 = vmul.f32 %v2254, %v2291
      %v2293 = vsub.f32 1.0, %v2292
      %v2294 = vmul.f32 %v2291, %v2293
      %v2295 = vadd.f32 %v2291, %v2294
      %vm2296 = vweird.f32 %v2254
      %vm2297 = vweird.f32 %v2291
      %vm2298 = vmor %vm2296, %vm2297
      %v2299 = vsel %vm2298, %v2291, %v2295
      %v2300 = vand.u32 2147483647, %v2254
      %vm2301 = vcmp.eq.f32.partialorder %v2300, 8.507059e+37
      %v2302 = vand.u32 %v2254, 2147483648
      %v2303 = vor.u32 1.1754944e-38, %v2302
      %v2304 = vsel %vm2301, %v2303, %v2299
      %v2305 = vmul.f32 %v2234, %v2304
      %v2306 = vrcp.pop %v2257
      %v2307 = vmul.f32 %v2257, %v2306
      %v2308 = vsub.f32 1.0, %v2307
      %v2309 = vmul.f32 %v2306, %v2308
      %v2310 = vadd.f32 %v2306, %v2309
      %vm2311 = vweird.f32 %v2257
      %vm2312 = vweird.f32 %v2306
      %vm2313 = vmor %vm2311, %vm2312
      %v2314 = vsel %vm2313, %v2306, %v2310
      %v2315 = vand.u32 2147483647, %v2257
      %vm2316 = vcmp.eq.f32.partialorder %v2315, 8.507059e+37
      %v2317 = vand.u32 %v2257, 2147483648
      %v2318 = vor.u32 1.1754944e-38, %v2317
      %v2319 = vsel %vm2316, %v2318, %v2314
      %v2320 = vmul.f32 %v2236, %v2319
      %v2321 = vrcp.pop %v2260
      %v2322 = vmul.f32 %v2260, %v2321
      %v2323 = vsub.f32 1.0, %v2322
      %v2324 = vmul.f32 %v2321, %v2323
      %v2325 = vadd.f32 %v2321, %v2324
      %vm2326 = vweird.f32 %v2260
      %vm2327 = vweird.f32 %v2321
      %vm2328 = vmor %vm2326, %vm2327
      %v2329 = vsel %vm2328, %v2321, %v2325
      %v2330 = vand.u32 2147483647, %v2260
      %vm2331 = vcmp.eq.f32.partialorder %v2330, 8.507059e+37
      %v2332 = vand.u32 %v2260, 2147483648
      %v2333 = vor.u32 1.1754944e-38, %v2332
      %v2334 = vsel %vm2331, %v2333, %v2329
      %v2335 = vmul.f32 %v2238, %v2334
      %v2336 = vrcp.pop %v2263
      %v2337 = vmul.f32 %v2263, %v2336
      %v2338 = vsub.f32 1.0, %v2337
      %v2339 = vmul.f32 %v2336, %v2338
      %v2340 = vadd.f32 %v2336, %v2339
      %vm2341 = vweird.f32 %v2263
      %vm2342 = vweird.f32 %v2336
      %vm2343 = vmor %vm2341, %vm2342
      %v2344 = vsel %vm2343, %v2336, %v2340
      %v2345 = vand.u32 2147483647, %v2263
      %vm2346 = vcmp.eq.f32.partialorder %v2345, 8.507059e+37
      %v2347 = vand.u32 %v2263, 2147483648
      %v2348 = vor.u32 1.1754944e-38, %v2347
      %v2349 = vsel %vm2346, %v2348, %v2344
      %v2350 = vmul.f32 %v2240, %v2349
      %v2351 = vrcp.pop %v2266
      %v2352 = vmul.f32 %v2266, %v2351
      %v2353 = vsub.f32 1.0, %v2352
      %v2354 = vmul.f32 %v2351, %v2353
      %v2355 = vadd.f32 %v2351, %v2354
      %vm2356 = vweird.f32 %v2266
      %vm2357 = vweird.f32 %v2351
      %vm2358 = vmor %vm2356, %vm2357
      %v2359 = vsel %vm2358, %v2351, %v2355
      %v2360 = vand.u32 2147483647, %v2266
      %vm2361 = vcmp.eq.f32.partialorder %v2360, 8.507059e+37
      %v2362 = vand.u32 %v2266, 2147483648
      %v2363 = vor.u32 1.1754944e-38, %v2362
      %v2364 = vsel %vm2361, %v2363, %v2359
      %v2365 = vmul.f32 %v2242, %v2364
      %v2366 = vrcp.pop %v2269
      %v2367 = vmul.f32 %v2269, %v2366
      %v2368 = vsub.f32 1.0, %v2367
      %v2369 = vmul.f32 %v2366, %v2368
      %v2370 = vadd.f32 %v2366, %v2369
      %vm2371 = vweird.f32 %v2269
      %vm2372 = vweird.f32 %v2366
      %vm2373 = vmor %vm2371, %vm2372
      %v2374 = vsel %vm2373, %v2366, %v2370
      %v2375 = vand.u32 2147483647, %v2269
      %vm2376 = vcmp.eq.f32.partialorder %v2375, 8.507059e+37
      %v2377 = vand.u32 %v2269, 2147483648
      %v2378 = vor.u32 1.1754944e-38, %v2377
      %v2379 = vsel %vm2376, %v2378, %v2374
      %v2380 = vmul.f32 %v2244, %v2379
      %v2381 = vrcp.pop %v2272
      %v2382 = vmul.f32 %v2272, %v2381
      %v2383 = vsub.f32 1.0, %v2382
      %v2384 = vmul.f32 %v2381, %v2383
      %v2385 = vadd.f32 %v2381, %v2384
      %vm2386 = vweird.f32 %v2272
      %vm2387 = vweird.f32 %v2381
      %vm2388 = vmor %vm2386, %vm2387
      %v2389 = vsel %vm2388, %v2381, %v2385
      %v2390 = vand.u32 2147483647, %v2272
      %vm2391 = vcmp.eq.f32.partialorder %v2390, 8.507059e+37
      %v2392 = vand.u32 %v2272, 2147483648
      %v2393 = vor.u32 1.1754944e-38, %v2392
      %v2394 = vsel %vm2391, %v2393, %v2389
      %v2395 = vmul.f32 %v2246, %v2394
      %v2396 = vrcp.pop %v2275
      %v2397 = vmul.f32 %v2275, %v2396
      %v2398 = vsub.f32 1.0, %v2397
      %v2399 = vmul.f32 %v2396, %v2398
      %v2400 = vadd.f32 %v2396, %v2399
      %vm2401 = vweird.f32 %v2275
      %vm2402 = vweird.f32 %v2396
      %vm2403 = vmor %vm2401, %vm2402
      %v2404 = vsel %vm2403, %v2396, %v2400
      %v2405 = vand.u32 2147483647, %v2275
      %vm2406 = vcmp.eq.f32.partialorder %v2405, 8.507059e+37
      %v2407 = vand.u32 %v2275, 2147483648
      %v2408 = vor.u32 1.1754944e-38, %v2407
      %v2409 = vsel %vm2406, %v2408, %v2404
      %v2410 = vmul.f32 %v2248, %v2409
      %v2411 = vpack.c.bf16 %v2290, %v2290
      %v2412 = vpack.c.bf16 %v2305, %v2305
      %v2413 = vpack.c.bf16 %v2320, %v2320
      %v2414 = vpack.c.bf16 %v2335, %v2335
      %v2415 = vpack.c.bf16 %v2350, %v2350
      %v2416 = vpack.c.bf16 %v2365, %v2365
      %v2417 = vpack.c.bf16 %v2380, %v2380
      %v2418 = vpack.c.bf16 %v2395, %v2395
      %v2419 = vpack.c.bf16 %v2410, %v2410
      %v2423 = vunpack.c.l.b16 %v2411
      %v2424 = vunpack.c.l.b16 %v2412
      %v2425 = vunpack.c.l.b16 %v2413
      %v2426 = vpack.c.b16 %v2424, %v2423
      %v2427 = vpack.c.b16 %v2425, %v2425
      %2428 = vrot.lane.b32.xlu0 %v1944, 64
      %v2429 = vpop.permute.xlu0 %2428
      %2430 = vrot.lane.b32.xlu0 %v1945, 64
      %v2431 = vpop.permute.xlu0 %2430
      %v2434 = vsel %vm1695, %v2426, 0
      %v2437 = vsel %vm1695, %v2427, 0
      %v2440 = vsel %vm1953, %v2431, 0
      %2442 = vmatpush.bf16.msra.mxu0 0
      %2443 = vmatpush.bf16.msra.mxu0 0
      %2444 = vmatpush.bf16.msra.mxu0 0
      %2445 = vmatpush.bf16.msra.mxu0 0
      %2446 = vmatpush.bf16.msra.mxu0 0
      %2447 = vmatpush.bf16.msra.mxu0 0
      %2448 = vmatpush.bf16.msra.mxu0 %v2440
      %2449 = vmatpush.bf16.msra.mxu0 %v2429
      %2450 = vmatmul.bf16.gmra.mxu0 %v2434
      %v2451 = vpop.f32.mrf.mxu0
      %v2452 = vadd.f32 0.0, %v2451
      %v2453 = vpop.f32.mrf.mxu0
      %v2454 = vadd.f32 0.0, %v2453
      %2455 = vmatmul.bf16.gmra.mxu0 %v2437
      %v2456 = vpop.f32.mrf.mxu0
      %v2457 = vadd.f32 0.0, %v2456
      %v2458 = vpop.f32.mrf.mxu0
      %2459 = vdwg.mxu0
      %v2463 = vunpack.c.l.b16 %v2414
      %v2464 = vunpack.c.l.b16 %v2415
      %v2465 = vunpack.c.l.b16 %v2416
      %v2466 = vpack.c.b16 %v2464, %v2463
      %v2467 = vpack.c.b16 %v2465, %v2465
      %2468 = vrot.lane.b32.xlu0 %v1989, 64
      %v2469 = vpop.permute.xlu0 %2468
      %2470 = vrot.lane.b32.xlu0 %v1990, 64
      %v2471 = vpop.permute.xlu0 %2470
      %v2474 = vsel %vm1695, %v2466, 0
      %v2477 = vsel %vm1695, %v2467, 0
      %v2480 = vsel %vm1953, %v2471, 0
      %2482 = vmatpush.bf16.msra.mxu0 0
      %2483 = vmatpush.bf16.msra.mxu0 0
      %2484 = vmatpush.bf16.msra.mxu0 0
      %2485 = vmatpush.bf16.msra.mxu0 0
      %2486 = vmatpush.bf16.msra.mxu0 0
      %2487 = vmatpush.bf16.msra.mxu0 0
      %2488 = vmatpush.bf16.msra.mxu0 %v2480
      %2489 = vmatpush.bf16.msra.mxu0 %v2469
      %2490 = vmatmul.bf16.gmra.mxu0 %v2474
      %v2491 = vpop.f32.mrf.mxu0
      %v2492 = vadd.f32 0.0, %v2491
      %v2493 = vpop.f32.mrf.mxu0
      %v2494 = vadd.f32 0.0, %v2493
      %2495 = vmatmul.bf16.gmra.mxu0 %v2477
      %v2496 = vpop.f32.mrf.mxu0
      %v2497 = vadd.f32 0.0, %v2496
      %v2498 = vpop.f32.mrf.mxu0
      %2499 = vdwg.mxu0
      %v2503 = vunpack.c.l.b16 %v2417
      %v2504 = vunpack.c.l.b16 %v2418
      %v2505 = vunpack.c.l.b16 %v2419
      %v2506 = vpack.c.b16 %v2504, %v2503
      %v2507 = vpack.c.b16 %v2505, %v2505
      %2508 = vrot.lane.b32.xlu0 %v2033, 64
      %v2509 = vpop.permute.xlu0 %2508
      %2510 = vrot.lane.b32.xlu0 %v2034, 64
      %v2511 = vpop.permute.xlu0 %2510
      %v2514 = vsel %vm1695, %v2506, 0
      %v2517 = vsel %vm1695, %v2507, 0
      %v2520 = vsel %vm1953, %v2511, 0
      %2522 = vmatpush.bf16.msra.mxu0 0
      %2523 = vmatpush.bf16.msra.mxu0 0
      %2524 = vmatpush.bf16.msra.mxu0 0
      %2525 = vmatpush.bf16.msra.mxu0 0
      %2526 = vmatpush.bf16.msra.mxu0 0
      %2527 = vmatpush.bf16.msra.mxu0 0
      %2528 = vmatpush.bf16.msra.mxu0 %v2520
      %2529 = vmatpush.bf16.msra.mxu0 %v2509
      %2530 = vmatmul.bf16.gmra.mxu0 %v2514
      %v2531 = vpop.f32.mrf.mxu0
      %v2532 = vadd.f32 0.0, %v2531
      %v2533 = vpop.f32.mrf.mxu0
      %v2534 = vadd.f32 0.0, %v2533
      %2535 = vmatmul.bf16.gmra.mxu0 %v2517
      %v2536 = vpop.f32.mrf.mxu0
      %v2537 = vadd.f32 0.0, %v2536
      %v2538 = vpop.f32.mrf.mxu0
      %2539 = vdwg.mxu0
      %2549 = vrot.lane.b32.xlu0 %v2452, 64
      %v2550 = vpop.permute.xlu0 %2549
      %2551 = vrot.lane.b32.xlu0 %v2454, 64
      %v2552 = vpop.permute.xlu0 %2551
      %2553 = vrot.lane.b32.xlu0 %v2457, 64
      %v2554 = vpop.permute.xlu0 %2553
      %2555 = vrot.lane.b32.xlu0 %v2492, 64
      %v2556 = vpop.permute.xlu0 %2555
      %2557 = vrot.lane.b32.xlu0 %v2494, 64
      %v2558 = vpop.permute.xlu0 %2557
      %2559 = vrot.lane.b32.xlu0 %v2497, 64
      %v2560 = vpop.permute.xlu0 %2559
      %2561 = vrot.lane.b32.xlu0 %v2532, 64
      %v2562 = vpop.permute.xlu0 %2561
      %2563 = vrot.lane.b32.xlu0 %v2534, 64
      %v2564 = vpop.permute.xlu0 %2563
      %2565 = vrot.lane.b32.xlu0 %v2537, 64
      %v2566 = vpop.permute.xlu0 %2565
      %v2576 = vsel %vm745, %v1967, %v2550
      %v2577 = vsel %vm745, %v1969, %v2552
      %v2578 = vsel %vm745, %v1972, %v2554
      %v2579 = vsel %vm745, %v2011, %v2556
      %v2580 = vsel %vm745, %v2013, %v2558
      %v2581 = vsel %vm745, %v2016, %v2560
      %v2582 = vsel %vm745, %v2055, %v2562
      %v2583 = vsel %vm745, %v2057, %v2564
      %v2584 = vsel %vm745, %v2060, %v2566
      %v2585 = vld [vmem:[%s12] sm:$0xff]
      %v2586 = vld [vmem:[%s12 + $0x8] sm:$0xff]
      %v2587 = vld [vmem:[%s12 + $0x10] sm:$0xff]
      %v2588 = vld [vmem:[%s12 + $0x18] sm:$0xff]
      %v2589 = vld [vmem:[%s12 + $0x20] sm:$0xff]
      %v2590 = vld [vmem:[%s12 + $0x28] sm:$0xff]
      %v2591 = vld [vmem:[%s12 + $0x30] sm:$0xff]
      %v2592 = vld [vmem:[%s12 + $0x38] sm:$0xff]
      %v2593 = vld [vmem:[%s12 + $0x40] sm:$0xff]
      %v2594 = vld [vmem:[%s12 + $0x48] sm:$0xff]
      %v2595 = vld [vmem:[%s12 + $0x50] sm:$0xff]
      %v2596 = vld [vmem:[%s12 + $0x58] sm:$0xff]
      %v2597 = vld [vmem:[%s12 + $0x60] sm:$0xff]
      %v2598 = vld [vmem:[%s12 + $0x68] sm:$0xff]
      %v2599 = vld [vmem:[%s12 + $0x70] sm:$0xff]
      %v2600 = vld [vmem:[%s12 + $0x78] sm:$0xff]
      %v2601 = vpack.c.bf16 %v2577, %v2576
      %v2602 = vpack.c.bf16 %v2579, %v2578
      %v2603 = vpack.c.bf16 %v2581, %v2580
      %v2604 = vpack.c.bf16 %v2583, %v2582
      %v2605 = vpack.c.bf16 %v2584, %v2584
      %v2606 = vpack.c.bf16 %v2586, %v2585
      %v2607 = vpack.c.bf16 %v2588, %v2587
      %v2608 = vpack.c.bf16 %v2590, %v2589
      %v2609 = vpack.c.bf16 %v2592, %v2591
      %v2610 = vpack.c.bf16 %v2594, %v2593
      %v2611 = vpack.c.bf16 %v2596, %v2595
      %v2612 = vpack.c.bf16 %v2598, %v2597
      %v2613 = vpack.c.bf16 %v2600, %v2599
      %2614 = vmatpush.bf16.msra.mxu0 %v2613
      %2615 = vmatpush.bf16.msra.mxu0 %v2612
      %2616 = vmatpush.bf16.msra.mxu0 %v2611
      %2617 = vmatpush.bf16.msra.mxu0 %v2610
      %2618 = vmatpush.bf16.msra.mxu0 %v2609
      %2619 = vmatpush.bf16.msra.mxu0 %v2608
      %2620 = vmatpush.bf16.msra.mxu0 %v2607
      %2621 = vmatpush.bf16.msra.mxu0 %v2606
      %2622 = vmatmul.bf16.gmra.mxu0 %v2601
      %v2623 = vpop.f32.mrf.mxu0
      %v2624 = vadd.f32 0.0, %v2623
      %v2625 = vpop.f32.mrf.mxu0
      %v2626 = vadd.f32 0.0, %v2625
      %2627 = vmatmul.bf16.gmra.mxu0 %v2602
      %v2628 = vpop.f32.mrf.mxu0
      %v2629 = vadd.f32 0.0, %v2628
      %v2630 = vpop.f32.mrf.mxu0
      %v2631 = vadd.f32 0.0, %v2630
      %2632 = vmatmul.bf16.gmra.mxu0 %v2603
      %v2633 = vpop.f32.mrf.mxu0
      %v2634 = vadd.f32 0.0, %v2633
      %v2635 = vpop.f32.mrf.mxu0
      %v2636 = vadd.f32 0.0, %v2635
      %2637 = vmatmul.bf16.gmra.mxu0 %v2604
      %v2638 = vpop.f32.mrf.mxu0
      %v2639 = vadd.f32 0.0, %v2638
      %v2640 = vpop.f32.mrf.mxu0
      %v2641 = vadd.f32 0.0, %v2640
      %2642 = vmatmul.bf16.gmra.mxu0 %v2605
      %v2643 = vpop.f32.mrf.mxu0
      %v2644 = vadd.f32 0.0, %v2643
      %v2645 = vpop.f32.mrf.mxu0
      %2646 = vdwg.mxu0
      %v2647 = vadd.f32 %v1125, %v2624
      %v2648 = vadd.f32 %v1126, %v2626
      %v2649 = vadd.f32 %v1127, %v2629
      %v2650 = vadd.f32 %v1128, %v2631
      %v2651 = vadd.f32 %v1129, %v2634
      %v2652 = vadd.f32 %v1130, %v2636
      %v2653 = vadd.f32 %v1131, %v2639
      %v2654 = vadd.f32 %v1132, %v2641
      %v2655 = vadd.f32 %v1133, %v2644
      %v2656 = vld [vmem:[%s13] sm:$0x1]
      %v2658 = vperm.slane %v2656, 0
      %v2660 = vadd.f32 %v2647, %v2658
      %v2661 = vadd.f32 %v2648, %v2658
      %v2662 = vadd.f32 %v2649, %v2658
      %v2663 = vadd.f32 %v2650, %v2658
      %v2664 = vadd.f32 %v2651, %v2658
      %v2665 = vadd.f32 %v2652, %v2658
      %v2666 = vadd.f32 %v2653, %v2658
      %v2667 = vadd.f32 %v2654, %v2658
      %v2668 = vadd.f32 %v2655, %v2658
      %v2669 = vld [vmem:[%s14] sm:$0x1]
      %v2670 = vld [vmem:[%s15] sm:$0x1]
      %2671 = vadd.xlane.f32.xlu0 %v2660
      %v2672 = vpop.xlane.xlu0 %2671
      %2673 = vadd.xlane.f32.xlu0 %v2661
      %v2674 = vpop.xlane.xlu0 %2673
      %2675 = vadd.xlane.f32.xlu0 %v2662
      %v2676 = vpop.xlane.xlu0 %2675
      %2677 = vadd.xlane.f32.xlu0 %v2663
      %v2678 = vpop.xlane.xlu0 %2677
      %2679 = vadd.xlane.f32.xlu0 %v2664
      %v2680 = vpop.xlane.xlu0 %2679
      %2681 = vadd.xlane.f32.xlu0 %v2665
      %v2682 = vpop.xlane.xlu0 %2681
      %2683 = vadd.xlane.f32.xlu0 %v2666
      %v2684 = vpop.xlane.xlu0 %2683
      %2685 = vadd.xlane.f32.xlu0 %v2667
      %v2686 = vpop.xlane.xlu0 %2685
      %2687 = vadd.xlane.f32.xlu0 %v2668
      %v2688 = vpop.xlane.xlu0 %2687
      %v2689 = vmul.f32 %v2672, %v975
      %v2690 = vmul.f32 %v2674, %v975
      %v2691 = vmul.f32 %v2676, %v975
      %v2692 = vmul.f32 %v2678, %v975
      %v2693 = vmul.f32 %v2680, %v975
      %v2694 = vmul.f32 %v2682, %v975
      %v2695 = vmul.f32 %v2684, %v975
      %v2696 = vmul.f32 %v2686, %v975
      %v2697 = vmul.f32 %v2688, %v975
      %v2698 = vsub.f32 %v2660, %v2689
      %v2699 = vsub.f32 %v2661, %v2690
      %v2700 = vsub.f32 %v2662, %v2691
      %v2701 = vsub.f32 %v2663, %v2692
      %v2702 = vsub.f32 %v2664, %v2693
      %v2703 = vsub.f32 %v2665, %v2694
      %v2704 = vsub.f32 %v2666, %v2695
      %v2705 = vsub.f32 %v2667, %v2696
      %v2706 = vsub.f32 %v2668, %v2697
      %v2707 = vmul.f32 %v2698, %v2698
      %v2708 = vmul.f32 %v2699, %v2699
      %v2709 = vmul.f32 %v2700, %v2700
      %v2710 = vmul.f32 %v2701, %v2701
      %v2711 = vmul.f32 %v2702, %v2702
      %v2712 = vmul.f32 %v2703, %v2703
      %v2713 = vmul.f32 %v2704, %v2704
      %v2714 = vmul.f32 %v2705, %v2705
      %v2715 = vmul.f32 %v2706, %v2706
      %2716 = vadd.xlane.f32.xlu0 %v2707
      %v2717 = vpop.xlane.xlu0 %2716
      %2718 = vadd.xlane.f32.xlu0 %v2708
      %v2719 = vpop.xlane.xlu0 %2718
      %2720 = vadd.xlane.f32.xlu0 %v2709
      %v2721 = vpop.xlane.xlu0 %2720
      %2722 = vadd.xlane.f32.xlu0 %v2710
      %v2723 = vpop.xlane.xlu0 %2722
      %2724 = vadd.xlane.f32.xlu0 %v2711
      %v2725 = vpop.xlane.xlu0 %2724
      %2726 = vadd.xlane.f32.xlu0 %v2712
      %v2727 = vpop.xlane.xlu0 %2726
      %2728 = vadd.xlane.f32.xlu0 %v2713
      %v2729 = vpop.xlane.xlu0 %2728
      %2730 = vadd.xlane.f32.xlu0 %v2714
      %v2731 = vpop.xlane.xlu0 %2730
      %2732 = vadd.xlane.f32.xlu0 %v2715
      %v2733 = vpop.xlane.xlu0 %2732
      %v2734 = vmul.f32 %v2717, %v975
      %v2735 = vmul.f32 %v2719, %v975
      %v2736 = vmul.f32 %v2721, %v975
      %v2737 = vmul.f32 %v2723, %v975
      %v2738 = vmul.f32 %v2725, %v975
      %v2739 = vmul.f32 %v2727, %v975
      %v2740 = vmul.f32 %v2729, %v975
      %v2741 = vmul.f32 %v2731, %v975
      %v2742 = vmul.f32 %v2733, %v975
      %v2743 = vadd.f32 %v2734, 1e-05
      %v2744 = vadd.f32 %v2735, 1e-05
      %v2745 = vadd.f32 %v2736, 1e-05
      %v2746 = vadd.f32 %v2737, 1e-05
      %v2747 = vadd.f32 %v2738, 1e-05
      %v2748 = vadd.f32 %v2739, 1e-05
      %v2749 = vadd.f32 %v2740, 1e-05
      %v2750 = vadd.f32 %v2741, 1e-05
      %v2751 = vadd.f32 %v2742, 1e-05
      %v2752 = vrsqrt.pop %v2743
      %v2753 = vmul.f32 %v2752, %v2743
      %v2754 = vmul.f32 %v2753, %v2752
      %v2755 = vmul.f32 0.5, %v2754
      %v2756 = vsub.f32 1.5, %v2755
      %v2757 = vmul.f32 %v2752, %v2756
      %vm2758 = vweird.f32 %v2743
      %vm2759 = vweird.f32 %v2752
      %vm2760 = vmor %vm2758, %vm2759
      %v2761 = vsel %vm2760, %v2752, %v2757
      %v2762 = vrsqrt.pop %v2744
      %v2763 = vmul.f32 %v2762, %v2744
      %v2764 = vmul.f32 %v2763, %v2762
      %v2765 = vmul.f32 0.5, %v2764
      %v2766 = vsub.f32 1.5, %v2765
      %v2767 = vmul.f32 %v2762, %v2766
      %vm2768 = vweird.f32 %v2744
      %vm2769 = vweird.f32 %v2762
      %vm2770 = vmor %vm2768, %vm2769
      %v2771 = vsel %vm2770, %v2762, %v2767
      %v2772 = vrsqrt.pop %v2745
      %v2773 = vmul.f32 %v2772, %v2745
      %v2774 = vmul.f32 %v2773, %v2772
      %v2775 = vmul.f32 0.5, %v2774
      %v2776 = vsub.f32 1.5, %v2775
      %v2777 = vmul.f32 %v2772, %v2776
      %vm2778 = vweird.f32 %v2745
      %vm2779 = vweird.f32 %v2772
      %vm2780 = vmor %vm2778, %vm2779
      %v2781 = vsel %vm2780, %v2772, %v2777
      %v2782 = vrsqrt.pop %v2746
      %v2783 = vmul.f32 %v2782, %v2746
      %v2784 = vmul.f32 %v2783, %v2782
      %v2785 = vmul.f32 0.5, %v2784
      %v2786 = vsub.f32 1.5, %v2785
      %v2787 = vmul.f32 %v2782, %v2786
      %vm2788 = vweird.f32 %v2746
      %vm2789 = vweird.f32 %v2782
      %vm2790 = vmor %vm2788, %vm2789
      %v2791 = vsel %vm2790, %v2782, %v2787
      %v2792 = vrsqrt.pop %v2747
      %v2793 = vmul.f32 %v2792, %v2747
      %v2794 = vmul.f32 %v2793, %v2792
      %v2795 = vmul.f32 0.5, %v2794
      %v2796 = vsub.f32 1.5, %v2795
      %v2797 = vmul.f32 %v2792, %v2796
      %vm2798 = vweird.f32 %v2747
      %vm2799 = vweird.f32 %v2792
      %vm2800 = vmor %vm2798, %vm2799
      %v2801 = vsel %vm2800, %v2792, %v2797
      %v2802 = vrsqrt.pop %v2748
      %v2803 = vmul.f32 %v2802, %v2748
      %v2804 = vmul.f32 %v2803, %v2802
      %v2805 = vmul.f32 0.5, %v2804
      %v2806 = vsub.f32 1.5, %v2805
      %v2807 = vmul.f32 %v2802, %v2806
      %vm2808 = vweird.f32 %v2748
      %vm2809 = vweird.f32 %v2802
      %vm2810 = vmor %vm2808, %vm2809
      %v2811 = vsel %vm2810, %v2802, %v2807
      %v2812 = vrsqrt.pop %v2749
      %v2813 = vmul.f32 %v2812, %v2749
      %v2814 = vmul.f32 %v2813, %v2812
      %v2815 = vmul.f32 0.5, %v2814
      %v2816 = vsub.f32 1.5, %v2815
      %v2817 = vmul.f32 %v2812, %v2816
      %vm2818 = vweird.f32 %v2749
      %vm2819 = vweird.f32 %v2812
      %vm2820 = vmor %vm2818, %vm2819
      %v2821 = vsel %vm2820, %v2812, %v2817
      %v2822 = vrsqrt.pop %v2750
      %v2823 = vmul.f32 %v2822, %v2750
      %v2824 = vmul.f32 %v2823, %v2822
      %v2825 = vmul.f32 0.5, %v2824
      %v2826 = vsub.f32 1.5, %v2825
      %v2827 = vmul.f32 %v2822, %v2826
      %vm2828 = vweird.f32 %v2750
      %vm2829 = vweird.f32 %v2822
      %vm2830 = vmor %vm2828, %vm2829
      %v2831 = vsel %vm2830, %v2822, %v2827
      %v2832 = vrsqrt.pop %v2751
      %v2833 = vmul.f32 %v2832, %v2751
      %v2834 = vmul.f32 %v2833, %v2832
      %v2835 = vmul.f32 0.5, %v2834
      %v2836 = vsub.f32 1.5, %v2835
      %v2837 = vmul.f32 %v2832, %v2836
      %vm2838 = vweird.f32 %v2751
      %vm2839 = vweird.f32 %v2832
      %vm2840 = vmor %vm2838, %vm2839
      %v2841 = vsel %vm2840, %v2832, %v2837
      %v2842 = vmul.f32 %v2698, %v2761
      %v2843 = vmul.f32 %v2699, %v2771
      %v2844 = vmul.f32 %v2700, %v2781
      %v2845 = vmul.f32 %v2701, %v2791
      %v2846 = vmul.f32 %v2702, %v2801
      %v2847 = vmul.f32 %v2703, %v2811
      %v2848 = vmul.f32 %v2704, %v2821
      %v2849 = vmul.f32 %v2705, %v2831
      %v2850 = vmul.f32 %v2706, %v2841
      %v2852 = vperm.slane %v2669, 0
      %v2854 = vmul.f32 %v2842, %v2852
      %v2855 = vmul.f32 %v2843, %v2852
      %v2856 = vmul.f32 %v2844, %v2852
      %v2857 = vmul.f32 %v2845, %v2852
      %v2858 = vmul.f32 %v2846, %v2852
      %v2859 = vmul.f32 %v2847, %v2852
      %v2860 = vmul.f32 %v2848, %v2852
      %v2861 = vmul.f32 %v2849, %v2852
      %v2862 = vmul.f32 %v2850, %v2852
      %v2864 = vperm.slane %v2670, 0
      %v2866 = vadd.f32 %v2854, %v2864
      %v2867 = vadd.f32 %v2855, %v2864
      %v2868 = vadd.f32 %v2856, %v2864
      %v2869 = vadd.f32 %v2857, %v2864
      %v2870 = vadd.f32 %v2858, %v2864
      %v2871 = vadd.f32 %v2859, %v2864
      %v2872 = vadd.f32 %v2860, %v2864
      %v2873 = vadd.f32 %v2861, %v2864
      %v2874 = vadd.f32 %v2862, %v2864
      %v2875 = vld [vmem:[%s16] sm:$0xff]
      %v2876 = vld [vmem:[%s16 + $0x8] sm:$0xff]
      %v2877 = vld [vmem:[%s16 + $0x10] sm:$0xff]
      %v2878 = vld [vmem:[%s16 + $0x18] sm:$0xff]
      %v2879 = vld [vmem:[%s16 + $0x20] sm:$0xff]
      %v2880 = vld [vmem:[%s16 + $0x28] sm:$0xff]
      %v2881 = vld [vmem:[%s16 + $0x30] sm:$0xff]
      %v2882 = vld [vmem:[%s16 + $0x38] sm:$0xff]
      %v2883 = vld [vmem:[%s16 + $0x40] sm:$0xff]
      %v2884 = vld [vmem:[%s16 + $0x48] sm:$0xff]
      %v2885 = vld [vmem:[%s16 + $0x50] sm:$0xff]
      %v2886 = vld [vmem:[%s16 + $0x58] sm:$0xff]
      %v2887 = vld [vmem:[%s16 + $0x60] sm:$0xff]
      %v2888 = vld [vmem:[%s16 + $0x68] sm:$0xff]
      %v2889 = vld [vmem:[%s16 + $0x70] sm:$0xff]
      %v2890 = vld [vmem:[%s16 + $0x78] sm:$0xff]
      %v2891 = vld [vmem:[%s16 + $0x80] sm:$0xff]
      %v2892 = vld [vmem:[%s16 + $0x88] sm:$0xff]
      %v2893 = vld [vmem:[%s16 + $0x90] sm:$0xff]
      %v2894 = vld [vmem:[%s16 + $0x98] sm:$0xff]
      %v2895 = vld [vmem:[%s16 + $0xa0] sm:$0xff]
      %v2896 = vld [vmem:[%s16 + $0xa8] sm:$0xff]
      %v2897 = vld [vmem:[%s16 + $0xb0] sm:$0xff]
      %v2898 = vld [vmem:[%s16 + $0xb8] sm:$0xff]
      %v2899 = vld [vmem:[%s16 + $0xc0] sm:$0xff]
      %v2900 = vld [vmem:[%s16 + $0xc8] sm:$0xff]
      %v2901 = vld [vmem:[%s16 + $0xd0] sm:$0xff]
      %v2902 = vld [vmem:[%s16 + $0xd8] sm:$0xff]
      %v2903 = vld [vmem:[%s16 + $0xe0] sm:$0xff]
      %v2904 = vld [vmem:[%s16 + $0xe8] sm:$0xff]
      %v2905 = vld [vmem:[%s16 + $0xf0] sm:$0xff]
      %v2906 = vld [vmem:[%s16 + $0xf8] sm:$0xff]
      %v2907 = vpack.c.bf16 %v2867, %v2866
      %v2908 = vpack.c.bf16 %v2869, %v2868
      %v2909 = vpack.c.bf16 %v2871, %v2870
      %v2910 = vpack.c.bf16 %v2873, %v2872
      %v2911 = vpack.c.bf16 %v2874, %v2874
      %v2912 = vpack.c.bf16 %v2877, %v2875
      %v2913 = vpack.c.bf16 %v2878, %v2876
      %v2914 = vpack.c.bf16 %v2881, %v2879
      %v2915 = vpack.c.bf16 %v2882, %v2880
      %v2916 = vpack.c.bf16 %v2885, %v2883
      %v2917 = vpack.c.bf16 %v2886, %v2884
      %v2918 = vpack.c.bf16 %v2889, %v2887
      %v2919 = vpack.c.bf16 %v2890, %v2888
      %v2920 = vpack.c.bf16 %v2893, %v2891
      %v2921 = vpack.c.bf16 %v2894, %v2892
      %v2922 = vpack.c.bf16 %v2897, %v2895
      %v2923 = vpack.c.bf16 %v2898, %v2896
      %v2924 = vpack.c.bf16 %v2901, %v2899
      %v2925 = vpack.c.bf16 %v2902, %v2900
      %v2926 = vpack.c.bf16 %v2905, %v2903
      %v2927 = vpack.c.bf16 %v2906, %v2904
      %v2928 = vld [vmem:[%s17] sm:$0x3]
      %v2930 = vperm.slane %v2928, 0
      %v2931 = vperm.slane %v2928, 1
      %2934 = vmatpush.bf16.msra.mxu0 %v2926
      %2935 = vmatpush.bf16.msra.mxu0 %v2924
      %2936 = vmatpush.bf16.msra.mxu0 %v2922
      %2937 = vmatpush.bf16.msra.mxu0 %v2920
      %2938 = vmatpush.bf16.msra.mxu0 %v2918
      %2939 = vmatpush.bf16.msra.mxu0 %v2916
      %2940 = vmatpush.bf16.msra.mxu0 %v2914
      %2941 = vmatpush.bf16.msra.mxu0 %v2912
      %2942 = vmatmul.bf16.gmra.mxu0 %v2907
      %v2943 = vpop.f32.mrf.mxu0
      %v2944 = vadd.f32 %v2930, %v2943
      %v2945 = vpop.f32.mrf.mxu0
      %v2946 = vadd.f32 %v2930, %v2945
      %2947 = vmatmul.bf16.gmra.mxu0 %v2908
      %v2948 = vpop.f32.mrf.mxu0
      %v2949 = vadd.f32 %v2930, %v2948
      %v2950 = vpop.f32.mrf.mxu0
      %v2951 = vadd.f32 %v2930, %v2950
      %2952 = vmatmul.bf16.gmra.mxu0 %v2909
      %v2953 = vpop.f32.mrf.mxu0
      %v2954 = vadd.f32 %v2930, %v2953
      %v2955 = vpop.f32.mrf.mxu0
      %v2956 = vadd.f32 %v2930, %v2955
      %2957 = vmatmul.bf16.gmra.mxu0 %v2910
      %v2958 = vpop.f32.mrf.mxu0
      %v2959 = vadd.f32 %v2930, %v2958
      %v2960 = vpop.f32.mrf.mxu0
      %v2961 = vadd.f32 %v2930, %v2960
      %2962 = vmatmul.bf16.gmra.mxu0 %v2911
      %v2963 = vpop.f32.mrf.mxu0
      %v2964 = vadd.f32 %v2930, %v2963
      %v2965 = vpop.f32.mrf.mxu0
      %2966 = vdwg.mxu0
      %2967 = vmatpush.bf16.msra.mxu0 %v2927
      %2968 = vmatpush.bf16.msra.mxu0 %v2925
      %2969 = vmatpush.bf16.msra.mxu0 %v2923
      %2970 = vmatpush.bf16.msra.mxu0 %v2921
      %2971 = vmatpush.bf16.msra.mxu0 %v2919
      %2972 = vmatpush.bf16.msra.mxu0 %v2917
      %2973 = vmatpush.bf16.msra.mxu0 %v2915
      %2974 = vmatpush.bf16.msra.mxu0 %v2913
      %2975 = vmatmul.bf16.gmra.mxu0 %v2907
      %v2976 = vpop.f32.mrf.mxu0
      %v2977 = vadd.f32 %v2931, %v2976
      %v2978 = vpop.f32.mrf.mxu0
      %v2979 = vadd.f32 %v2931, %v2978
      %2980 = vmatmul.bf16.gmra.mxu0 %v2908
      %v2981 = vpop.f32.mrf.mxu0
      %v2982 = vadd.f32 %v2931, %v2981
      %v2983 = vpop.f32.mrf.mxu0
      %v2984 = vadd.f32 %v2931, %v2983
      %2985 = vmatmul.bf16.gmra.mxu0 %v2909
      %v2986 = vpop.f32.mrf.mxu0
      %v2987 = vadd.f32 %v2931, %v2986
      %v2988 = vpop.f32.mrf.mxu0
      %v2989 = vadd.f32 %v2931, %v2988
      %2990 = vmatmul.bf16.gmra.mxu0 %v2910
      %v2991 = vpop.f32.mrf.mxu0
      %v2992 = vadd.f32 %v2931, %v2991
      %v2993 = vpop.f32.mrf.mxu0
      %v2994 = vadd.f32 %v2931, %v2993
      %2995 = vmatmul.bf16.gmra.mxu0 %v2911
      %v2996 = vpop.f32.mrf.mxu0
      %v2997 = vadd.f32 %v2931, %v2996
      %v2998 = vpop.f32.mrf.mxu0
      %2999 = vdwg.mxu0
      %v3000 = vmul.f32 %v2944, 0.5
      %v3001 = vmul.f32 %v2977, 0.5
      %v3002 = vmul.f32 %v2946, 0.5
      %v3003 = vmul.f32 %v2979, 0.5
      %v3004 = vmul.f32 %v2949, 0.5
      %v3005 = vmul.f32 %v2982, 0.5
      %v3006 = vmul.f32 %v2951, 0.5
      %v3007 = vmul.f32 %v2984, 0.5
      %v3008 = vmul.f32 %v2954, 0.5
      %v3009 = vmul.f32 %v2987, 0.5
      %v3010 = vmul.f32 %v2956, 0.5
      %v3011 = vmul.f32 %v2989, 0.5
      %v3012 = vmul.f32 %v2959, 0.5
      %v3013 = vmul.f32 %v2992, 0.5
      %v3014 = vmul.f32 %v2961, 0.5
      %v3015 = vmul.f32 %v2994, 0.5
      %v3016 = vmul.f32 %v2964, 0.5
      %v3017 = vmul.f32 %v2997, 0.5
      %v3018 = vmul.f32 %v2944, 0.044715
      %v3019 = vmul.f32 %v2977, 0.044715
      %v3020 = vmul.f32 %v2946, 0.044715
      %v3021 = vmul.f32 %v2979, 0.044715
      %v3022 = vmul.f32 %v2949, 0.044715
      %v3023 = vmul.f32 %v2982, 0.044715
      %v3024 = vmul.f32 %v2951, 0.044715
      %v3025 = vmul.f32 %v2984, 0.044715
      %v3026 = vmul.f32 %v2954, 0.044715
      %v3027 = vmul.f32 %v2987, 0.044715
      %v3028 = vmul.f32 %v2956, 0.044715
      %v3029 = vmul.f32 %v2989, 0.044715
      %v3030 = vmul.f32 %v2959, 0.044715
      %v3031 = vmul.f32 %v2992, 0.044715
      %v3032 = vmul.f32 %v2961, 0.044715
      %v3033 = vmul.f32 %v2994, 0.044715
      %v3034 = vmul.f32 %v2964, 0.044715
      %v3035 = vmul.f32 %v2997, 0.044715
      %v3036 = vmul.f32 %v3018, %v2944
      %v3037 = vmul.f32 %v3019, %v2977
      %v3038 = vmul.f32 %v3020, %v2946
      %v3039 = vmul.f32 %v3021, %v2979
      %v3040 = vmul.f32 %v3022, %v2949
      %v3041 = vmul.f32 %v3023, %v2982
      %v3042 = vmul.f32 %v3024, %v2951
      %v3043 = vmul.f32 %v3025, %v2984
      %v3044 = vmul.f32 %v3026, %v2954
      %v3045 = vmul.f32 %v3027, %v2987
      %v3046 = vmul.f32 %v3028, %v2956
      %v3047 = vmul.f32 %v3029, %v2989
      %v3048 = vmul.f32 %v3030, %v2959
      %v3049 = vmul.f32 %v3031, %v2992
      %v3050 = vmul.f32 %v3032, %v2961
      %v3051 = vmul.f32 %v3033, %v2994
      %v3052 = vmul.f32 %v3034, %v2964
      %v3053 = vmul.f32 %v3035, %v2997
      %v3054 = vmul.f32 %v3036, %v2944
      %v3055 = vmul.f32 %v3037, %v2977
      %v3056 = vmul.f32 %v3038, %v2946
      %v3057 = vmul.f32 %v3039, %v2979
      %v3058 = vmul.f32 %v3040, %v2949
      %v3059 = vmul.f32 %v3041, %v2982
      %v3060 = vmul.f32 %v3042, %v2951
      %v3061 = vmul.f32 %v3043, %v2984
      %v3062 = vmul.f32 %v3044, %v2954
      %v3063 = vmul.f32 %v3045, %v2987
      %v3064 = vmul.f32 %v3046, %v2956
      %v3065 = vmul.f32 %v3047, %v2989
      %v3066 = vmul.f32 %v3048, %v2959
      %v3067 = vmul.f32 %v3049, %v2992
      %v3068 = vmul.f32 %v3050, %v2961
      %v3069 = vmul.f32 %v3051, %v2994
      %v3070 = vmul.f32 %v3052, %v2964
      %v3071 = vmul.f32 %v3053, %v2997
      %v3072 = vadd.f32 %v2944, %v3054
      %v3073 = vadd.f32 %v2977, %v3055
      %v3074 = vadd.f32 %v2946, %v3056
      %v3075 = vadd.f32 %v2979, %v3057
      %v3076 = vadd.f32 %v2949, %v3058
      %v3077 = vadd.f32 %v2982, %v3059
      %v3078 = vadd.f32 %v2951, %v3060
      %v3079 = vadd.f32 %v2984, %v3061
      %v3080 = vadd.f32 %v2954, %v3062
      %v3081 = vadd.f32 %v2987, %v3063
      %v3082 = vadd.f32 %v2956, %v3064
      %v3083 = vadd.f32 %v2989, %v3065
      %v3084 = vadd.f32 %v2959, %v3066
      %v3085 = vadd.f32 %v2992, %v3067
      %v3086 = vadd.f32 %v2961, %v3068
      %v3087 = vadd.f32 %v2994, %v3069
      %v3088 = vadd.f32 %v2964, %v3070
      %v3089 = vadd.f32 %v2997, %v3071
      %v3090 = vmul.f32 %v3072, 0.7978846
      %v3091 = vmul.f32 %v3073, 0.7978846
      %v3092 = vmul.f32 %v3074, 0.7978846
      %v3093 = vmul.f32 %v3075, 0.7978846
      %v3094 = vmul.f32 %v3076, 0.7978846
      %v3095 = vmul.f32 %v3077, 0.7978846
      %v3096 = vmul.f32 %v3078, 0.7978846
      %v3097 = vmul.f32 %v3079, 0.7978846
      %v3098 = vmul.f32 %v3080, 0.7978846
      %v3099 = vmul.f32 %v3081, 0.7978846
      %v3100 = vmul.f32 %v3082, 0.7978846
      %v3101 = vmul.f32 %v3083, 0.7978846
      %v3102 = vmul.f32 %v3084, 0.7978846
      %v3103 = vmul.f32 %v3085, 0.7978846
      %v3104 = vmul.f32 %v3086, 0.7978846
      %v3105 = vmul.f32 %v3087, 0.7978846
      %v3106 = vmul.f32 %v3088, 0.7978846
      %v3107 = vmul.f32 %v3089, 0.7978846
      %v3108 = vtanh.pop %v3090
      %v3109 = vtanh.pop %v3091
      %v3110 = vtanh.pop %v3092
      %v3111 = vtanh.pop %v3093
      %v3112 = vtanh.pop %v3094
      %v3113 = vtanh.pop %v3095
      %v3114 = vtanh.pop %v3096
      %v3115 = vtanh.pop %v3097
      %v3116 = vtanh.pop %v3098
      %v3117 = vtanh.pop %v3099
      %v3118 = vtanh.pop %v3100
      %v3119 = vtanh.pop %v3101
      %v3120 = vtanh.pop %v3102
      %v3121 = vtanh.pop %v3103
      %v3122 = vtanh.pop %v3104
      %v3123 = vtanh.pop %v3105
      %v3124 = vtanh.pop %v3106
      %v3125 = vtanh.pop %v3107
      %v3126 = vadd.f32 %v3108, 1.0
      %v3127 = vadd.f32 %v3109, 1.0
      %v3128 = vadd.f32 %v3110, 1.0
      %v3129 = vadd.f32 %v3111, 1.0
      %v3130 = vadd.f32 %v3112, 1.0
      %v3131 = vadd.f32 %v3113, 1.0
      %v3132 = vadd.f32 %v3114, 1.0
      %v3133 = vadd.f32 %v3115, 1.0
      %v3134 = vadd.f32 %v3116, 1.0
      %v3135 = vadd.f32 %v3117, 1.0
      %v3136 = vadd.f32 %v3118, 1.0
      %v3137 = vadd.f32 %v3119, 1.0
      %v3138 = vadd.f32 %v3120, 1.0
      %v3139 = vadd.f32 %v3121, 1.0
      %v3140 = vadd.f32 %v3122, 1.0
      %v3141 = vadd.f32 %v3123, 1.0
      %v3142 = vadd.f32 %v3124, 1.0
      %v3143 = vadd.f32 %v3125, 1.0
      %v3144 = vmul.f32 %v3000, %v3126
      %v3145 = vmul.f32 %v3001, %v3127
      %v3146 = vmul.f32 %v3002, %v3128
      %v3147 = vmul.f32 %v3003, %v3129
      %v3148 = vmul.f32 %v3004, %v3130
      %v3149 = vmul.f32 %v3005, %v3131
      %v3150 = vmul.f32 %v3006, %v3132
      %v3151 = vmul.f32 %v3007, %v3133
      %v3152 = vmul.f32 %v3008, %v3134
      %v3153 = vmul.f32 %v3009, %v3135
      %v3154 = vmul.f32 %v3010, %v3136
      %v3155 = vmul.f32 %v3011, %v3137
      %v3156 = vmul.f32 %v3012, %v3138
      %v3157 = vmul.f32 %v3013, %v3139
      %v3158 = vmul.f32 %v3014, %v3140
      %v3159 = vmul.f32 %v3015, %v3141
      %v3160 = vmul.f32 %v3016, %v3142
      %v3161 = vmul.f32 %v3017, %v3143
      %v3162 = vld [vmem:[%s18] sm:$0xff]
      %v3163 = vld [vmem:[%s18 + $0x8] sm:$0xff]
      %v3164 = vld [vmem:[%s18 + $0x10] sm:$0xff]
      %v3165 = vld [vmem:[%s18 + $0x18] sm:$0xff]
      %v3166 = vld [vmem:[%s18 + $0x20] sm:$0xff]
      %v3167 = vld [vmem:[%s18 + $0x28] sm:$0xff]
      %v3168 = vld [vmem:[%s18 + $0x30] sm:$0xff]
      %v3169 = vld [vmem:[%s18 + $0x38] sm:$0xff]
      %v3170 = vld [vmem:[%s18 + $0x40] sm:$0xff]
      %v3171 = vld [vmem:[%s18 + $0x48] sm:$0xff]
      %v3172 = vld [vmem:[%s18 + $0x50] sm:$0xff]
      %v3173 = vld [vmem:[%s18 + $0x58] sm:$0xff]
      %v3174 = vld [vmem:[%s18 + $0x60] sm:$0xff]
      %v3175 = vld [vmem:[%s18 + $0x68] sm:$0xff]
      %v3176 = vld [vmem:[%s18 + $0x70] sm:$0xff]
      %v3177 = vld [vmem:[%s18 + $0x78] sm:$0xff]
      %v3178 = vld [vmem:[%s18 + $0x80] sm:$0xff]
      %v3179 = vld [vmem:[%s18 + $0x88] sm:$0xff]
      %v3180 = vld [vmem:[%s18 + $0x90] sm:$0xff]
      %v3181 = vld [vmem:[%s18 + $0x98] sm:$0xff]
      %v3182 = vld [vmem:[%s18 + $0xa0] sm:$0xff]
      %v3183 = vld [vmem:[%s18 + $0xa8] sm:$0xff]
      %v3184 = vld [vmem:[%s18 + $0xb0] sm:$0xff]
      %v3185 = vld [vmem:[%s18 + $0xb8] sm:$0xff]
      %v3186 = vld [vmem:[%s18 + $0xc0] sm:$0xff]
      %v3187 = vld [vmem:[%s18 + $0xc8] sm:$0xff]
      %v3188 = vld [vmem:[%s18 + $0xd0] sm:$0xff]
      %v3189 = vld [vmem:[%s18 + $0xd8] sm:$0xff]
      %v3190 = vld [vmem:[%s18 + $0xe0] sm:$0xff]
      %v3191 = vld [vmem:[%s18 + $0xe8] sm:$0xff]
      %v3192 = vld [vmem:[%s18 + $0xf0] sm:$0xff]
      %v3193 = vld [vmem:[%s18 + $0xf8] sm:$0xff]
      %v3194 = vpack.c.bf16 %v3146, %v3144
      %v3195 = vpack.c.bf16 %v3147, %v3145
      %v3196 = vpack.c.bf16 %v3150, %v3148
      %v3197 = vpack.c.bf16 %v3151, %v3149
      %v3198 = vpack.c.bf16 %v3154, %v3152
      %v3199 = vpack.c.bf16 %v3155, %v3153
      %v3200 = vpack.c.bf16 %v3158, %v3156
      %v3201 = vpack.c.bf16 %v3159, %v3157
      %v3202 = vpack.c.bf16 %v3160, %v3160
      %v3203 = vpack.c.bf16 %v3161, %v3161
      %v3204 = vpack.c.bf16 %v3163, %v3162
      %v3205 = vpack.c.bf16 %v3165, %v3164
      %v3206 = vpack.c.bf16 %v3167, %v3166
      %v3207 = vpack.c.bf16 %v3169, %v3168
      %v3208 = vpack.c.bf16 %v3171, %v3170
      %v3209 = vpack.c.bf16 %v3173, %v3172
      %v3210 = vpack.c.bf16 %v3175, %v3174
      %v3211 = vpack.c.bf16 %v3177, %v3176
      %v3212 = vpack.c.bf16 %v3179, %v3178
      %v3213 = vpack.c.bf16 %v3181, %v3180
      %v3214 = vpack.c.bf16 %v3183, %v3182
      %v3215 = vpack.c.bf16 %v3185, %v3184
      %v3216 = vpack.c.bf16 %v3187, %v3186
      %v3217 = vpack.c.bf16 %v3189, %v3188
      %v3218 = vpack.c.bf16 %v3191, %v3190
      %v3219 = vpack.c.bf16 %v3193, %v3192
      %3220 = vmatpush.bf16.msra.mxu0 %v3211
      %3221 = vmatpush.bf16.msra.mxu0 %v3210
      %3222 = vmatpush.bf16.msra.mxu0 %v3209
      %3223 = vmatpush.bf16.msra.mxu0 %v3208
      %3224 = vmatpush.bf16.msra.mxu0 %v3207
      %3225 = vmatpush.bf16.msra.mxu0 %v3206
      %3226 = vmatpush.bf16.msra.mxu0 %v3205
      %3227 = vmatpush.bf16.msra.mxu0 %v3204
      %3228 = vmatmul.bf16.gmra.mxu0 %v3194
      %v3229 = vpop.f32.mrf.mxu0
      %v3230 = vadd.f32 0.0, %v3229
      %v3231 = vpop.f32.mrf.mxu0
      %v3232 = vadd.f32 0.0, %v3231
      %3233 = vmatmul.bf16.gmra.mxu0 %v3196
      %v3234 = vpop.f32.mrf.mxu0
      %v3235 = vadd.f32 0.0, %v3234
      %v3236 = vpop.f32.mrf.mxu0
      %v3237 = vadd.f32 0.0, %v3236
      %3238 = vmatmul.bf16.gmra.mxu0 %v3198
      %v3239 = vpop.f32.mrf.mxu0
      %v3240 = vadd.f32 0.0, %v3239
      %v3241 = vpop.f32.mrf.mxu0
      %v3242 = vadd.f32 0.0, %v3241
      %3243 = vmatmul.bf16.gmra.mxu0 %v3200
      %v3244 = vpop.f32.mrf.mxu0
      %v3245 = vadd.f32 0.0, %v3244
      %v3246 = vpop.f32.mrf.mxu0
      %v3247 = vadd.f32 0.0, %v3246
      %3248 = vmatmul.bf16.gmra.mxu0 %v3202
      %v3249 = vpop.f32.mrf.mxu0
      %v3250 = vadd.f32 0.0, %v3249
      %v3251 = vpop.f32.mrf.mxu0
      %3252 = vdwg.mxu0
      %3253 = vmatpush.bf16.msra.mxu0 %v3219
      %3254 = vmatpush.bf16.msra.mxu0 %v3218
      %3255 = vmatpush.bf16.msra.mxu0 %v3217
      %3256 = vmatpush.bf16.msra.mxu0 %v3216
      %3257 = vmatpush.bf16.msra.mxu0 %v3215
      %3258 = vmatpush.bf16.msra.mxu0 %v3214
      %3259 = vmatpush.bf16.msra.mxu0 %v3213
      %3260 = vmatpush.bf16.msra.mxu0 %v3212
      %3261 = vmatmul.bf16.gmra.mxu0 %v3195
      %v3262 = vpop.f32.mrf.mxu0
      %v3263 = vadd.f32 %v3230, %v3262
      %v3264 = vpop.f32.mrf.mxu0
      %v3265 = vadd.f32 %v3232, %v3264
      %3266 = vmatmul.bf16.gmra.mxu0 %v3197
      %v3267 = vpop.f32.mrf.mxu0
      %v3268 = vadd.f32 %v3235, %v3267
      %v3269 = vpop.f32.mrf.mxu0
      %v3270 = vadd.f32 %v3237, %v3269
      %3271 = vmatmul.bf16.gmra.mxu0 %v3199
      %v3272 = vpop.f32.mrf.mxu0
      %v3273 = vadd.f32 %v3240, %v3272
      %v3274 = vpop.f32.mrf.mxu0
      %v3275 = vadd.f32 %v3242, %v3274
      %3276 = vmatmul.bf16.gmra.mxu0 %v3201
      %v3277 = vpop.f32.mrf.mxu0
      %v3278 = vadd.f32 %v3245, %v3277
      %v3279 = vpop.f32.mrf.mxu0
      %v3280 = vadd.f32 %v3247, %v3279
      %3281 = vmatmul.bf16.gmra.mxu0 %v3203
      %v3282 = vpop.f32.mrf.mxu0
      %v3283 = vadd.f32 %v3250, %v3282
      %v3284 = vpop.f32.mrf.mxu0
      %3285 = vdwg.mxu0
      %v3286 = vadd.f32 %v2660, %v3263
      %v3287 = vadd.f32 %v2661, %v3265
      %v3288 = vadd.f32 %v2662, %v3268
      %v3289 = vadd.f32 %v2663, %v3270
      %v3290 = vadd.f32 %v2664, %v3273
      %v3291 = vadd.f32 %v2665, %v3275
      %v3292 = vadd.f32 %v2666, %v3278
      %v3293 = vadd.f32 %v2667, %v3280
      %v3294 = vadd.f32 %v2668, %v3283
      %v3295 = vld [vmem:[%s19] sm:$0x1]
      %v3297 = vperm.slane %v3295, 0
      %v3299 = vadd.f32 %v3286, %v3297
      %v3300 = vadd.f32 %v3287, %v3297
      %v3301 = vadd.f32 %v3288, %v3297
      %v3302 = vadd.f32 %v3289, %v3297
      %v3303 = vadd.f32 %v3290, %v3297
      %v3304 = vadd.f32 %v3291, %v3297
      %v3305 = vadd.f32 %v3292, %v3297
      %v3306 = vadd.f32 %v3293, %v3297
      %v3307 = vadd.f32 %v3294, %v3297
      %s3308 = scalar_lea.vmem %s9, 1
      %v3309 = vld [vmem:[%s3308] sm:$0x1]
      %s3310 = scalar_lea.vmem %s10, 1
      %v3311 = vld [vmem:[%s3310] sm:$0x1]
      %3312 = vadd.xlane.f32.xlu0 %v3299
      %v3313 = vpop.xlane.xlu0 %3312
      %3314 = vadd.xlane.f32.xlu0 %v3300
      %v3315 = vpop.xlane.xlu0 %3314
      %3316 = vadd.xlane.f32.xlu0 %v3301
      %v3317 = vpop.xlane.xlu0 %3316
      %3318 = vadd.xlane.f32.xlu0 %v3302
      %v3319 = vpop.xlane.xlu0 %3318
      %3320 = vadd.xlane.f32.xlu0 %v3303
      %v3321 = vpop.xlane.xlu0 %3320
      %3322 = vadd.xlane.f32.xlu0 %v3304
      %v3323 = vpop.xlane.xlu0 %3322
      %3324 = vadd.xlane.f32.xlu0 %v3305
      %v3325 = vpop.xlane.xlu0 %3324
      %3326 = vadd.xlane.f32.xlu0 %v3306
      %v3327 = vpop.xlane.xlu0 %3326
      %3328 = vadd.xlane.f32.xlu0 %v3307
      %v3329 = vpop.xlane.xlu0 %3328
      %v3330 = vmul.f32 %v3313, %v975
      %v3331 = vmul.f32 %v3315, %v975
      %v3332 = vmul.f32 %v3317, %v975
      %v3333 = vmul.f32 %v3319, %v975
      %v3334 = vmul.f32 %v3321, %v975
      %v3335 = vmul.f32 %v3323, %v975
      %v3336 = vmul.f32 %v3325, %v975
      %v3337 = vmul.f32 %v3327, %v975
      %v3338 = vmul.f32 %v3329, %v975
      %v3339 = vsub.f32 %v3299, %v3330
      %v3340 = vsub.f32 %v3300, %v3331
      %v3341 = vsub.f32 %v3301, %v3332
      %v3342 = vsub.f32 %v3302, %v3333
      %v3343 = vsub.f32 %v3303, %v3334
      %v3344 = vsub.f32 %v3304, %v3335
      %v3345 = vsub.f32 %v3305, %v3336
      %v3346 = vsub.f32 %v3306, %v3337
      %v3347 = vsub.f32 %v3307, %v3338
      %v3348 = vmul.f32 %v3339, %v3339
      %v3349 = vmul.f32 %v3340, %v3340
      %v3350 = vmul.f32 %v3341, %v3341
      %v3351 = vmul.f32 %v3342, %v3342
      %v3352 = vmul.f32 %v3343, %v3343
      %v3353 = vmul.f32 %v3344, %v3344
      %v3354 = vmul.f32 %v3345, %v3345
      %v3355 = vmul.f32 %v3346, %v3346
      %v3356 = vmul.f32 %v3347, %v3347
      %3357 = vadd.xlane.f32.xlu0 %v3348
      %v3358 = vpop.xlane.xlu0 %3357
      %3359 = vadd.xlane.f32.xlu0 %v3349
      %v3360 = vpop.xlane.xlu0 %3359
      %3361 = vadd.xlane.f32.xlu0 %v3350
      %v3362 = vpop.xlane.xlu0 %3361
      %3363 = vadd.xlane.f32.xlu0 %v3351
      %v3364 = vpop.xlane.xlu0 %3363
      %3365 = vadd.xlane.f32.xlu0 %v3352
      %v3366 = vpop.xlane.xlu0 %3365
      %3367 = vadd.xlane.f32.xlu0 %v3353
      %v3368 = vpop.xlane.xlu0 %3367
      %3369 = vadd.xlane.f32.xlu0 %v3354
      %v3370 = vpop.xlane.xlu0 %3369
      %3371 = vadd.xlane.f32.xlu0 %v3355
      %v3372 = vpop.xlane.xlu0 %3371
      %3373 = vadd.xlane.f32.xlu0 %v3356
      %v3374 = vpop.xlane.xlu0 %3373
      %v3375 = vmul.f32 %v3358, %v975
      %v3376 = vmul.f32 %v3360, %v975
      %v3377 = vmul.f32 %v3362, %v975
      %v3378 = vmul.f32 %v3364, %v975
      %v3379 = vmul.f32 %v3366, %v975
      %v3380 = vmul.f32 %v3368, %v975
      %v3381 = vmul.f32 %v3370, %v975
      %v3382 = vmul.f32 %v3372, %v975
      %v3383 = vmul.f32 %v3374, %v975
      %v3384 = vadd.f32 %v3375, 1e-05
      %v3385 = vadd.f32 %v3376, 1e-05
      %v3386 = vadd.f32 %v3377, 1e-05
      %v3387 = vadd.f32 %v3378, 1e-05
      %v3388 = vadd.f32 %v3379, 1e-05
      %v3389 = vadd.f32 %v3380, 1e-05
      %v3390 = vadd.f32 %v3381, 1e-05
      %v3391 = vadd.f32 %v3382, 1e-05
      %v3392 = vadd.f32 %v3383, 1e-05
      %v3393 = vrsqrt.pop %v3384
      %v3394 = vmul.f32 %v3393, %v3384
      %v3395 = vmul.f32 %v3394, %v3393
      %v3396 = vmul.f32 0.5, %v3395
      %v3397 = vsub.f32 1.5, %v3396
      %v3398 = vmul.f32 %v3393, %v3397
      %vm3399 = vweird.f32 %v3384
      %vm3400 = vweird.f32 %v3393
      %vm3401 = vmor %vm3399, %vm3400
      %v3402 = vsel %vm3401, %v3393, %v3398
      %v3403 = vrsqrt.pop %v3385
      %v3404 = vmul.f32 %v3403, %v3385
      %v3405 = vmul.f32 %v3404, %v3403
      %v3406 = vmul.f32 0.5, %v3405
      %v3407 = vsub.f32 1.5, %v3406
      %v3408 = vmul.f32 %v3403, %v3407
      %vm3409 = vweird.f32 %v3385
      %vm3410 = vweird.f32 %v3403
      %vm3411 = vmor %vm3409, %vm3410
      %v3412 = vsel %vm3411, %v3403, %v3408
      %v3413 = vrsqrt.pop %v3386
      %v3414 = vmul.f32 %v3413, %v3386
      %v3415 = vmul.f32 %v3414, %v3413
      %v3416 = vmul.f32 0.5, %v3415
      %v3417 = vsub.f32 1.5, %v3416
      %v3418 = vmul.f32 %v3413, %v3417
      %vm3419 = vweird.f32 %v3386
      %vm3420 = vweird.f32 %v3413
      %vm3421 = vmor %vm3419, %vm3420
      %v3422 = vsel %vm3421, %v3413, %v3418
      %v3423 = vrsqrt.pop %v3387
      %v3424 = vmul.f32 %v3423, %v3387
      %v3425 = vmul.f32 %v3424, %v3423
      %v3426 = vmul.f32 0.5, %v3425
      %v3427 = vsub.f32 1.5, %v3426
      %v3428 = vmul.f32 %v3423, %v3427
      %vm3429 = vweird.f32 %v3387
      %vm3430 = vweird.f32 %v3423
      %vm3431 = vmor %vm3429, %vm3430
      %v3432 = vsel %vm3431, %v3423, %v3428
      %v3433 = vrsqrt.pop %v3388
      %v3434 = vmul.f32 %v3433, %v3388
      %v3435 = vmul.f32 %v3434, %v3433
      %v3436 = vmul.f32 0.5, %v3435
      %v3437 = vsub.f32 1.5, %v3436
      %v3438 = vmul.f32 %v3433, %v3437
      %vm3439 = vweird.f32 %v3388
      %vm3440 = vweird.f32 %v3433
      %vm3441 = vmor %vm3439, %vm3440
      %v3442 = vsel %vm3441, %v3433, %v3438
      %v3443 = vrsqrt.pop %v3389
      %v3444 = vmul.f32 %v3443, %v3389
      %v3445 = vmul.f32 %v3444, %v3443
      %v3446 = vmul.f32 0.5, %v3445
      %v3447 = vsub.f32 1.5, %v3446
      %v3448 = vmul.f32 %v3443, %v3447
      %vm3449 = vweird.f32 %v3389
      %vm3450 = vweird.f32 %v3443
      %vm3451 = vmor %vm3449, %vm3450
      %v3452 = vsel %vm3451, %v3443, %v3448
      %v3453 = vrsqrt.pop %v3390
      %v3454 = vmul.f32 %v3453, %v3390
      %v3455 = vmul.f32 %v3454, %v3453
      %v3456 = vmul.f32 0.5, %v3455
      %v3457 = vsub.f32 1.5, %v3456
      %v3458 = vmul.f32 %v3453, %v3457
      %vm3459 = vweird.f32 %v3390
      %vm3460 = vweird.f32 %v3453
      %vm3461 = vmor %vm3459, %vm3460
      %v3462 = vsel %vm3461, %v3453, %v3458
      %v3463 = vrsqrt.pop %v3391
      %v3464 = vmul.f32 %v3463, %v3391
      %v3465 = vmul.f32 %v3464, %v3463
      %v3466 = vmul.f32 0.5, %v3465
      %v3467 = vsub.f32 1.5, %v3466
      %v3468 = vmul.f32 %v3463, %v3467
      %vm3469 = vweird.f32 %v3391
      %vm3470 = vweird.f32 %v3463
      %vm3471 = vmor %vm3469, %vm3470
      %v3472 = vsel %vm3471, %v3463, %v3468
      %v3473 = vrsqrt.pop %v3392
      %v3474 = vmul.f32 %v3473, %v3392
      %v3475 = vmul.f32 %v3474, %v3473
      %v3476 = vmul.f32 0.5, %v3475
      %v3477 = vsub.f32 1.5, %v3476
      %v3478 = vmul.f32 %v3473, %v3477
      %vm3479 = vweird.f32 %v3392
      %vm3480 = vweird.f32 %v3473
      %vm3481 = vmor %vm3479, %vm3480
      %v3482 = vsel %vm3481, %v3473, %v3478
      %v3483 = vmul.f32 %v3339, %v3402
      %v3484 = vmul.f32 %v3340, %v3412
      %v3485 = vmul.f32 %v3341, %v3422
      %v3486 = vmul.f32 %v3342, %v3432
      %v3487 = vmul.f32 %v3343, %v3442
      %v3488 = vmul.f32 %v3344, %v3452
      %v3489 = vmul.f32 %v3345, %v3462
      %v3490 = vmul.f32 %v3346, %v3472
      %v3491 = vmul.f32 %v3347, %v3482
      %v3493 = vperm.slane %v3309, 0
      %v3495 = vmul.f32 %v3483, %v3493
      %v3496 = vmul.f32 %v3484, %v3493
      %v3497 = vmul.f32 %v3485, %v3493
      %v3498 = vmul.f32 %v3486, %v3493
      %v3499 = vmul.f32 %v3487, %v3493
      %v3500 = vmul.f32 %v3488, %v3493
      %v3501 = vmul.f32 %v3489, %v3493
      %v3502 = vmul.f32 %v3490, %v3493
      %v3503 = vmul.f32 %v3491, %v3493
      %v3505 = vperm.slane %v3311, 0
      %v3507 = vadd.f32 %v3495, %v3505
      %v3508 = vadd.f32 %v3496, %v3505
      %v3509 = vadd.f32 %v3497, %v3505
      %v3510 = vadd.f32 %v3498, %v3505
      %v3511 = vadd.f32 %v3499, %v3505
      %v3512 = vadd.f32 %v3500, %v3505
      %v3513 = vadd.f32 %v3501, %v3505
      %v3514 = vadd.f32 %v3502, %v3505
      %v3515 = vadd.f32 %v3503, %v3505
      %s3516 = scalar_lea.vmem %s11, 384
      %v3517 = vld [vmem:[%s3516] sm:$0xff]
      %v3518 = vld [vmem:[%s3516 + $0x8] sm:$0xff]
      %v3519 = vld [vmem:[%s3516 + $0x10] sm:$0xff]
      %v3520 = vld [vmem:[%s3516 + $0x18] sm:$0xff]
      %v3521 = vld [vmem:[%s3516 + $0x20] sm:$0xff]
      %v3522 = vld [vmem:[%s3516 + $0x28] sm:$0xff]
      %v3523 = vld [vmem:[%s3516 + $0x30] sm:$0xff]
      %v3524 = vld [vmem:[%s3516 + $0x38] sm:$0xff]
      %v3525 = vld [vmem:[%s3516 + $0x40] sm:$0xff]
      %v3526 = vld [vmem:[%s3516 + $0x48] sm:$0xff]
      %v3527 = vld [vmem:[%s3516 + $0x50] sm:$0xff]
      %v3528 = vld [vmem:[%s3516 + $0x58] sm:$0xff]
      %v3529 = vld [vmem:[%s3516 + $0x60] sm:$0xff]
      %v3530 = vld [vmem:[%s3516 + $0x68] sm:$0xff]
      %v3531 = vld [vmem:[%s3516 + $0x70] sm:$0xff]
      %v3532 = vld [vmem:[%s3516 + $0x78] sm:$0xff]
      %v3533 = vld [vmem:[%s3516 + $0x80] sm:$0xff]
      %v3534 = vld [vmem:[%s3516 + $0x88] sm:$0xff]
      %v3535 = vld [vmem:[%s3516 + $0x90] sm:$0xff]
      %v3536 = vld [vmem:[%s3516 + $0x98] sm:$0xff]
      %v3537 = vld [vmem:[%s3516 + $0xa0] sm:$0xff]
      %v3538 = vld [vmem:[%s3516 + $0xa8] sm:$0xff]
      %v3539 = vld [vmem:[%s3516 + $0xb0] sm:$0xff]
      %v3540 = vld [vmem:[%s3516 + $0xb8] sm:$0xff]
      %v3541 = vld [vmem:[%s3516 + $0xc0] sm:$0xff]
      %v3542 = vld [vmem:[%s3516 + $0xc8] sm:$0xff]
      %v3543 = vld [vmem:[%s3516 + $0xd0] sm:$0xff]
      %v3544 = vld [vmem:[%s3516 + $0xd8] sm:$0xff]
      %v3545 = vld [vmem:[%s3516 + $0xe0] sm:$0xff]
      %v3546 = vld [vmem:[%s3516 + $0xe8] sm:$0xff]
      %v3547 = vld [vmem:[%s3516 + $0xf0] sm:$0xff]
      %v3548 = vld [vmem:[%s3516 + $0xf8] sm:$0xff]
      %v3549 = vld [vmem:[%s3516 + $0x100] sm:$0xff]
      %v3550 = vld [vmem:[%s3516 + $0x108] sm:$0xff]
      %v3551 = vld [vmem:[%s3516 + $0x110] sm:$0xff]
      %v3552 = vld [vmem:[%s3516 + $0x118] sm:$0xff]
      %v3553 = vld [vmem:[%s3516 + $0x120] sm:$0xff]
      %v3554 = vld [vmem:[%s3516 + $0x128] sm:$0xff]
      %v3555 = vld [vmem:[%s3516 + $0x130] sm:$0xff]
      %v3556 = vld [vmem:[%s3516 + $0x138] sm:$0xff]
      %v3557 = vld [vmem:[%s3516 + $0x140] sm:$0xff]
      %v3558 = vld [vmem:[%s3516 + $0x148] sm:$0xff]
      %v3559 = vld [vmem:[%s3516 + $0x150] sm:$0xff]
      %v3560 = vld [vmem:[%s3516 + $0x158] sm:$0xff]
      %v3561 = vld [vmem:[%s3516 + $0x160] sm:$0xff]
      %v3562 = vld [vmem:[%s3516 + $0x168] sm:$0xff]
      %v3563 = vld [vmem:[%s3516 + $0x170] sm:$0xff]
      %v3564 = vld [vmem:[%s3516 + $0x178] sm:$0xff]
      %v3565 = vpack.c.bf16 %v3508, %v3507
      %v3566 = vpack.c.bf16 %v3510, %v3509
      %v3567 = vpack.c.bf16 %v3512, %v3511
      %v3568 = vpack.c.bf16 %v3514, %v3513
      %v3569 = vpack.c.bf16 %v3515, %v3515
      %v3570 = vpack.c.bf16 %v3520, %v3517
      %v3571 = vpack.c.bf16 %v3521, %v3518
      %v3572 = vpack.c.bf16 %v3522, %v3519
      %v3573 = vpack.c.bf16 %v3526, %v3523
      %v3574 = vpack.c.bf16 %v3527, %v3524
      %v3575 = vpack.c.bf16 %v3528, %v3525
      %v3576 = vpack.c.bf16 %v3532, %v3529
      %v3577 = vpack.c.bf16 %v3533, %v3530
      %v3578 = vpack.c.bf16 %v3534, %v3531
      %v3579 = vpack.c.bf16 %v3538, %v3535
      %v3580 = vpack.c.bf16 %v3539, %v3536
      %v3581 = vpack.c.bf16 %v3540, %v3537
      %v3582 = vpack.c.bf16 %v3544, %v3541
      %v3583 = vpack.c.bf16 %v3545, %v3542
      %v3584 = vpack.c.bf16 %v3546, %v3543
      %v3585 = vpack.c.bf16 %v3550, %v3547
      %v3586 = vpack.c.bf16 %v3551, %v3548
      %v3587 = vpack.c.bf16 %v3552, %v3549
      %v3588 = vpack.c.bf16 %v3556, %v3553
      %v3589 = vpack.c.bf16 %v3557, %v3554
      %v3590 = vpack.c.bf16 %v3558, %v3555
      %v3591 = vpack.c.bf16 %v3562, %v3559
      %v3592 = vpack.c.bf16 %v3563, %v3560
      %v3593 = vpack.c.bf16 %v3564, %v3561
      %3594 = vmatpush.bf16.msra.mxu0 %v3591
      %3595 = vmatpush.bf16.msra.mxu0 %v3588
      %3596 = vmatpush.bf16.msra.mxu0 %v3585
      %3597 = vmatpush.bf16.msra.mxu0 %v3582
      %3598 = vmatpush.bf16.msra.mxu0 %v3579
      %3599 = vmatpush.bf16.msra.mxu0 %v3576
      %3600 = vmatpush.bf16.msra.mxu0 %v3573
      %3601 = vmatpush.bf16.msra.mxu0 %v3570
      %3602 = vmatmul.bf16.gmra.mxu0 %v3565
      %v3603 = vpop.f32.mrf.mxu0
      %v3604 = vadd.f32 0.0, %v3603
      %v3605 = vpop.f32.mrf.mxu0
      %v3606 = vadd.f32 0.0, %v3605
      %3607 = vmatmul.bf16.gmra.mxu0 %v3566
      %v3608 = vpop.f32.mrf.mxu0
      %v3609 = vadd.f32 0.0, %v3608
      %v3610 = vpop.f32.mrf.mxu0
      %v3611 = vadd.f32 0.0, %v3610
      %3612 = vmatmul.bf16.gmra.mxu0 %v3567
      %v3613 = vpop.f32.mrf.mxu0
      %v3614 = vadd.f32 0.0, %v3613
      %v3615 = vpop.f32.mrf.mxu0
      %v3616 = vadd.f32 0.0, %v3615
      %3617 = vmatmul.bf16.gmra.mxu0 %v3568
      %v3618 = vpop.f32.mrf.mxu0
      %v3619 = vadd.f32 0.0, %v3618
      %v3620 = vpop.f32.mrf.mxu0
      %v3621 = vadd.f32 0.0, %v3620
      %3622 = vmatmul.bf16.gmra.mxu0 %v3569
      %v3623 = vpop.f32.mrf.mxu0
      %v3624 = vadd.f32 0.0, %v3623
      %v3625 = vpop.f32.mrf.mxu0
      %3626 = vdwg.mxu0
      %3627 = vmatpush.bf16.msra.mxu0 %v3592
      %3628 = vmatpush.bf16.msra.mxu0 %v3589
      %3629 = vmatpush.bf16.msra.mxu0 %v3586
      %3630 = vmatpush.bf16.msra.mxu0 %v3583
      %3631 = vmatpush.bf16.msra.mxu0 %v3580
      %3632 = vmatpush.bf16.msra.mxu0 %v3577
      %3633 = vmatpush.bf16.msra.mxu0 %v3574
      %3634 = vmatpush.bf16.msra.mxu0 %v3571
      %3635 = vmatmul.bf16.gmra.mxu0 %v3565
      %v3636 = vpop.f32.mrf.mxu0
      %v3637 = vadd.f32 0.0, %v3636
      %v3638 = vpop.f32.mrf.mxu0
      %v3639 = vadd.f32 0.0, %v3638
      %3640 = vmatmul.bf16.gmra.mxu0 %v3566
      %v3641 = vpop.f32.mrf.mxu0
      %v3642 = vadd.f32 0.0, %v3641
      %v3643 = vpop.f32.mrf.mxu0
      %v3644 = vadd.f32 0.0, %v3643
      %3645 = vmatmul.bf16.gmra.mxu0 %v3567
      %v3646 = vpop.f32.mrf.mxu0
      %v3647 = vadd.f32 0.0, %v3646
      %v3648 = vpop.f32.mrf.mxu0
      %v3649 = vadd.f32 0.0, %v3648
      %3650 = vmatmul.bf16.gmra.mxu0 %v3568
      %v3651 = vpop.f32.mrf.mxu0
      %v3652 = vadd.f32 0.0, %v3651
      %v3653 = vpop.f32.mrf.mxu0
      %v3654 = vadd.f32 0.0, %v3653
      %3655 = vmatmul.bf16.gmra.mxu0 %v3569
      %v3656 = vpop.f32.mrf.mxu0
      %v3657 = vadd.f32 0.0, %v3656
      %v3658 = vpop.f32.mrf.mxu0
      %3659 = vdwg.mxu0
      %3660 = vmatpush.bf16.msra.mxu0 %v3593
      %3661 = vmatpush.bf16.msra.mxu0 %v3590
      %3662 = vmatpush.bf16.msra.mxu0 %v3587
      %3663 = vmatpush.bf16.msra.mxu0 %v3584
      %3664 = vmatpush.bf16.msra.mxu0 %v3581
      %3665 = vmatpush.bf16.msra.mxu0 %v3578
      %3666 = vmatpush.bf16.msra.mxu0 %v3575
      %3667 = vmatpush.bf16.msra.mxu0 %v3572
      %3668 = vmatmul.bf16.gmra.mxu0 %v3565
      %v3669 = vpop.f32.mrf.mxu0
      %v3670 = vadd.f32 0.0, %v3669
      %v3671 = vpop.f32.mrf.mxu0
      %v3672 = vadd.f32 0.0, %v3671
      %3673 = vmatmul.bf16.gmra.mxu0 %v3566
      %v3674 = vpop.f32.mrf.mxu0
      %v3675 = vadd.f32 0.0, %v3674
      %v3676 = vpop.f32.mrf.mxu0
      %v3677 = vadd.f32 0.0, %v3676
      %3678 = vmatmul.bf16.gmra.mxu0 %v3567
      %v3679 = vpop.f32.mrf.mxu0
      %v3680 = vadd.f32 0.0, %v3679
      %v3681 = vpop.f32.mrf.mxu0
      %v3682 = vadd.f32 0.0, %v3681
      %3683 = vmatmul.bf16.gmra.mxu0 %v3568
      %v3684 = vpop.f32.mrf.mxu0
      %v3685 = vadd.f32 0.0, %v3684
      %v3686 = vpop.f32.mrf.mxu0
      %v3687 = vadd.f32 0.0, %v3686
      %3688 = vmatmul.bf16.gmra.mxu0 %v3569
      %v3689 = vpop.f32.mrf.mxu0
      %v3690 = vadd.f32 0.0, %v3689
      %v3691 = vpop.f32.mrf.mxu0
      %3692 = vdwg.mxu0
      %v3693 = vpack.c.bf16 %v3604, %v3604
      %v3694 = vpack.c.bf16 %v3606, %v3606
      %v3695 = vpack.c.bf16 %v3609, %v3609
      %v3696 = vpack.c.bf16 %v3611, %v3611
      %v3697 = vpack.c.bf16 %v3614, %v3614
      %v3698 = vpack.c.bf16 %v3616, %v3616
      %v3699 = vpack.c.bf16 %v3619, %v3619
      %v3700 = vpack.c.bf16 %v3621, %v3621
      %v3701 = vpack.c.bf16 %v3624, %v3624
      %v3702 = vpack.c.bf16 %v3637, %v3637
      %v3703 = vpack.c.bf16 %v3639, %v3639
      %v3704 = vpack.c.bf16 %v3642, %v3642
      %v3705 = vpack.c.bf16 %v3644, %v3644
      %v3706 = vpack.c.bf16 %v3647, %v3647
      %v3707 = vpack.c.bf16 %v3649, %v3649
      %v3708 = vpack.c.bf16 %v3652, %v3652
      %v3709 = vpack.c.bf16 %v3654, %v3654
      %v3710 = vpack.c.bf16 %v3657, %v3657
      %v3714 = vunpack.c.l.b16 %v3693
      %v3715 = vunpack.c.l.b16 %v3694
      %v3716 = vunpack.c.l.b16 %v3695
      %v3717 = vpack.c.b16 %v3715, %v3714
      %v3718 = vpack.c.b16 %v3716, %v3716
      %v3722 = vunpack.c.l.b16 %v3702
      %v3723 = vunpack.c.l.b16 %v3703
      %v3724 = vunpack.c.l.b16 %v3704
      %v3725 = vpack.c.b16 %v3723, %v3722
      %v3726 = vpack.c.b16 %v3724, %v3724
      %v3728 = vsel %vm745, %v3717, 0
      %v3731 = vsel %vm745, %v3718, 0
      %v3734 = vsel %vm745, %v3725, 0
      %v3737 = vsel %vm745, %v3726, 0
      %3739 = vmatpush.bf16.xpose.msra.mxu0 0
      %3740 = vmatpush.bf16.xpose.msra.mxu0 0
      %3741 = vmatpush.bf16.xpose.msra.mxu0 0
      %3742 = vmatpush.bf16.xpose.msra.mxu0 0
      %3743 = vmatpush.bf16.xpose.msra.mxu0 0
      %3744 = vmatpush.bf16.xpose.msra.mxu0 0
      %3745 = vmatpush.bf16.xpose.msra.mxu0 %v3737
      %3746 = vmatpush.bf16.xpose.msra.mxu0 %v3734
      %3747 = vmatmul.bf16.gmra.mxu0 %v3728
      %v3748 = vpop.f32.mrf.mxu0
      %v3749 = vadd.f32 0.0, %v3748
      %v3750 = vpop.f32.mrf.mxu0
      %v3751 = vadd.f32 0.0, %v3750
      %3752 = vmatmul.bf16.gmra.mxu0 %v3731
      %v3753 = vpop.f32.mrf.mxu0
      %v3754 = vadd.f32 0.0, %v3753
      %v3755 = vpop.f32.mrf.mxu0
      %3756 = vdwg.mxu0
      %v3760 = vunpack.c.l.b16 %v3696
      %v3761 = vunpack.c.l.b16 %v3697
      %v3762 = vunpack.c.l.b16 %v3698
      %v3763 = vpack.c.b16 %v3761, %v3760
      %v3764 = vpack.c.b16 %v3762, %v3762
      %v3768 = vunpack.c.l.b16 %v3705
      %v3769 = vunpack.c.l.b16 %v3706
      %v3770 = vunpack.c.l.b16 %v3707
      %v3771 = vpack.c.b16 %v3769, %v3768
      %v3772 = vpack.c.b16 %v3770, %v3770
      %v3774 = vsel %vm745, %v3763, 0
      %v3777 = vsel %vm745, %v3764, 0
      %v3780 = vsel %vm745, %v3771, 0
      %v3783 = vsel %vm745, %v3772, 0
      %3785 = vmatpush.bf16.xpose.msra.mxu0 0
      %3786 = vmatpush.bf16.xpose.msra.mxu0 0
      %3787 = vmatpush.bf16.xpose.msra.mxu0 0
      %3788 = vmatpush.bf16.xpose.msra.mxu0 0
      %3789 = vmatpush.bf16.xpose.msra.mxu0 0
      %3790 = vmatpush.bf16.xpose.msra.mxu0 0
      %3791 = vmatpush.bf16.xpose.msra.mxu0 %v3783
      %3792 = vmatpush.bf16.xpose.msra.mxu0 %v3780
      %3793 = vmatmul.bf16.gmra.mxu0 %v3774
      %v3794 = vpop.f32.mrf.mxu0
      %v3795 = vadd.f32 0.0, %v3794
      %v3796 = vpop.f32.mrf.mxu0
      %v3797 = vadd.f32 0.0, %v3796
      %3798 = vmatmul.bf16.gmra.mxu0 %v3777
      %v3799 = vpop.f32.mrf.mxu0
      %v3800 = vadd.f32 0.0, %v3799
      %v3801 = vpop.f32.mrf.mxu0
      %3802 = vdwg.mxu0
      %v3806 = vunpack.c.l.b16 %v3699
      %v3807 = vunpack.c.l.b16 %v3700
      %v3808 = vunpack.c.l.b16 %v3701
      %v3809 = vpack.c.b16 %v3807, %v3806
      %v3810 = vpack.c.b16 %v3808, %v3808
      %v3814 = vunpack.c.l.b16 %v3708
      %v3815 = vunpack.c.l.b16 %v3709
      %v3816 = vunpack.c.l.b16 %v3710
      %v3817 = vpack.c.b16 %v3815, %v3814
      %v3818 = vpack.c.b16 %v3816, %v3816
      %v3820 = vsel %vm745, %v3809, 0
      %v3823 = vsel %vm745, %v3810, 0
      %v3826 = vsel %vm745, %v3817, 0
      %v3829 = vsel %vm745, %v3818, 0
      %3831 = vmatpush.bf16.xpose.msra.mxu0 0
      %3832 = vmatpush.bf16.xpose.msra.mxu0 0
      %3833 = vmatpush.bf16.xpose.msra.mxu0 0
      %3834 = vmatpush.bf16.xpose.msra.mxu0 0
      %3835 = vmatpush.bf16.xpose.msra.mxu0 0
      %3836 = vmatpush.bf16.xpose.msra.mxu0 0
      %3837 = vmatpush.bf16.xpose.msra.mxu0 %v3829
      %3838 = vmatpush.bf16.xpose.msra.mxu0 %v3826
      %3839 = vmatmul.bf16.gmra.mxu0 %v3820
      %v3840 = vpop.f32.mrf.mxu0
      %v3841 = vadd.f32 0.0, %v3840
      %v3842 = vpop.f32.mrf.mxu0
      %v3843 = vadd.f32 0.0, %v3842
      %3844 = vmatmul.bf16.gmra.mxu0 %v3823
      %v3845 = vpop.f32.mrf.mxu0
      %v3846 = vadd.f32 0.0, %v3845
      %v3847 = vpop.f32.mrf.mxu0
      %3848 = vdwg.mxu0
      %v3849 = vmul.f32 %v3749, 0.125
      %v3850 = vmul.f32 %v3751, 0.125
      %v3851 = vmul.f32 %v3754, 0.125
      %v3852 = vmul.f32 %v3795, 0.125
      %v3853 = vmul.f32 %v3797, 0.125
      %v3854 = vmul.f32 %v3800, 0.125
      %v3855 = vmul.f32 %v3841, 0.125
      %v3856 = vmul.f32 %v3843, 0.125
      %v3857 = vmul.f32 %v3846, 0.125
      %v3858 = vsel %vm1685, %v3849, -1e+30
      %v3859 = vsel %vm1685, %v3850, -1e+30
      %v3860 = vsel %vm1685, %v3851, -1e+30
      %v3861 = vsel %vm1685, %v3852, -1e+30
      %v3862 = vsel %vm1685, %v3853, -1e+30
      %v3863 = vsel %vm1685, %v3854, -1e+30
      %v3864 = vsel %vm1685, %v3855, -1e+30
      %v3865 = vsel %vm1685, %v3856, -1e+30
      %v3866 = vsel %vm1685, %v3857, -1e+30
      %v3867 = vsel %vm1695, %v3858, -inf
      %3868 = vmax.xlane.f32.xlu0 %v3867
      %v3869 = vpop.xlane.xlu0 %3868
      %v3870 = vsel %vm1695, %v3859, -inf
      %3871 = vmax.xlane.f32.xlu0 %v3870
      %v3872 = vpop.xlane.xlu0 %3871
      %v3873 = vsel %vm1695, %v3860, -inf
      %3874 = vmax.xlane.f32.xlu0 %v3873
      %v3875 = vpop.xlane.xlu0 %3874
      %v3876 = vsel %vm1695, %v3861, -inf
      %3877 = vmax.xlane.f32.xlu0 %v3876
      %v3878 = vpop.xlane.xlu0 %3877
      %v3879 = vsel %vm1695, %v3862, -inf
      %3880 = vmax.xlane.f32.xlu0 %v3879
      %v3881 = vpop.xlane.xlu0 %3880
      %v3882 = vsel %vm1695, %v3863, -inf
      %3883 = vmax.xlane.f32.xlu0 %v3882
      %v3884 = vpop.xlane.xlu0 %3883
      %v3885 = vsel %vm1695, %v3864, -inf
      %3886 = vmax.xlane.f32.xlu0 %v3885
      %v3887 = vpop.xlane.xlu0 %3886
      %v3888 = vsel %vm1695, %v3865, -inf
      %3889 = vmax.xlane.f32.xlu0 %v3888
      %v3890 = vpop.xlane.xlu0 %3889
      %v3891 = vsel %vm1695, %v3866, -inf
      %3892 = vmax.xlane.f32.xlu0 %v3891
      %v3893 = vpop.xlane.xlu0 %3892
      %v3894 = vsub.f32 %v3858, %v3869
      %v3895 = vsub.f32 %v3859, %v3872
      %v3896 = vsub.f32 %v3860, %v3875
      %v3897 = vsub.f32 %v3861, %v3878
      %v3898 = vsub.f32 %v3862, %v3881
      %v3899 = vsub.f32 %v3863, %v3884
      %v3900 = vsub.f32 %v3864, %v3887
      %v3901 = vsub.f32 %v3865, %v3890
      %v3902 = vsub.f32 %v3866, %v3893
      %v3903 = vmul.f32 %v3894, 1.442695
      %v3904 = vpow.pop %v3903
      %v3905 = vmul.f32 %v3895, 1.442695
      %v3906 = vpow.pop %v3905
      %v3907 = vmul.f32 %v3896, 1.442695
      %v3908 = vpow.pop %v3907
      %v3909 = vmul.f32 %v3897, 1.442695
      %v3910 = vpow.pop %v3909
      %v3911 = vmul.f32 %v3898, 1.442695
      %v3912 = vpow.pop %v3911
      %v3913 = vmul.f32 %v3899, 1.442695
      %v3914 = vpow.pop %v3913
      %v3915 = vmul.f32 %v3900, 1.442695
      %v3916 = vpow.pop %v3915
      %v3917 = vmul.f32 %v3901, 1.442695
      %v3918 = vpow.pop %v3917
      %v3919 = vmul.f32 %v3902, 1.442695
      %v3920 = vpow.pop %v3919
      %v3921 = vsel %vm1695, %v3904, 0.0
      %3922 = vadd.xlane.f32.xlu0 %v3921
      %v3923 = vpop.xlane.xlu0 %3922
      %v3924 = vsel %vm1695, %v3906, 0.0
      %3925 = vadd.xlane.f32.xlu0 %v3924
      %v3926 = vpop.xlane.xlu0 %3925
      %v3927 = vsel %vm1695, %v3908, 0.0
      %3928 = vadd.xlane.f32.xlu0 %v3927
      %v3929 = vpop.xlane.xlu0 %3928
      %v3930 = vsel %vm1695, %v3910, 0.0
      %3931 = vadd.xlane.f32.xlu0 %v3930
      %v3932 = vpop.xlane.xlu0 %3931
      %v3933 = vsel %vm1695, %v3912, 0.0
      %3934 = vadd.xlane.f32.xlu0 %v3933
      %v3935 = vpop.xlane.xlu0 %3934
      %v3936 = vsel %vm1695, %v3914, 0.0
      %3937 = vadd.xlane.f32.xlu0 %v3936
      %v3938 = vpop.xlane.xlu0 %3937
      %v3939 = vsel %vm1695, %v3916, 0.0
      %3940 = vadd.xlane.f32.xlu0 %v3939
      %v3941 = vpop.xlane.xlu0 %3940
      %v3942 = vsel %vm1695, %v3918, 0.0
      %3943 = vadd.xlane.f32.xlu0 %v3942
      %v3944 = vpop.xlane.xlu0 %3943
      %v3945 = vsel %vm1695, %v3920, 0.0
      %3946 = vadd.xlane.f32.xlu0 %v3945
      %v3947 = vpop.xlane.xlu0 %3946
      %v3948 = vrcp.pop %v3923
      %v3949 = vmul.f32 %v3923, %v3948
      %v3950 = vsub.f32 1.0, %v3949
      %v3951 = vmul.f32 %v3948, %v3950
      %v3952 = vadd.f32 %v3948, %v3951
      %vm3953 = vweird.f32 %v3923
      %vm3954 = vweird.f32 %v3948
      %vm3955 = vmor %vm3953, %vm3954
      %v3956 = vsel %vm3955, %v3948, %v3952
      %v3957 = vand.u32 2147483647, %v3923
      %vm3958 = vcmp.eq.f32.partialorder %v3957, 8.507059e+37
      %v3959 = vand.u32 %v3923, 2147483648
      %v3960 = vor.u32 1.1754944e-38, %v3959
      %v3961 = vsel %vm3958, %v3960, %v3956
      %v3962 = vmul.f32 %v3904, %v3961
      %v3963 = vrcp.pop %v3926
      %v3964 = vmul.f32 %v3926, %v3963
      %v3965 = vsub.f32 1.0, %v3964
      %v3966 = vmul.f32 %v3963, %v3965
      %v3967 = vadd.f32 %v3963, %v3966
      %vm3968 = vweird.f32 %v3926
      %vm3969 = vweird.f32 %v3963
      %vm3970 = vmor %vm3968, %vm3969
      %v3971 = vsel %vm3970, %v3963, %v3967
      %v3972 = vand.u32 2147483647, %v3926
      %vm3973 = vcmp.eq.f32.partialorder %v3972, 8.507059e+37
      %v3974 = vand.u32 %v3926, 2147483648
      %v3975 = vor.u32 1.1754944e-38, %v3974
      %v3976 = vsel %vm3973, %v3975, %v3971
      %v3977 = vmul.f32 %v3906, %v3976
      %v3978 = vrcp.pop %v3929
      %v3979 = vmul.f32 %v3929, %v3978
      %v3980 = vsub.f32 1.0, %v3979
      %v3981 = vmul.f32 %v3978, %v3980
      %v3982 = vadd.f32 %v3978, %v3981
      %vm3983 = vweird.f32 %v3929
      %vm3984 = vweird.f32 %v3978
      %vm3985 = vmor %vm3983, %vm3984
      %v3986 = vsel %vm3985, %v3978, %v3982
      %v3987 = vand.u32 2147483647, %v3929
      %vm3988 = vcmp.eq.f32.partialorder %v3987, 8.507059e+37
      %v3989 = vand.u32 %v3929, 2147483648
      %v3990 = vor.u32 1.1754944e-38, %v3989
      %v3991 = vsel %vm3988, %v3990, %v3986
      %v3992 = vmul.f32 %v3908, %v3991
      %v3993 = vrcp.pop %v3932
      %v3994 = vmul.f32 %v3932, %v3993
      %v3995 = vsub.f32 1.0, %v3994
      %v3996 = vmul.f32 %v3993, %v3995
      %v3997 = vadd.f32 %v3993, %v3996
      %vm3998 = vweird.f32 %v3932
      %vm3999 = vweird.f32 %v3993
      %vm4000 = vmor %vm3998, %vm3999
      %v4001 = vsel %vm4000, %v3993, %v3997
      %v4002 = vand.u32 2147483647, %v3932
      %vm4003 = vcmp.eq.f32.partialorder %v4002, 8.507059e+37
      %v4004 = vand.u32 %v3932, 2147483648
      %v4005 = vor.u32 1.1754944e-38, %v4004
      %v4006 = vsel %vm4003, %v4005, %v4001
      %v4007 = vmul.f32 %v3910, %v4006
      %v4008 = vrcp.pop %v3935
      %v4009 = vmul.f32 %v3935, %v4008
      %v4010 = vsub.f32 1.0, %v4009
      %v4011 = vmul.f32 %v4008, %v4010
      %v4012 = vadd.f32 %v4008, %v4011
      %vm4013 = vweird.f32 %v3935
      %vm4014 = vweird.f32 %v4008
      %vm4015 = vmor %vm4013, %vm4014
      %v4016 = vsel %vm4015, %v4008, %v4012
      %v4017 = vand.u32 2147483647, %v3935
      %vm4018 = vcmp.eq.f32.partialorder %v4017, 8.507059e+37
      %v4019 = vand.u32 %v3935, 2147483648
      %v4020 = vor.u32 1.1754944e-38, %v4019
      %v4021 = vsel %vm4018, %v4020, %v4016
      %v4022 = vmul.f32 %v3912, %v4021
      %v4023 = vrcp.pop %v3938
      %v4024 = vmul.f32 %v3938, %v4023
      %v4025 = vsub.f32 1.0, %v4024
      %v4026 = vmul.f32 %v4023, %v4025
      %v4027 = vadd.f32 %v4023, %v4026
      %vm4028 = vweird.f32 %v3938
      %vm4029 = vweird.f32 %v4023
      %vm4030 = vmor %vm4028, %vm4029
      %v4031 = vsel %vm4030, %v4023, %v4027
      %v4032 = vand.u32 2147483647, %v3938
      %vm4033 = vcmp.eq.f32.partialorder %v4032, 8.507059e+37
      %v4034 = vand.u32 %v3938, 2147483648
      %v4035 = vor.u32 1.1754944e-38, %v4034
      %v4036 = vsel %vm4033, %v4035, %v4031
      %v4037 = vmul.f32 %v3914, %v4036
      %v4038 = vrcp.pop %v3941
      %v4039 = vmul.f32 %v3941, %v4038
      %v4040 = vsub.f32 1.0, %v4039
      %v4041 = vmul.f32 %v4038, %v4040
      %v4042 = vadd.f32 %v4038, %v4041
      %vm4043 = vweird.f32 %v3941
      %vm4044 = vweird.f32 %v4038
      %vm4045 = vmor %vm4043, %vm4044
      %v4046 = vsel %vm4045, %v4038, %v4042
      %v4047 = vand.u32 2147483647, %v3941
      %vm4048 = vcmp.eq.f32.partialorder %v4047, 8.507059e+37
      %v4049 = vand.u32 %v3941, 2147483648
      %v4050 = vor.u32 1.1754944e-38, %v4049
      %v4051 = vsel %vm4048, %v4050, %v4046
      %v4052 = vmul.f32 %v3916, %v4051
      %v4053 = vrcp.pop %v3944
      %v4054 = vmul.f32 %v3944, %v4053
      %v4055 = vsub.f32 1.0, %v4054
      %v4056 = vmul.f32 %v4053, %v4055
      %v4057 = vadd.f32 %v4053, %v4056
      %vm4058 = vweird.f32 %v3944
      %vm4059 = vweird.f32 %v4053
      %vm4060 = vmor %vm4058, %vm4059
      %v4061 = vsel %vm4060, %v4053, %v4057
      %v4062 = vand.u32 2147483647, %v3944
      %vm4063 = vcmp.eq.f32.partialorder %v4062, 8.507059e+37
      %v4064 = vand.u32 %v3944, 2147483648
      %v4065 = vor.u32 1.1754944e-38, %v4064
      %v4066 = vsel %vm4063, %v4065, %v4061
      %v4067 = vmul.f32 %v3918, %v4066
      %v4068 = vrcp.pop %v3947
      %v4069 = vmul.f32 %v3947, %v4068
      %v4070 = vsub.f32 1.0, %v4069
      %v4071 = vmul.f32 %v4068, %v4070
      %v4072 = vadd.f32 %v4068, %v4071
      %vm4073 = vweird.f32 %v3947
      %vm4074 = vweird.f32 %v4068
      %vm4075 = vmor %vm4073, %vm4074
      %v4076 = vsel %vm4075, %v4068, %v4072
      %v4077 = vand.u32 2147483647, %v3947
      %vm4078 = vcmp.eq.f32.partialorder %v4077, 8.507059e+37
      %v4079 = vand.u32 %v3947, 2147483648
      %v4080 = vor.u32 1.1754944e-38, %v4079
      %v4081 = vsel %vm4078, %v4080, %v4076
      %v4082 = vmul.f32 %v3920, %v4081
      %v4083 = vpack.c.bf16 %v3962, %v3962
      %v4084 = vpack.c.bf16 %v3977, %v3977
      %v4085 = vpack.c.bf16 %v3992, %v3992
      %v4086 = vpack.c.bf16 %v4007, %v4007
      %v4087 = vpack.c.bf16 %v4022, %v4022
      %v4088 = vpack.c.bf16 %v4037, %v4037
      %v4089 = vpack.c.bf16 %v4052, %v4052
      %v4090 = vpack.c.bf16 %v4067, %v4067
      %v4091 = vpack.c.bf16 %v4082, %v4082
      %v4092 = vpack.c.bf16 %v3670, %v3670
      %v4093 = vpack.c.bf16 %v3672, %v3672
      %v4094 = vpack.c.bf16 %v3675, %v3675
      %v4095 = vpack.c.bf16 %v3677, %v3677
      %v4096 = vpack.c.bf16 %v3680, %v3680
      %v4097 = vpack.c.bf16 %v3682, %v3682
      %v4098 = vpack.c.bf16 %v3685, %v3685
      %v4099 = vpack.c.bf16 %v3687, %v3687
      %v4100 = vpack.c.bf16 %v3690, %v3690
      %v4104 = vunpack.c.l.b16 %v4083
      %v4105 = vunpack.c.l.b16 %v4084
      %v4106 = vunpack.c.l.b16 %v4085
      %v4107 = vpack.c.b16 %v4105, %v4104
      %v4108 = vpack.c.b16 %v4106, %v4106
      %v4112 = vunpack.c.l.b16 %v4092
      %v4113 = vunpack.c.l.b16 %v4093
      %v4114 = vunpack.c.l.b16 %v4094
      %v4115 = vpack.c.b16 %v4113, %v4112
      %v4116 = vpack.c.b16 %v4114, %v4114
      %v4119 = vsel %vm1695, %v4107, 0
      %v4122 = vsel %vm1695, %v4108, 0
      %v4125 = vsel %vm1953, %v4116, 0
      %4127 = vmatpush.bf16.msra.mxu0 0
      %4128 = vmatpush.bf16.msra.mxu0 0
      %4129 = vmatpush.bf16.msra.mxu0 0
      %4130 = vmatpush.bf16.msra.mxu0 0
      %4131 = vmatpush.bf16.msra.mxu0 0
      %4132 = vmatpush.bf16.msra.mxu0 0
      %4133 = vmatpush.bf16.msra.mxu0 %v4125
      %4134 = vmatpush.bf16.msra.mxu0 %v4115
      %4135 = vmatmul.bf16.gmra.mxu0 %v4119
      %v4136 = vpop.f32.mrf.mxu0
      %v4137 = vadd.f32 0.0, %v4136
      %v4138 = vpop.f32.mrf.mxu0
      %v4139 = vadd.f32 0.0, %v4138
      %4140 = vmatmul.bf16.gmra.mxu0 %v4122
      %v4141 = vpop.f32.mrf.mxu0
      %v4142 = vadd.f32 0.0, %v4141
      %v4143 = vpop.f32.mrf.mxu0
      %4144 = vdwg.mxu0
      %v4148 = vunpack.c.l.b16 %v4086
      %v4149 = vunpack.c.l.b16 %v4087
      %v4150 = vunpack.c.l.b16 %v4088
      %v4151 = vpack.c.b16 %v4149, %v4148
      %v4152 = vpack.c.b16 %v4150, %v4150
      %v4156 = vunpack.c.l.b16 %v4095
      %v4157 = vunpack.c.l.b16 %v4096
      %v4158 = vunpack.c.l.b16 %v4097
      %v4159 = vpack.c.b16 %v4157, %v4156
      %v4160 = vpack.c.b16 %v4158, %v4158
      %v4163 = vsel %vm1695, %v4151, 0
      %v4166 = vsel %vm1695, %v4152, 0
      %v4169 = vsel %vm1953, %v4160, 0
      %4171 = vmatpush.bf16.msra.mxu0 0
      %4172 = vmatpush.bf16.msra.mxu0 0
      %4173 = vmatpush.bf16.msra.mxu0 0
      %4174 = vmatpush.bf16.msra.mxu0 0
      %4175 = vmatpush.bf16.msra.mxu0 0
      %4176 = vmatpush.bf16.msra.mxu0 0
      %4177 = vmatpush.bf16.msra.mxu0 %v4169
      %4178 = vmatpush.bf16.msra.mxu0 %v4159
      %4179 = vmatmul.bf16.gmra.mxu0 %v4163
      %v4180 = vpop.f32.mrf.mxu0
      %v4181 = vadd.f32 0.0, %v4180
      %v4182 = vpop.f32.mrf.mxu0
      %v4183 = vadd.f32 0.0, %v4182
      %4184 = vmatmul.bf16.gmra.mxu0 %v4166
      %v4185 = vpop.f32.mrf.mxu0
      %v4186 = vadd.f32 0.0, %v4185
      %v4187 = vpop.f32.mrf.mxu0
      %4188 = vdwg.mxu0
      %v4192 = vunpack.c.l.b16 %v4089
      %v4193 = vunpack.c.l.b16 %v4090
      %v4194 = vunpack.c.l.b16 %v4091
      %v4195 = vpack.c.b16 %v4193, %v4192
      %v4196 = vpack.c.b16 %v4194, %v4194
      %v4200 = vunpack.c.l.b16 %v4098
      %v4201 = vunpack.c.l.b16 %v4099
      %v4202 = vunpack.c.l.b16 %v4100
      %v4203 = vpack.c.b16 %v4201, %v4200
      %v4204 = vpack.c.b16 %v4202, %v4202
      %v4207 = vsel %vm1695, %v4195, 0
      %v4210 = vsel %vm1695, %v4196, 0
      %v4213 = vsel %vm1953, %v4204, 0
      %4215 = vmatpush.bf16.msra.mxu0 0
      %4216 = vmatpush.bf16.msra.mxu0 0
      %4217 = vmatpush.bf16.msra.mxu0 0
      %4218 = vmatpush.bf16.msra.mxu0 0
      %4219 = vmatpush.bf16.msra.mxu0 0
      %4220 = vmatpush.bf16.msra.mxu0 0
      %4221 = vmatpush.bf16.msra.mxu0 %v4213
      %4222 = vmatpush.bf16.msra.mxu0 %v4203
      %4223 = vmatmul.bf16.gmra.mxu0 %v4207
      %v4224 = vpop.f32.mrf.mxu0
      %v4225 = vadd.f32 0.0, %v4224
      %v4226 = vpop.f32.mrf.mxu0
      %v4227 = vadd.f32 0.0, %v4226
      %4228 = vmatmul.bf16.gmra.mxu0 %v4210
      %v4229 = vpop.f32.mrf.mxu0
      %v4230 = vadd.f32 0.0, %v4229
      %v4231 = vpop.f32.mrf.mxu0
      %4232 = vdwg.mxu0
      %4233 = vrot.lane.b32.xlu0 %v3717, 64
      %v4234 = vpop.permute.xlu0 %4233
      %4235 = vrot.lane.b32.xlu0 %v3718, 64
      %v4236 = vpop.permute.xlu0 %4235
      %4237 = vrot.lane.b32.xlu0 %v3725, 64
      %v4238 = vpop.permute.xlu0 %4237
      %4239 = vrot.lane.b32.xlu0 %v3726, 64
      %v4240 = vpop.permute.xlu0 %4239
      %v4242 = vsel %vm745, %v4234, 0
      %v4245 = vsel %vm745, %v4236, 0
      %v4248 = vsel %vm745, %v4238, 0
      %v4251 = vsel %vm745, %v4240, 0
      %4253 = vmatpush.bf16.xpose.msra.mxu0 0
      %4254 = vmatpush.bf16.xpose.msra.mxu0 0
      %4255 = vmatpush.bf16.xpose.msra.mxu0 0
      %4256 = vmatpush.bf16.xpose.msra.mxu0 0
      %4257 = vmatpush.bf16.xpose.msra.mxu0 0
      %4258 = vmatpush.bf16.xpose.msra.mxu0 0
      %4259 = vmatpush.bf16.xpose.msra.mxu0 %v4251
      %4260 = vmatpush.bf16.xpose.msra.mxu0 %v4248
      %4261 = vmatmul.bf16.gmra.mxu0 %v4242
      %v4262 = vpop.f32.mrf.mxu0
      %v4263 = vadd.f32 0.0, %v4262
      %v4264 = vpop.f32.mrf.mxu0
      %v4265 = vadd.f32 0.0, %v4264
      %4266 = vmatmul.bf16.gmra.mxu0 %v4245
      %v4267 = vpop.f32.mrf.mxu0
      %v4268 = vadd.f32 0.0, %v4267
      %v4269 = vpop.f32.mrf.mxu0
      %4270 = vdwg.mxu0
      %4271 = vrot.lane.b32.xlu0 %v3763, 64
      %v4272 = vpop.permute.xlu0 %4271
      %4273 = vrot.lane.b32.xlu0 %v3764, 64
      %v4274 = vpop.permute.xlu0 %4273
      %4275 = vrot.lane.b32.xlu0 %v3771, 64
      %v4276 = vpop.permute.xlu0 %4275
      %4277 = vrot.lane.b32.xlu0 %v3772, 64
      %v4278 = vpop.permute.xlu0 %4277
      %v4280 = vsel %vm745, %v4272, 0
      %v4283 = vsel %vm745, %v4274, 0
      %v4286 = vsel %vm745, %v4276, 0
      %v4289 = vsel %vm745, %v4278, 0
      %4291 = vmatpush.bf16.xpose.msra.mxu0 0
      %4292 = vmatpush.bf16.xpose.msra.mxu0 0
      %4293 = vmatpush.bf16.xpose.msra.mxu0 0
      %4294 = vmatpush.bf16.xpose.msra.mxu0 0
      %4295 = vmatpush.bf16.xpose.msra.mxu0 0
      %4296 = vmatpush.bf16.xpose.msra.mxu0 0
      %4297 = vmatpush.bf16.xpose.msra.mxu0 %v4289
      %4298 = vmatpush.bf16.xpose.msra.mxu0 %v4286
      %4299 = vmatmul.bf16.gmra.mxu0 %v4280
      %v4300 = vpop.f32.mrf.mxu0
      %v4301 = vadd.f32 0.0, %v4300
      %v4302 = vpop.f32.mrf.mxu0
      %v4303 = vadd.f32 0.0, %v4302
      %4304 = vmatmul.bf16.gmra.mxu0 %v4283
      %v4305 = vpop.f32.mrf.mxu0
      %v4306 = vadd.f32 0.0, %v4305
      %v4307 = vpop.f32.mrf.mxu0
      %4308 = vdwg.mxu0
      %4309 = vrot.lane.b32.xlu0 %v3809, 64
      %v4310 = vpop.permute.xlu0 %4309
      %4311 = vrot.lane.b32.xlu0 %v3810, 64
      %v4312 = vpop.permute.xlu0 %4311
      %4313 = vrot.lane.b32.xlu0 %v3817, 64
      %v4314 = vpop.permute.xlu0 %4313
      %4315 = vrot.lane.b32.xlu0 %v3818, 64
      %v4316 = vpop.permute.xlu0 %4315
      %v4318 = vsel %vm745, %v4310, 0
      %v4321 = vsel %vm745, %v4312, 0
      %v4324 = vsel %vm745, %v4314, 0
      %v4327 = vsel %vm745, %v4316, 0
      %4329 = vmatpush.bf16.xpose.msra.mxu0 0
      %4330 = vmatpush.bf16.xpose.msra.mxu0 0
      %4331 = vmatpush.bf16.xpose.msra.mxu0 0
      %4332 = vmatpush.bf16.xpose.msra.mxu0 0
      %4333 = vmatpush.bf16.xpose.msra.mxu0 0
      %4334 = vmatpush.bf16.xpose.msra.mxu0 0
      %4335 = vmatpush.bf16.xpose.msra.mxu0 %v4327
      %4336 = vmatpush.bf16.xpose.msra.mxu0 %v4324
      %4337 = vmatmul.bf16.gmra.mxu0 %v4318
      %v4338 = vpop.f32.mrf.mxu0
      %v4339 = vadd.f32 0.0, %v4338
      %v4340 = vpop.f32.mrf.mxu0
      %v4341 = vadd.f32 0.0, %v4340
      %4342 = vmatmul.bf16.gmra.mxu0 %v4321
      %v4343 = vpop.f32.mrf.mxu0
      %v4344 = vadd.f32 0.0, %v4343
      %v4345 = vpop.f32.mrf.mxu0
      %4346 = vdwg.mxu0
      %v4347 = vmul.f32 %v4263, 0.125
      %v4348 = vmul.f32 %v4265, 0.125
      %v4349 = vmul.f32 %v4268, 0.125
      %v4350 = vmul.f32 %v4301, 0.125
      %v4351 = vmul.f32 %v4303, 0.125
      %v4352 = vmul.f32 %v4306, 0.125
      %v4353 = vmul.f32 %v4339, 0.125
      %v4354 = vmul.f32 %v4341, 0.125
      %v4355 = vmul.f32 %v4344, 0.125
      %v4356 = vsel %vm1685, %v4347, -1e+30
      %v4357 = vsel %vm1685, %v4348, -1e+30
      %v4358 = vsel %vm1685, %v4349, -1e+30
      %v4359 = vsel %vm1685, %v4350, -1e+30
      %v4360 = vsel %vm1685, %v4351, -1e+30
      %v4361 = vsel %vm1685, %v4352, -1e+30
      %v4362 = vsel %vm1685, %v4353, -1e+30
      %v4363 = vsel %vm1685, %v4354, -1e+30
      %v4364 = vsel %vm1685, %v4355, -1e+30
      %v4365 = vsel %vm1695, %v4356, -inf
      %4366 = vmax.xlane.f32.xlu0 %v4365
      %v4367 = vpop.xlane.xlu0 %4366
      %v4368 = vsel %vm1695, %v4357, -inf
      %4369 = vmax.xlane.f32.xlu0 %v4368
      %v4370 = vpop.xlane.xlu0 %4369
      %v4371 = vsel %vm1695, %v4358, -inf
      %4372 = vmax.xlane.f32.xlu0 %v4371
      %v4373 = vpop.xlane.xlu0 %4372
      %v4374 = vsel %vm1695, %v4359, -inf
      %4375 = vmax.xlane.f32.xlu0 %v4374
      %v4376 = vpop.xlane.xlu0 %4375
      %v4377 = vsel %vm1695, %v4360, -inf
      %4378 = vmax.xlane.f32.xlu0 %v4377
      %v4379 = vpop.xlane.xlu0 %4378
      %v4380 = vsel %vm1695, %v4361, -inf
      %4381 = vmax.xlane.f32.xlu0 %v4380
      %v4382 = vpop.xlane.xlu0 %4381
      %v4383 = vsel %vm1695, %v4362, -inf
      %4384 = vmax.xlane.f32.xlu0 %v4383
      %v4385 = vpop.xlane.xlu0 %4384
      %v4386 = vsel %vm1695, %v4363, -inf
      %4387 = vmax.xlane.f32.xlu0 %v4386
      %v4388 = vpop.xlane.xlu0 %4387
      %v4389 = vsel %vm1695, %v4364, -inf
      %4390 = vmax.xlane.f32.xlu0 %v4389
      %v4391 = vpop.xlane.xlu0 %4390
      %v4392 = vsub.f32 %v4356, %v4367
      %v4393 = vsub.f32 %v4357, %v4370
      %v4394 = vsub.f32 %v4358, %v4373
      %v4395 = vsub.f32 %v4359, %v4376
      %v4396 = vsub.f32 %v4360, %v4379
      %v4397 = vsub.f32 %v4361, %v4382
      %v4398 = vsub.f32 %v4362, %v4385
      %v4399 = vsub.f32 %v4363, %v4388
      %v4400 = vsub.f32 %v4364, %v4391
      %v4401 = vmul.f32 %v4392, 1.442695
      %v4402 = vpow.pop %v4401
      %v4403 = vmul.f32 %v4393, 1.442695
      %v4404 = vpow.pop %v4403
      %v4405 = vmul.f32 %v4394, 1.442695
      %v4406 = vpow.pop %v4405
      %v4407 = vmul.f32 %v4395, 1.442695
      %v4408 = vpow.pop %v4407
      %v4409 = vmul.f32 %v4396, 1.442695
      %v4410 = vpow.pop %v4409
      %v4411 = vmul.f32 %v4397, 1.442695
      %v4412 = vpow.pop %v4411
      %v4413 = vmul.f32 %v4398, 1.442695
      %v4414 = vpow.pop %v4413
      %v4415 = vmul.f32 %v4399, 1.442695
      %v4416 = vpow.pop %v4415
      %v4417 = vmul.f32 %v4400, 1.442695
      %v4418 = vpow.pop %v4417
      %v4419 = vsel %vm1695, %v4402, 0.0
      %4420 = vadd.xlane.f32.xlu0 %v4419
      %v4421 = vpop.xlane.xlu0 %4420
      %v4422 = vsel %vm1695, %v4404, 0.0
      %4423 = vadd.xlane.f32.xlu0 %v4422
      %v4424 = vpop.xlane.xlu0 %4423
      %v4425 = vsel %vm1695, %v4406, 0.0
      %4426 = vadd.xlane.f32.xlu0 %v4425
      %v4427 = vpop.xlane.xlu0 %4426
      %v4428 = vsel %vm1695, %v4408, 0.0
      %4429 = vadd.xlane.f32.xlu0 %v4428
      %v4430 = vpop.xlane.xlu0 %4429
      %v4431 = vsel %vm1695, %v4410, 0.0
      %4432 = vadd.xlane.f32.xlu0 %v4431
      %v4433 = vpop.xlane.xlu0 %4432
      %v4434 = vsel %vm1695, %v4412, 0.0
      %4435 = vadd.xlane.f32.xlu0 %v4434
      %v4436 = vpop.xlane.xlu0 %4435
      %v4437 = vsel %vm1695, %v4414, 0.0
      %4438 = vadd.xlane.f32.xlu0 %v4437
      %v4439 = vpop.xlane.xlu0 %4438
      %v4440 = vsel %vm1695, %v4416, 0.0
      %4441 = vadd.xlane.f32.xlu0 %v4440
      %v4442 = vpop.xlane.xlu0 %4441
      %v4443 = vsel %vm1695, %v4418, 0.0
      %4444 = vadd.xlane.f32.xlu0 %v4443
      %v4445 = vpop.xlane.xlu0 %4444
      %v4446 = vrcp.pop %v4421
      %v4447 = vmul.f32 %v4421, %v4446
      %v4448 = vsub.f32 1.0, %v4447
      %v4449 = vmul.f32 %v4446, %v4448
      %v4450 = vadd.f32 %v4446, %v4449
      %vm4451 = vweird.f32 %v4421
      %vm4452 = vweird.f32 %v4446
      %vm4453 = vmor %vm4451, %vm4452
      %v4454 = vsel %vm4453, %v4446, %v4450
      %v4455 = vand.u32 2147483647, %v4421
      %vm4456 = vcmp.eq.f32.partialorder %v4455, 8.507059e+37
      %v4457 = vand.u32 %v4421, 2147483648
      %v4458 = vor.u32 1.1754944e-38, %v4457
      %v4459 = vsel %vm4456, %v4458, %v4454
      %v4460 = vmul.f32 %v4402, %v4459
      %v4461 = vrcp.pop %v4424
      %v4462 = vmul.f32 %v4424, %v4461
      %v4463 = vsub.f32 1.0, %v4462
      %v4464 = vmul.f32 %v4461, %v4463
      %v4465 = vadd.f32 %v4461, %v4464
      %vm4466 = vweird.f32 %v4424
      %vm4467 = vweird.f32 %v4461
      %vm4468 = vmor %vm4466, %vm4467
      %v4469 = vsel %vm4468, %v4461, %v4465
      %v4470 = vand.u32 2147483647, %v4424
      %vm4471 = vcmp.eq.f32.partialorder %v4470, 8.507059e+37
      %v4472 = vand.u32 %v4424, 2147483648
      %v4473 = vor.u32 1.1754944e-38, %v4472
      %v4474 = vsel %vm4471, %v4473, %v4469
      %v4475 = vmul.f32 %v4404, %v4474
      %v4476 = vrcp.pop %v4427
      %v4477 = vmul.f32 %v4427, %v4476
      %v4478 = vsub.f32 1.0, %v4477
      %v4479 = vmul.f32 %v4476, %v4478
      %v4480 = vadd.f32 %v4476, %v4479
      %vm4481 = vweird.f32 %v4427
      %vm4482 = vweird.f32 %v4476
      %vm4483 = vmor %vm4481, %vm4482
      %v4484 = vsel %vm4483, %v4476, %v4480
      %v4485 = vand.u32 2147483647, %v4427
      %vm4486 = vcmp.eq.f32.partialorder %v4485, 8.507059e+37
      %v4487 = vand.u32 %v4427, 2147483648
      %v4488 = vor.u32 1.1754944e-38, %v4487
      %v4489 = vsel %vm4486, %v4488, %v4484
      %v4490 = vmul.f32 %v4406, %v4489
      %v4491 = vrcp.pop %v4430
      %v4492 = vmul.f32 %v4430, %v4491
      %v4493 = vsub.f32 1.0, %v4492
      %v4494 = vmul.f32 %v4491, %v4493
      %v4495 = vadd.f32 %v4491, %v4494
      %vm4496 = vweird.f32 %v4430
      %vm4497 = vweird.f32 %v4491
      %vm4498 = vmor %vm4496, %vm4497
      %v4499 = vsel %vm4498, %v4491, %v4495
      %v4500 = vand.u32 2147483647, %v4430
      %vm4501 = vcmp.eq.f32.partialorder %v4500, 8.507059e+37
      %v4502 = vand.u32 %v4430, 2147483648
      %v4503 = vor.u32 1.1754944e-38, %v4502
      %v4504 = vsel %vm4501, %v4503, %v4499
      %v4505 = vmul.f32 %v4408, %v4504
      %v4506 = vrcp.pop %v4433
      %v4507 = vmul.f32 %v4433, %v4506
      %v4508 = vsub.f32 1.0, %v4507
      %v4509 = vmul.f32 %v4506, %v4508
      %v4510 = vadd.f32 %v4506, %v4509
      %vm4511 = vweird.f32 %v4433
      %vm4512 = vweird.f32 %v4506
      %vm4513 = vmor %vm4511, %vm4512
      %v4514 = vsel %vm4513, %v4506, %v4510
      %v4515 = vand.u32 2147483647, %v4433
      %vm4516 = vcmp.eq.f32.partialorder %v4515, 8.507059e+37
      %v4517 = vand.u32 %v4433, 2147483648
      %v4518 = vor.u32 1.1754944e-38, %v4517
      %v4519 = vsel %vm4516, %v4518, %v4514
      %v4520 = vmul.f32 %v4410, %v4519
      %v4521 = vrcp.pop %v4436
      %v4522 = vmul.f32 %v4436, %v4521
      %v4523 = vsub.f32 1.0, %v4522
      %v4524 = vmul.f32 %v4521, %v4523
      %v4525 = vadd.f32 %v4521, %v4524
      %vm4526 = vweird.f32 %v4436
      %vm4527 = vweird.f32 %v4521
      %vm4528 = vmor %vm4526, %vm4527
      %v4529 = vsel %vm4528, %v4521, %v4525
      %v4530 = vand.u32 2147483647, %v4436
      %vm4531 = vcmp.eq.f32.partialorder %v4530, 8.507059e+37
      %v4532 = vand.u32 %v4436, 2147483648
      %v4533 = vor.u32 1.1754944e-38, %v4532
      %v4534 = vsel %vm4531, %v4533, %v4529
      %v4535 = vmul.f32 %v4412, %v4534
      %v4536 = vrcp.pop %v4439
      %v4537 = vmul.f32 %v4439, %v4536
      %v4538 = vsub.f32 1.0, %v4537
      %v4539 = vmul.f32 %v4536, %v4538
      %v4540 = vadd.f32 %v4536, %v4539
      %vm4541 = vweird.f32 %v4439
      %vm4542 = vweird.f32 %v4536
      %vm4543 = vmor %vm4541, %vm4542
      %v4544 = vsel %vm4543, %v4536, %v4540
      %v4545 = vand.u32 2147483647, %v4439
      %vm4546 = vcmp.eq.f32.partialorder %v4545, 8.507059e+37
      %v4547 = vand.u32 %v4439, 2147483648
      %v4548 = vor.u32 1.1754944e-38, %v4547
      %v4549 = vsel %vm4546, %v4548, %v4544
      %v4550 = vmul.f32 %v4414, %v4549
      %v4551 = vrcp.pop %v4442
      %v4552 = vmul.f32 %v4442, %v4551
      %v4553 = vsub.f32 1.0, %v4552
      %v4554 = vmul.f32 %v4551, %v4553
      %v4555 = vadd.f32 %v4551, %v4554
      %vm4556 = vweird.f32 %v4442
      %vm4557 = vweird.f32 %v4551
      %vm4558 = vmor %vm4556, %vm4557
      %v4559 = vsel %vm4558, %v4551, %v4555
      %v4560 = vand.u32 2147483647, %v4442
      %vm4561 = vcmp.eq.f32.partialorder %v4560, 8.507059e+37
      %v4562 = vand.u32 %v4442, 2147483648
      %v4563 = vor.u32 1.1754944e-38, %v4562
      %v4564 = vsel %vm4561, %v4563, %v4559
      %v4565 = vmul.f32 %v4416, %v4564
      %v4566 = vrcp.pop %v4445
      %v4567 = vmul.f32 %v4445, %v4566
      %v4568 = vsub.f32 1.0, %v4567
      %v4569 = vmul.f32 %v4566, %v4568
      %v4570 = vadd.f32 %v4566, %v4569
      %vm4571 = vweird.f32 %v4445
      %vm4572 = vweird.f32 %v4566
      %vm4573 = vmor %vm4571, %vm4572
      %v4574 = vsel %vm4573, %v4566, %v4570
      %v4575 = vand.u32 2147483647, %v4445
      %vm4576 = vcmp.eq.f32.partialorder %v4575, 8.507059e+37
      %v4577 = vand.u32 %v4445, 2147483648
      %v4578 = vor.u32 1.1754944e-38, %v4577
      %v4579 = vsel %vm4576, %v4578, %v4574
      %v4580 = vmul.f32 %v4418, %v4579
      %v4581 = vpack.c.bf16 %v4460, %v4460
      %v4582 = vpack.c.bf16 %v4475, %v4475
      %v4583 = vpack.c.bf16 %v4490, %v4490
      %v4584 = vpack.c.bf16 %v4505, %v4505
      %v4585 = vpack.c.bf16 %v4520, %v4520
      %v4586 = vpack.c.bf16 %v4535, %v4535
      %v4587 = vpack.c.bf16 %v4550, %v4550
      %v4588 = vpack.c.bf16 %v4565, %v4565
      %v4589 = vpack.c.bf16 %v4580, %v4580
      %v4593 = vunpack.c.l.b16 %v4581
      %v4594 = vunpack.c.l.b16 %v4582
      %v4595 = vunpack.c.l.b16 %v4583
      %v4596 = vpack.c.b16 %v4594, %v4593
      %v4597 = vpack.c.b16 %v4595, %v4595
      %4598 = vrot.lane.b32.xlu0 %v4115, 64
      %v4599 = vpop.permute.xlu0 %4598
      %4600 = vrot.lane.b32.xlu0 %v4116, 64
      %v4601 = vpop.permute.xlu0 %4600
      %v4604 = vsel %vm1695, %v4596, 0
      %v4607 = vsel %vm1695, %v4597, 0
      %v4610 = vsel %vm1953, %v4601, 0
      %4612 = vmatpush.bf16.msra.mxu0 0
      %4613 = vmatpush.bf16.msra.mxu0 0
      %4614 = vmatpush.bf16.msra.mxu0 0
      %4615 = vmatpush.bf16.msra.mxu0 0
      %4616 = vmatpush.bf16.msra.mxu0 0
      %4617 = vmatpush.bf16.msra.mxu0 0
      %4618 = vmatpush.bf16.msra.mxu0 %v4610
      %4619 = vmatpush.bf16.msra.mxu0 %v4599
      %4620 = vmatmul.bf16.gmra.mxu0 %v4604
      %v4621 = vpop.f32.mrf.mxu0
      %v4622 = vadd.f32 0.0, %v4621
      %v4623 = vpop.f32.mrf.mxu0
      %v4624 = vadd.f32 0.0, %v4623
      %4625 = vmatmul.bf16.gmra.mxu0 %v4607
      %v4626 = vpop.f32.mrf.mxu0
      %v4627 = vadd.f32 0.0, %v4626
      %v4628 = vpop.f32.mrf.mxu0
      %4629 = vdwg.mxu0
      %v4633 = vunpack.c.l.b16 %v4584
      %v4634 = vunpack.c.l.b16 %v4585
      %v4635 = vunpack.c.l.b16 %v4586
      %v4636 = vpack.c.b16 %v4634, %v4633
      %v4637 = vpack.c.b16 %v4635, %v4635
      %4638 = vrot.lane.b32.xlu0 %v4159, 64
      %v4639 = vpop.permute.xlu0 %4638
      %4640 = vrot.lane.b32.xlu0 %v4160, 64
      %v4641 = vpop.permute.xlu0 %4640
      %v4644 = vsel %vm1695, %v4636, 0
      %v4647 = vsel %vm1695, %v4637, 0
      %v4650 = vsel %vm1953, %v4641, 0
      %4652 = vmatpush.bf16.msra.mxu0 0
      %4653 = vmatpush.bf16.msra.mxu0 0
      %4654 = vmatpush.bf16.msra.mxu0 0
      %4655 = vmatpush.bf16.msra.mxu0 0
      %4656 = vmatpush.bf16.msra.mxu0 0
      %4657 = vmatpush.bf16.msra.mxu0 0
      %4658 = vmatpush.bf16.msra.mxu0 %v4650
      %4659 = vmatpush.bf16.msra.mxu0 %v4639
      %4660 = vmatmul.bf16.gmra.mxu0 %v4644
      %v4661 = vpop.f32.mrf.mxu0
      %v4662 = vadd.f32 0.0, %v4661
      %v4663 = vpop.f32.mrf.mxu0
      %v4664 = vadd.f32 0.0, %v4663
      %4665 = vmatmul.bf16.gmra.mxu0 %v4647
      %v4666 = vpop.f32.mrf.mxu0
      %v4667 = vadd.f32 0.0, %v4666
      %v4668 = vpop.f32.mrf.mxu0
      %4669 = vdwg.mxu0
      %v4673 = vunpack.c.l.b16 %v4587
      %v4674 = vunpack.c.l.b16 %v4588
      %v4675 = vunpack.c.l.b16 %v4589
      %v4676 = vpack.c.b16 %v4674, %v4673
      %v4677 = vpack.c.b16 %v4675, %v4675
      %4678 = vrot.lane.b32.xlu0 %v4203, 64
      %v4679 = vpop.permute.xlu0 %4678
      %4680 = vrot.lane.b32.xlu0 %v4204, 64
      %v4681 = vpop.permute.xlu0 %4680
      %v4684 = vsel %vm1695, %v4676, 0
      %v4687 = vsel %vm1695, %v4677, 0
      %v4690 = vsel %vm1953, %v4681, 0
      %4692 = vmatpush.bf16.msra.mxu0 0
      %4693 = vmatpush.bf16.msra.mxu0 0
      %4694 = vmatpush.bf16.msra.mxu0 0
      %4695 = vmatpush.bf16.msra.mxu0 0
      %4696 = vmatpush.bf16.msra.mxu0 0
      %4697 = vmatpush.bf16.msra.mxu0 0
      %4698 = vmatpush.bf16.msra.mxu0 %v4690
      %4699 = vmatpush.bf16.msra.mxu0 %v4679
      %4700 = vmatmul.bf16.gmra.mxu0 %v4684
      %v4701 = vpop.f32.mrf.mxu0
      %v4702 = vadd.f32 0.0, %v4701
      %v4703 = vpop.f32.mrf.mxu0
      %v4704 = vadd.f32 0.0, %v4703
      %4705 = vmatmul.bf16.gmra.mxu0 %v4687
      %v4706 = vpop.f32.mrf.mxu0
      %v4707 = vadd.f32 0.0, %v4706
      %v4708 = vpop.f32.mrf.mxu0
      %4709 = vdwg.mxu0
      %4719 = vrot.lane.b32.xlu0 %v4622, 64
      %v4720 = vpop.permute.xlu0 %4719
      %4721 = vrot.lane.b32.xlu0 %v4624, 64
      %v4722 = vpop.permute.xlu0 %4721
      %4723 = vrot.lane.b32.xlu0 %v4627, 64
      %v4724 = vpop.permute.xlu0 %4723
      %4725 = vrot.lane.b32.xlu0 %v4662, 64
      %v4726 = vpop.permute.xlu0 %4725
      %4727 = vrot.lane.b32.xlu0 %v4664, 64
      %v4728 = vpop.permute.xlu0 %4727
      %4729 = vrot.lane.b32.xlu0 %v4667, 64
      %v4730 = vpop.permute.xlu0 %4729
      %4731 = vrot.lane.b32.xlu0 %v4702, 64
      %v4732 = vpop.permute.xlu0 %4731
      %4733 = vrot.lane.b32.xlu0 %v4704, 64
      %v4734 = vpop.permute.xlu0 %4733
      %4735 = vrot.lane.b32.xlu0 %v4707, 64
      %v4736 = vpop.permute.xlu0 %4735
      %v4746 = vsel %vm745, %v4137, %v4720
      %v4747 = vsel %vm745, %v4139, %v4722
      %v4748 = vsel %vm745, %v4142, %v4724
      %v4749 = vsel %vm745, %v4181, %v4726
      %v4750 = vsel %vm745, %v4183, %v4728
      %v4751 = vsel %vm745, %v4186, %v4730
      %v4752 = vsel %vm745, %v4225, %v4732
      %v4753 = vsel %vm745, %v4227, %v4734
      %v4754 = vsel %vm745, %v4230, %v4736
      %s4755 = scalar_lea.vmem %s12, 128
      %v4756 = vld [vmem:[%s4755] sm:$0xff]
      %v4757 = vld [vmem:[%s4755 + $0x8] sm:$0xff]
      %v4758 = vld [vmem:[%s4755 + $0x10] sm:$0xff]
      %v4759 = vld [vmem:[%s4755 + $0x18] sm:$0xff]
      %v4760 = vld [vmem:[%s4755 + $0x20] sm:$0xff]
      %v4761 = vld [vmem:[%s4755 + $0x28] sm:$0xff]
      %v4762 = vld [vmem:[%s4755 + $0x30] sm:$0xff]
      %v4763 = vld [vmem:[%s4755 + $0x38] sm:$0xff]
      %v4764 = vld [vmem:[%s4755 + $0x40] sm:$0xff]
      %v4765 = vld [vmem:[%s4755 + $0x48] sm:$0xff]
      %v4766 = vld [vmem:[%s4755 + $0x50] sm:$0xff]
      %v4767 = vld [vmem:[%s4755 + $0x58] sm:$0xff]
      %v4768 = vld [vmem:[%s4755 + $0x60] sm:$0xff]
      %v4769 = vld [vmem:[%s4755 + $0x68] sm:$0xff]
      %v4770 = vld [vmem:[%s4755 + $0x70] sm:$0xff]
      %v4771 = vld [vmem:[%s4755 + $0x78] sm:$0xff]
      %v4772 = vpack.c.bf16 %v4747, %v4746
      %v4773 = vpack.c.bf16 %v4749, %v4748
      %v4774 = vpack.c.bf16 %v4751, %v4750
      %v4775 = vpack.c.bf16 %v4753, %v4752
      %v4776 = vpack.c.bf16 %v4754, %v4754
      %v4777 = vpack.c.bf16 %v4757, %v4756
      %v4778 = vpack.c.bf16 %v4759, %v4758
      %v4779 = vpack.c.bf16 %v4761, %v4760
      %v4780 = vpack.c.bf16 %v4763, %v4762
      %v4781 = vpack.c.bf16 %v4765, %v4764
      %v4782 = vpack.c.bf16 %v4767, %v4766
      %v4783 = vpack.c.bf16 %v4769, %v4768
      %v4784 = vpack.c.bf16 %v4771, %v4770
      %4785 = vmatpush.bf16.msra.mxu0 %v4784
      %4786 = vmatpush.bf16.msra.mxu0 %v4783
      %4787 = vmatpush.bf16.msra.mxu0 %v4782
      %4788 = vmatpush.bf16.msra.mxu0 %v4781
      %4789 = vmatpush.bf16.msra.mxu0 %v4780
      %4790 = vmatpush.bf16.msra.mxu0 %v4779
      %4791 = vmatpush.bf16.msra.mxu0 %v4778
      %4792 = vmatpush.bf16.msra.mxu0 %v4777
      %4793 = vmatmul.bf16.gmra.mxu0 %v4772
      %v4794 = vpop.f32.mrf.mxu0
      %v4795 = vadd.f32 0.0, %v4794
      %v4796 = vpop.f32.mrf.mxu0
      %v4797 = vadd.f32 0.0, %v4796
      %4798 = vmatmul.bf16.gmra.mxu0 %v4773
      %v4799 = vpop.f32.mrf.mxu0
      %v4800 = vadd.f32 0.0, %v4799
      %v4801 = vpop.f32.mrf.mxu0
      %v4802 = vadd.f32 0.0, %v4801
      %4803 = vmatmul.bf16.gmra.mxu0 %v4774
      %v4804 = vpop.f32.mrf.mxu0
      %v4805 = vadd.f32 0.0, %v4804
      %v4806 = vpop.f32.mrf.mxu0
      %v4807 = vadd.f32 0.0, %v4806
      %4808 = vmatmul.bf16.gmra.mxu0 %v4775
      %v4809 = vpop.f32.mrf.mxu0
      %v4810 = vadd.f32 0.0, %v4809
      %v4811 = vpop.f32.mrf.mxu0
      %v4812 = vadd.f32 0.0, %v4811
      %4813 = vmatmul.bf16.gmra.mxu0 %v4776
      %v4814 = vpop.f32.mrf.mxu0
      %v4815 = vadd.f32 0.0, %v4814
      %v4816 = vpop.f32.mrf.mxu0
      %4817 = vdwg.mxu0
      %v4818 = vadd.f32 %v3299, %v4795
      %v4819 = vadd.f32 %v3300, %v4797
      %v4820 = vadd.f32 %v3301, %v4800
      %v4821 = vadd.f32 %v3302, %v4802
      %v4822 = vadd.f32 %v3303, %v4805
      %v4823 = vadd.f32 %v3304, %v4807
      %v4824 = vadd.f32 %v3305, %v4810
      %v4825 = vadd.f32 %v3306, %v4812
      %v4826 = vadd.f32 %v3307, %v4815
      %s4827 = scalar_lea.vmem %s13, 1
      %v4828 = vld [vmem:[%s4827] sm:$0x1]
      %v4830 = vperm.slane %v4828, 0
      %v4832 = vadd.f32 %v4818, %v4830
      %v4833 = vadd.f32 %v4819, %v4830
      %v4834 = vadd.f32 %v4820, %v4830
      %v4835 = vadd.f32 %v4821, %v4830
      %v4836 = vadd.f32 %v4822, %v4830
      %v4837 = vadd.f32 %v4823, %v4830
      %v4838 = vadd.f32 %v4824, %v4830
      %v4839 = vadd.f32 %v4825, %v4830
      %v4840 = vadd.f32 %v4826, %v4830
      %s4841 = scalar_lea.vmem %s14, 1
      %v4842 = vld [vmem:[%s4841] sm:$0x1]
      %s4843 = scalar_lea.vmem %s15, 1
      %v4844 = vld [vmem:[%s4843] sm:$0x1]
      %4845 = vadd.xlane.f32.xlu0 %v4832
      %v4846 = vpop.xlane.xlu0 %4845
      %4847 = vadd.xlane.f32.xlu0 %v4833
      %v4848 = vpop.xlane.xlu0 %4847
      %4849 = vadd.xlane.f32.xlu0 %v4834
      %v4850 = vpop.xlane.xlu0 %4849
      %4851 = vadd.xlane.f32.xlu0 %v4835
      %v4852 = vpop.xlane.xlu0 %4851
      %4853 = vadd.xlane.f32.xlu0 %v4836
      %v4854 = vpop.xlane.xlu0 %4853
      %4855 = vadd.xlane.f32.xlu0 %v4837
      %v4856 = vpop.xlane.xlu0 %4855
      %4857 = vadd.xlane.f32.xlu0 %v4838
      %v4858 = vpop.xlane.xlu0 %4857
      %4859 = vadd.xlane.f32.xlu0 %v4839
      %v4860 = vpop.xlane.xlu0 %4859
      %4861 = vadd.xlane.f32.xlu0 %v4840
      %v4862 = vpop.xlane.xlu0 %4861
      %v4863 = vmul.f32 %v4846, %v975
      %v4864 = vmul.f32 %v4848, %v975
      %v4865 = vmul.f32 %v4850, %v975
      %v4866 = vmul.f32 %v4852, %v975
      %v4867 = vmul.f32 %v4854, %v975
      %v4868 = vmul.f32 %v4856, %v975
      %v4869 = vmul.f32 %v4858, %v975
      %v4870 = vmul.f32 %v4860, %v975
      %v4871 = vmul.f32 %v4862, %v975
      %v4872 = vsub.f32 %v4832, %v4863
      %v4873 = vsub.f32 %v4833, %v4864
      %v4874 = vsub.f32 %v4834, %v4865
      %v4875 = vsub.f32 %v4835, %v4866
      %v4876 = vsub.f32 %v4836, %v4867
      %v4877 = vsub.f32 %v4837, %v4868
      %v4878 = vsub.f32 %v4838, %v4869
      %v4879 = vsub.f32 %v4839, %v4870
      %v4880 = vsub.f32 %v4840, %v4871
      %v4881 = vmul.f32 %v4872, %v4872
      %v4882 = vmul.f32 %v4873, %v4873
      %v4883 = vmul.f32 %v4874, %v4874
      %v4884 = vmul.f32 %v4875, %v4875
      %v4885 = vmul.f32 %v4876, %v4876
      %v4886 = vmul.f32 %v4877, %v4877
      %v4887 = vmul.f32 %v4878, %v4878
      %v4888 = vmul.f32 %v4879, %v4879
      %v4889 = vmul.f32 %v4880, %v4880
      %4890 = vadd.xlane.f32.xlu0 %v4881
      %v4891 = vpop.xlane.xlu0 %4890
      %4892 = vadd.xlane.f32.xlu0 %v4882
      %v4893 = vpop.xlane.xlu0 %4892
      %4894 = vadd.xlane.f32.xlu0 %v4883
      %v4895 = vpop.xlane.xlu0 %4894
      %4896 = vadd.xlane.f32.xlu0 %v4884
      %v4897 = vpop.xlane.xlu0 %4896
      %4898 = vadd.xlane.f32.xlu0 %v4885
      %v4899 = vpop.xlane.xlu0 %4898
      %4900 = vadd.xlane.f32.xlu0 %v4886
      %v4901 = vpop.xlane.xlu0 %4900
      %4902 = vadd.xlane.f32.xlu0 %v4887
      %v4903 = vpop.xlane.xlu0 %4902
      %4904 = vadd.xlane.f32.xlu0 %v4888
      %v4905 = vpop.xlane.xlu0 %4904
      %4906 = vadd.xlane.f32.xlu0 %v4889
      %v4907 = vpop.xlane.xlu0 %4906
      %v4908 = vmul.f32 %v4891, %v975
      %v4909 = vmul.f32 %v4893, %v975
      %v4910 = vmul.f32 %v4895, %v975
      %v4911 = vmul.f32 %v4897, %v975
      %v4912 = vmul.f32 %v4899, %v975
      %v4913 = vmul.f32 %v4901, %v975
      %v4914 = vmul.f32 %v4903, %v975
      %v4915 = vmul.f32 %v4905, %v975
      %v4916 = vmul.f32 %v4907, %v975
      %v4917 = vadd.f32 %v4908, 1e-05
      %v4918 = vadd.f32 %v4909, 1e-05
      %v4919 = vadd.f32 %v4910, 1e-05
      %v4920 = vadd.f32 %v4911, 1e-05
      %v4921 = vadd.f32 %v4912, 1e-05
      %v4922 = vadd.f32 %v4913, 1e-05
      %v4923 = vadd.f32 %v4914, 1e-05
      %v4924 = vadd.f32 %v4915, 1e-05
      %v4925 = vadd.f32 %v4916, 1e-05
      %v4926 = vrsqrt.pop %v4917
      %v4927 = vmul.f32 %v4926, %v4917
      %v4928 = vmul.f32 %v4927, %v4926
      %v4929 = vmul.f32 0.5, %v4928
      %v4930 = vsub.f32 1.5, %v4929
      %v4931 = vmul.f32 %v4926, %v4930
      %vm4932 = vweird.f32 %v4917
      %vm4933 = vweird.f32 %v4926
      %vm4934 = vmor %vm4932, %vm4933
      %v4935 = vsel %vm4934, %v4926, %v4931
      %v4936 = vrsqrt.pop %v4918
      %v4937 = vmul.f32 %v4936, %v4918
      %v4938 = vmul.f32 %v4937, %v4936
      %v4939 = vmul.f32 0.5, %v4938
      %v4940 = vsub.f32 1.5, %v4939
      %v4941 = vmul.f32 %v4936, %v4940
      %vm4942 = vweird.f32 %v4918
      %vm4943 = vweird.f32 %v4936
      %vm4944 = vmor %vm4942, %vm4943
      %v4945 = vsel %vm4944, %v4936, %v4941
      %v4946 = vrsqrt.pop %v4919
      %v4947 = vmul.f32 %v4946, %v4919
      %v4948 = vmul.f32 %v4947, %v4946
      %v4949 = vmul.f32 0.5, %v4948
      %v4950 = vsub.f32 1.5, %v4949
      %v4951 = vmul.f32 %v4946, %v4950
      %vm4952 = vweird.f32 %v4919
      %vm4953 = vweird.f32 %v4946
      %vm4954 = vmor %vm4952, %vm4953
      %v4955 = vsel %vm4954, %v4946, %v4951
      %v4956 = vrsqrt.pop %v4920
      %v4957 = vmul.f32 %v4956, %v4920
      %v4958 = vmul.f32 %v4957, %v4956
      %v4959 = vmul.f32 0.5, %v4958
      %v4960 = vsub.f32 1.5, %v4959
      %v4961 = vmul.f32 %v4956, %v4960
      %vm4962 = vweird.f32 %v4920
      %vm4963 = vweird.f32 %v4956
      %vm4964 = vmor %vm4962, %vm4963
      %v4965 = vsel %vm4964, %v4956, %v4961
      %v4966 = vrsqrt.pop %v4921
      %v4967 = vmul.f32 %v4966, %v4921
      %v4968 = vmul.f32 %v4967, %v4966
      %v4969 = vmul.f32 0.5, %v4968
      %v4970 = vsub.f32 1.5, %v4969
      %v4971 = vmul.f32 %v4966, %v4970
      %vm4972 = vweird.f32 %v4921
      %vm4973 = vweird.f32 %v4966
      %vm4974 = vmor %vm4972, %vm4973
      %v4975 = vsel %vm4974, %v4966, %v4971
      %v4976 = vrsqrt.pop %v4922
      %v4977 = vmul.f32 %v4976, %v4922
      %v4978 = vmul.f32 %v4977, %v4976
      %v4979 = vmul.f32 0.5, %v4978
      %v4980 = vsub.f32 1.5, %v4979
      %v4981 = vmul.f32 %v4976, %v4980
      %vm4982 = vweird.f32 %v4922
      %vm4983 = vweird.f32 %v4976
      %vm4984 = vmor %vm4982, %vm4983
      %v4985 = vsel %vm4984, %v4976, %v4981
      %v4986 = vrsqrt.pop %v4923
      %v4987 = vmul.f32 %v4986, %v4923
      %v4988 = vmul.f32 %v4987, %v4986
      %v4989 = vmul.f32 0.5, %v4988
      %v4990 = vsub.f32 1.5, %v4989
      %v4991 = vmul.f32 %v4986, %v4990
      %vm4992 = vweird.f32 %v4923
      %vm4993 = vweird.f32 %v4986
      %vm4994 = vmor %vm4992, %vm4993
      %v4995 = vsel %vm4994, %v4986, %v4991
      %v4996 = vrsqrt.pop %v4924
      %v4997 = vmul.f32 %v4996, %v4924
      %v4998 = vmul.f32 %v4997, %v4996
      %v4999 = vmul.f32 0.5, %v4998
      %v5000 = vsub.f32 1.5, %v4999
      %v5001 = vmul.f32 %v4996, %v5000
      %vm5002 = vweird.f32 %v4924
      %vm5003 = vweird.f32 %v4996
      %vm5004 = vmor %vm5002, %vm5003
      %v5005 = vsel %vm5004, %v4996, %v5001
      %v5006 = vrsqrt.pop %v4925
      %v5007 = vmul.f32 %v5006, %v4925
      %v5008 = vmul.f32 %v5007, %v5006
      %v5009 = vmul.f32 0.5, %v5008
      %v5010 = vsub.f32 1.5, %v5009
      %v5011 = vmul.f32 %v5006, %v5010
      %vm5012 = vweird.f32 %v4925
      %vm5013 = vweird.f32 %v5006
      %vm5014 = vmor %vm5012, %vm5013
      %v5015 = vsel %vm5014, %v5006, %v5011
      %v5016 = vmul.f32 %v4872, %v4935
      %v5017 = vmul.f32 %v4873, %v4945
      %v5018 = vmul.f32 %v4874, %v4955
      %v5019 = vmul.f32 %v4875, %v4965
      %v5020 = vmul.f32 %v4876, %v4975
      %v5021 = vmul.f32 %v4877, %v4985
      %v5022 = vmul.f32 %v4878, %v4995
      %v5023 = vmul.f32 %v4879, %v5005
      %v5024 = vmul.f32 %v4880, %v5015
      %v5026 = vperm.slane %v4842, 0
      %v5028 = vmul.f32 %v5016, %v5026
      %v5029 = vmul.f32 %v5017, %v5026
      %v5030 = vmul.f32 %v5018, %v5026
      %v5031 = vmul.f32 %v5019, %v5026
      %v5032 = vmul.f32 %v5020, %v5026
      %v5033 = vmul.f32 %v5021, %v5026
      %v5034 = vmul.f32 %v5022, %v5026
      %v5035 = vmul.f32 %v5023, %v5026
      %v5036 = vmul.f32 %v5024, %v5026
      %v5038 = vperm.slane %v4844, 0
      %v5040 = vadd.f32 %v5028, %v5038
      %v5041 = vadd.f32 %v5029, %v5038
      %v5042 = vadd.f32 %v5030, %v5038
      %v5043 = vadd.f32 %v5031, %v5038
      %v5044 = vadd.f32 %v5032, %v5038
      %v5045 = vadd.f32 %v5033, %v5038
      %v5046 = vadd.f32 %v5034, %v5038
      %v5047 = vadd.f32 %v5035, %v5038
      %v5048 = vadd.f32 %v5036, %v5038
      %s5049 = scalar_lea.vmem %s16, 256
      %v5050 = vld [vmem:[%s5049] sm:$0xff]
      %v5051 = vld [vmem:[%s5049 + $0x8] sm:$0xff]
      %v5052 = vld [vmem:[%s5049 + $0x10] sm:$0xff]
      %v5053 = vld [vmem:[%s5049 + $0x18] sm:$0xff]
      %v5054 = vld [vmem:[%s5049 + $0x20] sm:$0xff]
      %v5055 = vld [vmem:[%s5049 + $0x28] sm:$0xff]
      %v5056 = vld [vmem:[%s5049 + $0x30] sm:$0xff]
      %v5057 = vld [vmem:[%s5049 + $0x38] sm:$0xff]
      %v5058 = vld [vmem:[%s5049 + $0x40] sm:$0xff]
      %v5059 = vld [vmem:[%s5049 + $0x48] sm:$0xff]
      %v5060 = vld [vmem:[%s5049 + $0x50] sm:$0xff]
      %v5061 = vld [vmem:[%s5049 + $0x58] sm:$0xff]
      %v5062 = vld [vmem:[%s5049 + $0x60] sm:$0xff]
      %v5063 = vld [vmem:[%s5049 + $0x68] sm:$0xff]
      %v5064 = vld [vmem:[%s5049 + $0x70] sm:$0xff]
      %v5065 = vld [vmem:[%s5049 + $0x78] sm:$0xff]
      %v5066 = vld [vmem:[%s5049 + $0x80] sm:$0xff]
      %v5067 = vld [vmem:[%s5049 + $0x88] sm:$0xff]
      %v5068 = vld [vmem:[%s5049 + $0x90] sm:$0xff]
      %v5069 = vld [vmem:[%s5049 + $0x98] sm:$0xff]
      %v5070 = vld [vmem:[%s5049 + $0xa0] sm:$0xff]
      %v5071 = vld [vmem:[%s5049 + $0xa8] sm:$0xff]
      %v5072 = vld [vmem:[%s5049 + $0xb0] sm:$0xff]
      %v5073 = vld [vmem:[%s5049 + $0xb8] sm:$0xff]
      %v5074 = vld [vmem:[%s5049 + $0xc0] sm:$0xff]
      %v5075 = vld [vmem:[%s5049 + $0xc8] sm:$0xff]
      %v5076 = vld [vmem:[%s5049 + $0xd0] sm:$0xff]
      %v5077 = vld [vmem:[%s5049 + $0xd8] sm:$0xff]
      %v5078 = vld [vmem:[%s5049 + $0xe0] sm:$0xff]
      %v5079 = vld [vmem:[%s5049 + $0xe8] sm:$0xff]
      %v5080 = vld [vmem:[%s5049 + $0xf0] sm:$0xff]
      %v5081 = vld [vmem:[%s5049 + $0xf8] sm:$0xff]
      %v5082 = vpack.c.bf16 %v5041, %v5040
      %v5083 = vpack.c.bf16 %v5043, %v5042
      %v5084 = vpack.c.bf16 %v5045, %v5044
      %v5085 = vpack.c.bf16 %v5047, %v5046
      %v5086 = vpack.c.bf16 %v5048, %v5048
      %v5087 = vpack.c.bf16 %v5052, %v5050
      %v5088 = vpack.c.bf16 %v5053, %v5051
      %v5089 = vpack.c.bf16 %v5056, %v5054
      %v5090 = vpack.c.bf16 %v5057, %v5055
      %v5091 = vpack.c.bf16 %v5060, %v5058
      %v5092 = vpack.c.bf16 %v5061, %v5059
      %v5093 = vpack.c.bf16 %v5064, %v5062
      %v5094 = vpack.c.bf16 %v5065, %v5063
      %v5095 = vpack.c.bf16 %v5068, %v5066
      %v5096 = vpack.c.bf16 %v5069, %v5067
      %v5097 = vpack.c.bf16 %v5072, %v5070
      %v5098 = vpack.c.bf16 %v5073, %v5071
      %v5099 = vpack.c.bf16 %v5076, %v5074
      %v5100 = vpack.c.bf16 %v5077, %v5075
      %v5101 = vpack.c.bf16 %v5080, %v5078
      %v5102 = vpack.c.bf16 %v5081, %v5079
      %s5103 = scalar_lea.vmem %s17, 2
      %v5104 = vld [vmem:[%s5103] sm:$0x3]
      %v5106 = vperm.slane %v5104, 0
      %v5107 = vperm.slane %v5104, 1
      %5110 = vmatpush.bf16.msra.mxu0 %v5101
      %5111 = vmatpush.bf16.msra.mxu0 %v5099
      %5112 = vmatpush.bf16.msra.mxu0 %v5097
      %5113 = vmatpush.bf16.msra.mxu0 %v5095
      %5114 = vmatpush.bf16.msra.mxu0 %v5093
      %5115 = vmatpush.bf16.msra.mxu0 %v5091
      %5116 = vmatpush.bf16.msra.mxu0 %v5089
      %5117 = vmatpush.bf16.msra.mxu0 %v5087
      %5118 = vmatmul.bf16.gmra.mxu0 %v5082
      %v5119 = vpop.f32.mrf.mxu0
      %v5120 = vadd.f32 %v5106, %v5119
      %v5121 = vpop.f32.mrf.mxu0
      %v5122 = vadd.f32 %v5106, %v5121
      %5123 = vmatmul.bf16.gmra.mxu0 %v5083
      %v5124 = vpop.f32.mrf.mxu0
      %v5125 = vadd.f32 %v5106, %v5124
      %v5126 = vpop.f32.mrf.mxu0
      %v5127 = vadd.f32 %v5106, %v5126
      %5128 = vmatmul.bf16.gmra.mxu0 %v5084
      %v5129 = vpop.f32.mrf.mxu0
      %v5130 = vadd.f32 %v5106, %v5129
      %v5131 = vpop.f32.mrf.mxu0
      %v5132 = vadd.f32 %v5106, %v5131
      %5133 = vmatmul.bf16.gmra.mxu0 %v5085
      %v5134 = vpop.f32.mrf.mxu0
      %v5135 = vadd.f32 %v5106, %v5134
      %v5136 = vpop.f32.mrf.mxu0
      %v5137 = vadd.f32 %v5106, %v5136
      %5138 = vmatmul.bf16.gmra.mxu0 %v5086
      %v5139 = vpop.f32.mrf.mxu0
      %v5140 = vadd.f32 %v5106, %v5139
      %v5141 = vpop.f32.mrf.mxu0
      %5142 = vdwg.mxu0
      %5143 = vmatpush.bf16.msra.mxu0 %v5102
      %5144 = vmatpush.bf16.msra.mxu0 %v5100
      %5145 = vmatpush.bf16.msra.mxu0 %v5098
      %5146 = vmatpush.bf16.msra.mxu0 %v5096
      %5147 = vmatpush.bf16.msra.mxu0 %v5094
      %5148 = vmatpush.bf16.msra.mxu0 %v5092
      %5149 = vmatpush.bf16.msra.mxu0 %v5090
      %5150 = vmatpush.bf16.msra.mxu0 %v5088
      %5151 = vmatmul.bf16.gmra.mxu0 %v5082
      %v5152 = vpop.f32.mrf.mxu0
      %v5153 = vadd.f32 %v5107, %v5152
      %v5154 = vpop.f32.mrf.mxu0
      %v5155 = vadd.f32 %v5107, %v5154
      %5156 = vmatmul.bf16.gmra.mxu0 %v5083
      %v5157 = vpop.f32.mrf.mxu0
      %v5158 = vadd.f32 %v5107, %v5157
      %v5159 = vpop.f32.mrf.mxu0
      %v5160 = vadd.f32 %v5107, %v5159
      %5161 = vmatmul.bf16.gmra.mxu0 %v5084
      %v5162 = vpop.f32.mrf.mxu0
      %v5163 = vadd.f32 %v5107, %v5162
      %v5164 = vpop.f32.mrf.mxu0
      %v5165 = vadd.f32 %v5107, %v5164
      %5166 = vmatmul.bf16.gmra.mxu0 %v5085
      %v5167 = vpop.f32.mrf.mxu0
      %v5168 = vadd.f32 %v5107, %v5167
      %v5169 = vpop.f32.mrf.mxu0
      %v5170 = vadd.f32 %v5107, %v5169
      %5171 = vmatmul.bf16.gmra.mxu0 %v5086
      %v5172 = vpop.f32.mrf.mxu0
      %v5173 = vadd.f32 %v5107, %v5172
      %v5174 = vpop.f32.mrf.mxu0
      %5175 = vdwg.mxu0
      %v5176 = vmul.f32 %v5120, 0.5
      %v5177 = vmul.f32 %v5153, 0.5
      %v5178 = vmul.f32 %v5122, 0.5
      %v5179 = vmul.f32 %v5155, 0.5
      %v5180 = vmul.f32 %v5125, 0.5
      %v5181 = vmul.f32 %v5158, 0.5
      %v5182 = vmul.f32 %v5127, 0.5
      %v5183 = vmul.f32 %v5160, 0.5
      %v5184 = vmul.f32 %v5130, 0.5
      %v5185 = vmul.f32 %v5163, 0.5
      %v5186 = vmul.f32 %v5132, 0.5
      %v5187 = vmul.f32 %v5165, 0.5
      %v5188 = vmul.f32 %v5135, 0.5
      %v5189 = vmul.f32 %v5168, 0.5
      %v5190 = vmul.f32 %v5137, 0.5
      %v5191 = vmul.f32 %v5170, 0.5
      %v5192 = vmul.f32 %v5140, 0.5
      %v5193 = vmul.f32 %v5173, 0.5
      %v5194 = vmul.f32 %v5120, 0.044715
      %v5195 = vmul.f32 %v5153, 0.044715
      %v5196 = vmul.f32 %v5122, 0.044715
      %v5197 = vmul.f32 %v5155, 0.044715
      %v5198 = vmul.f32 %v5125, 0.044715
      %v5199 = vmul.f32 %v5158, 0.044715
      %v5200 = vmul.f32 %v5127, 0.044715
      %v5201 = vmul.f32 %v5160, 0.044715
      %v5202 = vmul.f32 %v5130, 0.044715
      %v5203 = vmul.f32 %v5163, 0.044715
      %v5204 = vmul.f32 %v5132, 0.044715
      %v5205 = vmul.f32 %v5165, 0.044715
      %v5206 = vmul.f32 %v5135, 0.044715
      %v5207 = vmul.f32 %v5168, 0.044715
      %v5208 = vmul.f32 %v5137, 0.044715
      %v5209 = vmul.f32 %v5170, 0.044715
      %v5210 = vmul.f32 %v5140, 0.044715
      %v5211 = vmul.f32 %v5173, 0.044715
      %v5212 = vmul.f32 %v5194, %v5120
      %v5213 = vmul.f32 %v5195, %v5153
      %v5214 = vmul.f32 %v5196, %v5122
      %v5215 = vmul.f32 %v5197, %v5155
      %v5216 = vmul.f32 %v5198, %v5125
      %v5217 = vmul.f32 %v5199, %v5158
      %v5218 = vmul.f32 %v5200, %v5127
      %v5219 = vmul.f32 %v5201, %v5160
      %v5220 = vmul.f32 %v5202, %v5130
      %v5221 = vmul.f32 %v5203, %v5163
      %v5222 = vmul.f32 %v5204, %v5132
      %v5223 = vmul.f32 %v5205, %v5165
      %v5224 = vmul.f32 %v5206, %v5135
      %v5225 = vmul.f32 %v5207, %v5168
      %v5226 = vmul.f32 %v5208, %v5137
      %v5227 = vmul.f32 %v5209, %v5170
      %v5228 = vmul.f32 %v5210, %v5140
      %v5229 = vmul.f32 %v5211, %v5173
      %v5230 = vmul.f32 %v5212, %v5120
      %v5231 = vmul.f32 %v5213, %v5153
      %v5232 = vmul.f32 %v5214, %v5122
      %v5233 = vmul.f32 %v5215, %v5155
      %v5234 = vmul.f32 %v5216, %v5125
      %v5235 = vmul.f32 %v5217, %v5158
      %v5236 = vmul.f32 %v5218, %v5127
      %v5237 = vmul.f32 %v5219, %v5160
      %v5238 = vmul.f32 %v5220, %v5130
      %v5239 = vmul.f32 %v5221, %v5163
      %v5240 = vmul.f32 %v5222, %v5132
      %v5241 = vmul.f32 %v5223, %v5165
      %v5242 = vmul.f32 %v5224, %v5135
      %v5243 = vmul.f32 %v5225, %v5168
      %v5244 = vmul.f32 %v5226, %v5137
      %v5245 = vmul.f32 %v5227, %v5170
      %v5246 = vmul.f32 %v5228, %v5140
      %v5247 = vmul.f32 %v5229, %v5173
      %v5248 = vadd.f32 %v5120, %v5230
      %v5249 = vadd.f32 %v5153, %v5231
      %v5250 = vadd.f32 %v5122, %v5232
      %v5251 = vadd.f32 %v5155, %v5233
      %v5252 = vadd.f32 %v5125, %v5234
      %v5253 = vadd.f32 %v5158, %v5235
      %v5254 = vadd.f32 %v5127, %v5236
      %v5255 = vadd.f32 %v5160, %v5237
      %v5256 = vadd.f32 %v5130, %v5238
      %v5257 = vadd.f32 %v5163, %v5239
      %v5258 = vadd.f32 %v5132, %v5240
      %v5259 = vadd.f32 %v5165, %v5241
      %v5260 = vadd.f32 %v5135, %v5242
      %v5261 = vadd.f32 %v5168, %v5243
      %v5262 = vadd.f32 %v5137, %v5244
      %v5263 = vadd.f32 %v5170, %v5245
      %v5264 = vadd.f32 %v5140, %v5246
      %v5265 = vadd.f32 %v5173, %v5247
      %v5266 = vmul.f32 %v5248, 0.7978846
      %v5267 = vmul.f32 %v5249, 0.7978846
      %v5268 = vmul.f32 %v5250, 0.7978846
      %v5269 = vmul.f32 %v5251, 0.7978846
      %v5270 = vmul.f32 %v5252, 0.7978846
      %v5271 = vmul.f32 %v5253, 0.7978846
      %v5272 = vmul.f32 %v5254, 0.7978846
      %v5273 = vmul.f32 %v5255, 0.7978846
      %v5274 = vmul.f32 %v5256, 0.7978846
      %v5275 = vmul.f32 %v5257, 0.7978846
      %v5276 = vmul.f32 %v5258, 0.7978846
      %v5277 = vmul.f32 %v5259, 0.7978846
      %v5278 = vmul.f32 %v5260, 0.7978846
      %v5279 = vmul.f32 %v5261, 0.7978846
      %v5280 = vmul.f32 %v5262, 0.7978846
      %v5281 = vmul.f32 %v5263, 0.7978846
      %v5282 = vmul.f32 %v5264, 0.7978846
      %v5283 = vmul.f32 %v5265, 0.7978846
      %v5284 = vtanh.pop %v5266
      %v5285 = vtanh.pop %v5267
      %v5286 = vtanh.pop %v5268
      %v5287 = vtanh.pop %v5269
      %v5288 = vtanh.pop %v5270
      %v5289 = vtanh.pop %v5271
      %v5290 = vtanh.pop %v5272
      %v5291 = vtanh.pop %v5273
      %v5292 = vtanh.pop %v5274
      %v5293 = vtanh.pop %v5275
      %v5294 = vtanh.pop %v5276
      %v5295 = vtanh.pop %v5277
      %v5296 = vtanh.pop %v5278
      %v5297 = vtanh.pop %v5279
      %v5298 = vtanh.pop %v5280
      %v5299 = vtanh.pop %v5281
      %v5300 = vtanh.pop %v5282
      %v5301 = vtanh.pop %v5283
      %v5302 = vadd.f32 %v5284, 1.0
      %v5303 = vadd.f32 %v5285, 1.0
      %v5304 = vadd.f32 %v5286, 1.0
      %v5305 = vadd.f32 %v5287, 1.0
      %v5306 = vadd.f32 %v5288, 1.0
      %v5307 = vadd.f32 %v5289, 1.0
      %v5308 = vadd.f32 %v5290, 1.0
      %v5309 = vadd.f32 %v5291, 1.0
      %v5310 = vadd.f32 %v5292, 1.0
      %v5311 = vadd.f32 %v5293, 1.0
      %v5312 = vadd.f32 %v5294, 1.0
      %v5313 = vadd.f32 %v5295, 1.0
      %v5314 = vadd.f32 %v5296, 1.0
      %v5315 = vadd.f32 %v5297, 1.0
      %v5316 = vadd.f32 %v5298, 1.0
      %v5317 = vadd.f32 %v5299, 1.0
      %v5318 = vadd.f32 %v5300, 1.0
      %v5319 = vadd.f32 %v5301, 1.0
      %v5320 = vmul.f32 %v5176, %v5302
      %v5321 = vmul.f32 %v5177, %v5303
      %v5322 = vmul.f32 %v5178, %v5304
      %v5323 = vmul.f32 %v5179, %v5305
      %v5324 = vmul.f32 %v5180, %v5306
      %v5325 = vmul.f32 %v5181, %v5307
      %v5326 = vmul.f32 %v5182, %v5308
      %v5327 = vmul.f32 %v5183, %v5309
      %v5328 = vmul.f32 %v5184, %v5310
      %v5329 = vmul.f32 %v5185, %v5311
      %v5330 = vmul.f32 %v5186, %v5312
      %v5331 = vmul.f32 %v5187, %v5313
      %v5332 = vmul.f32 %v5188, %v5314
      %v5333 = vmul.f32 %v5189, %v5315
      %v5334 = vmul.f32 %v5190, %v5316
      %v5335 = vmul.f32 %v5191, %v5317
      %v5336 = vmul.f32 %v5192, %v5318
      %v5337 = vmul.f32 %v5193, %v5319
      %s5338 = scalar_lea.vmem %s18, 256
      %v5339 = vld [vmem:[%s5338] sm:$0xff]
      %v5340 = vld [vmem:[%s5338 + $0x8] sm:$0xff]
      %v5341 = vld [vmem:[%s5338 + $0x10] sm:$0xff]
      %v5342 = vld [vmem:[%s5338 + $0x18] sm:$0xff]
      %v5343 = vld [vmem:[%s5338 + $0x20] sm:$0xff]
      %v5344 = vld [vmem:[%s5338 + $0x28] sm:$0xff]
      %v5345 = vld [vmem:[%s5338 + $0x30] sm:$0xff]
      %v5346 = vld [vmem:[%s5338 + $0x38] sm:$0xff]
      %v5347 = vld [vmem:[%s5338 + $0x40] sm:$0xff]
      %v5348 = vld [vmem:[%s5338 + $0x48] sm:$0xff]
      %v5349 = vld [vmem:[%s5338 + $0x50] sm:$0xff]
      %v5350 = vld [vmem:[%s5338 + $0x58] sm:$0xff]
      %v5351 = vld [vmem:[%s5338 + $0x60] sm:$0xff]
      %v5352 = vld [vmem:[%s5338 + $0x68] sm:$0xff]
      %v5353 = vld [vmem:[%s5338 + $0x70] sm:$0xff]
      %v5354 = vld [vmem:[%s5338 + $0x78] sm:$0xff]
      %v5355 = vld [vmem:[%s5338 + $0x80] sm:$0xff]
      %v5356 = vld [vmem:[%s5338 + $0x88] sm:$0xff]
      %v5357 = vld [vmem:[%s5338 + $0x90] sm:$0xff]
      %v5358 = vld [vmem:[%s5338 + $0x98] sm:$0xff]
      %v5359 = vld [vmem:[%s5338 + $0xa0] sm:$0xff]
      %v5360 = vld [vmem:[%s5338 + $0xa8] sm:$0xff]
      %v5361 = vld [vmem:[%s5338 + $0xb0] sm:$0xff]
      %v5362 = vld [vmem:[%s5338 + $0xb8] sm:$0xff]
      %v5363 = vld [vmem:[%s5338 + $0xc0] sm:$0xff]
      %v5364 = vld [vmem:[%s5338 + $0xc8] sm:$0xff]
      %v5365 = vld [vmem:[%s5338 + $0xd0] sm:$0xff]
      %v5366 = vld [vmem:[%s5338 + $0xd8] sm:$0xff]
      %v5367 = vld [vmem:[%s5338 + $0xe0] sm:$0xff]
      %v5368 = vld [vmem:[%s5338 + $0xe8] sm:$0xff]
      %v5369 = vld [vmem:[%s5338 + $0xf0] sm:$0xff]
      %v5370 = vld [vmem:[%s5338 + $0xf8] sm:$0xff]
      %v5371 = vpack.c.bf16 %v5322, %v5320
      %v5372 = vpack.c.bf16 %v5323, %v5321
      %v5373 = vpack.c.bf16 %v5326, %v5324
      %v5374 = vpack.c.bf16 %v5327, %v5325
      %v5375 = vpack.c.bf16 %v5330, %v5328
      %v5376 = vpack.c.bf16 %v5331, %v5329
      %v5377 = vpack.c.bf16 %v5334, %v5332
      %v5378 = vpack.c.bf16 %v5335, %v5333
      %v5379 = vpack.c.bf16 %v5336, %v5336
      %v5380 = vpack.c.bf16 %v5337, %v5337
      %v5381 = vpack.c.bf16 %v5340, %v5339
      %v5382 = vpack.c.bf16 %v5342, %v5341
      %v5383 = vpack.c.bf16 %v5344, %v5343
      %v5384 = vpack.c.bf16 %v5346, %v5345
      %v5385 = vpack.c.bf16 %v5348, %v5347
      %v5386 = vpack.c.bf16 %v5350, %v5349
      %v5387 = vpack.c.bf16 %v5352, %v5351
      %v5388 = vpack.c.bf16 %v5354, %v5353
      %v5389 = vpack.c.bf16 %v5356, %v5355
      %v5390 = vpack.c.bf16 %v5358, %v5357
      %v5391 = vpack.c.bf16 %v5360, %v5359
      %v5392 = vpack.c.bf16 %v5362, %v5361
      %v5393 = vpack.c.bf16 %v5364, %v5363
      %v5394 = vpack.c.bf16 %v5366, %v5365
      %v5395 = vpack.c.bf16 %v5368, %v5367
      %v5396 = vpack.c.bf16 %v5370, %v5369
      %5397 = vmatpush.bf16.msra.mxu0 %v5388
      %5398 = vmatpush.bf16.msra.mxu0 %v5387
      %5399 = vmatpush.bf16.msra.mxu0 %v5386
      %5400 = vmatpush.bf16.msra.mxu0 %v5385
      %5401 = vmatpush.bf16.msra.mxu0 %v5384
      %5402 = vmatpush.bf16.msra.mxu0 %v5383
      %5403 = vmatpush.bf16.msra.mxu0 %v5382
      %5404 = vmatpush.bf16.msra.mxu0 %v5381
      %5405 = vmatmul.bf16.gmra.mxu0 %v5371
      %v5406 = vpop.f32.mrf.mxu0
      %v5407 = vadd.f32 0.0, %v5406
      %v5408 = vpop.f32.mrf.mxu0
      %5409 = vmatmul.bf16.gmra.mxu0 %v5373
      %v5410 = vpop.f32.mrf.mxu0
      %v5411 = vpop.f32.mrf.mxu0
      %v5412 = vadd.f32 0.0, %v5411
      %5413 = vmatmul.bf16.gmra.mxu0 %v5375
      %v5414 = vpop.f32.mrf.mxu0
      %v5415 = vpop.f32.mrf.mxu0
      %5416 = vmatmul.bf16.gmra.mxu0 %v5377
      %v5417 = vpop.f32.mrf.mxu0
      %v5418 = vadd.f32 0.0, %v5417
      %v5419 = vpop.f32.mrf.mxu0
      %5420 = vmatmul.bf16.gmra.mxu0 %v5379
      %v5421 = vpop.f32.mrf.mxu0
      %v5422 = vpop.f32.mrf.mxu0
      %5423 = vdwg.mxu0
      %5424 = vmatpush.bf16.msra.mxu0 %v5396
      %5425 = vmatpush.bf16.msra.mxu0 %v5395
      %5426 = vmatpush.bf16.msra.mxu0 %v5394
      %5427 = vmatpush.bf16.msra.mxu0 %v5393
      %5428 = vmatpush.bf16.msra.mxu0 %v5392
      %5429 = vmatpush.bf16.msra.mxu0 %v5391
      %5430 = vmatpush.bf16.msra.mxu0 %v5390
      %5431 = vmatpush.bf16.msra.mxu0 %v5389
      %5432 = vmatmul.bf16.gmra.mxu0 %v5372
      %v5433 = vpop.f32.mrf.mxu0
      %v5434 = vadd.f32 %v5407, %v5433
      %v5435 = vpop.f32.mrf.mxu0
      %5436 = vmatmul.bf16.gmra.mxu0 %v5374
      %v5437 = vpop.f32.mrf.mxu0
      %v5438 = vpop.f32.mrf.mxu0
      %v5439 = vadd.f32 %v5412, %v5438
      %5440 = vmatmul.bf16.gmra.mxu0 %v5376
      %v5441 = vpop.f32.mrf.mxu0
      %v5442 = vpop.f32.mrf.mxu0
      %5443 = vmatmul.bf16.gmra.mxu0 %v5378
      %v5444 = vpop.f32.mrf.mxu0
      %v5445 = vadd.f32 %v5418, %v5444
      %v5446 = vpop.f32.mrf.mxu0
      %5447 = vmatmul.bf16.gmra.mxu0 %v5380
      %v5448 = vpop.f32.mrf.mxu0
      %v5449 = vpop.f32.mrf.mxu0
      %5450 = vdwg.mxu0
      %v5451 = vadd.f32 %v4832, %v5434
      %v5452 = vadd.f32 %v4835, %v5439
      %v5453 = vadd.f32 %v4838, %v5445
      %s5454 = scalar_lea.vmem %s19, 1
      %v5455 = vld [vmem:[%s5454] sm:$0x1]
      %v5457 = vperm.slane %v5455, 0
      %v5459 = vadd.f32 %v5451, %v5457
      %v5460 = vadd.f32 %v5452, %v5457
      %v5461 = vadd.f32 %v5453, %v5457
      %v5462 = vld [vmem:[%s20] sm:$0x1]
      %v5463 = vld [vmem:[%s21] sm:$0x1]
      %vm5464 = vcmask 1040384
      %v5465 = vsel %vm5464, %v5459, 0.0
      %5466 = vadd.xlane.f32.xlu0 %v5465
      %v5467 = vpop.xlane.xlu0 %5466
      %v5468 = vsel %vm5464, %v5460, 0.0
      %5469 = vadd.xlane.f32.xlu0 %v5468
      %v5470 = vpop.xlane.xlu0 %5469
      %v5471 = vsel %vm5464, %v5461, 0.0
      %5472 = vadd.xlane.f32.xlu0 %v5471
      %v5473 = vpop.xlane.xlu0 %5472
      %v5474 = vmul.f32 %v5467, %v975
      %v5475 = vmul.f32 %v5470, %v975
      %v5476 = vmul.f32 %v5473, %v975
      %v5477 = vsub.f32 %v5459, %v5474
      %v5478 = vsub.f32 %v5460, %v5475
      %v5479 = vsub.f32 %v5461, %v5476
      %v5480 = vmul.f32 %v5477, %v5477
      %v5481 = vmul.f32 %v5478, %v5478
      %v5482 = vmul.f32 %v5479, %v5479
      %v5483 = vsel %vm5464, %v5480, 0.0
      %5484 = vadd.xlane.f32.xlu0 %v5483
      %v5485 = vpop.xlane.xlu0 %5484
      %v5486 = vsel %vm5464, %v5481, 0.0
      %5487 = vadd.xlane.f32.xlu0 %v5486
      %v5488 = vpop.xlane.xlu0 %5487
      %v5489 = vsel %vm5464, %v5482, 0.0
      %5490 = vadd.xlane.f32.xlu0 %v5489
      %v5491 = vpop.xlane.xlu0 %5490
      %v5492 = vmul.f32 %v5485, %v975
      %v5493 = vmul.f32 %v5488, %v975
      %v5494 = vmul.f32 %v5491, %v975
      %v5495 = vadd.f32 %v5492, 1e-05
      %v5496 = vadd.f32 %v5493, 1e-05
      %v5497 = vadd.f32 %v5494, 1e-05
      %v5498 = vrsqrt.pop %v5495
      %v5499 = vmul.f32 %v5498, %v5495
      %v5500 = vmul.f32 %v5499, %v5498
      %v5501 = vmul.f32 0.5, %v5500
      %v5502 = vsub.f32 1.5, %v5501
      %v5503 = vmul.f32 %v5498, %v5502
      %vm5504 = vweird.f32 %v5495
      %vm5505 = vweird.f32 %v5498
      %vm5506 = vmor %vm5504, %vm5505
      %v5507 = vsel %vm5506, %v5498, %v5503
      %v5508 = vrsqrt.pop %v5496
      %v5509 = vmul.f32 %v5508, %v5496
      %v5510 = vmul.f32 %v5509, %v5508
      %v5511 = vmul.f32 0.5, %v5510
      %v5512 = vsub.f32 1.5, %v5511
      %v5513 = vmul.f32 %v5508, %v5512
      %vm5514 = vweird.f32 %v5496
      %vm5515 = vweird.f32 %v5508
      %vm5516 = vmor %vm5514, %vm5515
      %v5517 = vsel %vm5516, %v5508, %v5513
      %v5518 = vrsqrt.pop %v5497
      %v5519 = vmul.f32 %v5518, %v5497
      %v5520 = vmul.f32 %v5519, %v5518
      %v5521 = vmul.f32 0.5, %v5520
      %v5522 = vsub.f32 1.5, %v5521
      %v5523 = vmul.f32 %v5518, %v5522
      %vm5524 = vweird.f32 %v5497
      %vm5525 = vweird.f32 %v5518
      %vm5526 = vmor %vm5524, %vm5525
      %v5527 = vsel %vm5526, %v5518, %v5523
      %v5528 = vmul.f32 %v5477, %v5507
      %v5529 = vmul.f32 %v5478, %v5517
      %v5530 = vmul.f32 %v5479, %v5527
      %v5531 = vmul.f32 %v5528, %v5462
      %v5532 = vmul.f32 %v5529, %v5462
      %v5533 = vmul.f32 %v5530, %v5462
      %v5534 = vadd.f32 %v5531, %v5463
      %v5535 = vadd.f32 %v5532, %v5463
      %v5536 = vadd.f32 %v5533, %v5463
      %v5537 = vsel %vm5464, %v5534, 0.0
      %v5538 = vsel %vm5464, %v5535, 0.0
      %v5539 = vadd.f32 %v5537, %v5538
      %v5540 = vsel %vm5464, %v5536, 0.0
      %v5541 = vadd.f32 %v5539, %v5540
      %v5542 = vrcp.pop 3.0
      %v5543 = vmul.f32 3.0, %v5542
      %v5544 = vsub.f32 1.0, %v5543
      %v5545 = vmul.f32 %v5542, %v5544
      %v5546 = vadd.f32 %v5542, %v5545
      %vm5547 = vweird.f32 %v5542
      %v5548 = vsel %vm5547, %v5542, %v5546
      %v5549 = vmul.f32 %v5541, %v5548
      %v5550 = vld [vmem:[%s22] sm:$0xff]
      %v5551 = vld [vmem:[%s22 + $0x8] sm:$0xff]
      %v5552 = vld [vmem:[%s22 + $0x10] sm:$0xff]
      %v5553 = vld [vmem:[%s22 + $0x18] sm:$0xff]
      %v5554 = vld [vmem:[%s22 + $0x20] sm:$0xff]
      %v5555 = vld [vmem:[%s22 + $0x28] sm:$0xff]
      %v5556 = vld [vmem:[%s22 + $0x30] sm:$0xff]
      %v5557 = vld [vmem:[%s22 + $0x38] sm:$0xff]
      %v5558 = vld [vmem:[%s22 + $0x40] sm:$0xff]
      %v5559 = vld [vmem:[%s22 + $0x48] sm:$0xff]
      %v5560 = vld [vmem:[%s22 + $0x50] sm:$0xff]
      %v5561 = vld [vmem:[%s22 + $0x58] sm:$0xff]
      %v5562 = vld [vmem:[%s22 + $0x60] sm:$0xff]
      %v5563 = vld [vmem:[%s22 + $0x68] sm:$0xff]
      %v5564 = vld [vmem:[%s22 + $0x70] sm:$0xff]
      %v5565 = vld [vmem:[%s22 + $0x78] sm:$0xff]
      %v5566 = vld [vmem:[%s22 + $0x80] sm:$0xff]
      %v5567 = vld [vmem:[%s22 + $0x88] sm:$0xff]
      %v5568 = vld [vmem:[%s22 + $0x90] sm:$0xff]
      %v5569 = vld [vmem:[%s22 + $0x98] sm:$0xff]
      %v5570 = vld [vmem:[%s22 + $0xa0] sm:$0xff]
      %v5571 = vld [vmem:[%s22 + $0xa8] sm:$0xff]
      %v5572 = vld [vmem:[%s22 + $0xb0] sm:$0xff]
      %v5573 = vld [vmem:[%s22 + $0xb8] sm:$0xff]
      %v5574 = vld [vmem:[%s22 + $0xc0] sm:$0xff]
      %v5575 = vld [vmem:[%s22 + $0xc8] sm:$0xff]
      %v5576 = vld [vmem:[%s22 + $0xd0] sm:$0xff]
      %v5577 = vld [vmem:[%s22 + $0xd8] sm:$0xff]
      %v5578 = vld [vmem:[%s22 + $0xe0] sm:$0xff]
      %v5579 = vld [vmem:[%s22 + $0xe8] sm:$0xff]
      %v5580 = vld [vmem:[%s22 + $0xf0] sm:$0xff]
      %v5581 = vld [vmem:[%s22 + $0xf8] sm:$0xff]
      %v5582 = vld [vmem:[%s22 + $0x100] sm:$0xff]
      %v5583 = vld [vmem:[%s22 + $0x108] sm:$0xff]
      %v5584 = vld [vmem:[%s22 + $0x110] sm:$0xff]
      %v5585 = vld [vmem:[%s22 + $0x118] sm:$0xff]
      %v5586 = vld [vmem:[%s22 + $0x120] sm:$0xff]
      %v5587 = vld [vmem:[%s22 + $0x128] sm:$0xff]
      %v5588 = vld [vmem:[%s22 + $0x130] sm:$0xff]
      %v5589 = vld [vmem:[%s22 + $0x138] sm:$0xff]
      %v5590 = vld [vmem:[%s22 + $0x140] sm:$0xff]
      %v5591 = vld [vmem:[%s22 + $0x148] sm:$0xff]
      %v5592 = vld [vmem:[%s22 + $0x150] sm:$0xff]
      %v5593 = vld [vmem:[%s22 + $0x158] sm:$0xff]
      %v5594 = vld [vmem:[%s22 + $0x160] sm:$0xff]
      %v5595 = vld [vmem:[%s22 + $0x168] sm:$0xff]
      %v5596 = vld [vmem:[%s22 + $0x170] sm:$0xff]
      %v5597 = vld [vmem:[%s22 + $0x178] sm:$0xff]
      %v5598 = vld [vmem:[%s22 + $0x180] sm:$0xff]
      %v5599 = vld [vmem:[%s22 + $0x188] sm:$0xff]
      %v5600 = vld [vmem:[%s22 + $0x190] sm:$0xff]
      %v5601 = vld [vmem:[%s22 + $0x198] sm:$0xff]
      %v5602 = vld [vmem:[%s22 + $0x1a0] sm:$0xff]
      %v5603 = vld [vmem:[%s22 + $0x1a8] sm:$0xff]
      %v5604 = vld [vmem:[%s22 + $0x1b0] sm:$0xff]
      %v5605 = vld [vmem:[%s22 + $0x1b8] sm:$0xff]
      %v5606 = vld [vmem:[%s22 + $0x1c0] sm:$0xff]
      %v5607 = vld [vmem:[%s22 + $0x1c8] sm:$0xff]
      %v5608 = vld [vmem:[%s22 + $0x1d0] sm:$0xff]
      %v5609 = vld [vmem:[%s22 + $0x1d8] sm:$0xff]
      %v5610 = vld [vmem:[%s22 + $0x1e0] sm:$0xff]
      %v5611 = vld [vmem:[%s22 + $0x1e8] sm:$0xff]
      %v5612 = vld [vmem:[%s22 + $0x1f0] sm:$0xff]
      %v5613 = vld [vmem:[%s22 + $0x1f8] sm:$0xff]
      %v5614 = vld [vmem:[%s22 + $0x200] sm:$0xff]
      %v5615 = vld [vmem:[%s22 + $0x208] sm:$0xff]
      %v5616 = vld [vmem:[%s22 + $0x210] sm:$0xff]
      %v5617 = vld [vmem:[%s22 + $0x218] sm:$0xff]
      %v5618 = vld [vmem:[%s22 + $0x220] sm:$0xff]
      %v5619 = vld [vmem:[%s22 + $0x228] sm:$0xff]
      %v5620 = vld [vmem:[%s22 + $0x230] sm:$0xff]
      %v5621 = vld [vmem:[%s22 + $0x238] sm:$0xff]
      %v5622 = vld [vmem:[%s22 + $0x240] sm:$0xff]
      %v5623 = vld [vmem:[%s22 + $0x248] sm:$0xff]
      %v5624 = vld [vmem:[%s22 + $0x250] sm:$0xff]
      %v5625 = vld [vmem:[%s22 + $0x258] sm:$0xff]
      %v5626 = vld [vmem:[%s22 + $0x260] sm:$0xff]
      %v5627 = vld [vmem:[%s22 + $0x268] sm:$0xff]
      %v5628 = vld [vmem:[%s22 + $0x270] sm:$0xff]
      %v5629 = vld [vmem:[%s22 + $0x278] sm:$0xff]
      %v5630 = vld [vmem:[%s22 + $0x280] sm:$0xff]
      %v5631 = vld [vmem:[%s22 + $0x288] sm:$0xff]
      %v5632 = vld [vmem:[%s22 + $0x290] sm:$0xff]
      %v5633 = vld [vmem:[%s22 + $0x298] sm:$0xff]
      %v5634 = vld [vmem:[%s22 + $0x2a0] sm:$0xff]
      %v5635 = vld [vmem:[%s22 + $0x2a8] sm:$0xff]
      %v5636 = vld [vmem:[%s22 + $0x2b0] sm:$0xff]
      %v5637 = vld [vmem:[%s22 + $0x2b8] sm:$0xff]
      %v5638 = vld [vmem:[%s22 + $0x2c0] sm:$0xff]
      %v5639 = vld [vmem:[%s22 + $0x2c8] sm:$0xff]
      %v5640 = vld [vmem:[%s22 + $0x2d0] sm:$0xff]
      %v5641 = vld [vmem:[%s22 + $0x2d8] sm:$0xff]
      %v5642 = vld [vmem:[%s22 + $0x2e0] sm:$0xff]
      %v5643 = vld [vmem:[%s22 + $0x2e8] sm:$0xff]
      %v5644 = vld [vmem:[%s22 + $0x2f0] sm:$0xff]
      %v5645 = vld [vmem:[%s22 + $0x2f8] sm:$0xff]
      %v5646 = vld [vmem:[%s22 + $0x300] sm:$0xff]
      %v5647 = vld [vmem:[%s22 + $0x308] sm:$0xff]
      %v5648 = vld [vmem:[%s22 + $0x310] sm:$0xff]
      %v5649 = vld [vmem:[%s22 + $0x318] sm:$0xff]
      %v5650 = vld [vmem:[%s22 + $0x320] sm:$0xff]
      %v5651 = vld [vmem:[%s22 + $0x328] sm:$0xff]
      %v5652 = vld [vmem:[%s22 + $0x330] sm:$0xff]
      %v5653 = vld [vmem:[%s22 + $0x338] sm:$0xff]
      %v5654 = vld [vmem:[%s22 + $0x340] sm:$0xff]
      %v5655 = vld [vmem:[%s22 + $0x348] sm:$0xff]
      %v5656 = vld [vmem:[%s22 + $0x350] sm:$0xff]
      %v5657 = vld [vmem:[%s22 + $0x358] sm:$0xff]
      %v5658 = vld [vmem:[%s22 + $0x360] sm:$0xff]
      %v5659 = vld [vmem:[%s22 + $0x368] sm:$0xff]
      %v5660 = vld [vmem:[%s22 + $0x370] sm:$0xff]
      %v5661 = vld [vmem:[%s22 + $0x378] sm:$0xff]
      %v5662 = vld [vmem:[%s22 + $0x380] sm:$0xff]
      %v5663 = vld [vmem:[%s22 + $0x388] sm:$0xff]
      %v5664 = vld [vmem:[%s22 + $0x390] sm:$0xff]
      %v5665 = vld [vmem:[%s22 + $0x398] sm:$0xff]
      %v5666 = vld [vmem:[%s22 + $0x3a0] sm:$0xff]
      %v5667 = vld [vmem:[%s22 + $0x3a8] sm:$0xff]
      %v5668 = vld [vmem:[%s22 + $0x3b0] sm:$0xff]
      %v5669 = vld [vmem:[%s22 + $0x3b8] sm:$0xff]
      %v5670 = vld [vmem:[%s22 + $0x3c0] sm:$0xff]
      %v5671 = vld [vmem:[%s22 + $0x3c8] sm:$0xff]
      %v5672 = vld [vmem:[%s22 + $0x3d0] sm:$0xff]
      %v5673 = vld [vmem:[%s22 + $0x3d8] sm:$0xff]
      %v5674 = vld [vmem:[%s22 + $0x3e0] sm:$0xff]
      %v5675 = vld [vmem:[%s22 + $0x3e8] sm:$0xff]
      %v5676 = vld [vmem:[%s22 + $0x3f0] sm:$0xff]
      %v5677 = vld [vmem:[%s22 + $0x3f8] sm:$0xff]
      %v5678 = vpack.c.bf16 %v5549, %v5549
      %v5679 = vpack.c.bf16 %v5558, %v5550
      %v5680 = vpack.c.bf16 %v5559, %v5551
      %v5681 = vpack.c.bf16 %v5560, %v5552
      %v5682 = vpack.c.bf16 %v5561, %v5553
      %v5683 = vpack.c.bf16 %v5562, %v5554
      %v5684 = vpack.c.bf16 %v5563, %v5555
      %v5685 = vpack.c.bf16 %v5564, %v5556
      %v5686 = vpack.c.bf16 %v5565, %v5557
      %v5687 = vpack.c.bf16 %v5574, %v5566
      %v5688 = vpack.c.bf16 %v5575, %v5567
      %v5689 = vpack.c.bf16 %v5576, %v5568
      %v5690 = vpack.c.bf16 %v5577, %v5569
      %v5691 = vpack.c.bf16 %v5578, %v5570
      %v5692 = vpack.c.bf16 %v5579, %v5571
      %v5693 = vpack.c.bf16 %v5580, %v5572
      %v5694 = vpack.c.bf16 %v5581, %v5573
      %v5695 = vpack.c.bf16 %v5590, %v5582
      %v5696 = vpack.c.bf16 %v5591, %v5583
      %v5697 = vpack.c.bf16 %v5592, %v5584
      %v5698 = vpack.c.bf16 %v5593, %v5585
      %v5699 = vpack.c.bf16 %v5594, %v5586
      %v5700 = vpack.c.bf16 %v5595, %v5587
      %v5701 = vpack.c.bf16 %v5596, %v5588
      %v5702 = vpack.c.bf16 %v5597, %v5589
      %v5703 = vpack.c.bf16 %v5606, %v5598
      %v5704 = vpack.c.bf16 %v5607, %v5599
      %v5705 = vpack.c.bf16 %v5608, %v5600
      %v5706 = vpack.c.bf16 %v5609, %v5601
      %v5707 = vpack.c.bf16 %v5610, %v5602
      %v5708 = vpack.c.bf16 %v5611, %v5603
      %v5709 = vpack.c.bf16 %v5612, %v5604
      %v5710 = vpack.c.bf16 %v5613, %v5605
      %v5711 = vpack.c.bf16 %v5622, %v5614
      %v5712 = vpack.c.bf16 %v5623, %v5615
      %v5713 = vpack.c.bf16 %v5624, %v5616
      %v5714 = vpack.c.bf16 %v5625, %v5617
      %v5715 = vpack.c.bf16 %v5626, %v5618
      %v5716 = vpack.c.bf16 %v5627, %v5619
      %v5717 = vpack.c.bf16 %v5628, %v5620
      %v5718 = vpack.c.bf16 %v5629, %v5621
      %v5719 = vpack.c.bf16 %v5638, %v5630
      %v5720 = vpack.c.bf16 %v5639, %v5631
      %v5721 = vpack.c.bf16 %v5640, %v5632
      %v5722 = vpack.c.bf16 %v5641, %v5633
      %v5723 = vpack.c.bf16 %v5642, %v5634
      %v5724 = vpack.c.bf16 %v5643, %v5635
      %v5725 = vpack.c.bf16 %v5644, %v5636
      %v5726 = vpack.c.bf16 %v5645, %v5637
      %v5727 = vpack.c.bf16 %v5654, %v5646
      %v5728 = vpack.c.bf16 %v5655, %v5647
      %v5729 = vpack.c.bf16 %v5656, %v5648
      %v5730 = vpack.c.bf16 %v5657, %v5649
      %v5731 = vpack.c.bf16 %v5658, %v5650
      %v5732 = vpack.c.bf16 %v5659, %v5651
      %v5733 = vpack.c.bf16 %v5660, %v5652
      %v5734 = vpack.c.bf16 %v5661, %v5653
      %v5735 = vpack.c.bf16 %v5670, %v5662
      %v5736 = vpack.c.bf16 %v5671, %v5663
      %v5737 = vpack.c.bf16 %v5672, %v5664
      %v5738 = vpack.c.bf16 %v5673, %v5665
      %v5739 = vpack.c.bf16 %v5674, %v5666
      %v5740 = vpack.c.bf16 %v5675, %v5667
      %v5741 = vpack.c.bf16 %v5676, %v5668
      %v5742 = vpack.c.bf16 %v5677, %v5669
      %v5743 = vld [vmem:[%s23] sm:$0xff]
      %v5745 = vperm.slane %v5743, 0
      %v5746 = vperm.slane %v5743, 1
      %v5747 = vperm.slane %v5743, 2
      %v5748 = vperm.slane %v5743, 3
      %v5749 = vperm.slane %v5743, 4
      %v5750 = vperm.slane %v5743, 5
      %v5751 = vperm.slane %v5743, 6
      %v5752 = vperm.slane %v5743, 7
      %5761 = vmatpush.bf16.msra.mxu0 %v5735
      %5762 = vmatpush.bf16.msra.mxu0 %v5727
      %5763 = vmatpush.bf16.msra.mxu0 %v5719
      %5764 = vmatpush.bf16.msra.mxu0 %v5711
      %5765 = vmatpush.bf16.msra.mxu0 %v5703
      %5766 = vmatpush.bf16.msra.mxu0 %v5695
      %5767 = vmatpush.bf16.msra.mxu0 %v5687
      %5768 = vmatpush.bf16.msra.mxu0 %v5679
      %5769 = vmatmul.bf16.gmra.mxu0 %v5678
      %v5770 = vpop.f32.mrf.mxu0
      %v5771 = vadd.f32 %v5745, %v5770
      %v5772 = vpop.f32.mrf.mxu0
      %5773 = vdwg.mxu0
      %5774 = vmatpush.bf16.msra.mxu0 %v5736
      %5775 = vmatpush.bf16.msra.mxu0 %v5728
      %5776 = vmatpush.bf16.msra.mxu0 %v5720
      %5777 = vmatpush.bf16.msra.mxu0 %v5712
      %5778 = vmatpush.bf16.msra.mxu0 %v5704
      %5779 = vmatpush.bf16.msra.mxu0 %v5696
      %5780 = vmatpush.bf16.msra.mxu0 %v5688
      %5781 = vmatpush.bf16.msra.mxu0 %v5680
      %5782 = vmatmul.bf16.gmra.mxu0 %v5678
      %v5783 = vpop.f32.mrf.mxu0
      %v5784 = vadd.f32 %v5746, %v5783
      %v5785 = vpop.f32.mrf.mxu0
      %5786 = vdwg.mxu0
      %5787 = vmatpush.bf16.msra.mxu0 %v5737
      %5788 = vmatpush.bf16.msra.mxu0 %v5729
      %5789 = vmatpush.bf16.msra.mxu0 %v5721
      %5790 = vmatpush.bf16.msra.mxu0 %v5713
      %5791 = vmatpush.bf16.msra.mxu0 %v5705
      %5792 = vmatpush.bf16.msra.mxu0 %v5697
      %5793 = vmatpush.bf16.msra.mxu0 %v5689
      %5794 = vmatpush.bf16.msra.mxu0 %v5681
      %5795 = vmatmul.bf16.gmra.mxu0 %v5678
      %v5796 = vpop.f32.mrf.mxu0
      %v5797 = vadd.f32 %v5747, %v5796
      %v5798 = vpop.f32.mrf.mxu0
      %5799 = vdwg.mxu0
      %5800 = vmatpush.bf16.msra.mxu0 %v5738
      %5801 = vmatpush.bf16.msra.mxu0 %v5730
      %5802 = vmatpush.bf16.msra.mxu0 %v5722
      %5803 = vmatpush.bf16.msra.mxu0 %v5714
      %5804 = vmatpush.bf16.msra.mxu0 %v5706
      %5805 = vmatpush.bf16.msra.mxu0 %v5698
      %5806 = vmatpush.bf16.msra.mxu0 %v5690
      %5807 = vmatpush.bf16.msra.mxu0 %v5682
      %5808 = vmatmul.bf16.gmra.mxu0 %v5678
      %v5809 = vpop.f32.mrf.mxu0
      %v5810 = vadd.f32 %v5748, %v5809
      %v5811 = vpop.f32.mrf.mxu0
      %5812 = vdwg.mxu0
      %5813 = vmatpush.bf16.msra.mxu0 %v5739
      %5814 = vmatpush.bf16.msra.mxu0 %v5731
      %5815 = vmatpush.bf16.msra.mxu0 %v5723
      %5816 = vmatpush.bf16.msra.mxu0 %v5715
      %5817 = vmatpush.bf16.msra.mxu0 %v5707
      %5818 = vmatpush.bf16.msra.mxu0 %v5699
      %5819 = vmatpush.bf16.msra.mxu0 %v5691
      %5820 = vmatpush.bf16.msra.mxu0 %v5683
      %5821 = vmatmul.bf16.gmra.mxu0 %v5678
      %v5822 = vpop.f32.mrf.mxu0
      %v5823 = vadd.f32 %v5749, %v5822
      %v5824 = vpop.f32.mrf.mxu0
      %5825 = vdwg.mxu0
      %5826 = vmatpush.bf16.msra.mxu0 %v5740
      %5827 = vmatpush.bf16.msra.mxu0 %v5732
      %5828 = vmatpush.bf16.msra.mxu0 %v5724
      %5829 = vmatpush.bf16.msra.mxu0 %v5716
      %5830 = vmatpush.bf16.msra.mxu0 %v5708
      %5831 = vmatpush.bf16.msra.mxu0 %v5700
      %5832 = vmatpush.bf16.msra.mxu0 %v5692
      %5833 = vmatpush.bf16.msra.mxu0 %v5684
      %5834 = vmatmul.bf16.gmra.mxu0 %v5678
      %v5835 = vpop.f32.mrf.mxu0
      %v5836 = vadd.f32 %v5750, %v5835
      %v5837 = vpop.f32.mrf.mxu0
      %5838 = vdwg.mxu0
      %5839 = vmatpush.bf16.msra.mxu0 %v5741
      %5840 = vmatpush.bf16.msra.mxu0 %v5733
      %5841 = vmatpush.bf16.msra.mxu0 %v5725
      %5842 = vmatpush.bf16.msra.mxu0 %v5717
      %5843 = vmatpush.bf16.msra.mxu0 %v5709
      %5844 = vmatpush.bf16.msra.mxu0 %v5701
      %5845 = vmatpush.bf16.msra.mxu0 %v5693
      %5846 = vmatpush.bf16.msra.mxu0 %v5685
      %5847 = vmatmul.bf16.gmra.mxu0 %v5678
      %v5848 = vpop.f32.mrf.mxu0
      %v5849 = vadd.f32 %v5751, %v5848
      %v5850 = vpop.f32.mrf.mxu0
      %5851 = vdwg.mxu0
      %5852 = vmatpush.bf16.msra.mxu0 %v5742
      %5853 = vmatpush.bf16.msra.mxu0 %v5734
      %5854 = vmatpush.bf16.msra.mxu0 %v5726
      %5855 = vmatpush.bf16.msra.mxu0 %v5718
      %5856 = vmatpush.bf16.msra.mxu0 %v5710
      %5857 = vmatpush.bf16.msra.mxu0 %v5702
      %5858 = vmatpush.bf16.msra.mxu0 %v5694
      %5859 = vmatpush.bf16.msra.mxu0 %v5686
      %5860 = vmatmul.bf16.gmra.mxu0 %v5678
      %v5861 = vpop.f32.mrf.mxu0
      %v5862 = vadd.f32 %v5752, %v5861
      %v5863 = vpop.f32.mrf.mxu0
      %5864 = vdwg.mxu0
      %v5873 = vrot.slane %v5784, 7
      %v5874 = vrot.slane %v5797, 6
      %v5875 = vrot.slane %v5810, 5
      %v5876 = vrot.slane %v5823, 4
      %v5877 = vrot.slane %v5836, 3
      %v5878 = vrot.slane %v5849, 2
      %v5879 = vrot.slane %v5862, 1
      %v5880 = vsel %vm5464, %v5771, %v5873
      %vm5881 = vcmask 1042434
      %v5882 = vsel %vm5881, %v5874, %v5875
      %vm5883 = vcmask 1041408
      %v5884 = vsel %vm5883, %v5880, %v5882
      %vm5885 = vcmask 1044484
      %v5886 = vsel %vm5885, %v5876, %v5877
      %vm5887 = vcmask 1046534
      %v5888 = vsel %vm5887, %v5878, %v5879
      %vm5889 = vcmask 1045508
      %v5890 = vsel %vm5889, %v5886, %v5888
      %v5891 = vsel %vm1953, %v5884, %v5890
      %5893 = vst [vmem:[%s735] sm:$0xff] %v5891
      %p5894 = scmp.lt.s32.totalorder %s35, 1
      %s5895 = scalar_select %p5894, %s35, 1
      %s5896 = smul.addr %s5895, 8
      %s5897 = scalar_lea.vmem %s24, %s5896
      // Predicated region
      $region117: #{temporal_scan_predictor.1} parent=115 // pred_check
        %p5898 = pneg %p562
      $region118: #{temporal_scan_predictor.1} parent=115 // pred_check_branch
        %5900 = sbr.rel (%p5898) target = $region120
      $region119: #{temporal_scan_predictor.1} parent=115 // pred_region
        _
      $region120: #{temporal_scan_predictor.1} parent=115 // pred_fallthru
        _
    $region116: #{temporal_scan_predictor.1} parent=5 // pred_fallthru
      _
    %p5901 = scmp.le.s32.totalorder 2, %s30
    // Predicated region
    $region121: #{temporal_scan_predictor.1} parent=5 // pred_check
      %p5902 = pneg %p5901
    $region122: #{temporal_scan_predictor.1} parent=5 // pred_check_branch
      %5904 = sbr.rel (%p5902) target = $region124
    $region123: #{temporal_scan_predictor.1} parent=5 // pred_region
      %s5905 = ssub.s32 %s30, 2
      // Predicated region
      $region125: #{temporal_scan_predictor.1} parent=123 // pred_check
        %p5906 = pneg %p568
      $region126: #{temporal_scan_predictor.1} parent=123 // pred_check_branch
        %5908 = sbr.rel (%p5906) target = $region128
      $region127: #{temporal_scan_predictor.1} parent=123 // pred_region
        %p5909 = scmp.lt.s32.totalorder %s36, 1
        %s5910 = scalar_select %p5909, %s36, 1
        %s5911 = smul.addr %s5910, 8
        %s5912 = scalar_lea.vmem %s24, %s5911
      $region128: #{temporal_scan_predictor.1} parent=123 // pred_fallthru
        _
    $region124: #{temporal_scan_predictor.1} parent=5 // pred_fallthru
      _
  $region6: #{temporal_scan_predictor.1} parent=0 // loop_footer
    %s34 = sadd.s32 1, %s30
  $region7: #{temporal_scan_predictor.1} parent=0 // loop_footer_branch
    %29 = sbr.rel target = $region3
  $region8: #{temporal_scan_predictor.1} parent=0 // loop_exit
    _

</llo_original>
